<compile_context>
chip_gen: v7x
topology: tpu7x:2x2x1
jax: 0.10.0
libtpu: 0.0.40
codegen_flags: <defaults>
</compile_context>

<pallas_src>
import functools
import numpy as np
import jax
import jax.numpy as jnp
from jax import lax
from jax.experimental import pallas as pl
from jax.experimental.pallas import tpu as pltpu

# ----------------------------- config -----------------------------------
B          = 2      # batch
SRC_LEN    = 8      # source sequence length
TGT_LEN    = 6      # target sequence length (max_len)
VOCAB      = 16     # shared source/target vocab (decoder.tokens_num)
EMB        = 16     # embedding size
ENC_HID    = 16     # encoder hidden per direction (power of two)
NUM_LAYERS = 2      # encoder.num_layers == decoder.num_layers
DEC_HID    = 32     # decoder.hidden_size (== 2*ENC_HID)
FR_HID     = 2 * ENC_HID                 # encoder.forward_reverse_hidden_size
HALF_DEC   = DEC_HID // 2
TEACHER_FORCING = 0.5
OUT_PAD    = 128    # decoder logits padded to one full 128-lane store

_VMEM = pl.BlockSpec(memory_space=pltpu.MemorySpace.VMEM)


def _lstm_gate_math(gates, c_prev, width):
    """PyTorch gate order (i, f, g, o); each gate block is `width` lanes."""
    i = jax.nn.sigmoid(gates[:, 0 * width:1 * width])
    f = jax.nn.sigmoid(gates[:, 1 * width:2 * width])
    g = jnp.tanh(      gates[:, 2 * width:3 * width])
    o = jax.nn.sigmoid(gates[:, 3 * width:4 * width])
    c_new = f * c_prev + i * g
    return o * jnp.tanh(c_new), c_new


# --------------------- fused encoder kernel ------------------------------
def _encoder_kernel(emb_ref,
                    wih0_ref, whh0_ref, b0_ref,
                    wih1_ref, whh1_ref, b1_ref,
                    hmw_ref, hmb_ref, cmw_ref, cmb_ref,
                    enc_out_ref, hmap_ref, cmap_ref,
                    seq0_scratch):
    H = ENC_HID
    GH = 2 * H            # per-gate packed width [fwd | bwd]
    GW = 8 * H            # full packed gate width = 128 lanes

    # Static fwd/bwd column-block mask (ENC_HID is a power of two -> bit test).
    col = lax.broadcasted_iota(jnp.int32, (1, GW), 1)
    fwd_mask = (col & H) == 0          # True on forward-direction gate blocks

    layer_ws = [(wih0_ref, whh0_ref, b0_ref), (wih1_ref, whh1_ref, b1_ref)]
    x = emb_ref[...]                                       # (B, S, in_dim)

    for l in range(NUM_LAYERS):
        wih_ref, whh_ref, b_ref = layer_ws[l]
        in_dim = x.shape[-1]

        # Input projection for the whole sequence & both directions in ONE
        # MXU matmul; bias add hoisted out of the time loop.
        xp = jnp.dot(x.reshape(B * SRC_LEN, in_dim), wih_ref[...],
                     preferred_element_type=jnp.float32)   # (B*S, 128)
        xp = (xp + b_ref[...]).reshape(B, SRC_LEN, GW)

        whh = whh_ref[...]                                 # (2H, 8H) block-diag
        h = jnp.zeros((B, 2 * H), jnp.float32)             # [h_fwd | h_bwd]
        c = jnp.zeros((B, 2 * H), jnp.float32)
        out_ref_l = seq0_scratch if l == 0 else enc_out_ref

        for k in range(SRC_LEN):
            kb = SRC_LEN - 1 - k                           # backward time index
            gx = jnp.where(fwd_mask, xp[:, k, :], xp[:, kb, :])
            gates = gx + jnp.dot(h, whh, preferred_element_type=jnp.float32)
            h, c = _lstm_gate_math(gates, c, GH)
            out_ref_l[:, k, 0:H] = h[:, 0:H]               # fwd output at t=k
            out_ref_l[:, kb, H:2 * H] = h[:, H:2 * H]      # bwd output at t=kb

        # Fused Seq2Seq state mappings (Linear(FR_HID -> DEC_HID//2)).
        # Final [fwd|bwd] state == hidden_encoder_conversion()[l].
        # TODO(synk): nn.Dropout on mapped states treated as identity (eval).
        hmap_ref[l, :, :] = (
            jnp.dot(h, hmw_ref[l], preferred_element_type=jnp.float32)
            + hmb_ref[l])
        cmap_ref[l, :, :] = (
            jnp.dot(c, cmw_ref[l], preferred_element_type=jnp.float32)
            + cmb_ref[l])

        if l == 0:
            x = seq0_scratch[...]                          # next layer's input


# --------------------- fused decoder kernel ------------------------------
def _decoder_kernel(enc_ref, hmap_ref, cmap_ref, tgt_ref, emb_ref,
                    wih0_ref, whh0_ref, b0_ref,
                    wih1_ref, whh1_ref, b1_ref,
                    wout_ref, bout_ref,
                    out_ref,
                    *, tf_flags):
    D = DEC_HID
    enc = enc_ref[...]                                     # (B, S, D)
    emb_tab = emb_ref[...]                                 # (VOCAB, EMB)

    # All weights loaded exactly once and resident for the whole decode loop.
    wih0 = wih0_ref[...]
    wih0_e = wih0[0:EMB, :]                                # rows for emb part
    wih0_c = wih0[EMB:EMB + D, :]                          # rows for ctx part
    whh0 = whh0_ref[...]
    wih1 = wih1_ref[...]
    whh1 = whh1_ref[...]
    wout = wout_ref[...]                                   # (D, OUT_PAD)
    # Hoisted bias broadcasts (JAX does not CSE broadcast_in_dim).
    b0 = jnp.broadcast_to(b0_ref[...], (B, 4 * D))
    b1 = jnp.broadcast_to(b1_ref[...], (B, 4 * D))
    bout = jnp.broadcast_to(bout_ref[...], (B, OUT_PAD))

    hm = [hmap_ref[l] for l in range(NUM_LAYERS)]          # (B, HALF_DEC)
    cm = [cmap_ref[l] for l in range(NUM_LAYERS)]
    zeros_half = jnp.zeros((B, HALF_DEC), jnp.float32)
    res_h = [jnp.concatenate([zeros_half, hm[l]], axis=-1) for l in range(NUM_LAYERS)]
    res_c = [jnp.concatenate([zeros_half, cm[l]], axis=-1) for l in range(NUM_LAYERS)]
    h = [jnp.concatenate([hm[l], hm[l]], axis=-1) for l in range(NUM_LAYERS)]  # (B, D)
    c = [jnp.concatenate([cm[l], cm[l]], axis=-1) for l in range(NUM_LAYERS)]

    vocab_iota = lax.broadcasted_iota(jnp.int32, (B, VOCAB), 1)
    lane_iota = lax.broadcasted_iota(jnp.int32, (B, OUT_PAD), 1)

    out_ref[0, :, :] = jnp.zeros((B, OUT_PAD), jnp.float32)   # outputs[0] == 0
    cur_ids = tgt_ref[:, 0:1]                              # (B, 1) int32

    for idx in range(1, TGT_LEN):
        # --- embedding as one-hot matmul (MXU; no in-kernel gather) -------
        one_hot = (cur_ids == vocab_iota).astype(jnp.float32)        # (B, VOCAB)
        emb_x = jnp.dot(one_hot, emb_tab, preferred_element_type=jnp.float32)

        # --- dot-product attention over encoder outputs (MXU einsums) -----
        q = h[NUM_LAYERS - 1][:, None, :]                             # (B, 1, D)
        scores = jnp.einsum('bqd,bkd->bqk', q, enc,
                            preferred_element_type=jnp.float32)       # (B, 1, S)
        m = jnp.max(scores, axis=-1, keepdims=True)
        e = jnp.exp(scores - m)
        attn = e * pl.reciprocal(jnp.sum(e, axis=-1, keepdims=True), approx=True)
        ctx = jnp.einsum('bqk,bkd->bqd', attn, enc,
                         preferred_element_type=jnp.float32)          # (B, 1, D)
        ctx = ctx.reshape(B, D)

        # --- layer-0 LSTM cell (input = [emb, ctx]; concat fused away) ----
        gates0 = (jnp.dot(emb_x, wih0_e, preferred_element_type=jnp.float32)
                  + jnp.dot(ctx, wih0_c, preferred_element_type=jnp.float32)
                  + jnp.dot(h[0], whh0, preferred_element_type=jnp.float32)
                  + b0)
        h0, c0 = _lstm_gate_math(gates0, c[0], D)

        # --- layer-1 LSTM cell --------------------------------------------
        gates1 = (jnp.dot(h0, wih1, preferred_element_type=jnp.float32)
                  + jnp.dot(h[1], whh1, preferred_element_type=jnp.float32)
                  + b1)
        h1, c1 = _lstm_gate_math(gates1, c[1], D)

        # --- output projection, padded to 128 lanes (lane-dense store) ----
        logits = jnp.dot(h1, wout, preferred_element_type=jnp.float32) + bout
        out_ref[idx, :, :] = logits

        # --- residual add of mapped encoder state into second state half --
        h = [h0 + res_h[0], h1 + res_h[1]]
        c = [c0 + res_c[0], c1 + res_c[1]]

        # --- next input: teacher forcing (trace-time flag) or greedy argmax
        if idx < TGT_LEN - 1:
            if tf_flags[idx]:
                cur_ids = tgt_ref[:, idx:idx + 1]
            else:
                mx = jnp.max(logits, axis=1, keepdims=True)
                cur_ids = jnp.min(jnp.where(logits >= mx, lane_iota, OUT_PAD),
                                  axis=1, keepdims=True)   # first argmax index


# ----------------------------- parameters --------------------------------
def _make_params():
    key = jax.random.PRNGKey(0)
    counter = [0]

    def nxt(shape, scale=0.1):
        counter[0] += 1
        k = jax.random.fold_in(key, counter[0])
        return scale * jax.random.normal(k, shape, jnp.float32)

    p = {}
    p["enc_emb"] = nxt((VOCAB, EMB))
    p["enc_lstm"] = []
    for l in range(NUM_LAYERS):
        in_dim = EMB if l == 0 else 2 * ENC_HID
        layer = {}
        for d in ("fwd", "bwd"):
            layer[d] = dict(
                w_ih=nxt((in_dim, 4 * ENC_HID)),
                w_hh=nxt((ENC_HID, 4 * ENC_HID)),
                b=nxt((1, 4 * ENC_HID)),          # == PyTorch b_ih + b_hh
            )
        p["enc_lstm"].append(layer)

    p["dec_emb"] = nxt((VOCAB, EMB))
    p["dec_lstm"] = []
    for l in range(NUM_LAYERS):
        in_dim = EMB + DEC_HID if l == 0 else DEC_HID
        p["dec_lstm"].append(dict(
            w_ih=nxt((in_dim, 4 * DEC_HID)),
            w_hh=nxt((DEC_HID, 4 * DEC_HID)),
            b=nxt((1, 4 * DEC_HID)),
        ))
    p["dec_out_w"] = nxt((DEC_HID, VOCAB))
    p["dec_out_b"] = nxt((1, VOCAB))

    p["hidden_map"] = [dict(w=nxt((FR_HID, HALF_DEC)), b=nxt((1, HALF_DEC)))
                       for _ in range(NUM_LAYERS)]
    p["cell_map"] = [dict(w=nxt((FR_HID, HALF_DEC)), b=nxt((1, HALF_DEC)))
                     for _ in range(NUM_LAYERS)]
    return p


# ------------------- weight packing for the fused kernels -----------------
def _pack_gate_major(w_f, w_b, H):
    """Pack per-direction weights/biases along the last axis in gate-major,
    direction-minor order: [i_f, i_b, f_f, f_b, g_f, g_b, o_f, o_b]."""
    cols = []
    for j in range(4):
        cols.append(w_f[..., j * H:(j + 1) * H])
        cols.append(w_b[..., j * H:(j + 1) * H])
    return jnp.concatenate(cols, axis=-1)


def _pack_hh_blockdiag(w_f, w_b, H):
    """(H,4H)x2 -> (2H,8H) block-diagonal recurrent weight so that
    [h_fwd | h_bwd] @ W yields both directions' gates in gate-major order."""
    blk = jnp.zeros((2 * H, 8 * H), jnp.float32)
    for j in range(4):
        blk = blk.at[0:H, (2 * j) * H:(2 * j + 1) * H].set(w_f[:, j * H:(j + 1) * H])
        blk = blk.at[H:2 * H, (2 * j + 1) * H:(2 * j + 2) * H].set(w_b[:, j * H:(j + 1) * H])
    return blk


def prepare_params(p):
    H = ENC_HID
    pp = {"enc_emb": p["enc_emb"], "dec_emb": p["dec_emb"]}
    pp["enc_wih"], pp["enc_whh"], pp["enc_b"] = [], [], []
    for l in range(NUM_LAYERS):
        f, b = p["enc_lstm"][l]["fwd"], p["enc_lstm"][l]["bwd"]
        pp["enc_wih"].append(_pack_gate_major(f["w_ih"], b["w_ih"], H))
        pp["enc_whh"].append(_pack_hh_blockdiag(f["w_hh"], b["w_hh"], H))
        pp["enc_b"].append(_pack_gate_major(f["b"], b["b"], H))
    pp["hm_w"] = jnp.stack([p["hidden_map"][l]["w"] for l in range(NUM_LAYERS)])
    pp["hm_b"] = jnp.stack([p["hidden_map"][l]["b"] for l in range(NUM_LAYERS)])
    pp["cm_w"] = jnp.stack([p["cell_map"][l]["w"] for l in range(NUM_LAYERS)])
    pp["cm_b"] = jnp.stack([p["cell_map"][l]["b"] for l in range(NUM_LAYERS)])
    pp["dec_wih"] = [p["dec_lstm"][l]["w_ih"] for l in range(NUM_LAYERS)]
    pp["dec_whh"] = [p["dec_lstm"][l]["w_hh"] for l in range(NUM_LAYERS)]
    pp["dec_b"] = [p["dec_lstm"][l]["b"] for l in range(NUM_LAYERS)]
    # Pad the output projection to 128 lanes; padded bias lanes at -1e30 keep
    # the greedy argmax on the real vocabulary (pad is sliced off outside).
    pp["dec_out_w"] = (jnp.zeros((DEC_HID, OUT_PAD), jnp.float32)
                       .at[:, :VOCAB].set(p["dec_out_w"]))
    pp["dec_out_b"] = (jnp.full((1, OUT_PAD), -1e30, jnp.float32)
                       .at[:, :VOCAB].set(p["dec_out_b"]))
    return pp


# ----------------------------- forward ------------------------------------
def encoder_forward(source, pp):
    emb = pp["enc_emb"][source]                  # (B, S, E) gather (XLA glue)
    return pl.pallas_call(
        _encoder_kernel,
        out_shape=(
            jax.ShapeDtypeStruct((B, SRC_LEN, 2 * ENC_HID), jnp.float32),
            jax.ShapeDtypeStruct((NUM_LAYERS, B, HALF_DEC), jnp.float32),
            jax.ShapeDtypeStruct((NUM_LAYERS, B, HALF_DEC), jnp.float32),
        ),
        in_specs=[_VMEM] * 11,
        out_specs=(_VMEM, _VMEM, _VMEM),
        scratch_shapes=[pltpu.VMEM((B, SRC_LEN, 2 * ENC_HID), jnp.float32)],
    )(emb,
      pp["enc_wih"][0], pp["enc_whh"][0], pp["enc_b"][0],
      pp["enc_wih"][1], pp["enc_whh"][1], pp["enc_b"][1],
      pp["hm_w"], pp["hm_b"], pp["cm_w"], pp["cm_b"])


def decoder_forward(enc_out, hmap, cmap, target, pp, tf_flags):
    kernel = functools.partial(_decoder_kernel, tf_flags=tf_flags)
    out_padded = pl.pallas_call(
        kernel,
        out_shape=jax.ShapeDtypeStruct((TGT_LEN, B, OUT_PAD), jnp.float32),
        in_specs=[_VMEM] * 13,
        out_specs=_VMEM,
    )(enc_out, hmap, cmap, target, pp["dec_emb"],
      pp["dec_wih"][0], pp["dec_whh"][0], pp["dec_b"][0],
      pp["dec_wih"][1], pp["dec_whh"][1], pp["dec_b"][1],
      pp["dec_out_w"], pp["dec_out_b"])
    return out_padded[:, :, :VOCAB]              # (max_len, batch, vocab)


@functools.partial(jax.jit, static_argnums=(3,))
def seq2seq_forward(source, target, pp, tf_flags):
    enc_out, hmap, cmap = encoder_forward(source, pp)
    return decoder_forward(enc_out, hmap, cmap, target, pp, tf_flags)


# ----------------------------- main ---------------------------------------
if __name__ == "__main__":
    params = _make_params()
    pp = prepare_params(params)

    key = jax.random.PRNGKey(0)
    k_src, k_tgt = jax.random.split(key)
    source = jax.random.randint(k_src, (B, SRC_LEN), 0, VOCAB, dtype=jnp.int32)
    target = jax.random.randint(k_tgt, (B, TGT_LEN), 0, VOCAB, dtype=jnp.int32)

    # Deterministic teacher-forcing coin flips (trace-time, like the reference).
    rng = np.random.RandomState(0)
    tf_flags = (False,) + tuple(bool(rng.rand() < TEACHER_FORCING)
                                for _ in range(1, TGT_LEN))

    out = seq2seq_forward(source, target, pp, tf_flags)
    out = jax.block_until_ready(out)

    assert out.shape == (TGT_LEN, B, VOCAB)
    assert bool(jnp.all(jnp.isfinite(out)))
    print("KERNEL_OK")
</pallas_src>

<mosaic_0001>
module attributes {stable_mosaic.version = 11 : i64} {
  func.func @_decoder_kernel(%arg0: memref<2x8x32xf32, #tpu.memory_space<vmem>>, %arg1: memref<2x2x16xf32, #tpu.memory_space<vmem>>, %arg2: memref<2x2x16xf32, #tpu.memory_space<vmem>>, %arg3: memref<2x6xi32, #tpu.memory_space<vmem>>, %arg4: memref<16x16xf32, #tpu.memory_space<vmem>>, %arg5: memref<48x128xf32, #tpu.memory_space<vmem>>, %arg6: memref<32x128xf32, #tpu.memory_space<vmem>>, %arg7: memref<1x128xf32, #tpu.memory_space<vmem>>, %arg8: memref<32x128xf32, #tpu.memory_space<vmem>>, %arg9: memref<32x128xf32, #tpu.memory_space<vmem>>, %arg10: memref<1x128xf32, #tpu.memory_space<vmem>>, %arg11: memref<32x128xf32, #tpu.memory_space<vmem>>, %arg12: memref<1x128xf32, #tpu.memory_space<vmem>>, %arg13: memref<6x2x128xf32, #tpu.memory_space<vmem>>) attributes {dimension_semantics = [], scalar_prefetch = 0 : i64, scratch_operands = 0 : i64, tpu.core_type = #tpu.core_type<tc>} {
    %c0 = arith.constant 0 : index
    %c0_0 = arith.constant 0 : index
    %c0_1 = arith.constant 0 : index
    %0 = vector.load %arg0[%c0, %c0_0, %c0_1] : memref<2x8x32xf32, #tpu.memory_space<vmem>>, vector<2x8x32xf32>
    %c0_2 = arith.constant 0 : index
    %c0_3 = arith.constant 0 : index
    %1 = vector.load %arg4[%c0_2, %c0_3] : memref<16x16xf32, #tpu.memory_space<vmem>>, vector<16x16xf32>
    %c0_4 = arith.constant 0 : index
    %c0_5 = arith.constant 0 : index
    %2 = vector.load %arg5[%c0_4, %c0_5] : memref<48x128xf32, #tpu.memory_space<vmem>>, vector<48x128xf32>
    %3 = vector.extract_strided_slice %2 {offsets = [0, 0], sizes = [16, 128], strides = [1, 1]} : vector<48x128xf32> to vector<16x128xf32>
    %4 = vector.extract_strided_slice %2 {offsets = [16, 0], sizes = [32, 128], strides = [1, 1]} : vector<48x128xf32> to vector<32x128xf32>
    %c0_6 = arith.constant 0 : index
    %c0_7 = arith.constant 0 : index
    %5 = vector.load %arg6[%c0_6, %c0_7] : memref<32x128xf32, #tpu.memory_space<vmem>>, vector<32x128xf32>
    %c0_8 = arith.constant 0 : index
    %c0_9 = arith.constant 0 : index
    %6 = vector.load %arg8[%c0_8, %c0_9] : memref<32x128xf32, #tpu.memory_space<vmem>>, vector<32x128xf32>
    %c0_10 = arith.constant 0 : index
    %c0_11 = arith.constant 0 : index
    %7 = vector.load %arg9[%c0_10, %c0_11] : memref<32x128xf32, #tpu.memory_space<vmem>>, vector<32x128xf32>
    %c0_12 = arith.constant 0 : index
    %c0_13 = arith.constant 0 : index
    %8 = vector.load %arg11[%c0_12, %c0_13] : memref<32x128xf32, #tpu.memory_space<vmem>>, vector<32x128xf32>
    %c0_14 = arith.constant 0 : index
    %c0_15 = arith.constant 0 : index
    %9 = vector.load %arg7[%c0_14, %c0_15] : memref<1x128xf32, #tpu.memory_space<vmem>>, vector<1x128xf32>
    %10 = vector.shape_cast %9 : vector<1x128xf32> to vector<1x128xf32>
    %11 = vector.broadcast %10 : vector<1x128xf32> to vector<2x128xf32>
    %c0_16 = arith.constant 0 : index
    %c0_17 = arith.constant 0 : index
    %12 = vector.load %arg10[%c0_16, %c0_17] : memref<1x128xf32, #tpu.memory_space<vmem>>, vector<1x128xf32>
    %13 = vector.shape_cast %12 : vector<1x128xf32> to vector<1x128xf32>
    %14 = vector.broadcast %13 : vector<1x128xf32> to vector<2x128xf32>
    %c0_18 = arith.constant 0 : index
    %c0_19 = arith.constant 0 : index
    %15 = vector.load %arg12[%c0_18, %c0_19] : memref<1x128xf32, #tpu.memory_space<vmem>>, vector<1x128xf32>
    %16 = vector.shape_cast %15 : vector<1x128xf32> to vector<1x128xf32>
    %17 = vector.broadcast %16 : vector<1x128xf32> to vector<2x128xf32>
    %c0_20 = arith.constant 0 : index
    %c0_21 = arith.constant 0 : index
    %c0_22 = arith.constant 0 : index
    %18 = vector.load %arg1[%c0_20, %c0_21, %c0_22] : memref<2x2x16xf32, #tpu.memory_space<vmem>>, vector<1x2x16xf32>
    %19 = vector.shape_cast %18 : vector<1x2x16xf32> to vector<2x16xf32>
    %c1 = arith.constant 1 : index
    %c0_23 = arith.constant 0 : index
    %c0_24 = arith.constant 0 : index
    %20 = vector.load %arg1[%c1, %c0_23, %c0_24] : memref<2x2x16xf32, #tpu.memory_space<vmem>>, vector<1x2x16xf32>
    %21 = vector.shape_cast %20 : vector<1x2x16xf32> to vector<2x16xf32>
    %c0_25 = arith.constant 0 : index
    %c0_26 = arith.constant 0 : index
    %c0_27 = arith.constant 0 : index
    %22 = vector.load %arg2[%c0_25, %c0_26, %c0_27] : memref<2x2x16xf32, #tpu.memory_space<vmem>>, vector<1x2x16xf32>
    %23 = vector.shape_cast %22 : vector<1x2x16xf32> to vector<2x16xf32>
    %c1_28 = arith.constant 1 : index
    %c0_29 = arith.constant 0 : index
    %c0_30 = arith.constant 0 : index
    %24 = vector.load %arg2[%c1_28, %c0_29, %c0_30] : memref<2x2x16xf32, #tpu.memory_space<vmem>>, vector<1x2x16xf32>
    %25 = vector.shape_cast %24 : vector<1x2x16xf32> to vector<2x16xf32>
    %cst = arith.constant 0.000000e+00 : f32
    %26 = vector.broadcast %cst : f32 to vector<2x16xf32>
    %27 = tpu.concatenate %26, %19 in 1 : vector<2x16xf32>, vector<2x16xf32> -> vector<2x32xf32>
    %28 = tpu.concatenate %26, %21 in 1 : vector<2x16xf32>, vector<2x16xf32> -> vector<2x32xf32>
    %29 = tpu.concatenate %26, %23 in 1 : vector<2x16xf32>, vector<2x16xf32> -> vector<2x32xf32>
    %30 = tpu.concatenate %26, %25 in 1 : vector<2x16xf32>, vector<2x16xf32> -> vector<2x32xf32>
    %31 = tpu.concatenate %19, %19 in 1 : vector<2x16xf32>, vector<2x16xf32> -> vector<2x32xf32>
    %32 = tpu.concatenate %21, %21 in 1 : vector<2x16xf32>, vector<2x16xf32> -> vector<2x32xf32>
    %33 = tpu.concatenate %23, %23 in 1 : vector<2x16xf32>, vector<2x16xf32> -> vector<2x32xf32>
    %34 = tpu.concatenate %25, %25 in 1 : vector<2x16xf32>, vector<2x16xf32> -> vector<2x32xf32>
    %35 = tpu.iota {dimensions = array<i32: 1>} : vector<2x16xi32>
    %36 = tpu.iota {dimensions = array<i32: 1>} : vector<2x128xi32>
    %cst_31 = arith.constant 0.000000e+00 : f32
    %37 = vector.broadcast %cst_31 : f32 to vector<2x128xf32>
    %c0_32 = arith.constant 0 : index
    %c0_33 = arith.constant 0 : index
    %c0_34 = arith.constant 0 : index
    %38 = vector.load %arg13[%c0_32, %c0_33, %c0_34] : memref<6x2x128xf32, #tpu.memory_space<vmem>>, vector<1x2x128xf32>
    %39 = vector.shape_cast %38 : vector<1x2x128xf32> to vector<2x128xf32>
    %40 = vector.shape_cast %37 : vector<2x128xf32> to vector<1x2x128xf32>
    tpu.vector_store %arg13[%c0_32, %c0_33, %c0_34], %40 {strides = array<i32>} : memref<6x2x128xf32, #tpu.memory_space<vmem>>, vector<1x2x128xf32>,
    %c0_35 = arith.constant 0 : index
    %c0_36 = arith.constant 0 : index
    %41 = vector.load %arg3[%c0_35, %c0_36] : memref<2x6xi32, #tpu.memory_space<vmem>>, vector<2x1xi32>
    %42 = vector.broadcast %41 : vector<2x1xi32> to vector<2x16xi32>
    %43 = arith.cmpi eq, %42, %35 : vector<2x16xi32>
    %44 = arith.extui %43 : vector<2x16xi1> to vector<2x16xi32>
    %45 = arith.sitofp %44 : vector<2x16xi32> to vector<2x16xf32>
    %cst_37 = arith.constant dense<0.000000e+00> : vector<2x16xf32>
    %46 = tpu.matmul %45, %1, %cst_37 {dimension_numbers = #tpu.dot_dimension_numbers<[1], [0], [0], [1], [0, 0, 1, 1], [], []>} : vector<2x16xf32>, vector<16x16xf32>, vector<2x16xf32> -> vector<2x16xf32>
    %47 = vector.shape_cast %32 : vector<2x32xf32> to vector<2x1x32xf32>
    "tpu.trace_start"() <{level = 10 : i32, message = "bqd,bkd->bqk"}> : () -> ()
    %cst_38 = arith.constant dense<0.000000e+00> : vector<2x1x8xf32>
    %48 = tpu.matmul %47, %0, %cst_38 {dimension_numbers = #tpu.dot_dimension_numbers<[2], [2], [1], [1], [0, 0, 0, 1, 1, 1], [0], [0]>} : vector<2x1x32xf32>, vector<2x8x32xf32>, vector<2x1x8xf32> -> vector<2x1x8xf32>
    "tpu.trace_stop"() : () -> ()
    %cst_39 = arith.constant dense<0xFF800000> : vector<2x1xf32>
    %49 = vector.multi_reduction <maximumf>, %48, %cst_39 [2] : vector<2x1x8xf32> to vector<2x1xf32>
    %50 = vector.shape_cast %49 : vector<2x1xf32> to vector<2x1x1xf32>
    %51 = vector.broadcast %50 : vector<2x1x1xf32> to vector<2x1x8xf32>
    %52 = arith.subf %48, %51 : vector<2x1x8xf32>
    %53 = math.exp %52 : vector<2x1x8xf32>
    %cst_40 = arith.constant dense<0.000000e+00> : vector<2x1xf32>
    %54 = vector.multi_reduction <add>, %53, %cst_40 [2] : vector<2x1x8xf32> to vector<2x1xf32>
    %55 = vector.shape_cast %54 : vector<2x1xf32> to vector<2x1x1xf32>
    %56 = tpu.reciprocal %55 {approx = true} : vector<2x1x1xf32> -> vector<2x1x1xf32>
    %57 = vector.broadcast %56 : vector<2x1x1xf32> to vector<2x1x8xf32>
    %58 = arith.mulf %53, %57 : vector<2x1x8xf32>
    "tpu.trace_start"() <{level = 10 : i32, message = "bqk,bkd->bqd"}> : () -> ()
    %cst_41 = arith.constant dense<0.000000e+00> : vector<2x1x32xf32>
    %59 = tpu.matmul %58, %0, %cst_41 {dimension_numbers = #tpu.dot_dimension_numbers<[2], [1], [1], [2], [0, 0, 0, 1, 1, 2], [0], [0]>} : vector<2x1x8xf32>, vector<2x8x32xf32>, vector<2x1x32xf32> -> vector<2x1x32xf32>
    "tpu.trace_stop"() : () -> ()
    %60 = vector.shape_cast %59 : vector<2x1x32xf32> to vector<2x32xf32>
    %cst_42 = arith.constant dense<0.000000e+00> : vector<2x128xf32>
    %61 = tpu.matmul %46, %3, %cst_42 {dimension_numbers = #tpu.dot_dimension_numbers<[1], [0], [0], [1], [0, 0, 1, 1], [], []>} : vector<2x16xf32>, vector<16x128xf32>, vector<2x128xf32> -> vector<2x128xf32>
    %cst_43 = arith.constant dense<0.000000e+00> : vector<2x128xf32>
    %62 = tpu.matmul %60, %4, %cst_43 {dimension_numbers = #tpu.dot_dimension_numbers<[1], [0], [0], [1], [0, 0, 1, 1], [], []>} : vector<2x32xf32>, vector<32x128xf32>, vector<2x128xf32> -> vector<2x128xf32>
    %63 = arith.addf %61, %62 : vector<2x128xf32>
    %cst_44 = arith.constant dense<0.000000e+00> : vector<2x128xf32>
    %64 = tpu.matmul %31, %5, %cst_44 {dimension_numbers = #tpu.dot_dimension_numbers<[1], [0], [0], [1], [0, 0, 1, 1], [], []>} : vector<2x32xf32>, vector<32x128xf32>, vector<2x128xf32> -> vector<2x128xf32>
    %65 = arith.addf %63, %64 : vector<2x128xf32>
    %66 = arith.addf %65, %11 : vector<2x128xf32>
    %67 = vector.extract_strided_slice %66 {offsets = [0, 0], sizes = [2, 32], strides = [1, 1]} : vector<2x128xf32> to vector<2x32xf32>
    %68 = arith.negf %67 : vector<2x32xf32>
    %69 = math.exp %68 : vector<2x32xf32>
    %cst_45 = arith.constant 1.000000e+00 : f32
    %70 = vector.broadcast %cst_45 : f32 to vector<2x32xf32>
    %71 = arith.addf %70, %69 : vector<2x32xf32>
    %72 = arith.divf %70, %71 : vector<2x32xf32>
    %73 = vector.extract_strided_slice %66 {offsets = [0, 32], sizes = [2, 32], strides = [1, 1]} : vector<2x128xf32> to vector<2x32xf32>
    %74 = arith.negf %73 : vector<2x32xf32>
    %75 = math.exp %74 : vector<2x32xf32>
    %cst_46 = arith.constant 1.000000e+00 : f32
    %76 = vector.broadcast %cst_46 : f32 to vector<2x32xf32>
    %77 = arith.addf %76, %75 : vector<2x32xf32>
    %78 = arith.divf %76, %77 : vector<2x32xf32>
    %79 = vector.extract_strided_slice %66 {offsets = [0, 64], sizes = [2, 32], strides = [1, 1]} : vector<2x128xf32> to vector<2x32xf32>
    %80 = math.tanh %79 : vector<2x32xf32>
    %81 = vector.extract_strided_slice %66 {offsets = [0, 96], sizes = [2, 32], strides = [1, 1]} : vector<2x128xf32> to vector<2x32xf32>
    %82 = arith.negf %81 : vector<2x32xf32>
    %83 = math.exp %82 : vector<2x32xf32>
    %cst_47 = arith.constant 1.000000e+00 : f32
    %84 = vector.broadcast %cst_47 : f32 to vector<2x32xf32>
    %85 = arith.addf %84, %83 : vector<2x32xf32>
    %86 = arith.divf %84, %85 : vector<2x32xf32>
    %87 = arith.mulf %78, %33 : vector<2x32xf32>
    %88 = arith.mulf %72, %80 : vector<2x32xf32>
    %89 = arith.addf %87, %88 : vector<2x32xf32>
    %90 = math.tanh %89 : vector<2x32xf32>
    %91 = arith.mulf %86, %90 : vector<2x32xf32>
    %cst_48 = arith.constant dense<0.000000e+00> : vector<2x128xf32>
    %92 = tpu.matmul %91, %6, %cst_48 {dimension_numbers = #tpu.dot_dimension_numbers<[1], [0], [0], [1], [0, 0, 1, 1], [], []>} : vector<2x32xf32>, vector<32x128xf32>, vector<2x128xf32> -> vector<2x128xf32>
    %cst_49 = arith.constant dense<0.000000e+00> : vector<2x128xf32>
    %93 = tpu.matmul %32, %7, %cst_49 {dimension_numbers = #tpu.dot_dimension_numbers<[1], [0], [0], [1], [0, 0, 1, 1], [], []>} : vector<2x32xf32>, vector<32x128xf32>, vector<2x128xf32> -> vector<2x128xf32>
    %94 = arith.addf %92, %93 : vector<2x128xf32>
    %95 = arith.addf %94, %14 : vector<2x128xf32>
    %96 = vector.extract_strided_slice %95 {offsets = [0, 0], sizes = [2, 32], strides = [1, 1]} : vector<2x128xf32> to vector<2x32xf32>
    %97 = arith.negf %96 : vector<2x32xf32>
    %98 = math.exp %97 : vector<2x32xf32>
    %cst_50 = arith.constant 1.000000e+00 : f32
    %99 = vector.broadcast %cst_50 : f32 to vector<2x32xf32>
    %100 = arith.addf %99, %98 : vector<2x32xf32>
    %101 = arith.divf %99, %100 : vector<2x32xf32>
    %102 = vector.extract_strided_slice %95 {offsets = [0, 32], sizes = [2, 32], strides = [1, 1]} : vector<2x128xf32> to vector<2x32xf32>
    %103 = arith.negf %102 : vector<2x32xf32>
    %104 = math.exp %103 : vector<2x32xf32>
    %cst_51 = arith.constant 1.000000e+00 : f32
    %105 = vector.broadcast %cst_51 : f32 to vector<2x32xf32>
    %106 = arith.addf %105, %104 : vector<2x32xf32>
    %107 = arith.divf %105, %106 : vector<2x32xf32>
    %108 = vector.extract_strided_slice %95 {offsets = [0, 64], sizes = [2, 32], strides = [1, 1]} : vector<2x128xf32> to vector<2x32xf32>
    %109 = math.tanh %108 : vector<2x32xf32>
    %110 = vector.extract_strided_slice %95 {offsets = [0, 96], sizes = [2, 32], strides = [1, 1]} : vector<2x128xf32> to vector<2x32xf32>
    %111 = arith.negf %110 : vector<2x32xf32>
    %112 = math.exp %111 : vector<2x32xf32>
    %cst_52 = arith.constant 1.000000e+00 : f32
    %113 = vector.broadcast %cst_52 : f32 to vector<2x32xf32>
    %114 = arith.addf %113, %112 : vector<2x32xf32>
    %115 = arith.divf %113, %114 : vector<2x32xf32>
    %116 = arith.mulf %107, %34 : vector<2x32xf32>
    %117 = arith.mulf %101, %109 : vector<2x32xf32>
    %118 = arith.addf %116, %117 : vector<2x32xf32>
    %119 = math.tanh %118 : vector<2x32xf32>
    %120 = arith.mulf %115, %119 : vector<2x32xf32>
    %cst_53 = arith.constant dense<0.000000e+00> : vector<2x128xf32>
    %121 = tpu.matmul %120, %8, %cst_53 {dimension_numbers = #tpu.dot_dimension_numbers<[1], [0], [0], [1], [0, 0, 1, 1], [], []>} : vector<2x32xf32>, vector<32x128xf32>, vector<2x128xf32> -> vector<2x128xf32>
    %122 = arith.addf %121, %17 : vector<2x128xf32>
    %c1_54 = arith.constant 1 : index
    %c0_55 = arith.constant 0 : index
    %c0_56 = arith.constant 0 : index
    %123 = vector.load %arg13[%c1_54, %c0_55, %c0_56] : memref<6x2x128xf32, #tpu.memory_space<vmem>>, vector<1x2x128xf32>
    %124 = vector.shape_cast %123 : vector<1x2x128xf32> to vector<2x128xf32>
    %125 = vector.shape_cast %122 : vector<2x128xf32> to vector<1x2x128xf32>
    tpu.vector_store %arg13[%c1_54, %c0_55, %c0_56], %125 {strides = array<i32>} : memref<6x2x128xf32, #tpu.memory_space<vmem>>, vector<1x2x128xf32>,
    %126 = arith.addf %91, %27 : vector<2x32xf32>
    %127 = arith.addf %120, %28 : vector<2x32xf32>
    %128 = arith.addf %89, %29 : vector<2x32xf32>
    %129 = arith.addf %118, %30 : vector<2x32xf32>
    %cst_57 = arith.constant dense<0xFF800000> : vector<2xf32>
    %130 = vector.multi_reduction <maximumf>, %122, %cst_57 [1] : vector<2x128xf32> to vector<2xf32>
    %131 = vector.shape_cast %130 : vector<2xf32> to vector<2x1xf32>
    %132 = vector.broadcast %131 : vector<2x1xf32> to vector<2x128xf32>
    %133 = arith.cmpf oge, %122, %132 : vector<2x128xf32>
    %c128_i32 = arith.constant 128 : i32
    %134 = vector.broadcast %c128_i32 : i32 to vector<2x128xi32>
    %135 = arith.select %133, %36, %134 : vector<2x128xi1>, vector<2x128xi32>
    %cst_58 = arith.constant dense<2147483647> : vector<2xi32>
    %136 = vector.multi_reduction <minsi>, %135, %cst_58 [1] : vector<2x128xi32> to vector<2xi32>
    %137 = vector.shape_cast %136 : vector<2xi32> to vector<2x1xi32>
    %138 = vector.broadcast %137 : vector<2x1xi32> to vector<2x16xi32>
    %139 = arith.cmpi eq, %138, %35 : vector<2x16xi32>
    %140 = arith.extui %139 : vector<2x16xi1> to vector<2x16xi32>
    %141 = arith.sitofp %140 : vector<2x16xi32> to vector<2x16xf32>
    %cst_59 = arith.constant dense<0.000000e+00> : vector<2x16xf32>
    %142 = tpu.matmul %141, %1, %cst_59 {dimension_numbers = #tpu.dot_dimension_numbers<[1], [0], [0], [1], [0, 0, 1, 1], [], []>} : vector<2x16xf32>, vector<16x16xf32>, vector<2x16xf32> -> vector<2x16xf32>
    %143 = vector.shape_cast %127 : vector<2x32xf32> to vector<2x1x32xf32>
    "tpu.trace_start"() <{level = 10 : i32, message = "bqd,bkd->bqk"}> : () -> ()
    %cst_60 = arith.constant dense<0.000000e+00> : vector<2x1x8xf32>
    %144 = tpu.matmul %143, %0, %cst_60 {dimension_numbers = #tpu.dot_dimension_numbers<[2], [2], [1], [1], [0, 0, 0, 1, 1, 1], [0], [0]>} : vector<2x1x32xf32>, vector<2x8x32xf32>, vector<2x1x8xf32> -> vector<2x1x8xf32>
    "tpu.trace_stop"() : () -> ()
    %cst_61 = arith.constant dense<0xFF800000> : vector<2x1xf32>
    %145 = vector.multi_reduction <maximumf>, %144, %cst_61 [2] : vector<2x1x8xf32> to vector<2x1xf32>
    %146 = vector.shape_cast %145 : vector<2x1xf32> to vector<2x1x1xf32>
    %147 = vector.broadcast %146 : vector<2x1x1xf32> to vector<2x1x8xf32>
    %148 = arith.subf %144, %147 : vector<2x1x8xf32>
    %149 = math.exp %148 : vector<2x1x8xf32>
    %cst_62 = arith.constant dense<0.000000e+00> : vector<2x1xf32>
    %150 = vector.multi_reduction <add>, %149, %cst_62 [2] : vector<2x1x8xf32> to vector<2x1xf32>
    %151 = vector.shape_cast %150 : vector<2x1xf32> to vector<2x1x1xf32>
    %152 = tpu.reciprocal %151 {approx = true} : vector<2x1x1xf32> -> vector<2x1x1xf32>
    %153 = vector.broadcast %152 : vector<2x1x1xf32> to vector<2x1x8xf32>
    %154 = arith.mulf %149, %153 : vector<2x1x8xf32>
    "tpu.trace_start"() <{level = 10 : i32, message = "bqk,bkd->bqd"}> : () -> ()
    %cst_63 = arith.constant dense<0.000000e+00> : vector<2x1x32xf32>
    %155 = tpu.matmul %154, %0, %cst_63 {dimension_numbers = #tpu.dot_dimension_numbers<[2], [1], [1], [2], [0, 0, 0, 1, 1, 2], [0], [0]>} : vector<2x1x8xf32>, vector<2x8x32xf32>, vector<2x1x32xf32> -> vector<2x1x32xf32>
    "tpu.trace_stop"() : () -> ()
    %156 = vector.shape_cast %155 : vector<2x1x32xf32> to vector<2x32xf32>
    %cst_64 = arith.constant dense<0.000000e+00> : vector<2x128xf32>
    %157 = tpu.matmul %142, %3, %cst_64 {dimension_numbers = #tpu.dot_dimension_numbers<[1], [0], [0], [1], [0, 0, 1, 1], [], []>} : vector<2x16xf32>, vector<16x128xf32>, vector<2x128xf32> -> vector<2x128xf32>
    %cst_65 = arith.constant dense<0.000000e+00> : vector<2x128xf32>
    %158 = tpu.matmul %156, %4, %cst_65 {dimension_numbers = #tpu.dot_dimension_numbers<[1], [0], [0], [1], [0, 0, 1, 1], [], []>} : vector<2x32xf32>, vector<32x128xf32>, vector<2x128xf32> -> vector<2x128xf32>
    %159 = arith.addf %157, %158 : vector<2x128xf32>
    %cst_66 = arith.constant dense<0.000000e+00> : vector<2x128xf32>
    %160 = tpu.matmul %126, %5, %cst_66 {dimension_numbers = #tpu.dot_dimension_numbers<[1], [0], [0], [1], [0, 0, 1, 1], [], []>} : vector<2x32xf32>, vector<32x128xf32>, vector<2x128xf32> -> vector<2x128xf32>
    %161 = arith.addf %159, %160 : vector<2x128xf32>
    %162 = arith.addf %161, %11 : vector<2x128xf32>
    %163 = vector.extract_strided_slice %162 {offsets = [0, 0], sizes = [2, 32], strides = [1, 1]} : vector<2x128xf32> to vector<2x32xf32>
    %164 = arith.negf %163 : vector<2x32xf32>
    %165 = math.exp %164 : vector<2x32xf32>
    %cst_67 = arith.constant 1.000000e+00 : f32
    %166 = vector.broadcast %cst_67 : f32 to vector<2x32xf32>
    %167 = arith.addf %166, %165 : vector<2x32xf32>
    %168 = arith.divf %166, %167 : vector<2x32xf32>
    %169 = vector.extract_strided_slice %162 {offsets = [0, 32], sizes = [2, 32], strides = [1, 1]} : vector<2x128xf32> to vector<2x32xf32>
    %170 = arith.negf %169 : vector<2x32xf32>
    %171 = math.exp %170 : vector<2x32xf32>
    %cst_68 = arith.constant 1.000000e+00 : f32
    %172 = vector.broadcast %cst_68 : f32 to vector<2x32xf32>
    %173 = arith.addf %172, %171 : vector<2x32xf32>
    %174 = arith.divf %172, %173 : vector<2x32xf32>
    %175 = vector.extract_strided_slice %162 {offsets = [0, 64], sizes = [2, 32], strides = [1, 1]} : vector<2x128xf32> to vector<2x32xf32>
    %176 = math.tanh %175 : vector<2x32xf32>
    %177 = vector.extract_strided_slice %162 {offsets = [0, 96], sizes = [2, 32], strides = [1, 1]} : vector<2x128xf32> to vector<2x32xf32>
    %178 = arith.negf %177 : vector<2x32xf32>
    %179 = math.exp %178 : vector<2x32xf32>
    %cst_69 = arith.constant 1.000000e+00 : f32
    %180 = vector.broadcast %cst_69 : f32 to vector<2x32xf32>
    %181 = arith.addf %180, %179 : vector<2x32xf32>
    %182 = arith.divf %180, %181 : vector<2x32xf32>
    %183 = arith.mulf %174, %128 : vector<2x32xf32>
    %184 = arith.mulf %168, %176 : vector<2x32xf32>
    %185 = arith.addf %183, %184 : vector<2x32xf32>
    %186 = math.tanh %185 : vector<2x32xf32>
    %187 = arith.mulf %182, %186 : vector<2x32xf32>
    %cst_70 = arith.constant dense<0.000000e+00> : vector<2x128xf32>
    %188 = tpu.matmul %187, %6, %cst_70 {dimension_numbers = #tpu.dot_dimension_numbers<[1], [0], [0], [1], [0, 0, 1, 1], [], []>} : vector<2x32xf32>, vector<32x128xf32>, vector<2x128xf32> -> vector<2x128xf32>
    %cst_71 = arith.constant dense<0.000000e+00> : vector<2x128xf32>
    %189 = tpu.matmul %127, %7, %cst_71 {dimension_numbers = #tpu.dot_dimension_numbers<[1], [0], [0], [1], [0, 0, 1, 1], [], []>} : vector<2x32xf32>, vector<32x128xf32>, vector<2x128xf32> -> vector<2x128xf32>
    %190 = arith.addf %188, %189 : vector<2x128xf32>
    %191 = arith.addf %190, %14 : vector<2x128xf32>
    %192 = vector.extract_strided_slice %191 {offsets = [0, 0], sizes = [2, 32], strides = [1, 1]} : vector<2x128xf32> to vector<2x32xf32>
    %193 = arith.negf %192 : vector<2x32xf32>
    %194 = math.exp %193 : vector<2x32xf32>
    %cst_72 = arith.constant 1.000000e+00 : f32
    %195 = vector.broadcast %cst_72 : f32 to vector<2x32xf32>
    %196 = arith.addf %195, %194 : vector<2x32xf32>
    %197 = arith.divf %195, %196 : vector<2x32xf32>
    %198 = vector.extract_strided_slice %191 {offsets = [0, 32], sizes = [2, 32], strides = [1, 1]} : vector<2x128xf32> to vector<2x32xf32>
    %199 = arith.negf %198 : vector<2x32xf32>
    %200 = math.exp %199 : vector<2x32xf32>
    %cst_73 = arith.constant 1.000000e+00 : f32
    %201 = vector.broadcast %cst_73 : f32 to vector<2x32xf32>
    %202 = arith.addf %201, %200 : vector<2x32xf32>
    %203 = arith.divf %201, %202 : vector<2x32xf32>
    %204 = vector.extract_strided_slice %191 {offsets = [0, 64], sizes = [2, 32], strides = [1, 1]} : vector<2x128xf32> to vector<2x32xf32>
    %205 = math.tanh %204 : vector<2x32xf32>
    %206 = vector.extract_strided_slice %191 {offsets = [0, 96], sizes = [2, 32], strides = [1, 1]} : vector<2x128xf32> to vector<2x32xf32>
    %207 = arith.negf %206 : vector<2x32xf32>
    %208 = math.exp %207 : vector<2x32xf32>
    %cst_74 = arith.constant 1.000000e+00 : f32
    %209 = vector.broadcast %cst_74 : f32 to vector<2x32xf32>
    %210 = arith.addf %209, %208 : vector<2x32xf32>
    %211 = arith.divf %209, %210 : vector<2x32xf32>
    %212 = arith.mulf %203, %129 : vector<2x32xf32>
    %213 = arith.mulf %197, %205 : vector<2x32xf32>
    %214 = arith.addf %212, %213 : vector<2x32xf32>
    %215 = math.tanh %214 : vector<2x32xf32>
    %216 = arith.mulf %211, %215 : vector<2x32xf32>
    %cst_75 = arith.constant dense<0.000000e+00> : vector<2x128xf32>
    %217 = tpu.matmul %216, %8, %cst_75 {dimension_numbers = #tpu.dot_dimension_numbers<[1], [0], [0], [1], [0, 0, 1, 1], [], []>} : vector<2x32xf32>, vector<32x128xf32>, vector<2x128xf32> -> vector<2x128xf32>
    %218 = arith.addf %217, %17 : vector<2x128xf32>
    %c2 = arith.constant 2 : index
    %c0_76 = arith.constant 0 : index
    %c0_77 = arith.constant 0 : index
    %219 = vector.load %arg13[%c2, %c0_76, %c0_77] : memref<6x2x128xf32, #tpu.memory_space<vmem>>, vector<1x2x128xf32>
    %220 = vector.shape_cast %219 : vector<1x2x128xf32> to vector<2x128xf32>
    %221 = vector.shape_cast %218 : vector<2x128xf32> to vector<1x2x128xf32>
    tpu.vector_store %arg13[%c2, %c0_76, %c0_77], %221 {strides = array<i32>} : memref<6x2x128xf32, #tpu.memory_space<vmem>>, vector<1x2x128xf32>,
    %222 = arith.addf %187, %27 : vector<2x32xf32>
    %223 = arith.addf %216, %28 : vector<2x32xf32>
    %224 = arith.addf %185, %29 : vector<2x32xf32>
    %225 = arith.addf %214, %30 : vector<2x32xf32>
    %cst_78 = arith.constant dense<0xFF800000> : vector<2xf32>
    %226 = vector.multi_reduction <maximumf>, %218, %cst_78 [1] : vector<2x128xf32> to vector<2xf32>
    %227 = vector.shape_cast %226 : vector<2xf32> to vector<2x1xf32>
    %228 = vector.broadcast %227 : vector<2x1xf32> to vector<2x128xf32>
    %229 = arith.cmpf oge, %218, %228 : vector<2x128xf32>
    %c128_i32_79 = arith.constant 128 : i32
    %230 = vector.broadcast %c128_i32_79 : i32 to vector<2x128xi32>
    %231 = arith.select %229, %36, %230 : vector<2x128xi1>, vector<2x128xi32>
    %cst_80 = arith.constant dense<2147483647> : vector<2xi32>
    %232 = vector.multi_reduction <minsi>, %231, %cst_80 [1] : vector<2x128xi32> to vector<2xi32>
    %233 = vector.shape_cast %232 : vector<2xi32> to vector<2x1xi32>
    %234 = vector.broadcast %233 : vector<2x1xi32> to vector<2x16xi32>
    %235 = arith.cmpi eq, %234, %35 : vector<2x16xi32>
    %236 = arith.extui %235 : vector<2x16xi1> to vector<2x16xi32>
    %237 = arith.sitofp %236 : vector<2x16xi32> to vector<2x16xf32>
    %cst_81 = arith.constant dense<0.000000e+00> : vector<2x16xf32>
    %238 = tpu.matmul %237, %1, %cst_81 {dimension_numbers = #tpu.dot_dimension_numbers<[1], [0], [0], [1], [0, 0, 1, 1], [], []>} : vector<2x16xf32>, vector<16x16xf32>, vector<2x16xf32> -> vector<2x16xf32>
    %239 = vector.shape_cast %223 : vector<2x32xf32> to vector<2x1x32xf32>
    "tpu.trace_start"() <{level = 10 : i32, message = "bqd,bkd->bqk"}> : () -> ()
    %cst_82 = arith.constant dense<0.000000e+00> : vector<2x1x8xf32>
    %240 = tpu.matmul %239, %0, %cst_82 {dimension_numbers = #tpu.dot_dimension_numbers<[2], [2], [1], [1], [0, 0, 0, 1, 1, 1], [0], [0]>} : vector<2x1x32xf32>, vector<2x8x32xf32>, vector<2x1x8xf32> -> vector<2x1x8xf32>
    "tpu.trace_stop"() : () -> ()
    %cst_83 = arith.constant dense<0xFF800000> : vector<2x1xf32>
    %241 = vector.multi_reduction <maximumf>, %240, %cst_83 [2] : vector<2x1x8xf32> to vector<2x1xf32>
    %242 = vector.shape_cast %241 : vector<2x1xf32> to vector<2x1x1xf32>
    %243 = vector.broadcast %242 : vector<2x1x1xf32> to vector<2x1x8xf32>
    %244 = arith.subf %240, %243 : vector<2x1x8xf32>
    %245 = math.exp %244 : vector<2x1x8xf32>
    %cst_84 = arith.constant dense<0.000000e+00> : vector<2x1xf32>
    %246 = vector.multi_reduction <add>, %245, %cst_84 [2] : vector<2x1x8xf32> to vector<2x1xf32>
    %247 = vector.shape_cast %246 : vector<2x1xf32> to vector<2x1x1xf32>
    %248 = tpu.reciprocal %247 {approx = true} : vector<2x1x1xf32> -> vector<2x1x1xf32>
    %249 = vector.broadcast %248 : vector<2x1x1xf32> to vector<2x1x8xf32>
    %250 = arith.mulf %245, %249 : vector<2x1x8xf32>
    "tpu.trace_start"() <{level = 10 : i32, message = "bqk,bkd->bqd"}> : () -> ()
    %cst_85 = arith.constant dense<0.000000e+00> : vector<2x1x32xf32>
    %251 = tpu.matmul %250, %0, %cst_85 {dimension_numbers = #tpu.dot_dimension_numbers<[2], [1], [1], [2], [0, 0, 0, 1, 1, 2], [0], [0]>} : vector<2x1x8xf32>, vector<2x8x32xf32>, vector<2x1x32xf32> -> vector<2x1x32xf32>
    "tpu.trace_stop"() : () -> ()
    %252 = vector.shape_cast %251 : vector<2x1x32xf32> to vector<2x32xf32>
    %cst_86 = arith.constant dense<0.000000e+00> : vector<2x128xf32>
    %253 = tpu.matmul %238, %3, %cst_86 {dimension_numbers = #tpu.dot_dimension_numbers<[1], [0], [0], [1], [0, 0, 1, 1], [], []>} : vector<2x16xf32>, vector<16x128xf32>, vector<2x128xf32> -> vector<2x128xf32>
    %cst_87 = arith.constant dense<0.000000e+00> : vector<2x128xf32>
    %254 = tpu.matmul %252, %4, %cst_87 {dimension_numbers = #tpu.dot_dimension_numbers<[1], [0], [0], [1], [0, 0, 1, 1], [], []>} : vector<2x32xf32>, vector<32x128xf32>, vector<2x128xf32> -> vector<2x128xf32>
    %255 = arith.addf %253, %254 : vector<2x128xf32>
    %cst_88 = arith.constant dense<0.000000e+00> : vector<2x128xf32>
    %256 = tpu.matmul %222, %5, %cst_88 {dimension_numbers = #tpu.dot_dimension_numbers<[1], [0], [0], [1], [0, 0, 1, 1], [], []>} : vector<2x32xf32>, vector<32x128xf32>, vector<2x128xf32> -> vector<2x128xf32>
    %257 = arith.addf %255, %256 : vector<2x128xf32>
    %258 = arith.addf %257, %11 : vector<2x128xf32>
    %259 = vector.extract_strided_slice %258 {offsets = [0, 0], sizes = [2, 32], strides = [1, 1]} : vector<2x128xf32> to vector<2x32xf32>
    %260 = arith.negf %259 : vector<2x32xf32>
    %261 = math.exp %260 : vector<2x32xf32>
    %cst_89 = arith.constant 1.000000e+00 : f32
    %262 = vector.broadcast %cst_89 : f32 to vector<2x32xf32>
    %263 = arith.addf %262, %261 : vector<2x32xf32>
    %264 = arith.divf %262, %263 : vector<2x32xf32>
    %265 = vector.extract_strided_slice %258 {offsets = [0, 32], sizes = [2, 32], strides = [1, 1]} : vector<2x128xf32> to vector<2x32xf32>
    %266 = arith.negf %265 : vector<2x32xf32>
    %267 = math.exp %266 : vector<2x32xf32>
    %cst_90 = arith.constant 1.000000e+00 : f32
    %268 = vector.broadcast %cst_90 : f32 to vector<2x32xf32>
    %269 = arith.addf %268, %267 : vector<2x32xf32>
    %270 = arith.divf %268, %269 : vector<2x32xf32>
    %271 = vector.extract_strided_slice %258 {offsets = [0, 64], sizes = [2, 32], strides = [1, 1]} : vector<2x128xf32> to vector<2x32xf32>
    %272 = math.tanh %271 : vector<2x32xf32>
    %273 = vector.extract_strided_slice %258 {offsets = [0, 96], sizes = [2, 32], strides = [1, 1]} : vector<2x128xf32> to vector<2x32xf32>
    %274 = arith.negf %273 : vector<2x32xf32>
    %275 = math.exp %274 : vector<2x32xf32>
    %cst_91 = arith.constant 1.000000e+00 : f32
    %276 = vector.broadcast %cst_91 : f32 to vector<2x32xf32>
    %277 = arith.addf %276, %275 : vector<2x32xf32>
    %278 = arith.divf %276, %277 : vector<2x32xf32>
    %279 = arith.mulf %270, %224 : vector<2x32xf32>
    %280 = arith.mulf %264, %272 : vector<2x32xf32>
    %281 = arith.addf %279, %280 : vector<2x32xf32>
    %282 = math.tanh %281 : vector<2x32xf32>
    %283 = arith.mulf %278, %282 : vector<2x32xf32>
    %cst_92 = arith.constant dense<0.000000e+00> : vector<2x128xf32>
    %284 = tpu.matmul %283, %6, %cst_92 {dimension_numbers = #tpu.dot_dimension_numbers<[1], [0], [0], [1], [0, 0, 1, 1], [], []>} : vector<2x32xf32>, vector<32x128xf32>, vector<2x128xf32> -> vector<2x128xf32>
    %cst_93 = arith.constant dense<0.000000e+00> : vector<2x128xf32>
    %285 = tpu.matmul %223, %7, %cst_93 {dimension_numbers = #tpu.dot_dimension_numbers<[1], [0], [0], [1], [0, 0, 1, 1], [], []>} : vector<2x32xf32>, vector<32x128xf32>, vector<2x128xf32> -> vector<2x128xf32>
    %286 = arith.addf %284, %285 : vector<2x128xf32>
    %287 = arith.addf %286, %14 : vector<2x128xf32>
    %288 = vector.extract_strided_slice %287 {offsets = [0, 0], sizes = [2, 32], strides = [1, 1]} : vector<2x128xf32> to vector<2x32xf32>
    %289 = arith.negf %288 : vector<2x32xf32>
    %290 = math.exp %289 : vector<2x32xf32>
    %cst_94 = arith.constant 1.000000e+00 : f32
    %291 = vector.broadcast %cst_94 : f32 to vector<2x32xf32>
    %292 = arith.addf %291, %290 : vector<2x32xf32>
    %293 = arith.divf %291, %292 : vector<2x32xf32>
    %294 = vector.extract_strided_slice %287 {offsets = [0, 32], sizes = [2, 32], strides = [1, 1]} : vector<2x128xf32> to vector<2x32xf32>
    %295 = arith.negf %294 : vector<2x32xf32>
    %296 = math.exp %295 : vector<2x32xf32>
    %cst_95 = arith.constant 1.000000e+00 : f32
    %297 = vector.broadcast %cst_95 : f32 to vector<2x32xf32>
    %298 = arith.addf %297, %296 : vector<2x32xf32>
    %299 = arith.divf %297, %298 : vector<2x32xf32>
    %300 = vector.extract_strided_slice %287 {offsets = [0, 64], sizes = [2, 32], strides = [1, 1]} : vector<2x128xf32> to vector<2x32xf32>
    %301 = math.tanh %300 : vector<2x32xf32>
    %302 = vector.extract_strided_slice %287 {offsets = [0, 96], sizes = [2, 32], strides = [1, 1]} : vector<2x128xf32> to vector<2x32xf32>
    %303 = arith.negf %302 : vector<2x32xf32>
    %304 = math.exp %303 : vector<2x32xf32>
    %cst_96 = arith.constant 1.000000e+00 : f32
    %305 = vector.broadcast %cst_96 : f32 to vector<2x32xf32>
    %306 = arith.addf %305, %304 : vector<2x32xf32>
    %307 = arith.divf %305, %306 : vector<2x32xf32>
    %308 = arith.mulf %299, %225 : vector<2x32xf32>
    %309 = arith.mulf %293, %301 : vector<2x32xf32>
    %310 = arith.addf %308, %309 : vector<2x32xf32>
    %311 = math.tanh %310 : vector<2x32xf32>
    %312 = arith.mulf %307, %311 : vector<2x32xf32>
    %cst_97 = arith.constant dense<0.000000e+00> : vector<2x128xf32>
    %313 = tpu.matmul %312, %8, %cst_97 {dimension_numbers = #tpu.dot_dimension_numbers<[1], [0], [0], [1], [0, 0, 1, 1], [], []>} : vector<2x32xf32>, vector<32x128xf32>, vector<2x128xf32> -> vector<2x128xf32>
    %314 = arith.addf %313, %17 : vector<2x128xf32>
    %c3 = arith.constant 3 : index
    %c0_98 = arith.constant 0 : index
    %c0_99 = arith.constant 0 : index
    %315 = vector.load %arg13[%c3, %c0_98, %c0_99] : memref<6x2x128xf32, #tpu.memory_space<vmem>>, vector<1x2x128xf32>
    %316 = vector.shape_cast %315 : vector<1x2x128xf32> to vector<2x128xf32>
    %317 = vector.shape_cast %314 : vector<2x128xf32> to vector<1x2x128xf32>
    tpu.vector_store %arg13[%c3, %c0_98, %c0_99], %317 {strides = array<i32>} : memref<6x2x128xf32, #tpu.memory_space<vmem>>, vector<1x2x128xf32>,
    %318 = arith.addf %283, %27 : vector<2x32xf32>
    %319 = arith.addf %312, %28 : vector<2x32xf32>
    %320 = arith.addf %281, %29 : vector<2x32xf32>
    %321 = arith.addf %310, %30 : vector<2x32xf32>
    %cst_100 = arith.constant dense<0xFF800000> : vector<2xf32>
    %322 = vector.multi_reduction <maximumf>, %314, %cst_100 [1] : vector<2x128xf32> to vector<2xf32>
    %323 = vector.shape_cast %322 : vector<2xf32> to vector<2x1xf32>
    %324 = vector.broadcast %323 : vector<2x1xf32> to vector<2x128xf32>
    %325 = arith.cmpf oge, %314, %324 : vector<2x128xf32>
    %c128_i32_101 = arith.constant 128 : i32
    %326 = vector.broadcast %c128_i32_101 : i32 to vector<2x128xi32>
    %327 = arith.select %325, %36, %326 : vector<2x128xi1>, vector<2x128xi32>
    %cst_102 = arith.constant dense<2147483647> : vector<2xi32>
    %328 = vector.multi_reduction <minsi>, %327, %cst_102 [1] : vector<2x128xi32> to vector<2xi32>
    %329 = vector.shape_cast %328 : vector<2xi32> to vector<2x1xi32>
    %330 = vector.broadcast %329 : vector<2x1xi32> to vector<2x16xi32>
    %331 = arith.cmpi eq, %330, %35 : vector<2x16xi32>
    %332 = arith.extui %331 : vector<2x16xi1> to vector<2x16xi32>
    %333 = arith.sitofp %332 : vector<2x16xi32> to vector<2x16xf32>
    %cst_103 = arith.constant dense<0.000000e+00> : vector<2x16xf32>
    %334 = tpu.matmul %333, %1, %cst_103 {dimension_numbers = #tpu.dot_dimension_numbers<[1], [0], [0], [1], [0, 0, 1, 1], [], []>} : vector<2x16xf32>, vector<16x16xf32>, vector<2x16xf32> -> vector<2x16xf32>
    %335 = vector.shape_cast %319 : vector<2x32xf32> to vector<2x1x32xf32>
    "tpu.trace_start"() <{level = 10 : i32, message = "bqd,bkd->bqk"}> : () -> ()
    %cst_104 = arith.constant dense<0.000000e+00> : vector<2x1x8xf32>
    %336 = tpu.matmul %335, %0, %cst_104 {dimension_numbers = #tpu.dot_dimension_numbers<[2], [2], [1], [1], [0, 0, 0, 1, 1, 1], [0], [0]>} : vector<2x1x32xf32>, vector<2x8x32xf32>, vector<2x1x8xf32> -> vector<2x1x8xf32>
    "tpu.trace_stop"() : () -> ()
    %cst_105 = arith.constant dense<0xFF800000> : vector<2x1xf32>
    %337 = vector.multi_reduction <maximumf>, %336, %cst_105 [2] : vector<2x1x8xf32> to vector<2x1xf32>
    %338 = vector.shape_cast %337 : vector<2x1xf32> to vector<2x1x1xf32>
    %339 = vector.broadcast %338 : vector<2x1x1xf32> to vector<2x1x8xf32>
    %340 = arith.subf %336, %339 : vector<2x1x8xf32>
    %341 = math.exp %340 : vector<2x1x8xf32>
    %cst_106 = arith.constant dense<0.000000e+00> : vector<2x1xf32>
    %342 = vector.multi_reduction <add>, %341, %cst_106 [2] : vector<2x1x8xf32> to vector<2x1xf32>
    %343 = vector.shape_cast %342 : vector<2x1xf32> to vector<2x1x1xf32>
    %344 = tpu.reciprocal %343 {approx = true} : vector<2x1x1xf32> -> vector<2x1x1xf32>
    %345 = vector.broadcast %344 : vector<2x1x1xf32> to vector<2x1x8xf32>
    %346 = arith.mulf %341, %345 : vector<2x1x8xf32>
    "tpu.trace_start"() <{level = 10 : i32, message = "bqk,bkd->bqd"}> : () -> ()
    %cst_107 = arith.constant dense<0.000000e+00> : vector<2x1x32xf32>
    %347 = tpu.matmul %346, %0, %cst_107 {dimension_numbers = #tpu.dot_dimension_numbers<[2], [1], [1], [2], [0, 0, 0, 1, 1, 2], [0], [0]>} : vector<2x1x8xf32>, vector<2x8x32xf32>, vector<2x1x32xf32> -> vector<2x1x32xf32>
    "tpu.trace_stop"() : () -> ()
    %348 = vector.shape_cast %347 : vector<2x1x32xf32> to vector<2x32xf32>
    %cst_108 = arith.constant dense<0.000000e+00> : vector<2x128xf32>
    %349 = tpu.matmul %334, %3, %cst_108 {dimension_numbers = #tpu.dot_dimension_numbers<[1], [0], [0], [1], [0, 0, 1, 1], [], []>} : vector<2x16xf32>, vector<16x128xf32>, vector<2x128xf32> -> vector<2x128xf32>
    %cst_109 = arith.constant dense<0.000000e+00> : vector<2x128xf32>
    %350 = tpu.matmul %348, %4, %cst_109 {dimension_numbers = #tpu.dot_dimension_numbers<[1], [0], [0], [1], [0, 0, 1, 1], [], []>} : vector<2x32xf32>, vector<32x128xf32>, vector<2x128xf32> -> vector<2x128xf32>
    %351 = arith.addf %349, %350 : vector<2x128xf32>
    %cst_110 = arith.constant dense<0.000000e+00> : vector<2x128xf32>
    %352 = tpu.matmul %318, %5, %cst_110 {dimension_numbers = #tpu.dot_dimension_numbers<[1], [0], [0], [1], [0, 0, 1, 1], [], []>} : vector<2x32xf32>, vector<32x128xf32>, vector<2x128xf32> -> vector<2x128xf32>
    %353 = arith.addf %351, %352 : vector<2x128xf32>
    %354 = arith.addf %353, %11 : vector<2x128xf32>
    %355 = vector.extract_strided_slice %354 {offsets = [0, 0], sizes = [2, 32], strides = [1, 1]} : vector<2x128xf32> to vector<2x32xf32>
    %356 = arith.negf %355 : vector<2x32xf32>
    %357 = math.exp %356 : vector<2x32xf32>
    %cst_111 = arith.constant 1.000000e+00 : f32
    %358 = vector.broadcast %cst_111 : f32 to vector<2x32xf32>
    %359 = arith.addf %358, %357 : vector<2x32xf32>
    %360 = arith.divf %358, %359 : vector<2x32xf32>
    %361 = vector.extract_strided_slice %354 {offsets = [0, 32], sizes = [2, 32], strides = [1, 1]} : vector<2x128xf32> to vector<2x32xf32>
    %362 = arith.negf %361 : vector<2x32xf32>
    %363 = math.exp %362 : vector<2x32xf32>
    %cst_112 = arith.constant 1.000000e+00 : f32
    %364 = vector.broadcast %cst_112 : f32 to vector<2x32xf32>
    %365 = arith.addf %364, %363 : vector<2x32xf32>
    %366 = arith.divf %364, %365 : vector<2x32xf32>
    %367 = vector.extract_strided_slice %354 {offsets = [0, 64], sizes = [2, 32], strides = [1, 1]} : vector<2x128xf32> to vector<2x32xf32>
    %368 = math.tanh %367 : vector<2x32xf32>
    %369 = vector.extract_strided_slice %354 {offsets = [0, 96], sizes = [2, 32], strides = [1, 1]} : vector<2x128xf32> to vector<2x32xf32>
    %370 = arith.negf %369 : vector<2x32xf32>
    %371 = math.exp %370 : vector<2x32xf32>
    %cst_113 = arith.constant 1.000000e+00 : f32
    %372 = vector.broadcast %cst_113 : f32 to vector<2x32xf32>
    %373 = arith.addf %372, %371 : vector<2x32xf32>
    %374 = arith.divf %372, %373 : vector<2x32xf32>
    %375 = arith.mulf %366, %320 : vector<2x32xf32>
    %376 = arith.mulf %360, %368 : vector<2x32xf32>
    %377 = arith.addf %375, %376 : vector<2x32xf32>
    %378 = math.tanh %377 : vector<2x32xf32>
    %379 = arith.mulf %374, %378 : vector<2x32xf32>
    %cst_114 = arith.constant dense<0.000000e+00> : vector<2x128xf32>
    %380 = tpu.matmul %379, %6, %cst_114 {dimension_numbers = #tpu.dot_dimension_numbers<[1], [0], [0], [1], [0, 0, 1, 1], [], []>} : vector<2x32xf32>, vector<32x128xf32>, vector<2x128xf32> -> vector<2x128xf32>
    %cst_115 = arith.constant dense<0.000000e+00> : vector<2x128xf32>
    %381 = tpu.matmul %319, %7, %cst_115 {dimension_numbers = #tpu.dot_dimension_numbers<[1], [0], [0], [1], [0, 0, 1, 1], [], []>} : vector<2x32xf32>, vector<32x128xf32>, vector<2x128xf32> -> vector<2x128xf32>
    %382 = arith.addf %380, %381 : vector<2x128xf32>
    %383 = arith.addf %382, %14 : vector<2x128xf32>
    %384 = vector.extract_strided_slice %383 {offsets = [0, 0], sizes = [2, 32], strides = [1, 1]} : vector<2x128xf32> to vector<2x32xf32>
    %385 = arith.negf %384 : vector<2x32xf32>
    %386 = math.exp %385 : vector<2x32xf32>
    %cst_116 = arith.constant 1.000000e+00 : f32
    %387 = vector.broadcast %cst_116 : f32 to vector<2x32xf32>
    %388 = arith.addf %387, %386 : vector<2x32xf32>
    %389 = arith.divf %387, %388 : vector<2x32xf32>
    %390 = vector.extract_strided_slice %383 {offsets = [0, 32], sizes = [2, 32], strides = [1, 1]} : vector<2x128xf32> to vector<2x32xf32>
    %391 = arith.negf %390 : vector<2x32xf32>
    %392 = math.exp %391 : vector<2x32xf32>
    %cst_117 = arith.constant 1.000000e+00 : f32
    %393 = vector.broadcast %cst_117 : f32 to vector<2x32xf32>
    %394 = arith.addf %393, %392 : vector<2x32xf32>
    %395 = arith.divf %393, %394 : vector<2x32xf32>
    %396 = vector.extract_strided_slice %383 {offsets = [0, 64], sizes = [2, 32], strides = [1, 1]} : vector<2x128xf32> to vector<2x32xf32>
    %397 = math.tanh %396 : vector<2x32xf32>
    %398 = vector.extract_strided_slice %383 {offsets = [0, 96], sizes = [2, 32], strides = [1, 1]} : vector<2x128xf32> to vector<2x32xf32>
    %399 = arith.negf %398 : vector<2x32xf32>
    %400 = math.exp %399 : vector<2x32xf32>
    %cst_118 = arith.constant 1.000000e+00 : f32
    %401 = vector.broadcast %cst_118 : f32 to vector<2x32xf32>
    %402 = arith.addf %401, %400 : vector<2x32xf32>
    %403 = arith.divf %401, %402 : vector<2x32xf32>
    %404 = arith.mulf %395, %321 : vector<2x32xf32>
    %405 = arith.mulf %389, %397 : vector<2x32xf32>
    %406 = arith.addf %404, %405 : vector<2x32xf32>
    %407 = math.tanh %406 : vector<2x32xf32>
    %408 = arith.mulf %403, %407 : vector<2x32xf32>
    %cst_119 = arith.constant dense<0.000000e+00> : vector<2x128xf32>
    %409 = tpu.matmul %408, %8, %cst_119 {dimension_numbers = #tpu.dot_dimension_numbers<[1], [0], [0], [1], [0, 0, 1, 1], [], []>} : vector<2x32xf32>, vector<32x128xf32>, vector<2x128xf32> -> vector<2x128xf32>
    %410 = arith.addf %409, %17 : vector<2x128xf32>
    %c4 = arith.constant 4 : index
    %c0_120 = arith.constant 0 : index
    %c0_121 = arith.constant 0 : index
    %411 = vector.load %arg13[%c4, %c0_120, %c0_121] : memref<6x2x128xf32, #tpu.memory_space<vmem>>, vector<1x2x128xf32>
    %412 = vector.shape_cast %411 : vector<1x2x128xf32> to vector<2x128xf32>
    %413 = vector.shape_cast %410 : vector<2x128xf32> to vector<1x2x128xf32>
    tpu.vector_store %arg13[%c4, %c0_120, %c0_121], %413 {strides = array<i32>} : memref<6x2x128xf32, #tpu.memory_space<vmem>>, vector<1x2x128xf32>,
    %414 = arith.addf %379, %27 : vector<2x32xf32>
    %415 = arith.addf %408, %28 : vector<2x32xf32>
    %416 = arith.addf %377, %29 : vector<2x32xf32>
    %417 = arith.addf %406, %30 : vector<2x32xf32>
    %cst_122 = arith.constant dense<0xFF800000> : vector<2xf32>
    %418 = vector.multi_reduction <maximumf>, %410, %cst_122 [1] : vector<2x128xf32> to vector<2xf32>
    %419 = vector.shape_cast %418 : vector<2xf32> to vector<2x1xf32>
    %420 = vector.broadcast %419 : vector<2x1xf32> to vector<2x128xf32>
    %421 = arith.cmpf oge, %410, %420 : vector<2x128xf32>
    %c128_i32_123 = arith.constant 128 : i32
    %422 = vector.broadcast %c128_i32_123 : i32 to vector<2x128xi32>
    %423 = arith.select %421, %36, %422 : vector<2x128xi1>, vector<2x128xi32>
    %cst_124 = arith.constant dense<2147483647> : vector<2xi32>
    %424 = vector.multi_reduction <minsi>, %423, %cst_124 [1] : vector<2x128xi32> to vector<2xi32>
    %425 = vector.shape_cast %424 : vector<2xi32> to vector<2x1xi32>
    %426 = vector.broadcast %425 : vector<2x1xi32> to vector<2x16xi32>
    %427 = arith.cmpi eq, %426, %35 : vector<2x16xi32>
    %428 = arith.extui %427 : vector<2x16xi1> to vector<2x16xi32>
    %429 = arith.sitofp %428 : vector<2x16xi32> to vector<2x16xf32>
    %cst_125 = arith.constant dense<0.000000e+00> : vector<2x16xf32>
    %430 = tpu.matmul %429, %1, %cst_125 {dimension_numbers = #tpu.dot_dimension_numbers<[1], [0], [0], [1], [0, 0, 1, 1], [], []>} : vector<2x16xf32>, vector<16x16xf32>, vector<2x16xf32> -> vector<2x16xf32>
    %431 = vector.shape_cast %415 : vector<2x32xf32> to vector<2x1x32xf32>
    "tpu.trace_start"() <{level = 10 : i32, message = "bqd,bkd->bqk"}> : () -> ()
    %cst_126 = arith.constant dense<0.000000e+00> : vector<2x1x8xf32>
    %432 = tpu.matmul %431, %0, %cst_126 {dimension_numbers = #tpu.dot_dimension_numbers<[2], [2], [1], [1], [0, 0, 0, 1, 1, 1], [0], [0]>} : vector<2x1x32xf32>, vector<2x8x32xf32>, vector<2x1x8xf32> -> vector<2x1x8xf32>
    "tpu.trace_stop"() : () -> ()
    %cst_127 = arith.constant dense<0xFF800000> : vector<2x1xf32>
    %433 = vector.multi_reduction <maximumf>, %432, %cst_127 [2] : vector<2x1x8xf32> to vector<2x1xf32>
    %434 = vector.shape_cast %433 : vector<2x1xf32> to vector<2x1x1xf32>
    %435 = vector.broadcast %434 : vector<2x1x1xf32> to vector<2x1x8xf32>
    %436 = arith.subf %432, %435 : vector<2x1x8xf32>
    %437 = math.exp %436 : vector<2x1x8xf32>
    %cst_128 = arith.constant dense<0.000000e+00> : vector<2x1xf32>
    %438 = vector.multi_reduction <add>, %437, %cst_128 [2] : vector<2x1x8xf32> to vector<2x1xf32>
    %439 = vector.shape_cast %438 : vector<2x1xf32> to vector<2x1x1xf32>
    %440 = tpu.reciprocal %439 {approx = true} : vector<2x1x1xf32> -> vector<2x1x1xf32>
    %441 = vector.broadcast %440 : vector<2x1x1xf32> to vector<2x1x8xf32>
    %442 = arith.mulf %437, %441 : vector<2x1x8xf32>
    "tpu.trace_start"() <{level = 10 : i32, message = "bqk,bkd->bqd"}> : () -> ()
    %cst_129 = arith.constant dense<0.000000e+00> : vector<2x1x32xf32>
    %443 = tpu.matmul %442, %0, %cst_129 {dimension_numbers = #tpu.dot_dimension_numbers<[2], [1], [1], [2], [0, 0, 0, 1, 1, 2], [0], [0]>} : vector<2x1x8xf32>, vector<2x8x32xf32>, vector<2x1x32xf32> -> vector<2x1x32xf32>
    "tpu.trace_stop"() : () -> ()
    %444 = vector.shape_cast %443 : vector<2x1x32xf32> to vector<2x32xf32>
    %cst_130 = arith.constant dense<0.000000e+00> : vector<2x128xf32>
    %445 = tpu.matmul %430, %3, %cst_130 {dimension_numbers = #tpu.dot_dimension_numbers<[1], [0], [0], [1], [0, 0, 1, 1], [], []>} : vector<2x16xf32>, vector<16x128xf32>, vector<2x128xf32> -> vector<2x128xf32>
    %cst_131 = arith.constant dense<0.000000e+00> : vector<2x128xf32>
    %446 = tpu.matmul %444, %4, %cst_131 {dimension_numbers = #tpu.dot_dimension_numbers<[1], [0], [0], [1], [0, 0, 1, 1], [], []>} : vector<2x32xf32>, vector<32x128xf32>, vector<2x128xf32> -> vector<2x128xf32>
    %447 = arith.addf %445, %446 : vector<2x128xf32>
    %cst_132 = arith.constant dense<0.000000e+00> : vector<2x128xf32>
    %448 = tpu.matmul %414, %5, %cst_132 {dimension_numbers = #tpu.dot_dimension_numbers<[1], [0], [0], [1], [0, 0, 1, 1], [], []>} : vector<2x32xf32>, vector<32x128xf32>, vector<2x128xf32> -> vector<2x128xf32>
    %449 = arith.addf %447, %448 : vector<2x128xf32>
    %450 = arith.addf %449, %11 : vector<2x128xf32>
    %451 = vector.extract_strided_slice %450 {offsets = [0, 0], sizes = [2, 32], strides = [1, 1]} : vector<2x128xf32> to vector<2x32xf32>
    %452 = arith.negf %451 : vector<2x32xf32>
    %453 = math.exp %452 : vector<2x32xf32>
    %cst_133 = arith.constant 1.000000e+00 : f32
    %454 = vector.broadcast %cst_133 : f32 to vector<2x32xf32>
    %455 = arith.addf %454, %453 : vector<2x32xf32>
    %456 = arith.divf %454, %455 : vector<2x32xf32>
    %457 = vector.extract_strided_slice %450 {offsets = [0, 32], sizes = [2, 32], strides = [1, 1]} : vector<2x128xf32> to vector<2x32xf32>
    %458 = arith.negf %457 : vector<2x32xf32>
    %459 = math.exp %458 : vector<2x32xf32>
    %cst_134 = arith.constant 1.000000e+00 : f32
    %460 = vector.broadcast %cst_134 : f32 to vector<2x32xf32>
    %461 = arith.addf %460, %459 : vector<2x32xf32>
    %462 = arith.divf %460, %461 : vector<2x32xf32>
    %463 = vector.extract_strided_slice %450 {offsets = [0, 64], sizes = [2, 32], strides = [1, 1]} : vector<2x128xf32> to vector<2x32xf32>
    %464 = math.tanh %463 : vector<2x32xf32>
    %465 = vector.extract_strided_slice %450 {offsets = [0, 96], sizes = [2, 32], strides = [1, 1]} : vector<2x128xf32> to vector<2x32xf32>
    %466 = arith.negf %465 : vector<2x32xf32>
    %467 = math.exp %466 : vector<2x32xf32>
    %cst_135 = arith.constant 1.000000e+00 : f32
    %468 = vector.broadcast %cst_135 : f32 to vector<2x32xf32>
    %469 = arith.addf %468, %467 : vector<2x32xf32>
    %470 = arith.divf %468, %469 : vector<2x32xf32>
    %471 = arith.mulf %462, %416 : vector<2x32xf32>
    %472 = arith.mulf %456, %464 : vector<2x32xf32>
    %473 = arith.addf %471, %472 : vector<2x32xf32>
    %474 = math.tanh %473 : vector<2x32xf32>
    %475 = arith.mulf %470, %474 : vector<2x32xf32>
    %cst_136 = arith.constant dense<0.000000e+00> : vector<2x128xf32>
    %476 = tpu.matmul %475, %6, %cst_136 {dimension_numbers = #tpu.dot_dimension_numbers<[1], [0], [0], [1], [0, 0, 1, 1], [], []>} : vector<2x32xf32>, vector<32x128xf32>, vector<2x128xf32> -> vector<2x128xf32>
    %cst_137 = arith.constant dense<0.000000e+00> : vector<2x128xf32>
    %477 = tpu.matmul %415, %7, %cst_137 {dimension_numbers = #tpu.dot_dimension_numbers<[1], [0], [0], [1], [0, 0, 1, 1], [], []>} : vector<2x32xf32>, vector<32x128xf32>, vector<2x128xf32> -> vector<2x128xf32>
    %478 = arith.addf %476, %477 : vector<2x128xf32>
    %479 = arith.addf %478, %14 : vector<2x128xf32>
    %480 = vector.extract_strided_slice %479 {offsets = [0, 0], sizes = [2, 32], strides = [1, 1]} : vector<2x128xf32> to vector<2x32xf32>
    %481 = arith.negf %480 : vector<2x32xf32>
    %482 = math.exp %481 : vector<2x32xf32>
    %cst_138 = arith.constant 1.000000e+00 : f32
    %483 = vector.broadcast %cst_138 : f32 to vector<2x32xf32>
    %484 = arith.addf %483, %482 : vector<2x32xf32>
    %485 = arith.divf %483, %484 : vector<2x32xf32>
    %486 = vector.extract_strided_slice %479 {offsets = [0, 32], sizes = [2, 32], strides = [1, 1]} : vector<2x128xf32> to vector<2x32xf32>
    %487 = arith.negf %486 : vector<2x32xf32>
    %488 = math.exp %487 : vector<2x32xf32>
    %cst_139 = arith.constant 1.000000e+00 : f32
    %489 = vector.broadcast %cst_139 : f32 to vector<2x32xf32>
    %490 = arith.addf %489, %488 : vector<2x32xf32>
    %491 = arith.divf %489, %490 : vector<2x32xf32>
    %492 = vector.extract_strided_slice %479 {offsets = [0, 64], sizes = [2, 32], strides = [1, 1]} : vector<2x128xf32> to vector<2x32xf32>
    %493 = math.tanh %492 : vector<2x32xf32>
    %494 = vector.extract_strided_slice %479 {offsets = [0, 96], sizes = [2, 32], strides = [1, 1]} : vector<2x128xf32> to vector<2x32xf32>
    %495 = arith.negf %494 : vector<2x32xf32>
    %496 = math.exp %495 : vector<2x32xf32>
    %cst_140 = arith.constant 1.000000e+00 : f32
    %497 = vector.broadcast %cst_140 : f32 to vector<2x32xf32>
    %498 = arith.addf %497, %496 : vector<2x32xf32>
    %499 = arith.divf %497, %498 : vector<2x32xf32>
    %500 = arith.mulf %491, %417 : vector<2x32xf32>
    %501 = arith.mulf %485, %493 : vector<2x32xf32>
    %502 = arith.addf %500, %501 : vector<2x32xf32>
    %503 = math.tanh %502 : vector<2x32xf32>
    %504 = arith.mulf %499, %503 : vector<2x32xf32>
    %cst_141 = arith.constant dense<0.000000e+00> : vector<2x128xf32>
    %505 = tpu.matmul %504, %8, %cst_141 {dimension_numbers = #tpu.dot_dimension_numbers<[1], [0], [0], [1], [0, 0, 1, 1], [], []>} : vector<2x32xf32>, vector<32x128xf32>, vector<2x128xf32> -> vector<2x128xf32>
    %506 = arith.addf %505, %17 : vector<2x128xf32>
    %c5 = arith.constant 5 : index
    %c0_142 = arith.constant 0 : index
    %c0_143 = arith.constant 0 : index
    %507 = vector.load %arg13[%c5, %c0_142, %c0_143] : memref<6x2x128xf32, #tpu.memory_space<vmem>>, vector<1x2x128xf32>
    %508 = vector.shape_cast %507 : vector<1x2x128xf32> to vector<2x128xf32>
    %509 = vector.shape_cast %506 : vector<2x128xf32> to vector<1x2x128xf32>
    tpu.vector_store %arg13[%c5, %c0_142, %c0_143], %509 {strides = array<i32>} : memref<6x2x128xf32, #tpu.memory_space<vmem>>, vector<1x2x128xf32>,
    return
  }
}

module attributes {stable_mosaic.version = 11 : i64} {
  func.func @_encoder_kernel(%arg0: memref<2x8x16xf32, #tpu.memory_space<vmem>>, %arg1: memref<16x128xf32, #tpu.memory_space<vmem>>, %arg2: memref<32x128xf32, #tpu.memory_space<vmem>>, %arg3: memref<1x128xf32, #tpu.memory_space<vmem>>, %arg4: memref<32x128xf32, #tpu.memory_space<vmem>>, %arg5: memref<32x128xf32, #tpu.memory_space<vmem>>, %arg6: memref<1x128xf32, #tpu.memory_space<vmem>>, %arg7: memref<2x32x16xf32, #tpu.memory_space<vmem>>, %arg8: memref<2x1x16xf32, #tpu.memory_space<vmem>>, %arg9: memref<2x32x16xf32, #tpu.memory_space<vmem>>, %arg10: memref<2x1x16xf32, #tpu.memory_space<vmem>>, %arg11: memref<2x8x32xf32, #tpu.memory_space<vmem>>, %arg12: memref<2x2x16xf32, #tpu.memory_space<vmem>>, %arg13: memref<2x2x16xf32, #tpu.memory_space<vmem>>, %arg14: memref<2x8x32xf32, #tpu.memory_space<vmem>>) attributes {dimension_semantics = [], scalar_prefetch = 0 : i64, scratch_operands = 1 : i64, tpu.core_type = #tpu.core_type<tc>} {
    %0 = tpu.iota {dimensions = array<i32: 1>} : vector<1x128xi32>
    %c16_i32 = arith.constant 16 : i32
    %1 = vector.broadcast %c16_i32 : i32 to vector<1x128xi32>
    %2 = arith.andi %0, %1 : vector<1x128xi32>
    %c0_i32 = arith.constant 0 : i32
    %3 = vector.broadcast %c0_i32 : i32 to vector<1x128xi32>
    %4 = arith.cmpi eq, %2, %3 : vector<1x128xi32>
    %c0 = arith.constant 0 : index
    %c0_0 = arith.constant 0 : index
    %c0_1 = arith.constant 0 : index
    %5 = vector.load %arg0[%c0, %c0_0, %c0_1] : memref<2x8x16xf32, #tpu.memory_space<vmem>>, vector<2x8x16xf32>
    %6 = vector.shape_cast %5 : vector<2x8x16xf32> to vector<16x16xf32>
    %c0_2 = arith.constant 0 : index
    %c0_3 = arith.constant 0 : index
    %7 = vector.load %arg1[%c0_2, %c0_3] : memref<16x128xf32, #tpu.memory_space<vmem>>, vector<16x128xf32>
    %cst = arith.constant dense<0.000000e+00> : vector<16x128xf32>
    %8 = tpu.matmul %6, %7, %cst {dimension_numbers = #tpu.dot_dimension_numbers<[1], [0], [0], [1], [0, 0, 1, 1], [], []>} : vector<16x16xf32>, vector<16x128xf32>, vector<16x128xf32> -> vector<16x128xf32>
    %c0_4 = arith.constant 0 : index
    %c0_5 = arith.constant 0 : index
    %9 = vector.load %arg3[%c0_4, %c0_5] : memref<1x128xf32, #tpu.memory_space<vmem>>, vector<1x128xf32>
    %10 = vector.broadcast %9 : vector<1x128xf32> to vector<16x128xf32>
    %11 = arith.addf %8, %10 : vector<16x128xf32>
    %12 = vector.shape_cast %11 : vector<16x128xf32> to vector<2x8x128xf32>
    %c0_6 = arith.constant 0 : index
    %c0_7 = arith.constant 0 : index
    %13 = vector.load %arg2[%c0_6, %c0_7] : memref<32x128xf32, #tpu.memory_space<vmem>>, vector<32x128xf32>
    %cst_8 = arith.constant 0.000000e+00 : f32
    %14 = vector.broadcast %cst_8 : f32 to vector<2x32xf32>
    %cst_9 = arith.constant 0.000000e+00 : f32
    %15 = vector.broadcast %cst_9 : f32 to vector<2x32xf32>
    %16 = vector.extract_strided_slice %12 {offsets = [0, 0, 0], sizes = [2, 1, 128], strides = [1, 1, 1]} : vector<2x8x128xf32> to vector<2x1x128xf32>
    %17 = vector.shape_cast %16 : vector<2x1x128xf32> to vector<2x128xf32>
    %18 = vector.extract_strided_slice %12 {offsets = [0, 7, 0], sizes = [2, 1, 128], strides = [1, 1, 1]} : vector<2x8x128xf32> to vector<2x1x128xf32>
    %19 = vector.shape_cast %18 : vector<2x1x128xf32> to vector<2x128xf32>
    %20 = vector.shape_cast %4 : vector<1x128xi1> to vector<1x128xi1>
    %21 = vector.broadcast %20 : vector<1x128xi1> to vector<2x128xi1>
    %22 = arith.select %21, %17, %19 : vector<2x128xi1>, vector<2x128xf32>
    %cst_10 = arith.constant dense<0.000000e+00> : vector<2x128xf32>
    %23 = tpu.matmul %14, %13, %cst_10 {dimension_numbers = #tpu.dot_dimension_numbers<[1], [0], [0], [1], [0, 0, 1, 1], [], []>} : vector<2x32xf32>, vector<32x128xf32>, vector<2x128xf32> -> vector<2x128xf32>
    %24 = arith.addf %22, %23 : vector<2x128xf32>
    %25 = vector.extract_strided_slice %24 {offsets = [0, 0], sizes = [2, 32], strides = [1, 1]} : vector<2x128xf32> to vector<2x32xf32>
    %26 = arith.negf %25 : vector<2x32xf32>
    %27 = math.exp %26 : vector<2x32xf32>
    %cst_11 = arith.constant 1.000000e+00 : f32
    %28 = vector.broadcast %cst_11 : f32 to vector<2x32xf32>
    %29 = arith.addf %28, %27 : vector<2x32xf32>
    %30 = arith.divf %28, %29 : vector<2x32xf32>
    %31 = vector.extract_strided_slice %24 {offsets = [0, 32], sizes = [2, 32], strides = [1, 1]} : vector<2x128xf32> to vector<2x32xf32>
    %32 = arith.negf %31 : vector<2x32xf32>
    %33 = math.exp %32 : vector<2x32xf32>
    %cst_12 = arith.constant 1.000000e+00 : f32
    %34 = vector.broadcast %cst_12 : f32 to vector<2x32xf32>
    %35 = arith.addf %34, %33 : vector<2x32xf32>
    %36 = arith.divf %34, %35 : vector<2x32xf32>
    %37 = vector.extract_strided_slice %24 {offsets = [0, 64], sizes = [2, 32], strides = [1, 1]} : vector<2x128xf32> to vector<2x32xf32>
    %38 = math.tanh %37 : vector<2x32xf32>
    %39 = vector.extract_strided_slice %24 {offsets = [0, 96], sizes = [2, 32], strides = [1, 1]} : vector<2x128xf32> to vector<2x32xf32>
    %40 = arith.negf %39 : vector<2x32xf32>
    %41 = math.exp %40 : vector<2x32xf32>
    %cst_13 = arith.constant 1.000000e+00 : f32
    %42 = vector.broadcast %cst_13 : f32 to vector<2x32xf32>
    %43 = arith.addf %42, %41 : vector<2x32xf32>
    %44 = arith.divf %42, %43 : vector<2x32xf32>
    %45 = arith.mulf %36, %15 : vector<2x32xf32>
    %46 = arith.mulf %30, %38 : vector<2x32xf32>
    %47 = arith.addf %45, %46 : vector<2x32xf32>
    %48 = math.tanh %47 : vector<2x32xf32>
    %49 = arith.mulf %44, %48 : vector<2x32xf32>
    %50 = vector.extract_strided_slice %49 {offsets = [0, 0], sizes = [2, 16], strides = [1, 1]} : vector<2x32xf32> to vector<2x16xf32>
    %c0_14 = arith.constant 0 : index
    %c0_15 = arith.constant 0 : index
    %c0_16 = arith.constant 0 : index
    %51 = vector.load %arg14[%c0_14, %c0_15, %c0_16] : memref<2x8x32xf32, #tpu.memory_space<vmem>>, vector<2x1x16xf32>
    %52 = vector.shape_cast %51 : vector<2x1x16xf32> to vector<2x16xf32>
    %53 = vector.shape_cast %50 : vector<2x16xf32> to vector<2x1x16xf32>
    tpu.vector_store %arg14[%c0_14, %c0_15, %c0_16], %53 {strides = array<i32>} : memref<2x8x32xf32, #tpu.memory_space<vmem>>, vector<2x1x16xf32>,
    %54 = vector.extract_strided_slice %49 {offsets = [0, 16], sizes = [2, 16], strides = [1, 1]} : vector<2x32xf32> to vector<2x16xf32>
    %c0_17 = arith.constant 0 : index
    %c7 = arith.constant 7 : index
    %c16 = arith.constant 16 : index
    %55 = vector.load %arg14[%c0_17, %c7, %c16] : memref<2x8x32xf32, #tpu.memory_space<vmem>>, vector<2x1x16xf32>
    %56 = vector.shape_cast %55 : vector<2x1x16xf32> to vector<2x16xf32>
    %57 = vector.shape_cast %54 : vector<2x16xf32> to vector<2x1x16xf32>
    tpu.vector_store %arg14[%c0_17, %c7, %c16], %57 {strides = array<i32>} : memref<2x8x32xf32, #tpu.memory_space<vmem>>, vector<2x1x16xf32>,
    %58 = vector.extract_strided_slice %12 {offsets = [0, 1, 0], sizes = [2, 1, 128], strides = [1, 1, 1]} : vector<2x8x128xf32> to vector<2x1x128xf32>
    %59 = vector.shape_cast %58 : vector<2x1x128xf32> to vector<2x128xf32>
    %60 = vector.extract_strided_slice %12 {offsets = [0, 6, 0], sizes = [2, 1, 128], strides = [1, 1, 1]} : vector<2x8x128xf32> to vector<2x1x128xf32>
    %61 = vector.shape_cast %60 : vector<2x1x128xf32> to vector<2x128xf32>
    %62 = vector.shape_cast %4 : vector<1x128xi1> to vector<1x128xi1>
    %63 = vector.broadcast %62 : vector<1x128xi1> to vector<2x128xi1>
    %64 = arith.select %63, %59, %61 : vector<2x128xi1>, vector<2x128xf32>
    %cst_18 = arith.constant dense<0.000000e+00> : vector<2x128xf32>
    %65 = tpu.matmul %49, %13, %cst_18 {dimension_numbers = #tpu.dot_dimension_numbers<[1], [0], [0], [1], [0, 0, 1, 1], [], []>} : vector<2x32xf32>, vector<32x128xf32>, vector<2x128xf32> -> vector<2x128xf32>
    %66 = arith.addf %64, %65 : vector<2x128xf32>
    %67 = vector.extract_strided_slice %66 {offsets = [0, 0], sizes = [2, 32], strides = [1, 1]} : vector<2x128xf32> to vector<2x32xf32>
    %68 = arith.negf %67 : vector<2x32xf32>
    %69 = math.exp %68 : vector<2x32xf32>
    %cst_19 = arith.constant 1.000000e+00 : f32
    %70 = vector.broadcast %cst_19 : f32 to vector<2x32xf32>
    %71 = arith.addf %70, %69 : vector<2x32xf32>
    %72 = arith.divf %70, %71 : vector<2x32xf32>
    %73 = vector.extract_strided_slice %66 {offsets = [0, 32], sizes = [2, 32], strides = [1, 1]} : vector<2x128xf32> to vector<2x32xf32>
    %74 = arith.negf %73 : vector<2x32xf32>
    %75 = math.exp %74 : vector<2x32xf32>
    %cst_20 = arith.constant 1.000000e+00 : f32
    %76 = vector.broadcast %cst_20 : f32 to vector<2x32xf32>
    %77 = arith.addf %76, %75 : vector<2x32xf32>
    %78 = arith.divf %76, %77 : vector<2x32xf32>
    %79 = vector.extract_strided_slice %66 {offsets = [0, 64], sizes = [2, 32], strides = [1, 1]} : vector<2x128xf32> to vector<2x32xf32>
    %80 = math.tanh %79 : vector<2x32xf32>
    %81 = vector.extract_strided_slice %66 {offsets = [0, 96], sizes = [2, 32], strides = [1, 1]} : vector<2x128xf32> to vector<2x32xf32>
    %82 = arith.negf %81 : vector<2x32xf32>
    %83 = math.exp %82 : vector<2x32xf32>
    %cst_21 = arith.constant 1.000000e+00 : f32
    %84 = vector.broadcast %cst_21 : f32 to vector<2x32xf32>
    %85 = arith.addf %84, %83 : vector<2x32xf32>
    %86 = arith.divf %84, %85 : vector<2x32xf32>
    %87 = arith.mulf %78, %47 : vector<2x32xf32>
    %88 = arith.mulf %72, %80 : vector<2x32xf32>
    %89 = arith.addf %87, %88 : vector<2x32xf32>
    %90 = math.tanh %89 : vector<2x32xf32>
    %91 = arith.mulf %86, %90 : vector<2x32xf32>
    %92 = vector.extract_strided_slice %91 {offsets = [0, 0], sizes = [2, 16], strides = [1, 1]} : vector<2x32xf32> to vector<2x16xf32>
    %c0_22 = arith.constant 0 : index
    %c1 = arith.constant 1 : index
    %c0_23 = arith.constant 0 : index
    %93 = vector.load %arg14[%c0_22, %c1, %c0_23] : memref<2x8x32xf32, #tpu.memory_space<vmem>>, vector<2x1x16xf32>
    %94 = vector.shape_cast %93 : vector<2x1x16xf32> to vector<2x16xf32>
    %95 = vector.shape_cast %92 : vector<2x16xf32> to vector<2x1x16xf32>
    tpu.vector_store %arg14[%c0_22, %c1, %c0_23], %95 {strides = array<i32>} : memref<2x8x32xf32, #tpu.memory_space<vmem>>, vector<2x1x16xf32>,
    %96 = vector.extract_strided_slice %91 {offsets = [0, 16], sizes = [2, 16], strides = [1, 1]} : vector<2x32xf32> to vector<2x16xf32>
    %c0_24 = arith.constant 0 : index
    %c6 = arith.constant 6 : index
    %c16_25 = arith.constant 16 : index
    %97 = vector.load %arg14[%c0_24, %c6, %c16_25] : memref<2x8x32xf32, #tpu.memory_space<vmem>>, vector<2x1x16xf32>
    %98 = vector.shape_cast %97 : vector<2x1x16xf32> to vector<2x16xf32>
    %99 = vector.shape_cast %96 : vector<2x16xf32> to vector<2x1x16xf32>
    tpu.vector_store %arg14[%c0_24, %c6, %c16_25], %99 {strides = array<i32>} : memref<2x8x32xf32, #tpu.memory_space<vmem>>, vector<2x1x16xf32>,
    %100 = vector.extract_strided_slice %12 {offsets = [0, 2, 0], sizes = [2, 1, 128], strides = [1, 1, 1]} : vector<2x8x128xf32> to vector<2x1x128xf32>
    %101 = vector.shape_cast %100 : vector<2x1x128xf32> to vector<2x128xf32>
    %102 = vector.extract_strided_slice %12 {offsets = [0, 5, 0], sizes = [2, 1, 128], strides = [1, 1, 1]} : vector<2x8x128xf32> to vector<2x1x128xf32>
    %103 = vector.shape_cast %102 : vector<2x1x128xf32> to vector<2x128xf32>
    %104 = vector.shape_cast %4 : vector<1x128xi1> to vector<1x128xi1>
    %105 = vector.broadcast %104 : vector<1x128xi1> to vector<2x128xi1>
    %106 = arith.select %105, %101, %103 : vector<2x128xi1>, vector<2x128xf32>
    %cst_26 = arith.constant dense<0.000000e+00> : vector<2x128xf32>
    %107 = tpu.matmul %91, %13, %cst_26 {dimension_numbers = #tpu.dot_dimension_numbers<[1], [0], [0], [1], [0, 0, 1, 1], [], []>} : vector<2x32xf32>, vector<32x128xf32>, vector<2x128xf32> -> vector<2x128xf32>
    %108 = arith.addf %106, %107 : vector<2x128xf32>
    %109 = vector.extract_strided_slice %108 {offsets = [0, 0], sizes = [2, 32], strides = [1, 1]} : vector<2x128xf32> to vector<2x32xf32>
    %110 = arith.negf %109 : vector<2x32xf32>
    %111 = math.exp %110 : vector<2x32xf32>
    %cst_27 = arith.constant 1.000000e+00 : f32
    %112 = vector.broadcast %cst_27 : f32 to vector<2x32xf32>
    %113 = arith.addf %112, %111 : vector<2x32xf32>
    %114 = arith.divf %112, %113 : vector<2x32xf32>
    %115 = vector.extract_strided_slice %108 {offsets = [0, 32], sizes = [2, 32], strides = [1, 1]} : vector<2x128xf32> to vector<2x32xf32>
    %116 = arith.negf %115 : vector<2x32xf32>
    %117 = math.exp %116 : vector<2x32xf32>
    %cst_28 = arith.constant 1.000000e+00 : f32
    %118 = vector.broadcast %cst_28 : f32 to vector<2x32xf32>
    %119 = arith.addf %118, %117 : vector<2x32xf32>
    %120 = arith.divf %118, %119 : vector<2x32xf32>
    %121 = vector.extract_strided_slice %108 {offsets = [0, 64], sizes = [2, 32], strides = [1, 1]} : vector<2x128xf32> to vector<2x32xf32>
    %122 = math.tanh %121 : vector<2x32xf32>
    %123 = vector.extract_strided_slice %108 {offsets = [0, 96], sizes = [2, 32], strides = [1, 1]} : vector<2x128xf32> to vector<2x32xf32>
    %124 = arith.negf %123 : vector<2x32xf32>
    %125 = math.exp %124 : vector<2x32xf32>
    %cst_29 = arith.constant 1.000000e+00 : f32
    %126 = vector.broadcast %cst_29 : f32 to vector<2x32xf32>
    %127 = arith.addf %126, %125 : vector<2x32xf32>
    %128 = arith.divf %126, %127 : vector<2x32xf32>
    %129 = arith.mulf %120, %89 : vector<2x32xf32>
    %130 = arith.mulf %114, %122 : vector<2x32xf32>
    %131 = arith.addf %129, %130 : vector<2x32xf32>
    %132 = math.tanh %131 : vector<2x32xf32>
    %133 = arith.mulf %128, %132 : vector<2x32xf32>
    %134 = vector.extract_strided_slice %133 {offsets = [0, 0], sizes = [2, 16], strides = [1, 1]} : vector<2x32xf32> to vector<2x16xf32>
    %c0_30 = arith.constant 0 : index
    %c2 = arith.constant 2 : index
    %c0_31 = arith.constant 0 : index
    %135 = vector.load %arg14[%c0_30, %c2, %c0_31] : memref<2x8x32xf32, #tpu.memory_space<vmem>>, vector<2x1x16xf32>
    %136 = vector.shape_cast %135 : vector<2x1x16xf32> to vector<2x16xf32>
    %137 = vector.shape_cast %134 : vector<2x16xf32> to vector<2x1x16xf32>
    tpu.vector_store %arg14[%c0_30, %c2, %c0_31], %137 {strides = array<i32>} : memref<2x8x32xf32, #tpu.memory_space<vmem>>, vector<2x1x16xf32>,
    %138 = vector.extract_strided_slice %133 {offsets = [0, 16], sizes = [2, 16], strides = [1, 1]} : vector<2x32xf32> to vector<2x16xf32>
    %c0_32 = arith.constant 0 : index
    %c5 = arith.constant 5 : index
    %c16_33 = arith.constant 16 : index
    %139 = vector.load %arg14[%c0_32, %c5, %c16_33] : memref<2x8x32xf32, #tpu.memory_space<vmem>>, vector<2x1x16xf32>
    %140 = vector.shape_cast %139 : vector<2x1x16xf32> to vector<2x16xf32>
    %141 = vector.shape_cast %138 : vector<2x16xf32> to vector<2x1x16xf32>
    tpu.vector_store %arg14[%c0_32, %c5, %c16_33], %141 {strides = array<i32>} : memref<2x8x32xf32, #tpu.memory_space<vmem>>, vector<2x1x16xf32>,
    %142 = vector.extract_strided_slice %12 {offsets = [0, 3, 0], sizes = [2, 1, 128], strides = [1, 1, 1]} : vector<2x8x128xf32> to vector<2x1x128xf32>
    %143 = vector.shape_cast %142 : vector<2x1x128xf32> to vector<2x128xf32>
    %144 = vector.extract_strided_slice %12 {offsets = [0, 4, 0], sizes = [2, 1, 128], strides = [1, 1, 1]} : vector<2x8x128xf32> to vector<2x1x128xf32>
    %145 = vector.shape_cast %144 : vector<2x1x128xf32> to vector<2x128xf32>
    %146 = vector.shape_cast %4 : vector<1x128xi1> to vector<1x128xi1>
    %147 = vector.broadcast %146 : vector<1x128xi1> to vector<2x128xi1>
    %148 = arith.select %147, %143, %145 : vector<2x128xi1>, vector<2x128xf32>
    %cst_34 = arith.constant dense<0.000000e+00> : vector<2x128xf32>
    %149 = tpu.matmul %133, %13, %cst_34 {dimension_numbers = #tpu.dot_dimension_numbers<[1], [0], [0], [1], [0, 0, 1, 1], [], []>} : vector<2x32xf32>, vector<32x128xf32>, vector<2x128xf32> -> vector<2x128xf32>
    %150 = arith.addf %148, %149 : vector<2x128xf32>
    %151 = vector.extract_strided_slice %150 {offsets = [0, 0], sizes = [2, 32], strides = [1, 1]} : vector<2x128xf32> to vector<2x32xf32>
    %152 = arith.negf %151 : vector<2x32xf32>
    %153 = math.exp %152 : vector<2x32xf32>
    %cst_35 = arith.constant 1.000000e+00 : f32
    %154 = vector.broadcast %cst_35 : f32 to vector<2x32xf32>
    %155 = arith.addf %154, %153 : vector<2x32xf32>
    %156 = arith.divf %154, %155 : vector<2x32xf32>
    %157 = vector.extract_strided_slice %150 {offsets = [0, 32], sizes = [2, 32], strides = [1, 1]} : vector<2x128xf32> to vector<2x32xf32>
    %158 = arith.negf %157 : vector<2x32xf32>
    %159 = math.exp %158 : vector<2x32xf32>
    %cst_36 = arith.constant 1.000000e+00 : f32
    %160 = vector.broadcast %cst_36 : f32 to vector<2x32xf32>
    %161 = arith.addf %160, %159 : vector<2x32xf32>
    %162 = arith.divf %160, %161 : vector<2x32xf32>
    %163 = vector.extract_strided_slice %150 {offsets = [0, 64], sizes = [2, 32], strides = [1, 1]} : vector<2x128xf32> to vector<2x32xf32>
    %164 = math.tanh %163 : vector<2x32xf32>
    %165 = vector.extract_strided_slice %150 {offsets = [0, 96], sizes = [2, 32], strides = [1, 1]} : vector<2x128xf32> to vector<2x32xf32>
    %166 = arith.negf %165 : vector<2x32xf32>
    %167 = math.exp %166 : vector<2x32xf32>
    %cst_37 = arith.constant 1.000000e+00 : f32
    %168 = vector.broadcast %cst_37 : f32 to vector<2x32xf32>
    %169 = arith.addf %168, %167 : vector<2x32xf32>
    %170 = arith.divf %168, %169 : vector<2x32xf32>
    %171 = arith.mulf %162, %131 : vector<2x32xf32>
    %172 = arith.mulf %156, %164 : vector<2x32xf32>
    %173 = arith.addf %171, %172 : vector<2x32xf32>
    %174 = math.tanh %173 : vector<2x32xf32>
    %175 = arith.mulf %170, %174 : vector<2x32xf32>
    %176 = vector.extract_strided_slice %175 {offsets = [0, 0], sizes = [2, 16], strides = [1, 1]} : vector<2x32xf32> to vector<2x16xf32>
    %c0_38 = arith.constant 0 : index
    %c3 = arith.constant 3 : index
    %c0_39 = arith.constant 0 : index
    %177 = vector.load %arg14[%c0_38, %c3, %c0_39] : memref<2x8x32xf32, #tpu.memory_space<vmem>>, vector<2x1x16xf32>
    %178 = vector.shape_cast %177 : vector<2x1x16xf32> to vector<2x16xf32>
    %179 = vector.shape_cast %176 : vector<2x16xf32> to vector<2x1x16xf32>
    tpu.vector_store %arg14[%c0_38, %c3, %c0_39], %179 {strides = array<i32>} : memref<2x8x32xf32, #tpu.memory_space<vmem>>, vector<2x1x16xf32>,
    %180 = vector.extract_strided_slice %175 {offsets = [0, 16], sizes = [2, 16], strides = [1, 1]} : vector<2x32xf32> to vector<2x16xf32>
    %c0_40 = arith.constant 0 : index
    %c4 = arith.constant 4 : index
    %c16_41 = arith.constant 16 : index
    %181 = vector.load %arg14[%c0_40, %c4, %c16_41] : memref<2x8x32xf32, #tpu.memory_space<vmem>>, vector<2x1x16xf32>
    %182 = vector.shape_cast %181 : vector<2x1x16xf32> to vector<2x16xf32>
    %183 = vector.shape_cast %180 : vector<2x16xf32> to vector<2x1x16xf32>
    tpu.vector_store %arg14[%c0_40, %c4, %c16_41], %183 {strides = array<i32>} : memref<2x8x32xf32, #tpu.memory_space<vmem>>, vector<2x1x16xf32>,
    %184 = vector.extract_strided_slice %12 {offsets = [0, 4, 0], sizes = [2, 1, 128], strides = [1, 1, 1]} : vector<2x8x128xf32> to vector<2x1x128xf32>
    %185 = vector.shape_cast %184 : vector<2x1x128xf32> to vector<2x128xf32>
    %186 = vector.extract_strided_slice %12 {offsets = [0, 3, 0], sizes = [2, 1, 128], strides = [1, 1, 1]} : vector<2x8x128xf32> to vector<2x1x128xf32>
    %187 = vector.shape_cast %186 : vector<2x1x128xf32> to vector<2x128xf32>
    %188 = vector.shape_cast %4 : vector<1x128xi1> to vector<1x128xi1>
    %189 = vector.broadcast %188 : vector<1x128xi1> to vector<2x128xi1>
    %190 = arith.select %189, %185, %187 : vector<2x128xi1>, vector<2x128xf32>
    %cst_42 = arith.constant dense<0.000000e+00> : vector<2x128xf32>
    %191 = tpu.matmul %175, %13, %cst_42 {dimension_numbers = #tpu.dot_dimension_numbers<[1], [0], [0], [1], [0, 0, 1, 1], [], []>} : vector<2x32xf32>, vector<32x128xf32>, vector<2x128xf32> -> vector<2x128xf32>
    %192 = arith.addf %190, %191 : vector<2x128xf32>
    %193 = vector.extract_strided_slice %192 {offsets = [0, 0], sizes = [2, 32], strides = [1, 1]} : vector<2x128xf32> to vector<2x32xf32>
    %194 = arith.negf %193 : vector<2x32xf32>
    %195 = math.exp %194 : vector<2x32xf32>
    %cst_43 = arith.constant 1.000000e+00 : f32
    %196 = vector.broadcast %cst_43 : f32 to vector<2x32xf32>
    %197 = arith.addf %196, %195 : vector<2x32xf32>
    %198 = arith.divf %196, %197 : vector<2x32xf32>
    %199 = vector.extract_strided_slice %192 {offsets = [0, 32], sizes = [2, 32], strides = [1, 1]} : vector<2x128xf32> to vector<2x32xf32>
    %200 = arith.negf %199 : vector<2x32xf32>
    %201 = math.exp %200 : vector<2x32xf32>
    %cst_44 = arith.constant 1.000000e+00 : f32
    %202 = vector.broadcast %cst_44 : f32 to vector<2x32xf32>
    %203 = arith.addf %202, %201 : vector<2x32xf32>
    %204 = arith.divf %202, %203 : vector<2x32xf32>
    %205 = vector.extract_strided_slice %192 {offsets = [0, 64], sizes = [2, 32], strides = [1, 1]} : vector<2x128xf32> to vector<2x32xf32>
    %206 = math.tanh %205 : vector<2x32xf32>
    %207 = vector.extract_strided_slice %192 {offsets = [0, 96], sizes = [2, 32], strides = [1, 1]} : vector<2x128xf32> to vector<2x32xf32>
    %208 = arith.negf %207 : vector<2x32xf32>
    %209 = math.exp %208 : vector<2x32xf32>
    %cst_45 = arith.constant 1.000000e+00 : f32
    %210 = vector.broadcast %cst_45 : f32 to vector<2x32xf32>
    %211 = arith.addf %210, %209 : vector<2x32xf32>
    %212 = arith.divf %210, %211 : vector<2x32xf32>
    %213 = arith.mulf %204, %173 : vector<2x32xf32>
    %214 = arith.mulf %198, %206 : vector<2x32xf32>
    %215 = arith.addf %213, %214 : vector<2x32xf32>
    %216 = math.tanh %215 : vector<2x32xf32>
    %217 = arith.mulf %212, %216 : vector<2x32xf32>
    %218 = vector.extract_strided_slice %217 {offsets = [0, 0], sizes = [2, 16], strides = [1, 1]} : vector<2x32xf32> to vector<2x16xf32>
    %c0_46 = arith.constant 0 : index
    %c4_47 = arith.constant 4 : index
    %c0_48 = arith.constant 0 : index
    %219 = vector.load %arg14[%c0_46, %c4_47, %c0_48] : memref<2x8x32xf32, #tpu.memory_space<vmem>>, vector<2x1x16xf32>
    %220 = vector.shape_cast %219 : vector<2x1x16xf32> to vector<2x16xf32>
    %221 = vector.shape_cast %218 : vector<2x16xf32> to vector<2x1x16xf32>
    tpu.vector_store %arg14[%c0_46, %c4_47, %c0_48], %221 {strides = array<i32>} : memref<2x8x32xf32, #tpu.memory_space<vmem>>, vector<2x1x16xf32>,
    %222 = vector.extract_strided_slice %217 {offsets = [0, 16], sizes = [2, 16], strides = [1, 1]} : vector<2x32xf32> to vector<2x16xf32>
    %c0_49 = arith.constant 0 : index
    %c3_50 = arith.constant 3 : index
    %c16_51 = arith.constant 16 : index
    %223 = vector.load %arg14[%c0_49, %c3_50, %c16_51] : memref<2x8x32xf32, #tpu.memory_space<vmem>>, vector<2x1x16xf32>
    %224 = vector.shape_cast %223 : vector<2x1x16xf32> to vector<2x16xf32>
    %225 = vector.shape_cast %222 : vector<2x16xf32> to vector<2x1x16xf32>
    tpu.vector_store %arg14[%c0_49, %c3_50, %c16_51], %225 {strides = array<i32>} : memref<2x8x32xf32, #tpu.memory_space<vmem>>, vector<2x1x16xf32>,
    %226 = vector.extract_strided_slice %12 {offsets = [0, 5, 0], sizes = [2, 1, 128], strides = [1, 1, 1]} : vector<2x8x128xf32> to vector<2x1x128xf32>
    %227 = vector.shape_cast %226 : vector<2x1x128xf32> to vector<2x128xf32>
    %228 = vector.extract_strided_slice %12 {offsets = [0, 2, 0], sizes = [2, 1, 128], strides = [1, 1, 1]} : vector<2x8x128xf32> to vector<2x1x128xf32>
    %229 = vector.shape_cast %228 : vector<2x1x128xf32> to vector<2x128xf32>
    %230 = vector.shape_cast %4 : vector<1x128xi1> to vector<1x128xi1>
    %231 = vector.broadcast %230 : vector<1x128xi1> to vector<2x128xi1>
    %232 = arith.select %231, %227, %229 : vector<2x128xi1>, vector<2x128xf32>
    %cst_52 = arith.constant dense<0.000000e+00> : vector<2x128xf32>
    %233 = tpu.matmul %217, %13, %cst_52 {dimension_numbers = #tpu.dot_dimension_numbers<[1], [0], [0], [1], [0, 0, 1, 1], [], []>} : vector<2x32xf32>, vector<32x128xf32>, vector<2x128xf32> -> vector<2x128xf32>
    %234 = arith.addf %232, %233 : vector<2x128xf32>
    %235 = vector.extract_strided_slice %234 {offsets = [0, 0], sizes = [2, 32], strides = [1, 1]} : vector<2x128xf32> to vector<2x32xf32>
    %236 = arith.negf %235 : vector<2x32xf32>
    %237 = math.exp %236 : vector<2x32xf32>
    %cst_53 = arith.constant 1.000000e+00 : f32
    %238 = vector.broadcast %cst_53 : f32 to vector<2x32xf32>
    %239 = arith.addf %238, %237 : vector<2x32xf32>
    %240 = arith.divf %238, %239 : vector<2x32xf32>
    %241 = vector.extract_strided_slice %234 {offsets = [0, 32], sizes = [2, 32], strides = [1, 1]} : vector<2x128xf32> to vector<2x32xf32>
    %242 = arith.negf %241 : vector<2x32xf32>
    %243 = math.exp %242 : vector<2x32xf32>
    %cst_54 = arith.constant 1.000000e+00 : f32
    %244 = vector.broadcast %cst_54 : f32 to vector<2x32xf32>
    %245 = arith.addf %244, %243 : vector<2x32xf32>
    %246 = arith.divf %244, %245 : vector<2x32xf32>
    %247 = vector.extract_strided_slice %234 {offsets = [0, 64], sizes = [2, 32], strides = [1, 1]} : vector<2x128xf32> to vector<2x32xf32>
    %248 = math.tanh %247 : vector<2x32xf32>
    %249 = vector.extract_strided_slice %234 {offsets = [0, 96], sizes = [2, 32], strides = [1, 1]} : vector<2x128xf32> to vector<2x32xf32>
    %250 = arith.negf %249 : vector<2x32xf32>
    %251 = math.exp %250 : vector<2x32xf32>
    %cst_55 = arith.constant 1.000000e+00 : f32
    %252 = vector.broadcast %cst_55 : f32 to vector<2x32xf32>
    %253 = arith.addf %252, %251 : vector<2x32xf32>
    %254 = arith.divf %252, %253 : vector<2x32xf32>
    %255 = arith.mulf %246, %215 : vector<2x32xf32>
    %256 = arith.mulf %240, %248 : vector<2x32xf32>
    %257 = arith.addf %255, %256 : vector<2x32xf32>
    %258 = math.tanh %257 : vector<2x32xf32>
    %259 = arith.mulf %254, %258 : vector<2x32xf32>
    %260 = vector.extract_strided_slice %259 {offsets = [0, 0], sizes = [2, 16], strides = [1, 1]} : vector<2x32xf32> to vector<2x16xf32>
    %c0_56 = arith.constant 0 : index
    %c5_57 = arith.constant 5 : index
    %c0_58 = arith.constant 0 : index
    %261 = vector.load %arg14[%c0_56, %c5_57, %c0_58] : memref<2x8x32xf32, #tpu.memory_space<vmem>>, vector<2x1x16xf32>
    %262 = vector.shape_cast %261 : vector<2x1x16xf32> to vector<2x16xf32>
    %263 = vector.shape_cast %260 : vector<2x16xf32> to vector<2x1x16xf32>
    tpu.vector_store %arg14[%c0_56, %c5_57, %c0_58], %263 {strides = array<i32>} : memref<2x8x32xf32, #tpu.memory_space<vmem>>, vector<2x1x16xf32>,
    %264 = vector.extract_strided_slice %259 {offsets = [0, 16], sizes = [2, 16], strides = [1, 1]} : vector<2x32xf32> to vector<2x16xf32>
    %c0_59 = arith.constant 0 : index
    %c2_60 = arith.constant 2 : index
    %c16_61 = arith.constant 16 : index
    %265 = vector.load %arg14[%c0_59, %c2_60, %c16_61] : memref<2x8x32xf32, #tpu.memory_space<vmem>>, vector<2x1x16xf32>
    %266 = vector.shape_cast %265 : vector<2x1x16xf32> to vector<2x16xf32>
    %267 = vector.shape_cast %264 : vector<2x16xf32> to vector<2x1x16xf32>
    tpu.vector_store %arg14[%c0_59, %c2_60, %c16_61], %267 {strides = array<i32>} : memref<2x8x32xf32, #tpu.memory_space<vmem>>, vector<2x1x16xf32>,
    %268 = vector.extract_strided_slice %12 {offsets = [0, 6, 0], sizes = [2, 1, 128], strides = [1, 1, 1]} : vector<2x8x128xf32> to vector<2x1x128xf32>
    %269 = vector.shape_cast %268 : vector<2x1x128xf32> to vector<2x128xf32>
    %270 = vector.extract_strided_slice %12 {offsets = [0, 1, 0], sizes = [2, 1, 128], strides = [1, 1, 1]} : vector<2x8x128xf32> to vector<2x1x128xf32>
    %271 = vector.shape_cast %270 : vector<2x1x128xf32> to vector<2x128xf32>
    %272 = vector.shape_cast %4 : vector<1x128xi1> to vector<1x128xi1>
    %273 = vector.broadcast %272 : vector<1x128xi1> to vector<2x128xi1>
    %274 = arith.select %273, %269, %271 : vector<2x128xi1>, vector<2x128xf32>
    %cst_62 = arith.constant dense<0.000000e+00> : vector<2x128xf32>
    %275 = tpu.matmul %259, %13, %cst_62 {dimension_numbers = #tpu.dot_dimension_numbers<[1], [0], [0], [1], [0, 0, 1, 1], [], []>} : vector<2x32xf32>, vector<32x128xf32>, vector<2x128xf32> -> vector<2x128xf32>
    %276 = arith.addf %274, %275 : vector<2x128xf32>
    %277 = vector.extract_strided_slice %276 {offsets = [0, 0], sizes = [2, 32], strides = [1, 1]} : vector<2x128xf32> to vector<2x32xf32>
    %278 = arith.negf %277 : vector<2x32xf32>
    %279 = math.exp %278 : vector<2x32xf32>
    %cst_63 = arith.constant 1.000000e+00 : f32
    %280 = vector.broadcast %cst_63 : f32 to vector<2x32xf32>
    %281 = arith.addf %280, %279 : vector<2x32xf32>
    %282 = arith.divf %280, %281 : vector<2x32xf32>
    %283 = vector.extract_strided_slice %276 {offsets = [0, 32], sizes = [2, 32], strides = [1, 1]} : vector<2x128xf32> to vector<2x32xf32>
    %284 = arith.negf %283 : vector<2x32xf32>
    %285 = math.exp %284 : vector<2x32xf32>
    %cst_64 = arith.constant 1.000000e+00 : f32
    %286 = vector.broadcast %cst_64 : f32 to vector<2x32xf32>
    %287 = arith.addf %286, %285 : vector<2x32xf32>
    %288 = arith.divf %286, %287 : vector<2x32xf32>
    %289 = vector.extract_strided_slice %276 {offsets = [0, 64], sizes = [2, 32], strides = [1, 1]} : vector<2x128xf32> to vector<2x32xf32>
    %290 = math.tanh %289 : vector<2x32xf32>
    %291 = vector.extract_strided_slice %276 {offsets = [0, 96], sizes = [2, 32], strides = [1, 1]} : vector<2x128xf32> to vector<2x32xf32>
    %292 = arith.negf %291 : vector<2x32xf32>
    %293 = math.exp %292 : vector<2x32xf32>
    %cst_65 = arith.constant 1.000000e+00 : f32
    %294 = vector.broadcast %cst_65 : f32 to vector<2x32xf32>
    %295 = arith.addf %294, %293 : vector<2x32xf32>
    %296 = arith.divf %294, %295 : vector<2x32xf32>
    %297 = arith.mulf %288, %257 : vector<2x32xf32>
    %298 = arith.mulf %282, %290 : vector<2x32xf32>
    %299 = arith.addf %297, %298 : vector<2x32xf32>
    %300 = math.tanh %299 : vector<2x32xf32>
    %301 = arith.mulf %296, %300 : vector<2x32xf32>
    %302 = vector.extract_strided_slice %301 {offsets = [0, 0], sizes = [2, 16], strides = [1, 1]} : vector<2x32xf32> to vector<2x16xf32>
    %c0_66 = arith.constant 0 : index
    %c6_67 = arith.constant 6 : index
    %c0_68 = arith.constant 0 : index
    %303 = vector.load %arg14[%c0_66, %c6_67, %c0_68] : memref<2x8x32xf32, #tpu.memory_space<vmem>>, vector<2x1x16xf32>
    %304 = vector.shape_cast %303 : vector<2x1x16xf32> to vector<2x16xf32>
    %305 = vector.shape_cast %302 : vector<2x16xf32> to vector<2x1x16xf32>
    tpu.vector_store %arg14[%c0_66, %c6_67, %c0_68], %305 {strides = array<i32>} : memref<2x8x32xf32, #tpu.memory_space<vmem>>, vector<2x1x16xf32>,
    %306 = vector.extract_strided_slice %301 {offsets = [0, 16], sizes = [2, 16], strides = [1, 1]} : vector<2x32xf32> to vector<2x16xf32>
    %c0_69 = arith.constant 0 : index
    %c1_70 = arith.constant 1 : index
    %c16_71 = arith.constant 16 : index
    %307 = vector.load %arg14[%c0_69, %c1_70, %c16_71] : memref<2x8x32xf32, #tpu.memory_space<vmem>>, vector<2x1x16xf32>
    %308 = vector.shape_cast %307 : vector<2x1x16xf32> to vector<2x16xf32>
    %309 = vector.shape_cast %306 : vector<2x16xf32> to vector<2x1x16xf32>
    tpu.vector_store %arg14[%c0_69, %c1_70, %c16_71], %309 {strides = array<i32>} : memref<2x8x32xf32, #tpu.memory_space<vmem>>, vector<2x1x16xf32>,
    %310 = vector.extract_strided_slice %12 {offsets = [0, 7, 0], sizes = [2, 1, 128], strides = [1, 1, 1]} : vector<2x8x128xf32> to vector<2x1x128xf32>
    %311 = vector.shape_cast %310 : vector<2x1x128xf32> to vector<2x128xf32>
    %312 = vector.extract_strided_slice %12 {offsets = [0, 0, 0], sizes = [2, 1, 128], strides = [1, 1, 1]} : vector<2x8x128xf32> to vector<2x1x128xf32>
    %313 = vector.shape_cast %312 : vector<2x1x128xf32> to vector<2x128xf32>
    %314 = vector.shape_cast %4 : vector<1x128xi1> to vector<1x128xi1>
    %315 = vector.broadcast %314 : vector<1x128xi1> to vector<2x128xi1>
    %316 = arith.select %315, %311, %313 : vector<2x128xi1>, vector<2x128xf32>
    %cst_72 = arith.constant dense<0.000000e+00> : vector<2x128xf32>
    %317 = tpu.matmul %301, %13, %cst_72 {dimension_numbers = #tpu.dot_dimension_numbers<[1], [0], [0], [1], [0, 0, 1, 1], [], []>} : vector<2x32xf32>, vector<32x128xf32>, vector<2x128xf32> -> vector<2x128xf32>
    %318 = arith.addf %316, %317 : vector<2x128xf32>
    %319 = vector.extract_strided_slice %318 {offsets = [0, 0], sizes = [2, 32], strides = [1, 1]} : vector<2x128xf32> to vector<2x32xf32>
    %320 = arith.negf %319 : vector<2x32xf32>
    %321 = math.exp %320 : vector<2x32xf32>
    %cst_73 = arith.constant 1.000000e+00 : f32
    %322 = vector.broadcast %cst_73 : f32 to vector<2x32xf32>
    %323 = arith.addf %322, %321 : vector<2x32xf32>
    %324 = arith.divf %322, %323 : vector<2x32xf32>
    %325 = vector.extract_strided_slice %318 {offsets = [0, 32], sizes = [2, 32], strides = [1, 1]} : vector<2x128xf32> to vector<2x32xf32>
    %326 = arith.negf %325 : vector<2x32xf32>
    %327 = math.exp %326 : vector<2x32xf32>
    %cst_74 = arith.constant 1.000000e+00 : f32
    %328 = vector.broadcast %cst_74 : f32 to vector<2x32xf32>
    %329 = arith.addf %328, %327 : vector<2x32xf32>
    %330 = arith.divf %328, %329 : vector<2x32xf32>
    %331 = vector.extract_strided_slice %318 {offsets = [0, 64], sizes = [2, 32], strides = [1, 1]} : vector<2x128xf32> to vector<2x32xf32>
    %332 = math.tanh %331 : vector<2x32xf32>
    %333 = vector.extract_strided_slice %318 {offsets = [0, 96], sizes = [2, 32], strides = [1, 1]} : vector<2x128xf32> to vector<2x32xf32>
    %334 = arith.negf %333 : vector<2x32xf32>
    %335 = math.exp %334 : vector<2x32xf32>
    %cst_75 = arith.constant 1.000000e+00 : f32
    %336 = vector.broadcast %cst_75 : f32 to vector<2x32xf32>
    %337 = arith.addf %336, %335 : vector<2x32xf32>
    %338 = arith.divf %336, %337 : vector<2x32xf32>
    %339 = arith.mulf %330, %299 : vector<2x32xf32>
    %340 = arith.mulf %324, %332 : vector<2x32xf32>
    %341 = arith.addf %339, %340 : vector<2x32xf32>
    %342 = math.tanh %341 : vector<2x32xf32>
    %343 = arith.mulf %338, %342 : vector<2x32xf32>
    %344 = vector.extract_strided_slice %343 {offsets = [0, 0], sizes = [2, 16], strides = [1, 1]} : vector<2x32xf32> to vector<2x16xf32>
    %c0_76 = arith.constant 0 : index
    %c7_77 = arith.constant 7 : index
    %c0_78 = arith.constant 0 : index
    %345 = vector.load %arg14[%c0_76, %c7_77, %c0_78] : memref<2x8x32xf32, #tpu.memory_space<vmem>>, vector<2x1x16xf32>
    %346 = vector.shape_cast %345 : vector<2x1x16xf32> to vector<2x16xf32>
    %347 = vector.shape_cast %344 : vector<2x16xf32> to vector<2x1x16xf32>
    tpu.vector_store %arg14[%c0_76, %c7_77, %c0_78], %347 {strides = array<i32>} : memref<2x8x32xf32, #tpu.memory_space<vmem>>, vector<2x1x16xf32>,
    %348 = vector.extract_strided_slice %343 {offsets = [0, 16], sizes = [2, 16], strides = [1, 1]} : vector<2x32xf32> to vector<2x16xf32>
    %c0_79 = arith.constant 0 : index
    %c0_80 = arith.constant 0 : index
    %c16_81 = arith.constant 16 : index
    %349 = vector.load %arg14[%c0_79, %c0_80, %c16_81] : memref<2x8x32xf32, #tpu.memory_space<vmem>>, vector<2x1x16xf32>
    %350 = vector.shape_cast %349 : vector<2x1x16xf32> to vector<2x16xf32>
    %351 = vector.shape_cast %348 : vector<2x16xf32> to vector<2x1x16xf32>
    tpu.vector_store %arg14[%c0_79, %c0_80, %c16_81], %351 {strides = array<i32>} : memref<2x8x32xf32, #tpu.memory_space<vmem>>, vector<2x1x16xf32>,
    %c0_82 = arith.constant 0 : index
    %c0_83 = arith.constant 0 : index
    %c0_84 = arith.constant 0 : index
    %352 = vector.load %arg7[%c0_82, %c0_83, %c0_84] : memref<2x32x16xf32, #tpu.memory_space<vmem>>, vector<1x32x16xf32>
    %353 = vector.shape_cast %352 : vector<1x32x16xf32> to vector<32x16xf32>
    %cst_85 = arith.constant dense<0.000000e+00> : vector<2x16xf32>
    %354 = tpu.matmul %343, %353, %cst_85 {dimension_numbers = #tpu.dot_dimension_numbers<[1], [0], [0], [1], [0, 0, 1, 1], [], []>} : vector<2x32xf32>, vector<32x16xf32>, vector<2x16xf32> -> vector<2x16xf32>
    %c0_86 = arith.constant 0 : index
    %c0_87 = arith.constant 0 : index
    %c0_88 = arith.constant 0 : index
    %355 = vector.load %arg8[%c0_86, %c0_87, %c0_88] : memref<2x1x16xf32, #tpu.memory_space<vmem>>, vector<1x1x16xf32>
    %356 = vector.shape_cast %355 : vector<1x1x16xf32> to vector<1x16xf32>
    %357 = vector.broadcast %356 : vector<1x16xf32> to vector<2x16xf32>
    %358 = arith.addf %354, %357 : vector<2x16xf32>
    %c0_89 = arith.constant 0 : index
    %c0_90 = arith.constant 0 : index
    %c0_91 = arith.constant 0 : index
    %359 = vector.load %arg12[%c0_89, %c0_90, %c0_91] : memref<2x2x16xf32, #tpu.memory_space<vmem>>, vector<1x2x16xf32>
    %360 = vector.shape_cast %359 : vector<1x2x16xf32> to vector<2x16xf32>
    %361 = vector.shape_cast %358 : vector<2x16xf32> to vector<1x2x16xf32>
    tpu.vector_store %arg12[%c0_89, %c0_90, %c0_91], %361 {strides = array<i32>} : memref<2x2x16xf32, #tpu.memory_space<vmem>>, vector<1x2x16xf32>,
    %c0_92 = arith.constant 0 : index
    %c0_93 = arith.constant 0 : index
    %c0_94 = arith.constant 0 : index
    %362 = vector.load %arg9[%c0_92, %c0_93, %c0_94] : memref<2x32x16xf32, #tpu.memory_space<vmem>>, vector<1x32x16xf32>
    %363 = vector.shape_cast %362 : vector<1x32x16xf32> to vector<32x16xf32>
    %cst_95 = arith.constant dense<0.000000e+00> : vector<2x16xf32>
    %364 = tpu.matmul %341, %363, %cst_95 {dimension_numbers = #tpu.dot_dimension_numbers<[1], [0], [0], [1], [0, 0, 1, 1], [], []>} : vector<2x32xf32>, vector<32x16xf32>, vector<2x16xf32> -> vector<2x16xf32>
    %c0_96 = arith.constant 0 : index
    %c0_97 = arith.constant 0 : index
    %c0_98 = arith.constant 0 : index
    %365 = vector.load %arg10[%c0_96, %c0_97, %c0_98] : memref<2x1x16xf32, #tpu.memory_space<vmem>>, vector<1x1x16xf32>
    %366 = vector.shape_cast %365 : vector<1x1x16xf32> to vector<1x16xf32>
    %367 = vector.broadcast %366 : vector<1x16xf32> to vector<2x16xf32>
    %368 = arith.addf %364, %367 : vector<2x16xf32>
    %c0_99 = arith.constant 0 : index
    %c0_100 = arith.constant 0 : index
    %c0_101 = arith.constant 0 : index
    %369 = vector.load %arg13[%c0_99, %c0_100, %c0_101] : memref<2x2x16xf32, #tpu.memory_space<vmem>>, vector<1x2x16xf32>
    %370 = vector.shape_cast %369 : vector<1x2x16xf32> to vector<2x16xf32>
    %371 = vector.shape_cast %368 : vector<2x16xf32> to vector<1x2x16xf32>
    tpu.vector_store %arg13[%c0_99, %c0_100, %c0_101], %371 {strides = array<i32>} : memref<2x2x16xf32, #tpu.memory_space<vmem>>, vector<1x2x16xf32>,
    %c0_102 = arith.constant 0 : index
    %c0_103 = arith.constant 0 : index
    %c0_104 = arith.constant 0 : index
    %372 = vector.load %arg14[%c0_102, %c0_103, %c0_104] : memref<2x8x32xf32, #tpu.memory_space<vmem>>, vector<2x8x32xf32>
    %373 = vector.shape_cast %372 : vector<2x8x32xf32> to vector<16x32xf32>
    %c0_105 = arith.constant 0 : index
    %c0_106 = arith.constant 0 : index
    %374 = vector.load %arg4[%c0_105, %c0_106] : memref<32x128xf32, #tpu.memory_space<vmem>>, vector<32x128xf32>
    %cst_107 = arith.constant dense<0.000000e+00> : vector<16x128xf32>
    %375 = tpu.matmul %373, %374, %cst_107 {dimension_numbers = #tpu.dot_dimension_numbers<[1], [0], [0], [1], [0, 0, 1, 1], [], []>} : vector<16x32xf32>, vector<32x128xf32>, vector<16x128xf32> -> vector<16x128xf32>
    %c0_108 = arith.constant 0 : index
    %c0_109 = arith.constant 0 : index
    %376 = vector.load %arg6[%c0_108, %c0_109] : memref<1x128xf32, #tpu.memory_space<vmem>>, vector<1x128xf32>
    %377 = vector.broadcast %376 : vector<1x128xf32> to vector<16x128xf32>
    %378 = arith.addf %375, %377 : vector<16x128xf32>
    %379 = vector.shape_cast %378 : vector<16x128xf32> to vector<2x8x128xf32>
    %c0_110 = arith.constant 0 : index
    %c0_111 = arith.constant 0 : index
    %380 = vector.load %arg5[%c0_110, %c0_111] : memref<32x128xf32, #tpu.memory_space<vmem>>, vector<32x128xf32>
    %cst_112 = arith.constant 0.000000e+00 : f32
    %381 = vector.broadcast %cst_112 : f32 to vector<2x32xf32>
    %cst_113 = arith.constant 0.000000e+00 : f32
    %382 = vector.broadcast %cst_113 : f32 to vector<2x32xf32>
    %383 = vector.extract_strided_slice %379 {offsets = [0, 0, 0], sizes = [2, 1, 128], strides = [1, 1, 1]} : vector<2x8x128xf32> to vector<2x1x128xf32>
    %384 = vector.shape_cast %383 : vector<2x1x128xf32> to vector<2x128xf32>
    %385 = vector.extract_strided_slice %379 {offsets = [0, 7, 0], sizes = [2, 1, 128], strides = [1, 1, 1]} : vector<2x8x128xf32> to vector<2x1x128xf32>
    %386 = vector.shape_cast %385 : vector<2x1x128xf32> to vector<2x128xf32>
    %387 = vector.shape_cast %4 : vector<1x128xi1> to vector<1x128xi1>
    %388 = vector.broadcast %387 : vector<1x128xi1> to vector<2x128xi1>
    %389 = arith.select %388, %384, %386 : vector<2x128xi1>, vector<2x128xf32>
    %cst_114 = arith.constant dense<0.000000e+00> : vector<2x128xf32>
    %390 = tpu.matmul %381, %380, %cst_114 {dimension_numbers = #tpu.dot_dimension_numbers<[1], [0], [0], [1], [0, 0, 1, 1], [], []>} : vector<2x32xf32>, vector<32x128xf32>, vector<2x128xf32> -> vector<2x128xf32>
    %391 = arith.addf %389, %390 : vector<2x128xf32>
    %392 = vector.extract_strided_slice %391 {offsets = [0, 0], sizes = [2, 32], strides = [1, 1]} : vector<2x128xf32> to vector<2x32xf32>
    %393 = arith.negf %392 : vector<2x32xf32>
    %394 = math.exp %393 : vector<2x32xf32>
    %cst_115 = arith.constant 1.000000e+00 : f32
    %395 = vector.broadcast %cst_115 : f32 to vector<2x32xf32>
    %396 = arith.addf %395, %394 : vector<2x32xf32>
    %397 = arith.divf %395, %396 : vector<2x32xf32>
    %398 = vector.extract_strided_slice %391 {offsets = [0, 32], sizes = [2, 32], strides = [1, 1]} : vector<2x128xf32> to vector<2x32xf32>
    %399 = arith.negf %398 : vector<2x32xf32>
    %400 = math.exp %399 : vector<2x32xf32>
    %cst_116 = arith.constant 1.000000e+00 : f32
    %401 = vector.broadcast %cst_116 : f32 to vector<2x32xf32>
    %402 = arith.addf %401, %400 : vector<2x32xf32>
    %403 = arith.divf %401, %402 : vector<2x32xf32>
    %404 = vector.extract_strided_slice %391 {offsets = [0, 64], sizes = [2, 32], strides = [1, 1]} : vector<2x128xf32> to vector<2x32xf32>
    %405 = math.tanh %404 : vector<2x32xf32>
    %406 = vector.extract_strided_slice %391 {offsets = [0, 96], sizes = [2, 32], strides = [1, 1]} : vector<2x128xf32> to vector<2x32xf32>
    %407 = arith.negf %406 : vector<2x32xf32>
    %408 = math.exp %407 : vector<2x32xf32>
    %cst_117 = arith.constant 1.000000e+00 : f32
    %409 = vector.broadcast %cst_117 : f32 to vector<2x32xf32>
    %410 = arith.addf %409, %408 : vector<2x32xf32>
    %411 = arith.divf %409, %410 : vector<2x32xf32>
    %412 = arith.mulf %403, %382 : vector<2x32xf32>
    %413 = arith.mulf %397, %405 : vector<2x32xf32>
    %414 = arith.addf %412, %413 : vector<2x32xf32>
    %415 = math.tanh %414 : vector<2x32xf32>
    %416 = arith.mulf %411, %415 : vector<2x32xf32>
    %417 = vector.extract_strided_slice %416 {offsets = [0, 0], sizes = [2, 16], strides = [1, 1]} : vector<2x32xf32> to vector<2x16xf32>
    %c0_118 = arith.constant 0 : index
    %c0_119 = arith.constant 0 : index
    %c0_120 = arith.constant 0 : index
    %418 = vector.load %arg11[%c0_118, %c0_119, %c0_120] : memref<2x8x32xf32, #tpu.memory_space<vmem>>, vector<2x1x16xf32>
    %419 = vector.shape_cast %418 : vector<2x1x16xf32> to vector<2x16xf32>
    %420 = vector.shape_cast %417 : vector<2x16xf32> to vector<2x1x16xf32>
    tpu.vector_store %arg11[%c0_118, %c0_119, %c0_120], %420 {strides = array<i32>} : memref<2x8x32xf32, #tpu.memory_space<vmem>>, vector<2x1x16xf32>,
    %421 = vector.extract_strided_slice %416 {offsets = [0, 16], sizes = [2, 16], strides = [1, 1]} : vector<2x32xf32> to vector<2x16xf32>
    %c0_121 = arith.constant 0 : index
    %c7_122 = arith.constant 7 : index
    %c16_123 = arith.constant 16 : index
    %422 = vector.load %arg11[%c0_121, %c7_122, %c16_123] : memref<2x8x32xf32, #tpu.memory_space<vmem>>, vector<2x1x16xf32>
    %423 = vector.shape_cast %422 : vector<2x1x16xf32> to vector<2x16xf32>
    %424 = vector.shape_cast %421 : vector<2x16xf32> to vector<2x1x16xf32>
    tpu.vector_store %arg11[%c0_121, %c7_122, %c16_123], %424 {strides = array<i32>} : memref<2x8x32xf32, #tpu.memory_space<vmem>>, vector<2x1x16xf32>,
    %425 = vector.extract_strided_slice %379 {offsets = [0, 1, 0], sizes = [2, 1, 128], strides = [1, 1, 1]} : vector<2x8x128xf32> to vector<2x1x128xf32>
    %426 = vector.shape_cast %425 : vector<2x1x128xf32> to vector<2x128xf32>
    %427 = vector.extract_strided_slice %379 {offsets = [0, 6, 0], sizes = [2, 1, 128], strides = [1, 1, 1]} : vector<2x8x128xf32> to vector<2x1x128xf32>
    %428 = vector.shape_cast %427 : vector<2x1x128xf32> to vector<2x128xf32>
    %429 = vector.shape_cast %4 : vector<1x128xi1> to vector<1x128xi1>
    %430 = vector.broadcast %429 : vector<1x128xi1> to vector<2x128xi1>
    %431 = arith.select %430, %426, %428 : vector<2x128xi1>, vector<2x128xf32>
    %cst_124 = arith.constant dense<0.000000e+00> : vector<2x128xf32>
    %432 = tpu.matmul %416, %380, %cst_124 {dimension_numbers = #tpu.dot_dimension_numbers<[1], [0], [0], [1], [0, 0, 1, 1], [], []>} : vector<2x32xf32>, vector<32x128xf32>, vector<2x128xf32> -> vector<2x128xf32>
    %433 = arith.addf %431, %432 : vector<2x128xf32>
    %434 = vector.extract_strided_slice %433 {offsets = [0, 0], sizes = [2, 32], strides = [1, 1]} : vector<2x128xf32> to vector<2x32xf32>
    %435 = arith.negf %434 : vector<2x32xf32>
    %436 = math.exp %435 : vector<2x32xf32>
    %cst_125 = arith.constant 1.000000e+00 : f32
    %437 = vector.broadcast %cst_125 : f32 to vector<2x32xf32>
    %438 = arith.addf %437, %436 : vector<2x32xf32>
    %439 = arith.divf %437, %438 : vector<2x32xf32>
    %440 = vector.extract_strided_slice %433 {offsets = [0, 32], sizes = [2, 32], strides = [1, 1]} : vector<2x128xf32> to vector<2x32xf32>
    %441 = arith.negf %440 : vector<2x32xf32>
    %442 = math.exp %441 : vector<2x32xf32>
    %cst_126 = arith.constant 1.000000e+00 : f32
    %443 = vector.broadcast %cst_126 : f32 to vector<2x32xf32>
    %444 = arith.addf %443, %442 : vector<2x32xf32>
    %445 = arith.divf %443, %444 : vector<2x32xf32>
    %446 = vector.extract_strided_slice %433 {offsets = [0, 64], sizes = [2, 32], strides = [1, 1]} : vector<2x128xf32> to vector<2x32xf32>
    %447 = math.tanh %446 : vector<2x32xf32>
    %448 = vector.extract_strided_slice %433 {offsets = [0, 96], sizes = [2, 32], strides = [1, 1]} : vector<2x128xf32> to vector<2x32xf32>
    %449 = arith.negf %448 : vector<2x32xf32>
    %450 = math.exp %449 : vector<2x32xf32>
    %cst_127 = arith.constant 1.000000e+00 : f32
    %451 = vector.broadcast %cst_127 : f32 to vector<2x32xf32>
    %452 = arith.addf %451, %450 : vector<2x32xf32>
    %453 = arith.divf %451, %452 : vector<2x32xf32>
    %454 = arith.mulf %445, %414 : vector<2x32xf32>
    %455 = arith.mulf %439, %447 : vector<2x32xf32>
    %456 = arith.addf %454, %455 : vector<2x32xf32>
    %457 = math.tanh %456 : vector<2x32xf32>
    %458 = arith.mulf %453, %457 : vector<2x32xf32>
    %459 = vector.extract_strided_slice %458 {offsets = [0, 0], sizes = [2, 16], strides = [1, 1]} : vector<2x32xf32> to vector<2x16xf32>
    %c0_128 = arith.constant 0 : index
    %c1_129 = arith.constant 1 : index
    %c0_130 = arith.constant 0 : index
    %460 = vector.load %arg11[%c0_128, %c1_129, %c0_130] : memref<2x8x32xf32, #tpu.memory_space<vmem>>, vector<2x1x16xf32>
    %461 = vector.shape_cast %460 : vector<2x1x16xf32> to vector<2x16xf32>
    %462 = vector.shape_cast %459 : vector<2x16xf32> to vector<2x1x16xf32>
    tpu.vector_store %arg11[%c0_128, %c1_129, %c0_130], %462 {strides = array<i32>} : memref<2x8x32xf32, #tpu.memory_space<vmem>>, vector<2x1x16xf32>,
    %463 = vector.extract_strided_slice %458 {offsets = [0, 16], sizes = [2, 16], strides = [1, 1]} : vector<2x32xf32> to vector<2x16xf32>
    %c0_131 = arith.constant 0 : index
    %c6_132 = arith.constant 6 : index
    %c16_133 = arith.constant 16 : index
    %464 = vector.load %arg11[%c0_131, %c6_132, %c16_133] : memref<2x8x32xf32, #tpu.memory_space<vmem>>, vector<2x1x16xf32>
    %465 = vector.shape_cast %464 : vector<2x1x16xf32> to vector<2x16xf32>
    %466 = vector.shape_cast %463 : vector<2x16xf32> to vector<2x1x16xf32>
    tpu.vector_store %arg11[%c0_131, %c6_132, %c16_133], %466 {strides = array<i32>} : memref<2x8x32xf32, #tpu.memory_space<vmem>>, vector<2x1x16xf32>,
    %467 = vector.extract_strided_slice %379 {offsets = [0, 2, 0], sizes = [2, 1, 128], strides = [1, 1, 1]} : vector<2x8x128xf32> to vector<2x1x128xf32>
    %468 = vector.shape_cast %467 : vector<2x1x128xf32> to vector<2x128xf32>
    %469 = vector.extract_strided_slice %379 {offsets = [0, 5, 0], sizes = [2, 1, 128], strides = [1, 1, 1]} : vector<2x8x128xf32> to vector<2x1x128xf32>
    %470 = vector.shape_cast %469 : vector<2x1x128xf32> to vector<2x128xf32>
    %471 = vector.shape_cast %4 : vector<1x128xi1> to vector<1x128xi1>
    %472 = vector.broadcast %471 : vector<1x128xi1> to vector<2x128xi1>
    %473 = arith.select %472, %468, %470 : vector<2x128xi1>, vector<2x128xf32>
    %cst_134 = arith.constant dense<0.000000e+00> : vector<2x128xf32>
    %474 = tpu.matmul %458, %380, %cst_134 {dimension_numbers = #tpu.dot_dimension_numbers<[1], [0], [0], [1], [0, 0, 1, 1], [], []>} : vector<2x32xf32>, vector<32x128xf32>, vector<2x128xf32> -> vector<2x128xf32>
    %475 = arith.addf %473, %474 : vector<2x128xf32>
    %476 = vector.extract_strided_slice %475 {offsets = [0, 0], sizes = [2, 32], strides = [1, 1]} : vector<2x128xf32> to vector<2x32xf32>
    %477 = arith.negf %476 : vector<2x32xf32>
    %478 = math.exp %477 : vector<2x32xf32>
    %cst_135 = arith.constant 1.000000e+00 : f32
    %479 = vector.broadcast %cst_135 : f32 to vector<2x32xf32>
    %480 = arith.addf %479, %478 : vector<2x32xf32>
    %481 = arith.divf %479, %480 : vector<2x32xf32>
    %482 = vector.extract_strided_slice %475 {offsets = [0, 32], sizes = [2, 32], strides = [1, 1]} : vector<2x128xf32> to vector<2x32xf32>
    %483 = arith.negf %482 : vector<2x32xf32>
    %484 = math.exp %483 : vector<2x32xf32>
    %cst_136 = arith.constant 1.000000e+00 : f32
    %485 = vector.broadcast %cst_136 : f32 to vector<2x32xf32>
    %486 = arith.addf %485, %484 : vector<2x32xf32>
    %487 = arith.divf %485, %486 : vector<2x32xf32>
    %488 = vector.extract_strided_slice %475 {offsets = [0, 64], sizes = [2, 32], strides = [1, 1]} : vector<2x128xf32> to vector<2x32xf32>
    %489 = math.tanh %488 : vector<2x32xf32>
    %490 = vector.extract_strided_slice %475 {offsets = [0, 96], sizes = [2, 32], strides = [1, 1]} : vector<2x128xf32> to vector<2x32xf32>
    %491 = arith.negf %490 : vector<2x32xf32>
    %492 = math.exp %491 : vector<2x32xf32>
    %cst_137 = arith.constant 1.000000e+00 : f32
    %493 = vector.broadcast %cst_137 : f32 to vector<2x32xf32>
    %494 = arith.addf %493, %492 : vector<2x32xf32>
    %495 = arith.divf %493, %494 : vector<2x32xf32>
    %496 = arith.mulf %487, %456 : vector<2x32xf32>
    %497 = arith.mulf %481, %489 : vector<2x32xf32>
    %498 = arith.addf %496, %497 : vector<2x32xf32>
    %499 = math.tanh %498 : vector<2x32xf32>
    %500 = arith.mulf %495, %499 : vector<2x32xf32>
    %501 = vector.extract_strided_slice %500 {offsets = [0, 0], sizes = [2, 16], strides = [1, 1]} : vector<2x32xf32> to vector<2x16xf32>
    %c0_138 = arith.constant 0 : index
    %c2_139 = arith.constant 2 : index
    %c0_140 = arith.constant 0 : index
    %502 = vector.load %arg11[%c0_138, %c2_139, %c0_140] : memref<2x8x32xf32, #tpu.memory_space<vmem>>, vector<2x1x16xf32>
    %503 = vector.shape_cast %502 : vector<2x1x16xf32> to vector<2x16xf32>
    %504 = vector.shape_cast %501 : vector<2x16xf32> to vector<2x1x16xf32>
    tpu.vector_store %arg11[%c0_138, %c2_139, %c0_140], %504 {strides = array<i32>} : memref<2x8x32xf32, #tpu.memory_space<vmem>>, vector<2x1x16xf32>,
    %505 = vector.extract_strided_slice %500 {offsets = [0, 16], sizes = [2, 16], strides = [1, 1]} : vector<2x32xf32> to vector<2x16xf32>
    %c0_141 = arith.constant 0 : index
    %c5_142 = arith.constant 5 : index
    %c16_143 = arith.constant 16 : index
    %506 = vector.load %arg11[%c0_141, %c5_142, %c16_143] : memref<2x8x32xf32, #tpu.memory_space<vmem>>, vector<2x1x16xf32>
    %507 = vector.shape_cast %506 : vector<2x1x16xf32> to vector<2x16xf32>
    %508 = vector.shape_cast %505 : vector<2x16xf32> to vector<2x1x16xf32>
    tpu.vector_store %arg11[%c0_141, %c5_142, %c16_143], %508 {strides = array<i32>} : memref<2x8x32xf32, #tpu.memory_space<vmem>>, vector<2x1x16xf32>,
    %509 = vector.extract_strided_slice %379 {offsets = [0, 3, 0], sizes = [2, 1, 128], strides = [1, 1, 1]} : vector<2x8x128xf32> to vector<2x1x128xf32>
    %510 = vector.shape_cast %509 : vector<2x1x128xf32> to vector<2x128xf32>
    %511 = vector.extract_strided_slice %379 {offsets = [0, 4, 0], sizes = [2, 1, 128], strides = [1, 1, 1]} : vector<2x8x128xf32> to vector<2x1x128xf32>
    %512 = vector.shape_cast %511 : vector<2x1x128xf32> to vector<2x128xf32>
    %513 = vector.shape_cast %4 : vector<1x128xi1> to vector<1x128xi1>
    %514 = vector.broadcast %513 : vector<1x128xi1> to vector<2x128xi1>
    %515 = arith.select %514, %510, %512 : vector<2x128xi1>, vector<2x128xf32>
    %cst_144 = arith.constant dense<0.000000e+00> : vector<2x128xf32>
    %516 = tpu.matmul %500, %380, %cst_144 {dimension_numbers = #tpu.dot_dimension_numbers<[1], [0], [0], [1], [0, 0, 1, 1], [], []>} : vector<2x32xf32>, vector<32x128xf32>, vector<2x128xf32> -> vector<2x128xf32>
    %517 = arith.addf %515, %516 : vector<2x128xf32>
    %518 = vector.extract_strided_slice %517 {offsets = [0, 0], sizes = [2, 32], strides = [1, 1]} : vector<2x128xf32> to vector<2x32xf32>
    %519 = arith.negf %518 : vector<2x32xf32>
    %520 = math.exp %519 : vector<2x32xf32>
    %cst_145 = arith.constant 1.000000e+00 : f32
    %521 = vector.broadcast %cst_145 : f32 to vector<2x32xf32>
    %522 = arith.addf %521, %520 : vector<2x32xf32>
    %523 = arith.divf %521, %522 : vector<2x32xf32>
    %524 = vector.extract_strided_slice %517 {offsets = [0, 32], sizes = [2, 32], strides = [1, 1]} : vector<2x128xf32> to vector<2x32xf32>
    %525 = arith.negf %524 : vector<2x32xf32>
    %526 = math.exp %525 : vector<2x32xf32>
    %cst_146 = arith.constant 1.000000e+00 : f32
    %527 = vector.broadcast %cst_146 : f32 to vector<2x32xf32>
    %528 = arith.addf %527, %526 : vector<2x32xf32>
    %529 = arith.divf %527, %528 : vector<2x32xf32>
    %530 = vector.extract_strided_slice %517 {offsets = [0, 64], sizes = [2, 32], strides = [1, 1]} : vector<2x128xf32> to vector<2x32xf32>
    %531 = math.tanh %530 : vector<2x32xf32>
    %532 = vector.extract_strided_slice %517 {offsets = [0, 96], sizes = [2, 32], strides = [1, 1]} : vector<2x128xf32> to vector<2x32xf32>
    %533 = arith.negf %532 : vector<2x32xf32>
    %534 = math.exp %533 : vector<2x32xf32>
    %cst_147 = arith.constant 1.000000e+00 : f32
    %535 = vector.broadcast %cst_147 : f32 to vector<2x32xf32>
    %536 = arith.addf %535, %534 : vector<2x32xf32>
    %537 = arith.divf %535, %536 : vector<2x32xf32>
    %538 = arith.mulf %529, %498 : vector<2x32xf32>
    %539 = arith.mulf %523, %531 : vector<2x32xf32>
    %540 = arith.addf %538, %539 : vector<2x32xf32>
    %541 = math.tanh %540 : vector<2x32xf32>
    %542 = arith.mulf %537, %541 : vector<2x32xf32>
    %543 = vector.extract_strided_slice %542 {offsets = [0, 0], sizes = [2, 16], strides = [1, 1]} : vector<2x32xf32> to vector<2x16xf32>
    %c0_148 = arith.constant 0 : index
    %c3_149 = arith.constant 3 : index
    %c0_150 = arith.constant 0 : index
    %544 = vector.load %arg11[%c0_148, %c3_149, %c0_150] : memref<2x8x32xf32, #tpu.memory_space<vmem>>, vector<2x1x16xf32>
    %545 = vector.shape_cast %544 : vector<2x1x16xf32> to vector<2x16xf32>
    %546 = vector.shape_cast %543 : vector<2x16xf32> to vector<2x1x16xf32>
    tpu.vector_store %arg11[%c0_148, %c3_149, %c0_150], %546 {strides = array<i32>} : memref<2x8x32xf32, #tpu.memory_space<vmem>>, vector<2x1x16xf32>,
    %547 = vector.extract_strided_slice %542 {offsets = [0, 16], sizes = [2, 16], strides = [1, 1]} : vector<2x32xf32> to vector<2x16xf32>
    %c0_151 = arith.constant 0 : index
    %c4_152 = arith.constant 4 : index
    %c16_153 = arith.constant 16 : index
    %548 = vector.load %arg11[%c0_151, %c4_152, %c16_153] : memref<2x8x32xf32, #tpu.memory_space<vmem>>, vector<2x1x16xf32>
    %549 = vector.shape_cast %548 : vector<2x1x16xf32> to vector<2x16xf32>
    %550 = vector.shape_cast %547 : vector<2x16xf32> to vector<2x1x16xf32>
    tpu.vector_store %arg11[%c0_151, %c4_152, %c16_153], %550 {strides = array<i32>} : memref<2x8x32xf32, #tpu.memory_space<vmem>>, vector<2x1x16xf32>,
    %551 = vector.extract_strided_slice %379 {offsets = [0, 4, 0], sizes = [2, 1, 128], strides = [1, 1, 1]} : vector<2x8x128xf32> to vector<2x1x128xf32>
    %552 = vector.shape_cast %551 : vector<2x1x128xf32> to vector<2x128xf32>
    %553 = vector.extract_strided_slice %379 {offsets = [0, 3, 0], sizes = [2, 1, 128], strides = [1, 1, 1]} : vector<2x8x128xf32> to vector<2x1x128xf32>
    %554 = vector.shape_cast %553 : vector<2x1x128xf32> to vector<2x128xf32>
    %555 = vector.shape_cast %4 : vector<1x128xi1> to vector<1x128xi1>
    %556 = vector.broadcast %555 : vector<1x128xi1> to vector<2x128xi1>
    %557 = arith.select %556, %552, %554 : vector<2x128xi1>, vector<2x128xf32>
    %cst_154 = arith.constant dense<0.000000e+00> : vector<2x128xf32>
    %558 = tpu.matmul %542, %380, %cst_154 {dimension_numbers = #tpu.dot_dimension_numbers<[1], [0], [0], [1], [0, 0, 1, 1], [], []>} : vector<2x32xf32>, vector<32x128xf32>, vector<2x128xf32> -> vector<2x128xf32>
    %559 = arith.addf %557, %558 : vector<2x128xf32>
    %560 = vector.extract_strided_slice %559 {offsets = [0, 0], sizes = [2, 32], strides = [1, 1]} : vector<2x128xf32> to vector<2x32xf32>
    %561 = arith.negf %560 : vector<2x32xf32>
    %562 = math.exp %561 : vector<2x32xf32>
    %cst_155 = arith.constant 1.000000e+00 : f32
    %563 = vector.broadcast %cst_155 : f32 to vector<2x32xf32>
    %564 = arith.addf %563, %562 : vector<2x32xf32>
    %565 = arith.divf %563, %564 : vector<2x32xf32>
    %566 = vector.extract_strided_slice %559 {offsets = [0, 32], sizes = [2, 32], strides = [1, 1]} : vector<2x128xf32> to vector<2x32xf32>
    %567 = arith.negf %566 : vector<2x32xf32>
    %568 = math.exp %567 : vector<2x32xf32>
    %cst_156 = arith.constant 1.000000e+00 : f32
    %569 = vector.broadcast %cst_156 : f32 to vector<2x32xf32>
    %570 = arith.addf %569, %568 : vector<2x32xf32>
    %571 = arith.divf %569, %570 : vector<2x32xf32>
    %572 = vector.extract_strided_slice %559 {offsets = [0, 64], sizes = [2, 32], strides = [1, 1]} : vector<2x128xf32> to vector<2x32xf32>
    %573 = math.tanh %572 : vector<2x32xf32>
    %574 = vector.extract_strided_slice %559 {offsets = [0, 96], sizes = [2, 32], strides = [1, 1]} : vector<2x128xf32> to vector<2x32xf32>
    %575 = arith.negf %574 : vector<2x32xf32>
    %576 = math.exp %575 : vector<2x32xf32>
    %cst_157 = arith.constant 1.000000e+00 : f32
    %577 = vector.broadcast %cst_157 : f32 to vector<2x32xf32>
    %578 = arith.addf %577, %576 : vector<2x32xf32>
    %579 = arith.divf %577, %578 : vector<2x32xf32>
    %580 = arith.mulf %571, %540 : vector<2x32xf32>
    %581 = arith.mulf %565, %573 : vector<2x32xf32>
    %582 = arith.addf %580, %581 : vector<2x32xf32>
    %583 = math.tanh %582 : vector<2x32xf32>
    %584 = arith.mulf %579, %583 : vector<2x32xf32>
    %585 = vector.extract_strided_slice %584 {offsets = [0, 0], sizes = [2, 16], strides = [1, 1]} : vector<2x32xf32> to vector<2x16xf32>
    %c0_158 = arith.constant 0 : index
    %c4_159 = arith.constant 4 : index
    %c0_160 = arith.constant 0 : index
    %586 = vector.load %arg11[%c0_158, %c4_159, %c0_160] : memref<2x8x32xf32, #tpu.memory_space<vmem>>, vector<2x1x16xf32>
    %587 = vector.shape_cast %586 : vector<2x1x16xf32> to vector<2x16xf32>
    %588 = vector.shape_cast %585 : vector<2x16xf32> to vector<2x1x16xf32>
    tpu.vector_store %arg11[%c0_158, %c4_159, %c0_160], %588 {strides = array<i32>} : memref<2x8x32xf32, #tpu.memory_space<vmem>>, vector<2x1x16xf32>,
    %589 = vector.extract_strided_slice %584 {offsets = [0, 16], sizes = [2, 16], strides = [1, 1]} : vector<2x32xf32> to vector<2x16xf32>
    %c0_161 = arith.constant 0 : index
    %c3_162 = arith.constant 3 : index
    %c16_163 = arith.constant 16 : index
    %590 = vector.load %arg11[%c0_161, %c3_162, %c16_163] : memref<2x8x32xf32, #tpu.memory_space<vmem>>, vector<2x1x16xf32>
    %591 = vector.shape_cast %590 : vector<2x1x16xf32> to vector<2x16xf32>
    %592 = vector.shape_cast %589 : vector<2x16xf32> to vector<2x1x16xf32>
    tpu.vector_store %arg11[%c0_161, %c3_162, %c16_163], %592 {strides = array<i32>} : memref<2x8x32xf32, #tpu.memory_space<vmem>>, vector<2x1x16xf32>,
    %593 = vector.extract_strided_slice %379 {offsets = [0, 5, 0], sizes = [2, 1, 128], strides = [1, 1, 1]} : vector<2x8x128xf32> to vector<2x1x128xf32>
    %594 = vector.shape_cast %593 : vector<2x1x128xf32> to vector<2x128xf32>
    %595 = vector.extract_strided_slice %379 {offsets = [0, 2, 0], sizes = [2, 1, 128], strides = [1, 1, 1]} : vector<2x8x128xf32> to vector<2x1x128xf32>
    %596 = vector.shape_cast %595 : vector<2x1x128xf32> to vector<2x128xf32>
    %597 = vector.shape_cast %4 : vector<1x128xi1> to vector<1x128xi1>
    %598 = vector.broadcast %597 : vector<1x128xi1> to vector<2x128xi1>
    %599 = arith.select %598, %594, %596 : vector<2x128xi1>, vector<2x128xf32>
    %cst_164 = arith.constant dense<0.000000e+00> : vector<2x128xf32>
    %600 = tpu.matmul %584, %380, %cst_164 {dimension_numbers = #tpu.dot_dimension_numbers<[1], [0], [0], [1], [0, 0, 1, 1], [], []>} : vector<2x32xf32>, vector<32x128xf32>, vector<2x128xf32> -> vector<2x128xf32>
    %601 = arith.addf %599, %600 : vector<2x128xf32>
    %602 = vector.extract_strided_slice %601 {offsets = [0, 0], sizes = [2, 32], strides = [1, 1]} : vector<2x128xf32> to vector<2x32xf32>
    %603 = arith.negf %602 : vector<2x32xf32>
    %604 = math.exp %603 : vector<2x32xf32>
    %cst_165 = arith.constant 1.000000e+00 : f32
    %605 = vector.broadcast %cst_165 : f32 to vector<2x32xf32>
    %606 = arith.addf %605, %604 : vector<2x32xf32>
    %607 = arith.divf %605, %606 : vector<2x32xf32>
    %608 = vector.extract_strided_slice %601 {offsets = [0, 32], sizes = [2, 32], strides = [1, 1]} : vector<2x128xf32> to vector<2x32xf32>
    %609 = arith.negf %608 : vector<2x32xf32>
    %610 = math.exp %609 : vector<2x32xf32>
    %cst_166 = arith.constant 1.000000e+00 : f32
    %611 = vector.broadcast %cst_166 : f32 to vector<2x32xf32>
    %612 = arith.addf %611, %610 : vector<2x32xf32>
    %613 = arith.divf %611, %612 : vector<2x32xf32>
    %614 = vector.extract_strided_slice %601 {offsets = [0, 64], sizes = [2, 32], strides = [1, 1]} : vector<2x128xf32> to vector<2x32xf32>
    %615 = math.tanh %614 : vector<2x32xf32>
    %616 = vector.extract_strided_slice %601 {offsets = [0, 96], sizes = [2, 32], strides = [1, 1]} : vector<2x128xf32> to vector<2x32xf32>
    %617 = arith.negf %616 : vector<2x32xf32>
    %618 = math.exp %617 : vector<2x32xf32>
    %cst_167 = arith.constant 1.000000e+00 : f32
    %619 = vector.broadcast %cst_167 : f32 to vector<2x32xf32>
    %620 = arith.addf %619, %618 : vector<2x32xf32>
    %621 = arith.divf %619, %620 : vector<2x32xf32>
    %622 = arith.mulf %613, %582 : vector<2x32xf32>
    %623 = arith.mulf %607, %615 : vector<2x32xf32>
    %624 = arith.addf %622, %623 : vector<2x32xf32>
    %625 = math.tanh %624 : vector<2x32xf32>
    %626 = arith.mulf %621, %625 : vector<2x32xf32>
    %627 = vector.extract_strided_slice %626 {offsets = [0, 0], sizes = [2, 16], strides = [1, 1]} : vector<2x32xf32> to vector<2x16xf32>
    %c0_168 = arith.constant 0 : index
    %c5_169 = arith.constant 5 : index
    %c0_170 = arith.constant 0 : index
    %628 = vector.load %arg11[%c0_168, %c5_169, %c0_170] : memref<2x8x32xf32, #tpu.memory_space<vmem>>, vector<2x1x16xf32>
    %629 = vector.shape_cast %628 : vector<2x1x16xf32> to vector<2x16xf32>
    %630 = vector.shape_cast %627 : vector<2x16xf32> to vector<2x1x16xf32>
    tpu.vector_store %arg11[%c0_168, %c5_169, %c0_170], %630 {strides = array<i32>} : memref<2x8x32xf32, #tpu.memory_space<vmem>>, vector<2x1x16xf32>,
    %631 = vector.extract_strided_slice %626 {offsets = [0, 16], sizes = [2, 16], strides = [1, 1]} : vector<2x32xf32> to vector<2x16xf32>
    %c0_171 = arith.constant 0 : index
    %c2_172 = arith.constant 2 : index
    %c16_173 = arith.constant 16 : index
    %632 = vector.load %arg11[%c0_171, %c2_172, %c16_173] : memref<2x8x32xf32, #tpu.memory_space<vmem>>, vector<2x1x16xf32>
    %633 = vector.shape_cast %632 : vector<2x1x16xf32> to vector<2x16xf32>
    %634 = vector.shape_cast %631 : vector<2x16xf32> to vector<2x1x16xf32>
    tpu.vector_store %arg11[%c0_171, %c2_172, %c16_173], %634 {strides = array<i32>} : memref<2x8x32xf32, #tpu.memory_space<vmem>>, vector<2x1x16xf32>,
    %635 = vector.extract_strided_slice %379 {offsets = [0, 6, 0], sizes = [2, 1, 128], strides = [1, 1, 1]} : vector<2x8x128xf32> to vector<2x1x128xf32>
    %636 = vector.shape_cast %635 : vector<2x1x128xf32> to vector<2x128xf32>
    %637 = vector.extract_strided_slice %379 {offsets = [0, 1, 0], sizes = [2, 1, 128], strides = [1, 1, 1]} : vector<2x8x128xf32> to vector<2x1x128xf32>
    %638 = vector.shape_cast %637 : vector<2x1x128xf32> to vector<2x128xf32>
    %639 = vector.shape_cast %4 : vector<1x128xi1> to vector<1x128xi1>
    %640 = vector.broadcast %639 : vector<1x128xi1> to vector<2x128xi1>
    %641 = arith.select %640, %636, %638 : vector<2x128xi1>, vector<2x128xf32>
    %cst_174 = arith.constant dense<0.000000e+00> : vector<2x128xf32>
    %642 = tpu.matmul %626, %380, %cst_174 {dimension_numbers = #tpu.dot_dimension_numbers<[1], [0], [0], [1], [0, 0, 1, 1], [], []>} : vector<2x32xf32>, vector<32x128xf32>, vector<2x128xf32> -> vector<2x128xf32>
    %643 = arith.addf %641, %642 : vector<2x128xf32>
    %644 = vector.extract_strided_slice %643 {offsets = [0, 0], sizes = [2, 32], strides = [1, 1]} : vector<2x128xf32> to vector<2x32xf32>
    %645 = arith.negf %644 : vector<2x32xf32>
    %646 = math.exp %645 : vector<2x32xf32>
    %cst_175 = arith.constant 1.000000e+00 : f32
    %647 = vector.broadcast %cst_175 : f32 to vector<2x32xf32>
    %648 = arith.addf %647, %646 : vector<2x32xf32>
    %649 = arith.divf %647, %648 : vector<2x32xf32>
    %650 = vector.extract_strided_slice %643 {offsets = [0, 32], sizes = [2, 32], strides = [1, 1]} : vector<2x128xf32> to vector<2x32xf32>
    %651 = arith.negf %650 : vector<2x32xf32>
    %652 = math.exp %651 : vector<2x32xf32>
    %cst_176 = arith.constant 1.000000e+00 : f32
    %653 = vector.broadcast %cst_176 : f32 to vector<2x32xf32>
    %654 = arith.addf %653, %652 : vector<2x32xf32>
    %655 = arith.divf %653, %654 : vector<2x32xf32>
    %656 = vector.extract_strided_slice %643 {offsets = [0, 64], sizes = [2, 32], strides = [1, 1]} : vector<2x128xf32> to vector<2x32xf32>
    %657 = math.tanh %656 : vector<2x32xf32>
    %658 = vector.extract_strided_slice %643 {offsets = [0, 96], sizes = [2, 32], strides = [1, 1]} : vector<2x128xf32> to vector<2x32xf32>
    %659 = arith.negf %658 : vector<2x32xf32>
    %660 = math.exp %659 : vector<2x32xf32>
    %cst_177 = arith.constant 1.000000e+00 : f32
    %661 = vector.broadcast %cst_177 : f32 to vector<2x32xf32>
    %662 = arith.addf %661, %660 : vector<2x32xf32>
    %663 = arith.divf %661, %662 : vector<2x32xf32>
    %664 = arith.mulf %655, %624 : vector<2x32xf32>
    %665 = arith.mulf %649, %657 : vector<2x32xf32>
    %666 = arith.addf %664, %665 : vector<2x32xf32>
    %667 = math.tanh %666 : vector<2x32xf32>
    %668 = arith.mulf %663, %667 : vector<2x32xf32>
    %669 = vector.extract_strided_slice %668 {offsets = [0, 0], sizes = [2, 16], strides = [1, 1]} : vector<2x32xf32> to vector<2x16xf32>
    %c0_178 = arith.constant 0 : index
    %c6_179 = arith.constant 6 : index
    %c0_180 = arith.constant 0 : index
    %670 = vector.load %arg11[%c0_178, %c6_179, %c0_180] : memref<2x8x32xf32, #tpu.memory_space<vmem>>, vector<2x1x16xf32>
    %671 = vector.shape_cast %670 : vector<2x1x16xf32> to vector<2x16xf32>
    %672 = vector.shape_cast %669 : vector<2x16xf32> to vector<2x1x16xf32>
    tpu.vector_store %arg11[%c0_178, %c6_179, %c0_180], %672 {strides = array<i32>} : memref<2x8x32xf32, #tpu.memory_space<vmem>>, vector<2x1x16xf32>,
    %673 = vector.extract_strided_slice %668 {offsets = [0, 16], sizes = [2, 16], strides = [1, 1]} : vector<2x32xf32> to vector<2x16xf32>
    %c0_181 = arith.constant 0 : index
    %c1_182 = arith.constant 1 : index
    %c16_183 = arith.constant 16 : index
    %674 = vector.load %arg11[%c0_181, %c1_182, %c16_183] : memref<2x8x32xf32, #tpu.memory_space<vmem>>, vector<2x1x16xf32>
    %675 = vector.shape_cast %674 : vector<2x1x16xf32> to vector<2x16xf32>
    %676 = vector.shape_cast %673 : vector<2x16xf32> to vector<2x1x16xf32>
    tpu.vector_store %arg11[%c0_181, %c1_182, %c16_183], %676 {strides = array<i32>} : memref<2x8x32xf32, #tpu.memory_space<vmem>>, vector<2x1x16xf32>,
    %677 = vector.extract_strided_slice %379 {offsets = [0, 7, 0], sizes = [2, 1, 128], strides = [1, 1, 1]} : vector<2x8x128xf32> to vector<2x1x128xf32>
    %678 = vector.shape_cast %677 : vector<2x1x128xf32> to vector<2x128xf32>
    %679 = vector.extract_strided_slice %379 {offsets = [0, 0, 0], sizes = [2, 1, 128], strides = [1, 1, 1]} : vector<2x8x128xf32> to vector<2x1x128xf32>
    %680 = vector.shape_cast %679 : vector<2x1x128xf32> to vector<2x128xf32>
    %681 = vector.shape_cast %4 : vector<1x128xi1> to vector<1x128xi1>
    %682 = vector.broadcast %681 : vector<1x128xi1> to vector<2x128xi1>
    %683 = arith.select %682, %678, %680 : vector<2x128xi1>, vector<2x128xf32>
    %cst_184 = arith.constant dense<0.000000e+00> : vector<2x128xf32>
    %684 = tpu.matmul %668, %380, %cst_184 {dimension_numbers = #tpu.dot_dimension_numbers<[1], [0], [0], [1], [0, 0, 1, 1], [], []>} : vector<2x32xf32>, vector<32x128xf32>, vector<2x128xf32> -> vector<2x128xf32>
    %685 = arith.addf %683, %684 : vector<2x128xf32>
    %686 = vector.extract_strided_slice %685 {offsets = [0, 0], sizes = [2, 32], strides = [1, 1]} : vector<2x128xf32> to vector<2x32xf32>
    %687 = arith.negf %686 : vector<2x32xf32>
    %688 = math.exp %687 : vector<2x32xf32>
    %cst_185 = arith.constant 1.000000e+00 : f32
    %689 = vector.broadcast %cst_185 : f32 to vector<2x32xf32>
    %690 = arith.addf %689, %688 : vector<2x32xf32>
    %691 = arith.divf %689, %690 : vector<2x32xf32>
    %692 = vector.extract_strided_slice %685 {offsets = [0, 32], sizes = [2, 32], strides = [1, 1]} : vector<2x128xf32> to vector<2x32xf32>
    %693 = arith.negf %692 : vector<2x32xf32>
    %694 = math.exp %693 : vector<2x32xf32>
    %cst_186 = arith.constant 1.000000e+00 : f32
    %695 = vector.broadcast %cst_186 : f32 to vector<2x32xf32>
    %696 = arith.addf %695, %694 : vector<2x32xf32>
    %697 = arith.divf %695, %696 : vector<2x32xf32>
    %698 = vector.extract_strided_slice %685 {offsets = [0, 64], sizes = [2, 32], strides = [1, 1]} : vector<2x128xf32> to vector<2x32xf32>
    %699 = math.tanh %698 : vector<2x32xf32>
    %700 = vector.extract_strided_slice %685 {offsets = [0, 96], sizes = [2, 32], strides = [1, 1]} : vector<2x128xf32> to vector<2x32xf32>
    %701 = arith.negf %700 : vector<2x32xf32>
    %702 = math.exp %701 : vector<2x32xf32>
    %cst_187 = arith.constant 1.000000e+00 : f32
    %703 = vector.broadcast %cst_187 : f32 to vector<2x32xf32>
    %704 = arith.addf %703, %702 : vector<2x32xf32>
    %705 = arith.divf %703, %704 : vector<2x32xf32>
    %706 = arith.mulf %697, %666 : vector<2x32xf32>
    %707 = arith.mulf %691, %699 : vector<2x32xf32>
    %708 = arith.addf %706, %707 : vector<2x32xf32>
    %709 = math.tanh %708 : vector<2x32xf32>
    %710 = arith.mulf %705, %709 : vector<2x32xf32>
    %711 = vector.extract_strided_slice %710 {offsets = [0, 0], sizes = [2, 16], strides = [1, 1]} : vector<2x32xf32> to vector<2x16xf32>
    %c0_188 = arith.constant 0 : index
    %c7_189 = arith.constant 7 : index
    %c0_190 = arith.constant 0 : index
    %712 = vector.load %arg11[%c0_188, %c7_189, %c0_190] : memref<2x8x32xf32, #tpu.memory_space<vmem>>, vector<2x1x16xf32>
    %713 = vector.shape_cast %712 : vector<2x1x16xf32> to vector<2x16xf32>
    %714 = vector.shape_cast %711 : vector<2x16xf32> to vector<2x1x16xf32>
    tpu.vector_store %arg11[%c0_188, %c7_189, %c0_190], %714 {strides = array<i32>} : memref<2x8x32xf32, #tpu.memory_space<vmem>>, vector<2x1x16xf32>,
    %715 = vector.extract_strided_slice %710 {offsets = [0, 16], sizes = [2, 16], strides = [1, 1]} : vector<2x32xf32> to vector<2x16xf32>
    %c0_191 = arith.constant 0 : index
    %c0_192 = arith.constant 0 : index
    %c16_193 = arith.constant 16 : index
    %716 = vector.load %arg11[%c0_191, %c0_192, %c16_193] : memref<2x8x32xf32, #tpu.memory_space<vmem>>, vector<2x1x16xf32>
    %717 = vector.shape_cast %716 : vector<2x1x16xf32> to vector<2x16xf32>
    %718 = vector.shape_cast %715 : vector<2x16xf32> to vector<2x1x16xf32>
    tpu.vector_store %arg11[%c0_191, %c0_192, %c16_193], %718 {strides = array<i32>} : memref<2x8x32xf32, #tpu.memory_space<vmem>>, vector<2x1x16xf32>,
    %c1_194 = arith.constant 1 : index
    %c0_195 = arith.constant 0 : index
    %c0_196 = arith.constant 0 : index
    %719 = vector.load %arg7[%c1_194, %c0_195, %c0_196] : memref<2x32x16xf32, #tpu.memory_space<vmem>>, vector<1x32x16xf32>
    %720 = vector.shape_cast %719 : vector<1x32x16xf32> to vector<32x16xf32>
    %cst_197 = arith.constant dense<0.000000e+00> : vector<2x16xf32>
    %721 = tpu.matmul %710, %720, %cst_197 {dimension_numbers = #tpu.dot_dimension_numbers<[1], [0], [0], [1], [0, 0, 1, 1], [], []>} : vector<2x32xf32>, vector<32x16xf32>, vector<2x16xf32> -> vector<2x16xf32>
    %c1_198 = arith.constant 1 : index
    %c0_199 = arith.constant 0 : index
    %c0_200 = arith.constant 0 : index
    %722 = vector.load %arg8[%c1_198, %c0_199, %c0_200] : memref<2x1x16xf32, #tpu.memory_space<vmem>>, vector<1x1x16xf32>
    %723 = vector.shape_cast %722 : vector<1x1x16xf32> to vector<1x16xf32>
    %724 = vector.broadcast %723 : vector<1x16xf32> to vector<2x16xf32>
    %725 = arith.addf %721, %724 : vector<2x16xf32>
    %c1_201 = arith.constant 1 : index
    %c0_202 = arith.constant 0 : index
    %c0_203 = arith.constant 0 : index
    %726 = vector.load %arg12[%c1_201, %c0_202, %c0_203] : memref<2x2x16xf32, #tpu.memory_space<vmem>>, vector<1x2x16xf32>
    %727 = vector.shape_cast %726 : vector<1x2x16xf32> to vector<2x16xf32>
    %728 = vector.shape_cast %725 : vector<2x16xf32> to vector<1x2x16xf32>
    tpu.vector_store %arg12[%c1_201, %c0_202, %c0_203], %728 {strides = array<i32>} : memref<2x2x16xf32, #tpu.memory_space<vmem>>, vector<1x2x16xf32>,
    %c1_204 = arith.constant 1 : index
    %c0_205 = arith.constant 0 : index
    %c0_206 = arith.constant 0 : index
    %729 = vector.load %arg9[%c1_204, %c0_205, %c0_206] : memref<2x32x16xf32, #tpu.memory_space<vmem>>, vector<1x32x16xf32>
    %730 = vector.shape_cast %729 : vector<1x32x16xf32> to vector<32x16xf32>
    %cst_207 = arith.constant dense<0.000000e+00> : vector<2x16xf32>
    %731 = tpu.matmul %708, %730, %cst_207 {dimension_numbers = #tpu.dot_dimension_numbers<[1], [0], [0], [1], [0, 0, 1, 1], [], []>} : vector<2x32xf32>, vector<32x16xf32>, vector<2x16xf32> -> vector<2x16xf32>
    %c1_208 = arith.constant 1 : index
    %c0_209 = arith.constant 0 : index
    %c0_210 = arith.constant 0 : index
    %732 = vector.load %arg10[%c1_208, %c0_209, %c0_210] : memref<2x1x16xf32, #tpu.memory_space<vmem>>, vector<1x1x16xf32>
    %733 = vector.shape_cast %732 : vector<1x1x16xf32> to vector<1x16xf32>
    %734 = vector.broadcast %733 : vector<1x16xf32> to vector<2x16xf32>
    %735 = arith.addf %731, %734 : vector<2x16xf32>
    %c1_211 = arith.constant 1 : index
    %c0_212 = arith.constant 0 : index
    %c0_213 = arith.constant 0 : index
    %736 = vector.load %arg13[%c1_211, %c0_212, %c0_213] : memref<2x2x16xf32, #tpu.memory_space<vmem>>, vector<1x2x16xf32>
    %737 = vector.shape_cast %736 : vector<1x2x16xf32> to vector<2x16xf32>
    %738 = vector.shape_cast %735 : vector<2x16xf32> to vector<1x2x16xf32>
    tpu.vector_store %arg13[%c1_211, %c0_212, %c0_213], %738 {strides = array<i32>} : memref<2x2x16xf32, #tpu.memory_space<vmem>>, vector<1x2x16xf32>,
    return
  }
}

</mosaic_0001>

<llo_original>
// kernel: seq2seq_forward.2
$region0: #{seq2seq_forward.2}
  #allocation0 [shape = 'u32[]', space=smem, size = 0x4, offset = 0x4, fixed_abs, tag = 'smem constant byte address 0x4 - core index']
  #allocation1 [shape = 'u32[144,128]{1,0:T(1,128)}', space=vmem, size = 0x12000, scoped, tag = 'internal scratch']
  #allocation2 [shape = 'f32[2,8,32]{2,1,0:T(8,128)}', space=vmem, size = 0x2000, scoped, tag = 'scratch operand']
  %s0 = inlined_call_operand.vmem [shape: f32[2,8,16], index: 0, kind: input, shape index: {}]
  %s1 = inlined_call_operand.vmem [shape: f32[16,128], index: 1, kind: input, shape index: {}]
  %s2 = inlined_call_operand.vmem [shape: f32[32,128], index: 2, kind: input, shape index: {}]
  %s3 = inlined_call_operand.vmem [shape: f32[1,128], index: 3, kind: input, shape index: {}]
  %s4 = inlined_call_operand.vmem [shape: f32[32,128], index: 4, kind: input, shape index: {}]
  %s5 = inlined_call_operand.vmem [shape: f32[32,128], index: 5, kind: input, shape index: {}]
  %s6 = inlined_call_operand.vmem [shape: f32[1,128], index: 6, kind: input, shape index: {}]
  %s7 = inlined_call_operand.vmem [shape: f32[2,32,16], index: 7, kind: input, shape index: {}]
  %s8 = inlined_call_operand.vmem [shape: f32[2,1,16], index: 8, kind: input, shape index: {}]
  %s9 = inlined_call_operand.vmem [shape: f32[2,32,16], index: 9, kind: input, shape index: {}]
  %s10 = inlined_call_operand.vmem [shape: f32[2,1,16], index: 10, kind: input, shape index: {}]
  %s11 = inlined_call_operand.vmem [shape: f32[2,8,32], index: 11, kind: output, shape index: {0}]
  %s12 = inlined_call_operand.vmem [shape: f32[2,2,16], index: 12, kind: output, shape index: {1}]
  %s13 = inlined_call_operand.vmem [shape: f32[2,2,16], index: 13, kind: output, shape index: {2}]
  %14 = xla_tuple %s11, %s12, %s13
  %s15 = sld [smem:[#allocation0]]
  $region70: #{seq2seq_forward.2} parent=0
    _
  %s17 = ssub.s32 1, %s15
  %s18 = scalar_select 0, %s17, %s15
  // Predicated region
  $region2: #{seq2seq_forward.2} parent=0 // pred_check
    _
  $region3: #{seq2seq_forward.2} parent=0 // pred_check_branch
    %20 = sbr.rel (0) target = $region5
  $region4: #{seq2seq_forward.2} parent=0 // pred_region
    _
  $region5: #{seq2seq_forward.2} parent=0 // pred_fallthru
    _
  // Predicated region
  $region6: #{seq2seq_forward.2} parent=0 // pred_check
    _
  $region7: #{seq2seq_forward.2} parent=0 // pred_check_branch
    %22 = sbr.rel (0) target = $region9
  $region8: #{seq2seq_forward.2} parent=0 // pred_region
    _
  $region9: #{seq2seq_forward.2} parent=0 // pred_fallthru
    _
  // Predicated region
  $region10: #{seq2seq_forward.2} parent=0 // pred_check
    _
  $region11: #{seq2seq_forward.2} parent=0 // pred_check_branch
    %24 = sbr.rel (0) target = $region13
  $region12: #{seq2seq_forward.2} parent=0 // pred_region
    _
  $region13: #{seq2seq_forward.2} parent=0 // pred_fallthru
    _
  // Predicated region
  $region14: #{seq2seq_forward.2} parent=0 // pred_check
    _
  $region15: #{seq2seq_forward.2} parent=0 // pred_check_branch
    %26 = sbr.rel (0) target = $region17
  $region16: #{seq2seq_forward.2} parent=0 // pred_region
    _
  $region17: #{seq2seq_forward.2} parent=0 // pred_fallthru
    _
  // Predicated region
  $region18: #{seq2seq_forward.2} parent=0 // pred_check
    _
  $region19: #{seq2seq_forward.2} parent=0 // pred_check_branch
    %28 = sbr.rel (0) target = $region21
  $region20: #{seq2seq_forward.2} parent=0 // pred_region
    _
  $region21: #{seq2seq_forward.2} parent=0 // pred_fallthru
    _
  // Predicated region
  $region22: #{seq2seq_forward.2} parent=0 // pred_check
    _
  $region23: #{seq2seq_forward.2} parent=0 // pred_check_branch
    %30 = sbr.rel (0) target = $region25
  $region24: #{seq2seq_forward.2} parent=0 // pred_region
    _
  $region25: #{seq2seq_forward.2} parent=0 // pred_fallthru
    _
  // Predicated region
  $region26: #{seq2seq_forward.2} parent=0 // pred_check
    _
  $region27: #{seq2seq_forward.2} parent=0 // pred_check_branch
    %32 = sbr.rel (0) target = $region29
  $region28: #{seq2seq_forward.2} parent=0 // pred_region
    _
  $region29: #{seq2seq_forward.2} parent=0 // pred_fallthru
    _
  // Predicated region
  $region30: #{seq2seq_forward.2} parent=0 // pred_check
    _
  $region31: #{seq2seq_forward.2} parent=0 // pred_check_branch
    %34 = sbr.rel (0) target = $region33
  $region32: #{seq2seq_forward.2} parent=0 // pred_region
    _
  $region33: #{seq2seq_forward.2} parent=0 // pred_fallthru
    _
  // Predicated region
  $region34: #{seq2seq_forward.2} parent=0 // pred_check
    _
  $region35: #{seq2seq_forward.2} parent=0 // pred_check_branch
    %36 = sbr.rel (0) target = $region37
  $region36: #{seq2seq_forward.2} parent=0 // pred_region
    _
  $region37: #{seq2seq_forward.2} parent=0 // pred_fallthru
    _
  // Predicated region
  $region38: #{seq2seq_forward.2} parent=0 // pred_check
    _
  $region39: #{seq2seq_forward.2} parent=0 // pred_check_branch
    %38 = sbr.rel (0) target = $region41
  $region40: #{seq2seq_forward.2} parent=0 // pred_region
    _
  $region41: #{seq2seq_forward.2} parent=0 // pred_fallthru
    _
  // Predicated region
  $region42: #{seq2seq_forward.2} parent=0 // pred_check
    _
  $region43: #{seq2seq_forward.2} parent=0 // pred_check_branch
    %40 = sbr.rel (0) target = $region45
  $region44: #{seq2seq_forward.2} parent=0 // pred_region
    _
  $region45: #{seq2seq_forward.2} parent=0 // pred_fallthru
    _
  %v41 = vlaneseq
  %v42 = vand.u32 %v41, 127
  %v43 = vand.u32 %v42, 16
  %vm44 = vcmp.eq.s32.totalorder %v43, 0
  %v45 = vld [vmem:[%s0] sm:$0xff]
  %v46 = vld [vmem:[%s0 + $0x8] sm:$0xff]
  %v47 = vld [vmem:[%s1] sm:$0xff]
  %v48 = vld [vmem:[%s1 + $0x8] sm:$0xff]
  %v49 = vld [vmem:[%s3] sm:$0x1]
  %v51 = vlaneseq
  %v52 = vshrl.u32 %v51, 7
  %v53 = vsub.s32 0, %v52
  %v54 = vrot.slane %v49, %v53
  %vm56 = vcmask 130048
  %v58 = vsel %vm56, %v45, 0
  %v61 = vsel %vm56, %v46, 0
  %63 = vmatprep.subr.mxu0 0.0
  %64 = vmatpush1.msra.mxu0 %v47
  %65 = vmatprep.subr.mxu0 0.0
  %66 = vmatpush1.msra.mxu0 %v48
  %67 = vmatprep.subr.mxu0 0.0
  %68 = vmatpush1.msra.mxu0 0.0
  %69 = vmatprep.subr.mxu0 0.0
  %70 = vmatpush1.msra.mxu0 0.0
  %71 = vmatprep.subr.mxu0 0.0
  %72 = vmatpush1.msra.mxu0 0.0
  %73 = vmatprep.subr.mxu0 0.0
  %74 = vmatpush1.msra.mxu0 0.0
  %75 = vmatprep.subr.mxu0 0.0
  %76 = vmatpush1.msra.mxu0 0.0
  %77 = vmatprep.subr.mxu0 0.0
  %78 = vmatpush1.msra.mxu0 0.0
  %79 = vmatprep.subr.mxu0 0.0
  %80 = vmatpush1.msra.mxu0 0.0
  %81 = vmatprep.subr.mxu0 0.0
  %82 = vmatpush1.msra.mxu0 0.0
  %83 = vmatprep.subr.mxu0 0.0
  %84 = vmatpush1.msra.mxu0 0.0
  %85 = vmatprep.subr.mxu0 0.0
  %86 = vmatpush1.msra.mxu0 0.0
  %87 = vmatprep.subr.mxu0 0.0
  %88 = vmatpush1.msra.mxu0 0.0
  %89 = vmatprep.subr.mxu0 0.0
  %90 = vmatpush1.msra.mxu0 0.0
  %91 = vmatprep.subr.mxu0 0.0
  %92 = vmatpush1.msra.mxu0 0.0
  %93 = vmatprep.subr.mxu0 0.0
  %94 = vmatpush1.msra.mxu0 0.0
  %95 = vmatprep.subr.mxu0 0.0
  %96 = vmatpush1.msra.mxu0 0.0
  %97 = vmatprep.subr.mxu0 0.0
  %98 = vmatpush1.msra.mxu0 0.0
  %99 = vmatprep.subr.mxu0 0.0
  %100 = vmatpush1.msra.mxu0 0.0
  %101 = vmatprep.subr.mxu0 0.0
  %102 = vmatpush1.msra.mxu0 0.0
  %103 = vmatprep.subr.mxu0 0.0
  %104 = vmatpush1.msra.mxu0 0.0
  %105 = vmatprep.subr.mxu0 0.0
  %106 = vmatpush1.msra.mxu0 0.0
  %107 = vmatprep.subr.mxu0 0.0
  %108 = vmatpush1.msra.mxu0 0.0
  %109 = vmatprep.subr.mxu0 0.0
  %110 = vmatpush1.msra.mxu0 0.0
  %111 = vmatprep.subr.mxu0 0.0
  %112 = vmatpush1.msra.mxu0 0.0
  %113 = vmatprep.subr.mxu0 0.0
  %114 = vmatpush1.msra.mxu0 0.0
  %115 = vmatprep.subr.mxu0 0.0
  %116 = vmatpush1.msra.mxu0 0.0
  %117 = vmatprep.subr.mxu0 0.0
  %118 = vmatpush1.msra.mxu0 0.0
  %119 = vmatprep.subr.mxu0 0.0
  %120 = vmatpush1.msra.mxu0 0.0
  %121 = vmatprep.subr.mxu0 0.0
  %122 = vmatpush1.msra.mxu0 0.0
  %123 = vmatprep.subr.mxu0 0.0
  %124 = vmatpush1.msra.mxu0 0.0
  %125 = vmatprep.subr.mxu0 0.0
  %126 = vmatpush1.msra.mxu0 0.0
  %127 = vmatprep.mubr.f32.mxu0 0.0
  %128 = vmatmul.mubr.f32.gmra.mrb[0].mxu0 %v58
  %v129 = vpop.f32.mrb[0].mxu0
  %v130 = vadd.f32 %v54, %v129
  %v131 = vpop.f32.mrb[0].mxu0
  %132 = vmatprep.mubr.f32.mxu0 0.0
  %133 = vmatmul.mubr.f32.gmra.mrb[0].mxu0 %v61
  %v134 = vpop.f32.mrb[0].mxu0
  %v135 = vadd.f32 %v54, %v134
  %v136 = vpop.f32.mrb[0].mxu0
  %137 = vdwg.mxu0
  %v138 = vld [vmem:[%s2] sm:$0xff]
  %v139 = vld [vmem:[%s2 + $0x8] sm:$0xff]
  %v140 = vld [vmem:[%s2 + $0x10] sm:$0xff]
  %v141 = vld [vmem:[%s2 + $0x18] sm:$0xff]
  %v142 = vsel %vm44, 1, 0
  %vm143 = vcmp.eq.s32.totalorder %v142, 1
  %v146 = vrot.slane %v135, 7
  %vm147 = vcmask 1041409
  %v148 = vsel %vm147, %v146, %v130
  %v150 = vrot.slane %v130, 7
  %v151 = vrot.slane %v135, 6
  %v152 = vsel %vm147, %v151, %v150
  %v154 = vsel %vm143, %v148, %v152
  %vm155 = vcmask 261120
  %v157 = vsel %vm155, 0.0, 0
  %159 = vmatprep.subr.mxu0 0.0
  %160 = vmatpush1.msra.mxu0 %v138
  %161 = vmatprep.subr.mxu0 0.0
  %162 = vmatpush1.msra.mxu0 %v139
  %163 = vmatprep.subr.mxu0 0.0
  %164 = vmatpush1.msra.mxu0 %v140
  %165 = vmatprep.subr.mxu0 0.0
  %166 = vmatpush1.msra.mxu0 %v141
  %167 = vmatprep.subr.mxu0 0.0
  %168 = vmatpush1.msra.mxu0 0.0
  %169 = vmatprep.subr.mxu0 0.0
  %170 = vmatpush1.msra.mxu0 0.0
  %171 = vmatprep.subr.mxu0 0.0
  %172 = vmatpush1.msra.mxu0 0.0
  %173 = vmatprep.subr.mxu0 0.0
  %174 = vmatpush1.msra.mxu0 0.0
  %175 = vmatprep.subr.mxu0 0.0
  %176 = vmatpush1.msra.mxu0 0.0
  %177 = vmatprep.subr.mxu0 0.0
  %178 = vmatpush1.msra.mxu0 0.0
  %179 = vmatprep.subr.mxu0 0.0
  %180 = vmatpush1.msra.mxu0 0.0
  %181 = vmatprep.subr.mxu0 0.0
  %182 = vmatpush1.msra.mxu0 0.0
  %183 = vmatprep.subr.mxu0 0.0
  %184 = vmatpush1.msra.mxu0 0.0
  %185 = vmatprep.subr.mxu0 0.0
  %186 = vmatpush1.msra.mxu0 0.0
  %187 = vmatprep.subr.mxu0 0.0
  %188 = vmatpush1.msra.mxu0 0.0
  %189 = vmatprep.subr.mxu0 0.0
  %190 = vmatpush1.msra.mxu0 0.0
  %191 = vmatprep.subr.mxu0 0.0
  %192 = vmatpush1.msra.mxu0 0.0
  %193 = vmatprep.subr.mxu0 0.0
  %194 = vmatpush1.msra.mxu0 0.0
  %195 = vmatprep.subr.mxu0 0.0
  %196 = vmatpush1.msra.mxu0 0.0
  %197 = vmatprep.subr.mxu0 0.0
  %198 = vmatpush1.msra.mxu0 0.0
  %199 = vmatprep.subr.mxu0 0.0
  %200 = vmatpush1.msra.mxu0 0.0
  %201 = vmatprep.subr.mxu0 0.0
  %202 = vmatpush1.msra.mxu0 0.0
  %203 = vmatprep.subr.mxu0 0.0
  %204 = vmatpush1.msra.mxu0 0.0
  %205 = vmatprep.subr.mxu0 0.0
  %206 = vmatpush1.msra.mxu0 0.0
  %207 = vmatprep.subr.mxu0 0.0
  %208 = vmatpush1.msra.mxu0 0.0
  %209 = vmatprep.subr.mxu0 0.0
  %210 = vmatpush1.msra.mxu0 0.0
  %211 = vmatprep.subr.mxu0 0.0
  %212 = vmatpush1.msra.mxu0 0.0
  %213 = vmatprep.subr.mxu0 0.0
  %214 = vmatpush1.msra.mxu0 0.0
  %215 = vmatprep.subr.mxu0 0.0
  %216 = vmatpush1.msra.mxu0 0.0
  %217 = vmatprep.subr.mxu0 0.0
  %218 = vmatpush1.msra.mxu0 0.0
  %219 = vmatprep.subr.mxu0 0.0
  %220 = vmatpush1.msra.mxu0 0.0
  %221 = vmatprep.subr.mxu0 0.0
  %222 = vmatpush1.msra.mxu0 0.0
  %223 = vmatprep.mubr.f32.mxu0 0.0
  %224 = vmatmul.mubr.f32.gmra.mrb[0].mxu0 %v157
  %v225 = vpop.f32.mrb[0].mxu0
  %v226 = vadd.f32 0.0, %v225
  %v227 = vpop.f32.mrb[0].mxu0
  %228 = vdwg.mxu0
  %v229 = vadd.f32 %v154, %v226
  %v230 = vxor.u32 %v229, 2147483648
  %v231 = vmul.f32 %v230, 1.442695
  %v232 = vpow.pop %v231
  %v233 = vadd.f32 %v232, 1.0
  %v234 = vrcp.pop %v233
  %v235 = vmul.f32 1.0, %v234
  %v236 = vtanh.pop %v229
  %v237 = vmul.f32 %v235, 0.0
  %239 = vrot.lane.b32.xlu0 %v236, 64
  %v240 = vpop.permute.xlu0 %239
  %v242 = vmul.f32 %v235, %v240
  %244 = vrot.lane.b32.xlu0 %v242, 32
  %v245 = vpop.permute.xlu0 %244
  %v247 = vadd.f32 %v237, %v245
  %v248 = vtanh.pop %v247
  %250 = vrot.lane.b32.xlu0 %v248, 64
  %v251 = vpop.permute.xlu0 %250
  %v253 = vmul.f32 %v235, %v251
  %v256 = vunpack.c.l.s4 1966171168
  %v257 = vunpack.c.0.s8 %v256
  %v258 = vlaneseq
  %v259 = vshrl.u32 %v258, 7
  %v260 = vsub.s32 %v257, %v259
  %v261 = vrot.slane %v253, %v260
  %v262 = vcombine.high %v261, %v261
  %v264 = vunpack.c.l.s4 1966171168
  %v265 = vunpack.c.0.s8 %v264
  %v266 = vlaneseq
  %v267 = vshrl.u32 %v266, 7
  %v268 = vsub.s32 %v265, %v267
  %v269 = vrot.slane %v261, %v268
  %v271 = vunpack.c.l.s4 1966171168
  %v272 = vunpack.c.0.s8 %v271
  %v273 = vlaneseq
  %v274 = vshrl.u32 %v273, 7
  %v275 = vsub.s32 %v272, %v274
  %v276 = vrot.slane %v262, %v275
  %v277 = vlaneseq
  %v278 = vshrl.u32 %v277, 7
  %v279 = vsub.s32 0, %v278
  %v280 = vrot.slane %v269, %v279
  %v281 = vlaneseq
  %v282 = vshrl.u32 %v281, 7
  %v283 = vsub.s32 0, %v282
  %v284 = vrot.slane %v276, %v283
  %285 = vrot.lane.b32.xlu0 %v280, 32
  %v286 = vpop.permute.xlu0 %285
  %287 = vrot.lane.b32.xlu0 %v284, 32
  %v288 = vpop.permute.xlu0 %287
  %vm291 = vcmask 122880
  %292 = vst.msk [vmem:[#allocation2] sm:$0x1] %vm291, %v286
  %293 = vst.msk [vmem:[#allocation2 + $0x8] sm:$0x1] %vm291, %v288
  %vm294 = vcmask 254080
  %295 = vst.msk [vmem:[#allocation2 + $0x7] sm:$0x1] %vm294, %v286
  %296 = vst.msk [vmem:[#allocation2 + $0xf] sm:$0x1] %vm294, %v288
  %v297 = vrot.slane %v130, 1
  %v298 = vsel %vm147, %v135, %v297
  %v300 = vrot.slane %v130, 6
  %v301 = vrot.slane %v135, 5
  %v302 = vsel %vm147, %v301, %v300
  %v304 = vsel %vm143, %v298, %v302
  %305 = vrot.lane.b32.xlu0 %v253, 32
  %v306 = vpop.permute.xlu0 %305
  %v307 = vsel %vm155, %v306, 0
  %309 = vmatprep.subr.mxu0 0.0
  %310 = vmatpush1.msra.mxu0 %v138
  %311 = vmatprep.subr.mxu0 0.0
  %312 = vmatpush1.msra.mxu0 %v139
  %313 = vmatprep.subr.mxu0 0.0
  %314 = vmatpush1.msra.mxu0 %v140
  %315 = vmatprep.subr.mxu0 0.0
  %316 = vmatpush1.msra.mxu0 %v141
  %317 = vmatprep.subr.mxu0 0.0
  %318 = vmatpush1.msra.mxu0 0.0
  %319 = vmatprep.subr.mxu0 0.0
  %320 = vmatpush1.msra.mxu0 0.0
  %321 = vmatprep.subr.mxu0 0.0
  %322 = vmatpush1.msra.mxu0 0.0
  %323 = vmatprep.subr.mxu0 0.0
  %324 = vmatpush1.msra.mxu0 0.0
  %325 = vmatprep.subr.mxu0 0.0
  %326 = vmatpush1.msra.mxu0 0.0
  %327 = vmatprep.subr.mxu0 0.0
  %328 = vmatpush1.msra.mxu0 0.0
  %329 = vmatprep.subr.mxu0 0.0
  %330 = vmatpush1.msra.mxu0 0.0
  %331 = vmatprep.subr.mxu0 0.0
  %332 = vmatpush1.msra.mxu0 0.0
  %333 = vmatprep.subr.mxu0 0.0
  %334 = vmatpush1.msra.mxu0 0.0
  %335 = vmatprep.subr.mxu0 0.0
  %336 = vmatpush1.msra.mxu0 0.0
  %337 = vmatprep.subr.mxu0 0.0
  %338 = vmatpush1.msra.mxu0 0.0
  %339 = vmatprep.subr.mxu0 0.0
  %340 = vmatpush1.msra.mxu0 0.0
  %341 = vmatprep.subr.mxu0 0.0
  %342 = vmatpush1.msra.mxu0 0.0
  %343 = vmatprep.subr.mxu0 0.0
  %344 = vmatpush1.msra.mxu0 0.0
  %345 = vmatprep.subr.mxu0 0.0
  %346 = vmatpush1.msra.mxu0 0.0
  %347 = vmatprep.subr.mxu0 0.0
  %348 = vmatpush1.msra.mxu0 0.0
  %349 = vmatprep.subr.mxu0 0.0
  %350 = vmatpush1.msra.mxu0 0.0
  %351 = vmatprep.subr.mxu0 0.0
  %352 = vmatpush1.msra.mxu0 0.0
  %353 = vmatprep.subr.mxu0 0.0
  %354 = vmatpush1.msra.mxu0 0.0
  %355 = vmatprep.subr.mxu0 0.0
  %356 = vmatpush1.msra.mxu0 0.0
  %357 = vmatprep.subr.mxu0 0.0
  %358 = vmatpush1.msra.mxu0 0.0
  %359 = vmatprep.subr.mxu0 0.0
  %360 = vmatpush1.msra.mxu0 0.0
  %361 = vmatprep.subr.mxu0 0.0
  %362 = vmatpush1.msra.mxu0 0.0
  %363 = vmatprep.subr.mxu0 0.0
  %364 = vmatpush1.msra.mxu0 0.0
  %365 = vmatprep.subr.mxu0 0.0
  %366 = vmatpush1.msra.mxu0 0.0
  %367 = vmatprep.subr.mxu0 0.0
  %368 = vmatpush1.msra.mxu0 0.0
  %369 = vmatprep.subr.mxu0 0.0
  %370 = vmatpush1.msra.mxu0 0.0
  %371 = vmatprep.subr.mxu0 0.0
  %372 = vmatpush1.msra.mxu0 0.0
  %373 = vmatprep.mubr.f32.mxu0 0.0
  %374 = vmatmul.mubr.f32.gmra.mrb[0].mxu0 %v307
  %v375 = vpop.f32.mrb[0].mxu0
  %v376 = vadd.f32 0.0, %v375
  %v377 = vpop.f32.mrb[0].mxu0
  %378 = vdwg.mxu0
  %v379 = vadd.f32 %v304, %v376
  %v380 = vxor.u32 %v379, 2147483648
  %v381 = vmul.f32 %v380, 1.442695
  %v382 = vpow.pop %v381
  %v383 = vadd.f32 %v382, 1.0
  %v384 = vrcp.pop %v383
  %v385 = vmul.f32 1.0, %v384
  %v386 = vtanh.pop %v379
  %v387 = vmul.f32 %v385, %v247
  %389 = vrot.lane.b32.xlu0 %v386, 64
  %v390 = vpop.permute.xlu0 %389
  %v392 = vmul.f32 %v385, %v390
  %394 = vrot.lane.b32.xlu0 %v392, 32
  %v395 = vpop.permute.xlu0 %394
  %v397 = vadd.f32 %v387, %v395
  %v398 = vtanh.pop %v397
  %400 = vrot.lane.b32.xlu0 %v398, 64
  %v401 = vpop.permute.xlu0 %400
  %v403 = vmul.f32 %v385, %v401
  %v406 = vunpack.c.l.s4 1966171168
  %v407 = vunpack.c.0.s8 %v406
  %v408 = vlaneseq
  %v409 = vshrl.u32 %v408, 7
  %v410 = vsub.s32 %v407, %v409
  %v411 = vrot.slane %v403, %v410
  %v412 = vcombine.high %v411, %v411
  %v414 = vunpack.c.l.s4 1966171168
  %v415 = vunpack.c.0.s8 %v414
  %v416 = vlaneseq
  %v417 = vshrl.u32 %v416, 7
  %v418 = vsub.s32 %v415, %v417
  %v419 = vrot.slane %v411, %v418
  %v421 = vunpack.c.l.s4 1966171168
  %v422 = vunpack.c.0.s8 %v421
  %v423 = vlaneseq
  %v424 = vshrl.u32 %v423, 7
  %v425 = vsub.s32 %v422, %v424
  %v426 = vrot.slane %v412, %v425
  %v427 = vlaneseq
  %v428 = vshrl.u32 %v427, 7
  %v429 = vsub.s32 0, %v428
  %v430 = vrot.slane %v419, %v429
  %v431 = vlaneseq
  %v432 = vshrl.u32 %v431, 7
  %v433 = vsub.s32 0, %v432
  %v434 = vrot.slane %v426, %v433
  %435 = vrot.lane.b32.xlu0 %v430, 32
  %v436 = vpop.permute.xlu0 %435
  %437 = vrot.lane.b32.xlu0 %v434, 32
  %v438 = vpop.permute.xlu0 %437
  %441 = vst.msk [vmem:[#allocation2 + $0x1] sm:$0x1] %vm291, %v436
  %442 = vst.msk [vmem:[#allocation2 + $0x9] sm:$0x1] %vm291, %v438
  %443 = vst.msk [vmem:[#allocation2 + $0x6] sm:$0x1] %vm294, %v436
  %444 = vst.msk [vmem:[#allocation2 + $0xe] sm:$0x1] %vm294, %v438
  %v445 = vrot.slane %v130, 2
  %v446 = vrot.slane %v135, 1
  %v447 = vsel %vm147, %v446, %v445
  %v449 = vrot.slane %v130, 5
  %v450 = vrot.slane %v135, 4
  %v451 = vsel %vm147, %v450, %v449
  %v453 = vsel %vm143, %v447, %v451
  %454 = vrot.lane.b32.xlu0 %v403, 32
  %v455 = vpop.permute.xlu0 %454
  %v456 = vsel %vm155, %v455, 0
  %458 = vmatprep.subr.mxu0 0.0
  %459 = vmatpush1.msra.mxu0 %v138
  %460 = vmatprep.subr.mxu0 0.0
  %461 = vmatpush1.msra.mxu0 %v139
  %462 = vmatprep.subr.mxu0 0.0
  %463 = vmatpush1.msra.mxu0 %v140
  %464 = vmatprep.subr.mxu0 0.0
  %465 = vmatpush1.msra.mxu0 %v141
  %466 = vmatprep.subr.mxu0 0.0
  %467 = vmatpush1.msra.mxu0 0.0
  %468 = vmatprep.subr.mxu0 0.0
  %469 = vmatpush1.msra.mxu0 0.0
  %470 = vmatprep.subr.mxu0 0.0
  %471 = vmatpush1.msra.mxu0 0.0
  %472 = vmatprep.subr.mxu0 0.0
  %473 = vmatpush1.msra.mxu0 0.0
  %474 = vmatprep.subr.mxu0 0.0
  %475 = vmatpush1.msra.mxu0 0.0
  %476 = vmatprep.subr.mxu0 0.0
  %477 = vmatpush1.msra.mxu0 0.0
  %478 = vmatprep.subr.mxu0 0.0
  %479 = vmatpush1.msra.mxu0 0.0
  %480 = vmatprep.subr.mxu0 0.0
  %481 = vmatpush1.msra.mxu0 0.0
  %482 = vmatprep.subr.mxu0 0.0
  %483 = vmatpush1.msra.mxu0 0.0
  %484 = vmatprep.subr.mxu0 0.0
  %485 = vmatpush1.msra.mxu0 0.0
  %486 = vmatprep.subr.mxu0 0.0
  %487 = vmatpush1.msra.mxu0 0.0
  %488 = vmatprep.subr.mxu0 0.0
  %489 = vmatpush1.msra.mxu0 0.0
  %490 = vmatprep.subr.mxu0 0.0
  %491 = vmatpush1.msra.mxu0 0.0
  %492 = vmatprep.subr.mxu0 0.0
  %493 = vmatpush1.msra.mxu0 0.0
  %494 = vmatprep.subr.mxu0 0.0
  %495 = vmatpush1.msra.mxu0 0.0
  %496 = vmatprep.subr.mxu0 0.0
  %497 = vmatpush1.msra.mxu0 0.0
  %498 = vmatprep.subr.mxu0 0.0
  %499 = vmatpush1.msra.mxu0 0.0
  %500 = vmatprep.subr.mxu0 0.0
  %501 = vmatpush1.msra.mxu0 0.0
  %502 = vmatprep.subr.mxu0 0.0
  %503 = vmatpush1.msra.mxu0 0.0
  %504 = vmatprep.subr.mxu0 0.0
  %505 = vmatpush1.msra.mxu0 0.0
  %506 = vmatprep.subr.mxu0 0.0
  %507 = vmatpush1.msra.mxu0 0.0
  %508 = vmatprep.subr.mxu0 0.0
  %509 = vmatpush1.msra.mxu0 0.0
  %510 = vmatprep.subr.mxu0 0.0
  %511 = vmatpush1.msra.mxu0 0.0
  %512 = vmatprep.subr.mxu0 0.0
  %513 = vmatpush1.msra.mxu0 0.0
  %514 = vmatprep.subr.mxu0 0.0
  %515 = vmatpush1.msra.mxu0 0.0
  %516 = vmatprep.subr.mxu0 0.0
  %517 = vmatpush1.msra.mxu0 0.0
  %518 = vmatprep.subr.mxu0 0.0
  %519 = vmatpush1.msra.mxu0 0.0
  %520 = vmatprep.subr.mxu0 0.0
  %521 = vmatpush1.msra.mxu0 0.0
  %522 = vmatprep.mubr.f32.mxu0 0.0
  %523 = vmatmul.mubr.f32.gmra.mrb[0].mxu0 %v456
  %v524 = vpop.f32.mrb[0].mxu0
  %v525 = vadd.f32 0.0, %v524
  %v526 = vpop.f32.mrb[0].mxu0
  %527 = vdwg.mxu0
  %v528 = vadd.f32 %v453, %v525
  %v529 = vxor.u32 %v528, 2147483648
  %v530 = vmul.f32 %v529, 1.442695
  %v531 = vpow.pop %v530
  %v532 = vadd.f32 %v531, 1.0
  %v533 = vrcp.pop %v532
  %v534 = vmul.f32 1.0, %v533
  %v535 = vtanh.pop %v528
  %v536 = vmul.f32 %v534, %v397
  %538 = vrot.lane.b32.xlu0 %v535, 64
  %v539 = vpop.permute.xlu0 %538
  %v541 = vmul.f32 %v534, %v539
  %543 = vrot.lane.b32.xlu0 %v541, 32
  %v544 = vpop.permute.xlu0 %543
  %v546 = vadd.f32 %v536, %v544
  %v547 = vtanh.pop %v546
  %549 = vrot.lane.b32.xlu0 %v547, 64
  %v550 = vpop.permute.xlu0 %549
  %v552 = vmul.f32 %v534, %v550
  %v555 = vunpack.c.l.s4 1966171168
  %v556 = vunpack.c.0.s8 %v555
  %v557 = vlaneseq
  %v558 = vshrl.u32 %v557, 7
  %v559 = vsub.s32 %v556, %v558
  %v560 = vrot.slane %v552, %v559
  %v561 = vcombine.high %v560, %v560
  %v563 = vunpack.c.l.s4 1966171168
  %v564 = vunpack.c.0.s8 %v563
  %v565 = vlaneseq
  %v566 = vshrl.u32 %v565, 7
  %v567 = vsub.s32 %v564, %v566
  %v568 = vrot.slane %v560, %v567
  %v570 = vunpack.c.l.s4 1966171168
  %v571 = vunpack.c.0.s8 %v570
  %v572 = vlaneseq
  %v573 = vshrl.u32 %v572, 7
  %v574 = vsub.s32 %v571, %v573
  %v575 = vrot.slane %v561, %v574
  %v576 = vlaneseq
  %v577 = vshrl.u32 %v576, 7
  %v578 = vsub.s32 0, %v577
  %v579 = vrot.slane %v568, %v578
  %v580 = vlaneseq
  %v581 = vshrl.u32 %v580, 7
  %v582 = vsub.s32 0, %v581
  %v583 = vrot.slane %v575, %v582
  %584 = vrot.lane.b32.xlu0 %v579, 32
  %v585 = vpop.permute.xlu0 %584
  %586 = vrot.lane.b32.xlu0 %v583, 32
  %v587 = vpop.permute.xlu0 %586
  %590 = vst.msk [vmem:[#allocation2 + $0x2] sm:$0x1] %vm291, %v585
  %591 = vst.msk [vmem:[#allocation2 + $0xa] sm:$0x1] %vm291, %v587
  %592 = vst.msk [vmem:[#allocation2 + $0x5] sm:$0x1] %vm294, %v585
  %593 = vst.msk [vmem:[#allocation2 + $0xd] sm:$0x1] %vm294, %v587
  %v594 = vrot.slane %v130, 3
  %v595 = vrot.slane %v135, 2
  %v596 = vsel %vm147, %v595, %v594
  %v598 = vrot.slane %v130, 4
  %v599 = vrot.slane %v135, 3
  %v600 = vsel %vm147, %v599, %v598
  %v602 = vsel %vm143, %v596, %v600
  %603 = vrot.lane.b32.xlu0 %v552, 32
  %v604 = vpop.permute.xlu0 %603
  %v605 = vsel %vm155, %v604, 0
  %607 = vmatprep.subr.mxu0 0.0
  %608 = vmatpush1.msra.mxu0 %v138
  %609 = vmatprep.subr.mxu0 0.0
  %610 = vmatpush1.msra.mxu0 %v139
  %611 = vmatprep.subr.mxu0 0.0
  %612 = vmatpush1.msra.mxu0 %v140
  %613 = vmatprep.subr.mxu0 0.0
  %614 = vmatpush1.msra.mxu0 %v141
  %615 = vmatprep.subr.mxu0 0.0
  %616 = vmatpush1.msra.mxu0 0.0
  %617 = vmatprep.subr.mxu0 0.0
  %618 = vmatpush1.msra.mxu0 0.0
  %619 = vmatprep.subr.mxu0 0.0
  %620 = vmatpush1.msra.mxu0 0.0
  %621 = vmatprep.subr.mxu0 0.0
  %622 = vmatpush1.msra.mxu0 0.0
  %623 = vmatprep.subr.mxu0 0.0
  %624 = vmatpush1.msra.mxu0 0.0
  %625 = vmatprep.subr.mxu0 0.0
  %626 = vmatpush1.msra.mxu0 0.0
  %627 = vmatprep.subr.mxu0 0.0
  %628 = vmatpush1.msra.mxu0 0.0
  %629 = vmatprep.subr.mxu0 0.0
  %630 = vmatpush1.msra.mxu0 0.0
  %631 = vmatprep.subr.mxu0 0.0
  %632 = vmatpush1.msra.mxu0 0.0
  %633 = vmatprep.subr.mxu0 0.0
  %634 = vmatpush1.msra.mxu0 0.0
  %635 = vmatprep.subr.mxu0 0.0
  %636 = vmatpush1.msra.mxu0 0.0
  %637 = vmatprep.subr.mxu0 0.0
  %638 = vmatpush1.msra.mxu0 0.0
  %639 = vmatprep.subr.mxu0 0.0
  %640 = vmatpush1.msra.mxu0 0.0
  %641 = vmatprep.subr.mxu0 0.0
  %642 = vmatpush1.msra.mxu0 0.0
  %643 = vmatprep.subr.mxu0 0.0
  %644 = vmatpush1.msra.mxu0 0.0
  %645 = vmatprep.subr.mxu0 0.0
  %646 = vmatpush1.msra.mxu0 0.0
  %647 = vmatprep.subr.mxu0 0.0
  %648 = vmatpush1.msra.mxu0 0.0
  %649 = vmatprep.subr.mxu0 0.0
  %650 = vmatpush1.msra.mxu0 0.0
  %651 = vmatprep.subr.mxu0 0.0
  %652 = vmatpush1.msra.mxu0 0.0
  %653 = vmatprep.subr.mxu0 0.0
  %654 = vmatpush1.msra.mxu0 0.0
  %655 = vmatprep.subr.mxu0 0.0
  %656 = vmatpush1.msra.mxu0 0.0
  %657 = vmatprep.subr.mxu0 0.0
  %658 = vmatpush1.msra.mxu0 0.0
  %659 = vmatprep.subr.mxu0 0.0
  %660 = vmatpush1.msra.mxu0 0.0
  %661 = vmatprep.subr.mxu0 0.0
  %662 = vmatpush1.msra.mxu0 0.0
  %663 = vmatprep.subr.mxu0 0.0
  %664 = vmatpush1.msra.mxu0 0.0
  %665 = vmatprep.subr.mxu0 0.0
  %666 = vmatpush1.msra.mxu0 0.0
  %667 = vmatprep.subr.mxu0 0.0
  %668 = vmatpush1.msra.mxu0 0.0
  %669 = vmatprep.subr.mxu0 0.0
  %670 = vmatpush1.msra.mxu0 0.0
  %671 = vmatprep.mubr.f32.mxu0 0.0
  %672 = vmatmul.mubr.f32.gmra.mrb[0].mxu0 %v605
  %v673 = vpop.f32.mrb[0].mxu0
  %v674 = vadd.f32 0.0, %v673
  %v675 = vpop.f32.mrb[0].mxu0
  %676 = vdwg.mxu0
  %v677 = vadd.f32 %v602, %v674
  %v678 = vxor.u32 %v677, 2147483648
  %v679 = vmul.f32 %v678, 1.442695
  %v680 = vpow.pop %v679
  %v681 = vadd.f32 %v680, 1.0
  %v682 = vrcp.pop %v681
  %v683 = vmul.f32 1.0, %v682
  %v684 = vtanh.pop %v677
  %v685 = vmul.f32 %v683, %v546
  %687 = vrot.lane.b32.xlu0 %v684, 64
  %v688 = vpop.permute.xlu0 %687
  %v690 = vmul.f32 %v683, %v688
  %692 = vrot.lane.b32.xlu0 %v690, 32
  %v693 = vpop.permute.xlu0 %692
  %v695 = vadd.f32 %v685, %v693
  %v696 = vtanh.pop %v695
  %698 = vrot.lane.b32.xlu0 %v696, 64
  %v699 = vpop.permute.xlu0 %698
  %v701 = vmul.f32 %v683, %v699
  %v704 = vunpack.c.l.s4 1966171168
  %v705 = vunpack.c.0.s8 %v704
  %v706 = vlaneseq
  %v707 = vshrl.u32 %v706, 7
  %v708 = vsub.s32 %v705, %v707
  %v709 = vrot.slane %v701, %v708
  %v710 = vcombine.high %v709, %v709
  %v712 = vunpack.c.l.s4 1966171168
  %v713 = vunpack.c.0.s8 %v712
  %v714 = vlaneseq
  %v715 = vshrl.u32 %v714, 7
  %v716 = vsub.s32 %v713, %v715
  %v717 = vrot.slane %v709, %v716
  %v719 = vunpack.c.l.s4 1966171168
  %v720 = vunpack.c.0.s8 %v719
  %v721 = vlaneseq
  %v722 = vshrl.u32 %v721, 7
  %v723 = vsub.s32 %v720, %v722
  %v724 = vrot.slane %v710, %v723
  %v725 = vlaneseq
  %v726 = vshrl.u32 %v725, 7
  %v727 = vsub.s32 0, %v726
  %v728 = vrot.slane %v717, %v727
  %v729 = vlaneseq
  %v730 = vshrl.u32 %v729, 7
  %v731 = vsub.s32 0, %v730
  %v732 = vrot.slane %v724, %v731
  %733 = vrot.lane.b32.xlu0 %v728, 32
  %v734 = vpop.permute.xlu0 %733
  %735 = vrot.lane.b32.xlu0 %v732, 32
  %v736 = vpop.permute.xlu0 %735
  %739 = vst.msk [vmem:[#allocation2 + $0x3] sm:$0x1] %vm291, %v734
  %740 = vst.msk [vmem:[#allocation2 + $0xb] sm:$0x1] %vm291, %v736
  %741 = vst.msk [vmem:[#allocation2 + $0x4] sm:$0x1] %vm294, %v734
  %742 = vst.msk [vmem:[#allocation2 + $0xc] sm:$0x1] %vm294, %v736
  %v743 = vsel %vm143, %v600, %v596
  %744 = vrot.lane.b32.xlu0 %v701, 32
  %v745 = vpop.permute.xlu0 %744
  %v746 = vsel %vm155, %v745, 0
  %748 = vmatprep.subr.mxu0 0.0
  %749 = vmatpush1.msra.mxu0 %v138
  %750 = vmatprep.subr.mxu0 0.0
  %751 = vmatpush1.msra.mxu0 %v139
  %752 = vmatprep.subr.mxu0 0.0
  %753 = vmatpush1.msra.mxu0 %v140
  %754 = vmatprep.subr.mxu0 0.0
  %755 = vmatpush1.msra.mxu0 %v141
  %756 = vmatprep.subr.mxu0 0.0
  %757 = vmatpush1.msra.mxu0 0.0
  %758 = vmatprep.subr.mxu0 0.0
  %759 = vmatpush1.msra.mxu0 0.0
  %760 = vmatprep.subr.mxu0 0.0
  %761 = vmatpush1.msra.mxu0 0.0
  %762 = vmatprep.subr.mxu0 0.0
  %763 = vmatpush1.msra.mxu0 0.0
  %764 = vmatprep.subr.mxu0 0.0
  %765 = vmatpush1.msra.mxu0 0.0
  %766 = vmatprep.subr.mxu0 0.0
  %767 = vmatpush1.msra.mxu0 0.0
  %768 = vmatprep.subr.mxu0 0.0
  %769 = vmatpush1.msra.mxu0 0.0
  %770 = vmatprep.subr.mxu0 0.0
  %771 = vmatpush1.msra.mxu0 0.0
  %772 = vmatprep.subr.mxu0 0.0
  %773 = vmatpush1.msra.mxu0 0.0
  %774 = vmatprep.subr.mxu0 0.0
  %775 = vmatpush1.msra.mxu0 0.0
  %776 = vmatprep.subr.mxu0 0.0
  %777 = vmatpush1.msra.mxu0 0.0
  %778 = vmatprep.subr.mxu0 0.0
  %779 = vmatpush1.msra.mxu0 0.0
  %780 = vmatprep.subr.mxu0 0.0
  %781 = vmatpush1.msra.mxu0 0.0
  %782 = vmatprep.subr.mxu0 0.0
  %783 = vmatpush1.msra.mxu0 0.0
  %784 = vmatprep.subr.mxu0 0.0
  %785 = vmatpush1.msra.mxu0 0.0
  %786 = vmatprep.subr.mxu0 0.0
  %787 = vmatpush1.msra.mxu0 0.0
  %788 = vmatprep.subr.mxu0 0.0
  %789 = vmatpush1.msra.mxu0 0.0
  %790 = vmatprep.subr.mxu0 0.0
  %791 = vmatpush1.msra.mxu0 0.0
  %792 = vmatprep.subr.mxu0 0.0
  %793 = vmatpush1.msra.mxu0 0.0
  %794 = vmatprep.subr.mxu0 0.0
  %795 = vmatpush1.msra.mxu0 0.0
  %796 = vmatprep.subr.mxu0 0.0
  %797 = vmatpush1.msra.mxu0 0.0
  %798 = vmatprep.subr.mxu0 0.0
  %799 = vmatpush1.msra.mxu0 0.0
  %800 = vmatprep.subr.mxu0 0.0
  %801 = vmatpush1.msra.mxu0 0.0
  %802 = vmatprep.subr.mxu0 0.0
  %803 = vmatpush1.msra.mxu0 0.0
  %804 = vmatprep.subr.mxu0 0.0
  %805 = vmatpush1.msra.mxu0 0.0
  %806 = vmatprep.subr.mxu0 0.0
  %807 = vmatpush1.msra.mxu0 0.0
  %808 = vmatprep.subr.mxu0 0.0
  %809 = vmatpush1.msra.mxu0 0.0
  %810 = vmatprep.subr.mxu0 0.0
  %811 = vmatpush1.msra.mxu0 0.0
  %812 = vmatprep.mubr.f32.mxu0 0.0
  %813 = vmatmul.mubr.f32.gmra.mrb[0].mxu0 %v746
  %v814 = vpop.f32.mrb[0].mxu0
  %v815 = vadd.f32 0.0, %v814
  %v816 = vpop.f32.mrb[0].mxu0
  %817 = vdwg.mxu0
  %v818 = vadd.f32 %v743, %v815
  %v819 = vxor.u32 %v818, 2147483648
  %v820 = vmul.f32 %v819, 1.442695
  %v821 = vpow.pop %v820
  %v822 = vadd.f32 %v821, 1.0
  %v823 = vrcp.pop %v822
  %v824 = vmul.f32 1.0, %v823
  %v825 = vtanh.pop %v818
  %v826 = vmul.f32 %v824, %v695
  %828 = vrot.lane.b32.xlu0 %v825, 64
  %v829 = vpop.permute.xlu0 %828
  %v831 = vmul.f32 %v824, %v829
  %833 = vrot.lane.b32.xlu0 %v831, 32
  %v834 = vpop.permute.xlu0 %833
  %v836 = vadd.f32 %v826, %v834
  %v837 = vtanh.pop %v836
  %839 = vrot.lane.b32.xlu0 %v837, 64
  %v840 = vpop.permute.xlu0 %839
  %v842 = vmul.f32 %v824, %v840
  %v845 = vunpack.c.l.s4 1966171168
  %v846 = vunpack.c.0.s8 %v845
  %v847 = vlaneseq
  %v848 = vshrl.u32 %v847, 7
  %v849 = vsub.s32 %v846, %v848
  %v850 = vrot.slane %v842, %v849
  %v851 = vcombine.high %v850, %v850
  %v853 = vunpack.c.l.s4 1966171168
  %v854 = vunpack.c.0.s8 %v853
  %v855 = vlaneseq
  %v856 = vshrl.u32 %v855, 7
  %v857 = vsub.s32 %v854, %v856
  %v858 = vrot.slane %v850, %v857
  %v860 = vunpack.c.l.s4 1966171168
  %v861 = vunpack.c.0.s8 %v860
  %v862 = vlaneseq
  %v863 = vshrl.u32 %v862, 7
  %v864 = vsub.s32 %v861, %v863
  %v865 = vrot.slane %v851, %v864
  %v866 = vlaneseq
  %v867 = vshrl.u32 %v866, 7
  %v868 = vsub.s32 0, %v867
  %v869 = vrot.slane %v858, %v868
  %v870 = vlaneseq
  %v871 = vshrl.u32 %v870, 7
  %v872 = vsub.s32 0, %v871
  %v873 = vrot.slane %v865, %v872
  %874 = vrot.lane.b32.xlu0 %v869, 32
  %v875 = vpop.permute.xlu0 %874
  %876 = vrot.lane.b32.xlu0 %v873, 32
  %v877 = vpop.permute.xlu0 %876
  %880 = vst.msk [vmem:[#allocation2 + $0x4] sm:$0x1] %vm291, %v875
  %881 = vst.msk [vmem:[#allocation2 + $0xc] sm:$0x1] %vm291, %v877
  %882 = vst.msk [vmem:[#allocation2 + $0x3] sm:$0x1] %vm294, %v875
  %883 = vst.msk [vmem:[#allocation2 + $0xb] sm:$0x1] %vm294, %v877
  %v884 = vsel %vm143, %v451, %v447
  %885 = vrot.lane.b32.xlu0 %v842, 32
  %v886 = vpop.permute.xlu0 %885
  %v887 = vsel %vm155, %v886, 0
  %889 = vmatprep.subr.mxu0 0.0
  %890 = vmatpush1.msra.mxu0 %v138
  %891 = vmatprep.subr.mxu0 0.0
  %892 = vmatpush1.msra.mxu0 %v139
  %893 = vmatprep.subr.mxu0 0.0
  %894 = vmatpush1.msra.mxu0 %v140
  %895 = vmatprep.subr.mxu0 0.0
  %896 = vmatpush1.msra.mxu0 %v141
  %897 = vmatprep.subr.mxu0 0.0
  %898 = vmatpush1.msra.mxu0 0.0
  %899 = vmatprep.subr.mxu0 0.0
  %900 = vmatpush1.msra.mxu0 0.0
  %901 = vmatprep.subr.mxu0 0.0
  %902 = vmatpush1.msra.mxu0 0.0
  %903 = vmatprep.subr.mxu0 0.0
  %904 = vmatpush1.msra.mxu0 0.0
  %905 = vmatprep.subr.mxu0 0.0
  %906 = vmatpush1.msra.mxu0 0.0
  %907 = vmatprep.subr.mxu0 0.0
  %908 = vmatpush1.msra.mxu0 0.0
  %909 = vmatprep.subr.mxu0 0.0
  %910 = vmatpush1.msra.mxu0 0.0
  %911 = vmatprep.subr.mxu0 0.0
  %912 = vmatpush1.msra.mxu0 0.0
  %913 = vmatprep.subr.mxu0 0.0
  %914 = vmatpush1.msra.mxu0 0.0
  %915 = vmatprep.subr.mxu0 0.0
  %916 = vmatpush1.msra.mxu0 0.0
  %917 = vmatprep.subr.mxu0 0.0
  %918 = vmatpush1.msra.mxu0 0.0
  %919 = vmatprep.subr.mxu0 0.0
  %920 = vmatpush1.msra.mxu0 0.0
  %921 = vmatprep.subr.mxu0 0.0
  %922 = vmatpush1.msra.mxu0 0.0
  %923 = vmatprep.subr.mxu0 0.0
  %924 = vmatpush1.msra.mxu0 0.0
  %925 = vmatprep.subr.mxu0 0.0
  %926 = vmatpush1.msra.mxu0 0.0
  %927 = vmatprep.subr.mxu0 0.0
  %928 = vmatpush1.msra.mxu0 0.0
  %929 = vmatprep.subr.mxu0 0.0
  %930 = vmatpush1.msra.mxu0 0.0
  %931 = vmatprep.subr.mxu0 0.0
  %932 = vmatpush1.msra.mxu0 0.0
  %933 = vmatprep.subr.mxu0 0.0
  %934 = vmatpush1.msra.mxu0 0.0
  %935 = vmatprep.subr.mxu0 0.0
  %936 = vmatpush1.msra.mxu0 0.0
  %937 = vmatprep.subr.mxu0 0.0
  %938 = vmatpush1.msra.mxu0 0.0
  %939 = vmatprep.subr.mxu0 0.0
  %940 = vmatpush1.msra.mxu0 0.0
  %941 = vmatprep.subr.mxu0 0.0
  %942 = vmatpush1.msra.mxu0 0.0
  %943 = vmatprep.subr.mxu0 0.0
  %944 = vmatpush1.msra.mxu0 0.0
  %945 = vmatprep.subr.mxu0 0.0
  %946 = vmatpush1.msra.mxu0 0.0
  %947 = vmatprep.subr.mxu0 0.0
  %948 = vmatpush1.msra.mxu0 0.0
  %949 = vmatprep.subr.mxu0 0.0
  %950 = vmatpush1.msra.mxu0 0.0
  %951 = vmatprep.subr.mxu0 0.0
  %952 = vmatpush1.msra.mxu0 0.0
  %953 = vmatprep.mubr.f32.mxu0 0.0
  %954 = vmatmul.mubr.f32.gmra.mrb[0].mxu0 %v887
  %v955 = vpop.f32.mrb[0].mxu0
  %v956 = vadd.f32 0.0, %v955
  %v957 = vpop.f32.mrb[0].mxu0
  %958 = vdwg.mxu0
  %v959 = vadd.f32 %v884, %v956
  %v960 = vxor.u32 %v959, 2147483648
  %v961 = vmul.f32 %v960, 1.442695
  %v962 = vpow.pop %v961
  %v963 = vadd.f32 %v962, 1.0
  %v964 = vrcp.pop %v963
  %v965 = vmul.f32 1.0, %v964
  %v966 = vtanh.pop %v959
  %v967 = vmul.f32 %v965, %v836
  %969 = vrot.lane.b32.xlu0 %v966, 64
  %v970 = vpop.permute.xlu0 %969
  %v972 = vmul.f32 %v965, %v970
  %974 = vrot.lane.b32.xlu0 %v972, 32
  %v975 = vpop.permute.xlu0 %974
  %v977 = vadd.f32 %v967, %v975
  %v978 = vtanh.pop %v977
  %980 = vrot.lane.b32.xlu0 %v978, 64
  %v981 = vpop.permute.xlu0 %980
  %v983 = vmul.f32 %v965, %v981
  %v986 = vunpack.c.l.s4 1966171168
  %v987 = vunpack.c.0.s8 %v986
  %v988 = vlaneseq
  %v989 = vshrl.u32 %v988, 7
  %v990 = vsub.s32 %v987, %v989
  %v991 = vrot.slane %v983, %v990
  %v992 = vcombine.high %v991, %v991
  %v994 = vunpack.c.l.s4 1966171168
  %v995 = vunpack.c.0.s8 %v994
  %v996 = vlaneseq
  %v997 = vshrl.u32 %v996, 7
  %v998 = vsub.s32 %v995, %v997
  %v999 = vrot.slane %v991, %v998
  %v1001 = vunpack.c.l.s4 1966171168
  %v1002 = vunpack.c.0.s8 %v1001
  %v1003 = vlaneseq
  %v1004 = vshrl.u32 %v1003, 7
  %v1005 = vsub.s32 %v1002, %v1004
  %v1006 = vrot.slane %v992, %v1005
  %v1007 = vlaneseq
  %v1008 = vshrl.u32 %v1007, 7
  %v1009 = vsub.s32 0, %v1008
  %v1010 = vrot.slane %v999, %v1009
  %v1011 = vlaneseq
  %v1012 = vshrl.u32 %v1011, 7
  %v1013 = vsub.s32 0, %v1012
  %v1014 = vrot.slane %v1006, %v1013
  %1015 = vrot.lane.b32.xlu0 %v1010, 32
  %v1016 = vpop.permute.xlu0 %1015
  %1017 = vrot.lane.b32.xlu0 %v1014, 32
  %v1018 = vpop.permute.xlu0 %1017
  %1021 = vst.msk [vmem:[#allocation2 + $0x5] sm:$0x1] %vm291, %v1016
  %1022 = vst.msk [vmem:[#allocation2 + $0xd] sm:$0x1] %vm291, %v1018
  %1023 = vst.msk [vmem:[#allocation2 + $0x2] sm:$0x1] %vm294, %v1016
  %1024 = vst.msk [vmem:[#allocation2 + $0xa] sm:$0x1] %vm294, %v1018
  %v1025 = vsel %vm143, %v302, %v298
  %1026 = vrot.lane.b32.xlu0 %v983, 32
  %v1027 = vpop.permute.xlu0 %1026
  %v1028 = vsel %vm155, %v1027, 0
  %1030 = vmatprep.subr.mxu0 0.0
  %1031 = vmatpush1.msra.mxu0 %v138
  %1032 = vmatprep.subr.mxu0 0.0
  %1033 = vmatpush1.msra.mxu0 %v139
  %1034 = vmatprep.subr.mxu0 0.0
  %1035 = vmatpush1.msra.mxu0 %v140
  %1036 = vmatprep.subr.mxu0 0.0
  %1037 = vmatpush1.msra.mxu0 %v141
  %1038 = vmatprep.subr.mxu0 0.0
  %1039 = vmatpush1.msra.mxu0 0.0
  %1040 = vmatprep.subr.mxu0 0.0
  %1041 = vmatpush1.msra.mxu0 0.0
  %1042 = vmatprep.subr.mxu0 0.0
  %1043 = vmatpush1.msra.mxu0 0.0
  %1044 = vmatprep.subr.mxu0 0.0
  %1045 = vmatpush1.msra.mxu0 0.0
  %1046 = vmatprep.subr.mxu0 0.0
  %1047 = vmatpush1.msra.mxu0 0.0
  %1048 = vmatprep.subr.mxu0 0.0
  %1049 = vmatpush1.msra.mxu0 0.0
  %1050 = vmatprep.subr.mxu0 0.0
  %1051 = vmatpush1.msra.mxu0 0.0
  %1052 = vmatprep.subr.mxu0 0.0
  %1053 = vmatpush1.msra.mxu0 0.0
  %1054 = vmatprep.subr.mxu0 0.0
  %1055 = vmatpush1.msra.mxu0 0.0
  %1056 = vmatprep.subr.mxu0 0.0
  %1057 = vmatpush1.msra.mxu0 0.0
  %1058 = vmatprep.subr.mxu0 0.0
  %1059 = vmatpush1.msra.mxu0 0.0
  %1060 = vmatprep.subr.mxu0 0.0
  %1061 = vmatpush1.msra.mxu0 0.0
  %1062 = vmatprep.subr.mxu0 0.0
  %1063 = vmatpush1.msra.mxu0 0.0
  %1064 = vmatprep.subr.mxu0 0.0
  %1065 = vmatpush1.msra.mxu0 0.0
  %1066 = vmatprep.subr.mxu0 0.0
  %1067 = vmatpush1.msra.mxu0 0.0
  %1068 = vmatprep.subr.mxu0 0.0
  %1069 = vmatpush1.msra.mxu0 0.0
  %1070 = vmatprep.subr.mxu0 0.0
  %1071 = vmatpush1.msra.mxu0 0.0
  %1072 = vmatprep.subr.mxu0 0.0
  %1073 = vmatpush1.msra.mxu0 0.0
  %1074 = vmatprep.subr.mxu0 0.0
  %1075 = vmatpush1.msra.mxu0 0.0
  %1076 = vmatprep.subr.mxu0 0.0
  %1077 = vmatpush1.msra.mxu0 0.0
  %1078 = vmatprep.subr.mxu0 0.0
  %1079 = vmatpush1.msra.mxu0 0.0
  %1080 = vmatprep.subr.mxu0 0.0
  %1081 = vmatpush1.msra.mxu0 0.0
  %1082 = vmatprep.subr.mxu0 0.0
  %1083 = vmatpush1.msra.mxu0 0.0
  %1084 = vmatprep.subr.mxu0 0.0
  %1085 = vmatpush1.msra.mxu0 0.0
  %1086 = vmatprep.subr.mxu0 0.0
  %1087 = vmatpush1.msra.mxu0 0.0
  %1088 = vmatprep.subr.mxu0 0.0
  %1089 = vmatpush1.msra.mxu0 0.0
  %1090 = vmatprep.subr.mxu0 0.0
  %1091 = vmatpush1.msra.mxu0 0.0
  %1092 = vmatprep.subr.mxu0 0.0
  %1093 = vmatpush1.msra.mxu0 0.0
  %1094 = vmatprep.mubr.f32.mxu0 0.0
  %1095 = vmatmul.mubr.f32.gmra.mrb[0].mxu0 %v1028
  %v1096 = vpop.f32.mrb[0].mxu0
  %v1097 = vadd.f32 0.0, %v1096
  %v1098 = vpop.f32.mrb[0].mxu0
  %1099 = vdwg.mxu0
  %v1100 = vadd.f32 %v1025, %v1097
  %v1101 = vxor.u32 %v1100, 2147483648
  %v1102 = vmul.f32 %v1101, 1.442695
  %v1103 = vpow.pop %v1102
  %v1104 = vadd.f32 %v1103, 1.0
  %v1105 = vrcp.pop %v1104
  %v1106 = vmul.f32 1.0, %v1105
  %v1107 = vtanh.pop %v1100
  %v1108 = vmul.f32 %v1106, %v977
  %1110 = vrot.lane.b32.xlu0 %v1107, 64
  %v1111 = vpop.permute.xlu0 %1110
  %v1113 = vmul.f32 %v1106, %v1111
  %1115 = vrot.lane.b32.xlu0 %v1113, 32
  %v1116 = vpop.permute.xlu0 %1115
  %v1118 = vadd.f32 %v1108, %v1116
  %v1119 = vtanh.pop %v1118
  %1121 = vrot.lane.b32.xlu0 %v1119, 64
  %v1122 = vpop.permute.xlu0 %1121
  %v1124 = vmul.f32 %v1106, %v1122
  %v1127 = vunpack.c.l.s4 1966171168
  %v1128 = vunpack.c.0.s8 %v1127
  %v1129 = vlaneseq
  %v1130 = vshrl.u32 %v1129, 7
  %v1131 = vsub.s32 %v1128, %v1130
  %v1132 = vrot.slane %v1124, %v1131
  %v1133 = vcombine.high %v1132, %v1132
  %v1135 = vunpack.c.l.s4 1966171168
  %v1136 = vunpack.c.0.s8 %v1135
  %v1137 = vlaneseq
  %v1138 = vshrl.u32 %v1137, 7
  %v1139 = vsub.s32 %v1136, %v1138
  %v1140 = vrot.slane %v1132, %v1139
  %v1142 = vunpack.c.l.s4 1966171168
  %v1143 = vunpack.c.0.s8 %v1142
  %v1144 = vlaneseq
  %v1145 = vshrl.u32 %v1144, 7
  %v1146 = vsub.s32 %v1143, %v1145
  %v1147 = vrot.slane %v1133, %v1146
  %v1148 = vlaneseq
  %v1149 = vshrl.u32 %v1148, 7
  %v1150 = vsub.s32 0, %v1149
  %v1151 = vrot.slane %v1140, %v1150
  %v1152 = vlaneseq
  %v1153 = vshrl.u32 %v1152, 7
  %v1154 = vsub.s32 0, %v1153
  %v1155 = vrot.slane %v1147, %v1154
  %1156 = vrot.lane.b32.xlu0 %v1151, 32
  %v1157 = vpop.permute.xlu0 %1156
  %1158 = vrot.lane.b32.xlu0 %v1155, 32
  %v1159 = vpop.permute.xlu0 %1158
  %1162 = vst.msk [vmem:[#allocation2 + $0x6] sm:$0x1] %vm291, %v1157
  %1163 = vst.msk [vmem:[#allocation2 + $0xe] sm:$0x1] %vm291, %v1159
  %1164 = vst.msk [vmem:[#allocation2 + $0x1] sm:$0x1] %vm294, %v1157
  %1165 = vst.msk [vmem:[#allocation2 + $0x9] sm:$0x1] %vm294, %v1159
  %v1166 = vsel %vm143, %v152, %v148
  %1167 = vrot.lane.b32.xlu0 %v1124, 32
  %v1168 = vpop.permute.xlu0 %1167
  %v1169 = vsel %vm155, %v1168, 0
  %1171 = vmatprep.subr.mxu0 0.0
  %1172 = vmatpush1.msra.mxu0 %v138
  %1173 = vmatprep.subr.mxu0 0.0
  %1174 = vmatpush1.msra.mxu0 %v139
  %1175 = vmatprep.subr.mxu0 0.0
  %1176 = vmatpush1.msra.mxu0 %v140
  %1177 = vmatprep.subr.mxu0 0.0
  %1178 = vmatpush1.msra.mxu0 %v141
  %1179 = vmatprep.subr.mxu0 0.0
  %1180 = vmatpush1.msra.mxu0 0.0
  %1181 = vmatprep.subr.mxu0 0.0
  %1182 = vmatpush1.msra.mxu0 0.0
  %1183 = vmatprep.subr.mxu0 0.0
  %1184 = vmatpush1.msra.mxu0 0.0
  %1185 = vmatprep.subr.mxu0 0.0
  %1186 = vmatpush1.msra.mxu0 0.0
  %1187 = vmatprep.subr.mxu0 0.0
  %1188 = vmatpush1.msra.mxu0 0.0
  %1189 = vmatprep.subr.mxu0 0.0
  %1190 = vmatpush1.msra.mxu0 0.0
  %1191 = vmatprep.subr.mxu0 0.0
  %1192 = vmatpush1.msra.mxu0 0.0
  %1193 = vmatprep.subr.mxu0 0.0
  %1194 = vmatpush1.msra.mxu0 0.0
  %1195 = vmatprep.subr.mxu0 0.0
  %1196 = vmatpush1.msra.mxu0 0.0
  %1197 = vmatprep.subr.mxu0 0.0
  %1198 = vmatpush1.msra.mxu0 0.0
  %1199 = vmatprep.subr.mxu0 0.0
  %1200 = vmatpush1.msra.mxu0 0.0
  %1201 = vmatprep.subr.mxu0 0.0
  %1202 = vmatpush1.msra.mxu0 0.0
  %1203 = vmatprep.subr.mxu0 0.0
  %1204 = vmatpush1.msra.mxu0 0.0
  %1205 = vmatprep.subr.mxu0 0.0
  %1206 = vmatpush1.msra.mxu0 0.0
  %1207 = vmatprep.subr.mxu0 0.0
  %1208 = vmatpush1.msra.mxu0 0.0
  %1209 = vmatprep.subr.mxu0 0.0
  %1210 = vmatpush1.msra.mxu0 0.0
  %1211 = vmatprep.subr.mxu0 0.0
  %1212 = vmatpush1.msra.mxu0 0.0
  %1213 = vmatprep.subr.mxu0 0.0
  %1214 = vmatpush1.msra.mxu0 0.0
  %1215 = vmatprep.subr.mxu0 0.0
  %1216 = vmatpush1.msra.mxu0 0.0
  %1217 = vmatprep.subr.mxu0 0.0
  %1218 = vmatpush1.msra.mxu0 0.0
  %1219 = vmatprep.subr.mxu0 0.0
  %1220 = vmatpush1.msra.mxu0 0.0
  %1221 = vmatprep.subr.mxu0 0.0
  %1222 = vmatpush1.msra.mxu0 0.0
  %1223 = vmatprep.subr.mxu0 0.0
  %1224 = vmatpush1.msra.mxu0 0.0
  %1225 = vmatprep.subr.mxu0 0.0
  %1226 = vmatpush1.msra.mxu0 0.0
  %1227 = vmatprep.subr.mxu0 0.0
  %1228 = vmatpush1.msra.mxu0 0.0
  %1229 = vmatprep.subr.mxu0 0.0
  %1230 = vmatpush1.msra.mxu0 0.0
  %1231 = vmatprep.subr.mxu0 0.0
  %1232 = vmatpush1.msra.mxu0 0.0
  %1233 = vmatprep.subr.mxu0 0.0
  %1234 = vmatpush1.msra.mxu0 0.0
  %1235 = vmatprep.mubr.f32.mxu0 0.0
  %1236 = vmatmul.mubr.f32.gmra.mrb[0].mxu0 %v1169
  %v1237 = vpop.f32.mrb[0].mxu0
  %v1238 = vadd.f32 0.0, %v1237
  %v1239 = vpop.f32.mrb[0].mxu0
  %1240 = vdwg.mxu0
  %v1241 = vadd.f32 %v1166, %v1238
  %v1242 = vxor.u32 %v1241, 2147483648
  %v1243 = vmul.f32 %v1242, 1.442695
  %v1244 = vpow.pop %v1243
  %v1245 = vadd.f32 %v1244, 1.0
  %v1246 = vrcp.pop %v1245
  %v1247 = vmul.f32 1.0, %v1246
  %v1248 = vtanh.pop %v1241
  %v1249 = vmul.f32 %v1247, %v1118
  %1251 = vrot.lane.b32.xlu0 %v1248, 64
  %v1252 = vpop.permute.xlu0 %1251
  %v1254 = vmul.f32 %v1247, %v1252
  %1256 = vrot.lane.b32.xlu0 %v1254, 32
  %v1257 = vpop.permute.xlu0 %1256
  %v1259 = vadd.f32 %v1249, %v1257
  %v1260 = vtanh.pop %v1259
  %1262 = vrot.lane.b32.xlu0 %v1260, 64
  %v1263 = vpop.permute.xlu0 %1262
  %v1265 = vmul.f32 %v1247, %v1263
  %v1268 = vunpack.c.l.s4 1966171168
  %v1269 = vunpack.c.0.s8 %v1268
  %v1270 = vlaneseq
  %v1271 = vshrl.u32 %v1270, 7
  %v1272 = vsub.s32 %v1269, %v1271
  %v1273 = vrot.slane %v1265, %v1272
  %v1274 = vcombine.high %v1273, %v1273
  %v1276 = vunpack.c.l.s4 1966171168
  %v1277 = vunpack.c.0.s8 %v1276
  %v1278 = vlaneseq
  %v1279 = vshrl.u32 %v1278, 7
  %v1280 = vsub.s32 %v1277, %v1279
  %v1281 = vrot.slane %v1273, %v1280
  %v1283 = vunpack.c.l.s4 1966171168
  %v1284 = vunpack.c.0.s8 %v1283
  %v1285 = vlaneseq
  %v1286 = vshrl.u32 %v1285, 7
  %v1287 = vsub.s32 %v1284, %v1286
  %v1288 = vrot.slane %v1274, %v1287
  %v1289 = vlaneseq
  %v1290 = vshrl.u32 %v1289, 7
  %v1291 = vsub.s32 0, %v1290
  %v1292 = vrot.slane %v1281, %v1291
  %v1293 = vlaneseq
  %v1294 = vshrl.u32 %v1293, 7
  %v1295 = vsub.s32 0, %v1294
  %v1296 = vrot.slane %v1288, %v1295
  %1297 = vrot.lane.b32.xlu0 %v1292, 32
  %v1298 = vpop.permute.xlu0 %1297
  %1299 = vrot.lane.b32.xlu0 %v1296, 32
  %v1300 = vpop.permute.xlu0 %1299
  %1303 = vst.msk [vmem:[#allocation2 + $0x7] sm:$0x1] %vm291, %v1298
  %1304 = vst.msk [vmem:[#allocation2 + $0xf] sm:$0x1] %vm291, %v1300
  %1305 = vst.msk [vmem:[#allocation2] sm:$0x1] %vm294, %v1298
  %1306 = vst.msk [vmem:[#allocation2 + $0x8] sm:$0x1] %vm294, %v1300
  %v1307 = vld [vmem:[%s7] sm:$0xff]
  %v1308 = vld [vmem:[%s7 + $0x8] sm:$0xff]
  %v1309 = vld [vmem:[%s7 + $0x10] sm:$0xff]
  %v1310 = vld [vmem:[%s7 + $0x18] sm:$0xff]
  %v1311 = vld [vmem:[%s8] sm:$0x1]
  %v1313 = vlaneseq
  %v1314 = vshrl.u32 %v1313, 7
  %v1315 = vsub.s32 0, %v1314
  %v1316 = vrot.slane %v1311, %v1315
  %1318 = vrot.lane.b32.xlu0 %v1265, 32
  %v1319 = vpop.permute.xlu0 %1318
  %v1320 = vsel %vm155, %v1319, 0
  %1322 = vmatprep.subr.mxu0 0.0
  %1323 = vmatpush1.msra.mxu0 %v1307
  %1324 = vmatprep.subr.mxu0 0.0
  %1325 = vmatpush1.msra.mxu0 %v1308
  %1326 = vmatprep.subr.mxu0 0.0
  %1327 = vmatpush1.msra.mxu0 %v1309
  %1328 = vmatprep.subr.mxu0 0.0
  %1329 = vmatpush1.msra.mxu0 %v1310
  %1330 = vmatprep.subr.mxu0 0.0
  %1331 = vmatpush1.msra.mxu0 0.0
  %1332 = vmatprep.subr.mxu0 0.0
  %1333 = vmatpush1.msra.mxu0 0.0
  %1334 = vmatprep.subr.mxu0 0.0
  %1335 = vmatpush1.msra.mxu0 0.0
  %1336 = vmatprep.subr.mxu0 0.0
  %1337 = vmatpush1.msra.mxu0 0.0
  %1338 = vmatprep.subr.mxu0 0.0
  %1339 = vmatpush1.msra.mxu0 0.0
  %1340 = vmatprep.subr.mxu0 0.0
  %1341 = vmatpush1.msra.mxu0 0.0
  %1342 = vmatprep.subr.mxu0 0.0
  %1343 = vmatpush1.msra.mxu0 0.0
  %1344 = vmatprep.subr.mxu0 0.0
  %1345 = vmatpush1.msra.mxu0 0.0
  %1346 = vmatprep.subr.mxu0 0.0
  %1347 = vmatpush1.msra.mxu0 0.0
  %1348 = vmatprep.subr.mxu0 0.0
  %1349 = vmatpush1.msra.mxu0 0.0
  %1350 = vmatprep.subr.mxu0 0.0
  %1351 = vmatpush1.msra.mxu0 0.0
  %1352 = vmatprep.subr.mxu0 0.0
  %1353 = vmatpush1.msra.mxu0 0.0
  %1354 = vmatprep.subr.mxu0 0.0
  %1355 = vmatpush1.msra.mxu0 0.0
  %1356 = vmatprep.subr.mxu0 0.0
  %1357 = vmatpush1.msra.mxu0 0.0
  %1358 = vmatprep.subr.mxu0 0.0
  %1359 = vmatpush1.msra.mxu0 0.0
  %1360 = vmatprep.subr.mxu0 0.0
  %1361 = vmatpush1.msra.mxu0 0.0
  %1362 = vmatprep.subr.mxu0 0.0
  %1363 = vmatpush1.msra.mxu0 0.0
  %1364 = vmatprep.subr.mxu0 0.0
  %1365 = vmatpush1.msra.mxu0 0.0
  %1366 = vmatprep.subr.mxu0 0.0
  %1367 = vmatpush1.msra.mxu0 0.0
  %1368 = vmatprep.subr.mxu0 0.0
  %1369 = vmatpush1.msra.mxu0 0.0
  %1370 = vmatprep.subr.mxu0 0.0
  %1371 = vmatpush1.msra.mxu0 0.0
  %1372 = vmatprep.subr.mxu0 0.0
  %1373 = vmatpush1.msra.mxu0 0.0
  %1374 = vmatprep.subr.mxu0 0.0
  %1375 = vmatpush1.msra.mxu0 0.0
  %1376 = vmatprep.subr.mxu0 0.0
  %1377 = vmatpush1.msra.mxu0 0.0
  %1378 = vmatprep.subr.mxu0 0.0
  %1379 = vmatpush1.msra.mxu0 0.0
  %1380 = vmatprep.subr.mxu0 0.0
  %1381 = vmatpush1.msra.mxu0 0.0
  %1382 = vmatprep.subr.mxu0 0.0
  %1383 = vmatpush1.msra.mxu0 0.0
  %1384 = vmatprep.subr.mxu0 0.0
  %1385 = vmatpush1.msra.mxu0 0.0
  %1386 = vmatprep.mubr.f32.mxu0 0.0
  %1387 = vmatmul.mubr.f32.gmra.mrb[0].mxu0 %v1320
  %v1388 = vpop.f32.mrb[0].mxu0
  %v1389 = vadd.f32 %v1316, %v1388
  %v1390 = vpop.f32.mrb[0].mxu0
  %1391 = vdwg.mxu0
  %vm1392 = vcmask 123904
  %1393 = vst.msk [vmem:[%s12] sm:$0x3] %vm1392, %v1389
  %v1394 = vld [vmem:[%s9] sm:$0xff]
  %v1395 = vld [vmem:[%s9 + $0x8] sm:$0xff]
  %v1396 = vld [vmem:[%s9 + $0x10] sm:$0xff]
  %v1397 = vld [vmem:[%s9 + $0x18] sm:$0xff]
  %v1398 = vld [vmem:[%s10] sm:$0x1]
  %v1400 = vlaneseq
  %v1401 = vshrl.u32 %v1400, 7
  %v1402 = vsub.s32 0, %v1401
  %v1403 = vrot.slane %v1398, %v1402
  %1406 = vrot.lane.b32.xlu0 %v1259, 96
  %v1407 = vpop.permute.xlu0 %1406
  %v1408 = vsel %vm155, %v1407, 0
  %1410 = vmatprep.subr.mxu0 0.0
  %1411 = vmatpush1.msra.mxu0 %v1394
  %1412 = vmatprep.subr.mxu0 0.0
  %1413 = vmatpush1.msra.mxu0 %v1395
  %1414 = vmatprep.subr.mxu0 0.0
  %1415 = vmatpush1.msra.mxu0 %v1396
  %1416 = vmatprep.subr.mxu0 0.0
  %1417 = vmatpush1.msra.mxu0 %v1397
  %1418 = vmatprep.subr.mxu0 0.0
  %1419 = vmatpush1.msra.mxu0 0.0
  %1420 = vmatprep.subr.mxu0 0.0
  %1421 = vmatpush1.msra.mxu0 0.0
  %1422 = vmatprep.subr.mxu0 0.0
  %1423 = vmatpush1.msra.mxu0 0.0
  %1424 = vmatprep.subr.mxu0 0.0
  %1425 = vmatpush1.msra.mxu0 0.0
  %1426 = vmatprep.subr.mxu0 0.0
  %1427 = vmatpush1.msra.mxu0 0.0
  %1428 = vmatprep.subr.mxu0 0.0
  %1429 = vmatpush1.msra.mxu0 0.0
  %1430 = vmatprep.subr.mxu0 0.0
  %1431 = vmatpush1.msra.mxu0 0.0
  %1432 = vmatprep.subr.mxu0 0.0
  %1433 = vmatpush1.msra.mxu0 0.0
  %1434 = vmatprep.subr.mxu0 0.0
  %1435 = vmatpush1.msra.mxu0 0.0
  %1436 = vmatprep.subr.mxu0 0.0
  %1437 = vmatpush1.msra.mxu0 0.0
  %1438 = vmatprep.subr.mxu0 0.0
  %1439 = vmatpush1.msra.mxu0 0.0
  %1440 = vmatprep.subr.mxu0 0.0
  %1441 = vmatpush1.msra.mxu0 0.0
  %1442 = vmatprep.subr.mxu0 0.0
  %1443 = vmatpush1.msra.mxu0 0.0
  %1444 = vmatprep.subr.mxu0 0.0
  %1445 = vmatpush1.msra.mxu0 0.0
  %1446 = vmatprep.subr.mxu0 0.0
  %1447 = vmatpush1.msra.mxu0 0.0
  %1448 = vmatprep.subr.mxu0 0.0
  %1449 = vmatpush1.msra.mxu0 0.0
  %1450 = vmatprep.subr.mxu0 0.0
  %1451 = vmatpush1.msra.mxu0 0.0
  %1452 = vmatprep.subr.mxu0 0.0
  %1453 = vmatpush1.msra.mxu0 0.0
  %1454 = vmatprep.subr.mxu0 0.0
  %1455 = vmatpush1.msra.mxu0 0.0
  %1456 = vmatprep.subr.mxu0 0.0
  %1457 = vmatpush1.msra.mxu0 0.0
  %1458 = vmatprep.subr.mxu0 0.0
  %1459 = vmatpush1.msra.mxu0 0.0
  %1460 = vmatprep.subr.mxu0 0.0
  %1461 = vmatpush1.msra.mxu0 0.0
  %1462 = vmatprep.subr.mxu0 0.0
  %1463 = vmatpush1.msra.mxu0 0.0
  %1464 = vmatprep.subr.mxu0 0.0
  %1465 = vmatpush1.msra.mxu0 0.0
  %1466 = vmatprep.subr.mxu0 0.0
  %1467 = vmatpush1.msra.mxu0 0.0
  %1468 = vmatprep.subr.mxu0 0.0
  %1469 = vmatpush1.msra.mxu0 0.0
  %1470 = vmatprep.subr.mxu0 0.0
  %1471 = vmatpush1.msra.mxu0 0.0
  %1472 = vmatprep.subr.mxu0 0.0
  %1473 = vmatpush1.msra.mxu0 0.0
  %1474 = vmatprep.mubr.f32.mxu0 0.0
  %1475 = vmatmul.mubr.f32.gmra.mrb[0].mxu0 %v1408
  %v1476 = vpop.f32.mrb[0].mxu0
  %v1477 = vadd.f32 %v1403, %v1476
  %v1478 = vpop.f32.mrb[0].mxu0
  %1479 = vdwg.mxu0
  %1480 = vst.msk [vmem:[%s13] sm:$0x3] %vm1392, %v1477
  %v1481 = vld [vmem:[#allocation2] sm:$0xff]
  %v1482 = vld [vmem:[#allocation2 + $0x8] sm:$0xff]
  %v1483 = vld [vmem:[%s4] sm:$0xff]
  %v1484 = vld [vmem:[%s4 + $0x8] sm:$0xff]
  %v1485 = vld [vmem:[%s4 + $0x10] sm:$0xff]
  %v1486 = vld [vmem:[%s4 + $0x18] sm:$0xff]
  %v1487 = vld [vmem:[%s6] sm:$0x1]
  %v1489 = vlaneseq
  %v1490 = vshrl.u32 %v1489, 7
  %v1491 = vsub.s32 0, %v1490
  %v1492 = vrot.slane %v1487, %v1491
  %v1495 = vsel %vm155, %v1481, 0
  %v1498 = vsel %vm155, %v1482, 0
  %1500 = vmatprep.subr.mxu0 0.0
  %1501 = vmatpush1.msra.mxu0 %v1483
  %1502 = vmatprep.subr.mxu0 0.0
  %1503 = vmatpush1.msra.mxu0 %v1484
  %1504 = vmatprep.subr.mxu0 0.0
  %1505 = vmatpush1.msra.mxu0 %v1485
  %1506 = vmatprep.subr.mxu0 0.0
  %1507 = vmatpush1.msra.mxu0 %v1486
  %1508 = vmatprep.subr.mxu0 0.0
  %1509 = vmatpush1.msra.mxu0 0.0
  %1510 = vmatprep.subr.mxu0 0.0
  %1511 = vmatpush1.msra.mxu0 0.0
  %1512 = vmatprep.subr.mxu0 0.0
  %1513 = vmatpush1.msra.mxu0 0.0
  %1514 = vmatprep.subr.mxu0 0.0
  %1515 = vmatpush1.msra.mxu0 0.0
  %1516 = vmatprep.subr.mxu0 0.0
  %1517 = vmatpush1.msra.mxu0 0.0
  %1518 = vmatprep.subr.mxu0 0.0
  %1519 = vmatpush1.msra.mxu0 0.0
  %1520 = vmatprep.subr.mxu0 0.0
  %1521 = vmatpush1.msra.mxu0 0.0
  %1522 = vmatprep.subr.mxu0 0.0
  %1523 = vmatpush1.msra.mxu0 0.0
  %1524 = vmatprep.subr.mxu0 0.0
  %1525 = vmatpush1.msra.mxu0 0.0
  %1526 = vmatprep.subr.mxu0 0.0
  %1527 = vmatpush1.msra.mxu0 0.0
  %1528 = vmatprep.subr.mxu0 0.0
  %1529 = vmatpush1.msra.mxu0 0.0
  %1530 = vmatprep.subr.mxu0 0.0
  %1531 = vmatpush1.msra.mxu0 0.0
  %1532 = vmatprep.subr.mxu0 0.0
  %1533 = vmatpush1.msra.mxu0 0.0
  %1534 = vmatprep.subr.mxu0 0.0
  %1535 = vmatpush1.msra.mxu0 0.0
  %1536 = vmatprep.subr.mxu0 0.0
  %1537 = vmatpush1.msra.mxu0 0.0
  %1538 = vmatprep.subr.mxu0 0.0
  %1539 = vmatpush1.msra.mxu0 0.0
  %1540 = vmatprep.subr.mxu0 0.0
  %1541 = vmatpush1.msra.mxu0 0.0
  %1542 = vmatprep.subr.mxu0 0.0
  %1543 = vmatpush1.msra.mxu0 0.0
  %1544 = vmatprep.subr.mxu0 0.0
  %1545 = vmatpush1.msra.mxu0 0.0
  %1546 = vmatprep.subr.mxu0 0.0
  %1547 = vmatpush1.msra.mxu0 0.0
  %1548 = vmatprep.subr.mxu0 0.0
  %1549 = vmatpush1.msra.mxu0 0.0
  %1550 = vmatprep.subr.mxu0 0.0
  %1551 = vmatpush1.msra.mxu0 0.0
  %1552 = vmatprep.subr.mxu0 0.0
  %1553 = vmatpush1.msra.mxu0 0.0
  %1554 = vmatprep.subr.mxu0 0.0
  %1555 = vmatpush1.msra.mxu0 0.0
  %1556 = vmatprep.subr.mxu0 0.0
  %1557 = vmatpush1.msra.mxu0 0.0
  %1558 = vmatprep.subr.mxu0 0.0
  %1559 = vmatpush1.msra.mxu0 0.0
  %1560 = vmatprep.subr.mxu0 0.0
  %1561 = vmatpush1.msra.mxu0 0.0
  %1562 = vmatprep.subr.mxu0 0.0
  %1563 = vmatpush1.msra.mxu0 0.0
  %1564 = vmatprep.mubr.f32.mxu0 0.0
  %1565 = vmatmul.mubr.f32.gmra.mrb[0].mxu0 %v1495
  %v1566 = vpop.f32.mrb[0].mxu0
  %v1567 = vadd.f32 %v1492, %v1566
  %v1568 = vpop.f32.mrb[0].mxu0
  %1569 = vmatprep.mubr.f32.mxu0 0.0
  %1570 = vmatmul.mubr.f32.gmra.mrb[0].mxu0 %v1498
  %v1571 = vpop.f32.mrb[0].mxu0
  %v1572 = vadd.f32 %v1492, %v1571
  %v1573 = vpop.f32.mrb[0].mxu0
  %1574 = vdwg.mxu0
  %v1575 = vld [vmem:[%s5] sm:$0xff]
  %v1576 = vld [vmem:[%s5 + $0x8] sm:$0xff]
  %v1577 = vld [vmem:[%s5 + $0x10] sm:$0xff]
  %v1578 = vld [vmem:[%s5 + $0x18] sm:$0xff]
  %v1581 = vrot.slane %v1572, 7
  %v1582 = vsel %vm147, %v1581, %v1567
  %v1584 = vrot.slane %v1567, 7
  %v1585 = vrot.slane %v1572, 6
  %v1586 = vsel %vm147, %v1585, %v1584
  %v1588 = vsel %vm143, %v1582, %v1586
  %1589 = vmatprep.subr.mxu0 0.0
  %1590 = vmatpush1.msra.mxu0 %v1575
  %1591 = vmatprep.subr.mxu0 0.0
  %1592 = vmatpush1.msra.mxu0 %v1576
  %1593 = vmatprep.subr.mxu0 0.0
  %1594 = vmatpush1.msra.mxu0 %v1577
  %1595 = vmatprep.subr.mxu0 0.0
  %1596 = vmatpush1.msra.mxu0 %v1578
  %1597 = vmatprep.subr.mxu0 0.0
  %1598 = vmatpush1.msra.mxu0 0.0
  %1599 = vmatprep.subr.mxu0 0.0
  %1600 = vmatpush1.msra.mxu0 0.0
  %1601 = vmatprep.subr.mxu0 0.0
  %1602 = vmatpush1.msra.mxu0 0.0
  %1603 = vmatprep.subr.mxu0 0.0
  %1604 = vmatpush1.msra.mxu0 0.0
  %1605 = vmatprep.subr.mxu0 0.0
  %1606 = vmatpush1.msra.mxu0 0.0
  %1607 = vmatprep.subr.mxu0 0.0
  %1608 = vmatpush1.msra.mxu0 0.0
  %1609 = vmatprep.subr.mxu0 0.0
  %1610 = vmatpush1.msra.mxu0 0.0
  %1611 = vmatprep.subr.mxu0 0.0
  %1612 = vmatpush1.msra.mxu0 0.0
  %1613 = vmatprep.subr.mxu0 0.0
  %1614 = vmatpush1.msra.mxu0 0.0
  %1615 = vmatprep.subr.mxu0 0.0
  %1616 = vmatpush1.msra.mxu0 0.0
  %1617 = vmatprep.subr.mxu0 0.0
  %1618 = vmatpush1.msra.mxu0 0.0
  %1619 = vmatprep.subr.mxu0 0.0
  %1620 = vmatpush1.msra.mxu0 0.0
  %1621 = vmatprep.subr.mxu0 0.0
  %1622 = vmatpush1.msra.mxu0 0.0
  %1623 = vmatprep.subr.mxu0 0.0
  %1624 = vmatpush1.msra.mxu0 0.0
  %1625 = vmatprep.subr.mxu0 0.0
  %1626 = vmatpush1.msra.mxu0 0.0
  %1627 = vmatprep.subr.mxu0 0.0
  %1628 = vmatpush1.msra.mxu0 0.0
  %1629 = vmatprep.subr.mxu0 0.0
  %1630 = vmatpush1.msra.mxu0 0.0
  %1631 = vmatprep.subr.mxu0 0.0
  %1632 = vmatpush1.msra.mxu0 0.0
  %1633 = vmatprep.subr.mxu0 0.0
  %1634 = vmatpush1.msra.mxu0 0.0
  %1635 = vmatprep.subr.mxu0 0.0
  %1636 = vmatpush1.msra.mxu0 0.0
  %1637 = vmatprep.subr.mxu0 0.0
  %1638 = vmatpush1.msra.mxu0 0.0
  %1639 = vmatprep.subr.mxu0 0.0
  %1640 = vmatpush1.msra.mxu0 0.0
  %1641 = vmatprep.subr.mxu0 0.0
  %1642 = vmatpush1.msra.mxu0 0.0
  %1643 = vmatprep.subr.mxu0 0.0
  %1644 = vmatpush1.msra.mxu0 0.0
  %1645 = vmatprep.subr.mxu0 0.0
  %1646 = vmatpush1.msra.mxu0 0.0
  %1647 = vmatprep.subr.mxu0 0.0
  %1648 = vmatpush1.msra.mxu0 0.0
  %1649 = vmatprep.subr.mxu0 0.0
  %1650 = vmatpush1.msra.mxu0 0.0
  %1651 = vmatprep.subr.mxu0 0.0
  %1652 = vmatpush1.msra.mxu0 0.0
  %1653 = vmatprep.mubr.f32.mxu0 0.0
  %1654 = vmatmul.mubr.f32.gmra.mrb[0].mxu0 %v157
  %v1655 = vpop.f32.mrb[0].mxu0
  %v1656 = vadd.f32 0.0, %v1655
  %v1657 = vpop.f32.mrb[0].mxu0
  %1658 = vdwg.mxu0
  %v1659 = vadd.f32 %v1588, %v1656
  %v1660 = vxor.u32 %v1659, 2147483648
  %v1661 = vmul.f32 %v1660, 1.442695
  %v1662 = vpow.pop %v1661
  %v1663 = vadd.f32 %v1662, 1.0
  %v1664 = vrcp.pop %v1663
  %v1665 = vmul.f32 1.0, %v1664
  %v1666 = vtanh.pop %v1659
  %v1667 = vmul.f32 %v1665, 0.0
  %1669 = vrot.lane.b32.xlu0 %v1666, 64
  %v1670 = vpop.permute.xlu0 %1669
  %v1672 = vmul.f32 %v1665, %v1670
  %1674 = vrot.lane.b32.xlu0 %v1672, 32
  %v1675 = vpop.permute.xlu0 %1674
  %v1677 = vadd.f32 %v1667, %v1675
  %v1678 = vtanh.pop %v1677
  %1680 = vrot.lane.b32.xlu0 %v1678, 64
  %v1681 = vpop.permute.xlu0 %1680
  %v1683 = vmul.f32 %v1665, %v1681
  %v1686 = vunpack.c.l.s4 1966171168
  %v1687 = vunpack.c.0.s8 %v1686
  %v1688 = vlaneseq
  %v1689 = vshrl.u32 %v1688, 7
  %v1690 = vsub.s32 %v1687, %v1689
  %v1691 = vrot.slane %v1683, %v1690
  %v1692 = vcombine.high %v1691, %v1691
  %v1694 = vunpack.c.l.s4 1966171168
  %v1695 = vunpack.c.0.s8 %v1694
  %v1696 = vlaneseq
  %v1697 = vshrl.u32 %v1696, 7
  %v1698 = vsub.s32 %v1695, %v1697
  %v1699 = vrot.slane %v1691, %v1698
  %v1701 = vunpack.c.l.s4 1966171168
  %v1702 = vunpack.c.0.s8 %v1701
  %v1703 = vlaneseq
  %v1704 = vshrl.u32 %v1703, 7
  %v1705 = vsub.s32 %v1702, %v1704
  %v1706 = vrot.slane %v1692, %v1705
  %v1707 = vlaneseq
  %v1708 = vshrl.u32 %v1707, 7
  %v1709 = vsub.s32 0, %v1708
  %v1710 = vrot.slane %v1699, %v1709
  %v1711 = vlaneseq
  %v1712 = vshrl.u32 %v1711, 7
  %v1713 = vsub.s32 0, %v1712
  %v1714 = vrot.slane %v1706, %v1713
  %1715 = vrot.lane.b32.xlu0 %v1710, 32
  %v1716 = vpop.permute.xlu0 %1715
  %1717 = vrot.lane.b32.xlu0 %v1714, 32
  %v1718 = vpop.permute.xlu0 %1717
  %1721 = vst.msk [vmem:[%s11] sm:$0x1] %vm291, %v1716
  %1722 = vst.msk [vmem:[%s11 + $0x8] sm:$0x1] %vm291, %v1718
  %1723 = vst.msk [vmem:[%s11 + $0x7] sm:$0x1] %vm294, %v1716
  %1724 = vst.msk [vmem:[%s11 + $0xf] sm:$0x1] %vm294, %v1718
  %v1725 = vrot.slane %v1567, 1
  %v1726 = vsel %vm147, %v1572, %v1725
  %v1728 = vrot.slane %v1567, 6
  %v1729 = vrot.slane %v1572, 5
  %v1730 = vsel %vm147, %v1729, %v1728
  %v1732 = vsel %vm143, %v1726, %v1730
  %1733 = vrot.lane.b32.xlu0 %v1683, 32
  %v1734 = vpop.permute.xlu0 %1733
  %v1735 = vsel %vm155, %v1734, 0
  %1737 = vmatprep.subr.mxu0 0.0
  %1738 = vmatpush1.msra.mxu0 %v1575
  %1739 = vmatprep.subr.mxu0 0.0
  %1740 = vmatpush1.msra.mxu0 %v1576
  %1741 = vmatprep.subr.mxu0 0.0
  %1742 = vmatpush1.msra.mxu0 %v1577
  %1743 = vmatprep.subr.mxu0 0.0
  %1744 = vmatpush1.msra.mxu0 %v1578
  %1745 = vmatprep.subr.mxu0 0.0
  %1746 = vmatpush1.msra.mxu0 0.0
  %1747 = vmatprep.subr.mxu0 0.0
  %1748 = vmatpush1.msra.mxu0 0.0
  %1749 = vmatprep.subr.mxu0 0.0
  %1750 = vmatpush1.msra.mxu0 0.0
  %1751 = vmatprep.subr.mxu0 0.0
  %1752 = vmatpush1.msra.mxu0 0.0
  %1753 = vmatprep.subr.mxu0 0.0
  %1754 = vmatpush1.msra.mxu0 0.0
  %1755 = vmatprep.subr.mxu0 0.0
  %1756 = vmatpush1.msra.mxu0 0.0
  %1757 = vmatprep.subr.mxu0 0.0
  %1758 = vmatpush1.msra.mxu0 0.0
  %1759 = vmatprep.subr.mxu0 0.0
  %1760 = vmatpush1.msra.mxu0 0.0
  %1761 = vmatprep.subr.mxu0 0.0
  %1762 = vmatpush1.msra.mxu0 0.0
  %1763 = vmatprep.subr.mxu0 0.0
  %1764 = vmatpush1.msra.mxu0 0.0
  %1765 = vmatprep.subr.mxu0 0.0
  %1766 = vmatpush1.msra.mxu0 0.0
  %1767 = vmatprep.subr.mxu0 0.0
  %1768 = vmatpush1.msra.mxu0 0.0
  %1769 = vmatprep.subr.mxu0 0.0
  %1770 = vmatpush1.msra.mxu0 0.0
  %1771 = vmatprep.subr.mxu0 0.0
  %1772 = vmatpush1.msra.mxu0 0.0
  %1773 = vmatprep.subr.mxu0 0.0
  %1774 = vmatpush1.msra.mxu0 0.0
  %1775 = vmatprep.subr.mxu0 0.0
  %1776 = vmatpush1.msra.mxu0 0.0
  %1777 = vmatprep.subr.mxu0 0.0
  %1778 = vmatpush1.msra.mxu0 0.0
  %1779 = vmatprep.subr.mxu0 0.0
  %1780 = vmatpush1.msra.mxu0 0.0
  %1781 = vmatprep.subr.mxu0 0.0
  %1782 = vmatpush1.msra.mxu0 0.0
  %1783 = vmatprep.subr.mxu0 0.0
  %1784 = vmatpush1.msra.mxu0 0.0
  %1785 = vmatprep.subr.mxu0 0.0
  %1786 = vmatpush1.msra.mxu0 0.0
  %1787 = vmatprep.subr.mxu0 0.0
  %1788 = vmatpush1.msra.mxu0 0.0
  %1789 = vmatprep.subr.mxu0 0.0
  %1790 = vmatpush1.msra.mxu0 0.0
  %1791 = vmatprep.subr.mxu0 0.0
  %1792 = vmatpush1.msra.mxu0 0.0
  %1793 = vmatprep.subr.mxu0 0.0
  %1794 = vmatpush1.msra.mxu0 0.0
  %1795 = vmatprep.subr.mxu0 0.0
  %1796 = vmatpush1.msra.mxu0 0.0
  %1797 = vmatprep.subr.mxu0 0.0
  %1798 = vmatpush1.msra.mxu0 0.0
  %1799 = vmatprep.subr.mxu0 0.0
  %1800 = vmatpush1.msra.mxu0 0.0
  %1801 = vmatprep.mubr.f32.mxu0 0.0
  %1802 = vmatmul.mubr.f32.gmra.mrb[0].mxu0 %v1735
  %v1803 = vpop.f32.mrb[0].mxu0
  %v1804 = vadd.f32 0.0, %v1803
  %v1805 = vpop.f32.mrb[0].mxu0
  %1806 = vdwg.mxu0
  %v1807 = vadd.f32 %v1732, %v1804
  %v1808 = vxor.u32 %v1807, 2147483648
  %v1809 = vmul.f32 %v1808, 1.442695
  %v1810 = vpow.pop %v1809
  %v1811 = vadd.f32 %v1810, 1.0
  %v1812 = vrcp.pop %v1811
  %v1813 = vmul.f32 1.0, %v1812
  %v1814 = vtanh.pop %v1807
  %v1815 = vmul.f32 %v1813, %v1677
  %1817 = vrot.lane.b32.xlu0 %v1814, 64
  %v1818 = vpop.permute.xlu0 %1817
  %v1820 = vmul.f32 %v1813, %v1818
  %1822 = vrot.lane.b32.xlu0 %v1820, 32
  %v1823 = vpop.permute.xlu0 %1822
  %v1825 = vadd.f32 %v1815, %v1823
  %v1826 = vtanh.pop %v1825
  %1828 = vrot.lane.b32.xlu0 %v1826, 64
  %v1829 = vpop.permute.xlu0 %1828
  %v1831 = vmul.f32 %v1813, %v1829
  %v1834 = vunpack.c.l.s4 1966171168
  %v1835 = vunpack.c.0.s8 %v1834
  %v1836 = vlaneseq
  %v1837 = vshrl.u32 %v1836, 7
  %v1838 = vsub.s32 %v1835, %v1837
  %v1839 = vrot.slane %v1831, %v1838
  %v1840 = vcombine.high %v1839, %v1839
  %v1842 = vunpack.c.l.s4 1966171168
  %v1843 = vunpack.c.0.s8 %v1842
  %v1844 = vlaneseq
  %v1845 = vshrl.u32 %v1844, 7
  %v1846 = vsub.s32 %v1843, %v1845
  %v1847 = vrot.slane %v1839, %v1846
  %v1849 = vunpack.c.l.s4 1966171168
  %v1850 = vunpack.c.0.s8 %v1849
  %v1851 = vlaneseq
  %v1852 = vshrl.u32 %v1851, 7
  %v1853 = vsub.s32 %v1850, %v1852
  %v1854 = vrot.slane %v1840, %v1853
  %v1855 = vlaneseq
  %v1856 = vshrl.u32 %v1855, 7
  %v1857 = vsub.s32 0, %v1856
  %v1858 = vrot.slane %v1847, %v1857
  %v1859 = vlaneseq
  %v1860 = vshrl.u32 %v1859, 7
  %v1861 = vsub.s32 0, %v1860
  %v1862 = vrot.slane %v1854, %v1861
  %1863 = vrot.lane.b32.xlu0 %v1858, 32
  %v1864 = vpop.permute.xlu0 %1863
  %1865 = vrot.lane.b32.xlu0 %v1862, 32
  %v1866 = vpop.permute.xlu0 %1865
  %1869 = vst.msk [vmem:[%s11 + $0x1] sm:$0x1] %vm291, %v1864
  %1870 = vst.msk [vmem:[%s11 + $0x9] sm:$0x1] %vm291, %v1866
  %1871 = vst.msk [vmem:[%s11 + $0x6] sm:$0x1] %vm294, %v1864
  %1872 = vst.msk [vmem:[%s11 + $0xe] sm:$0x1] %vm294, %v1866
  %v1873 = vrot.slane %v1567, 2
  %v1874 = vrot.slane %v1572, 1
  %v1875 = vsel %vm147, %v1874, %v1873
  %v1877 = vrot.slane %v1567, 5
  %v1878 = vrot.slane %v1572, 4
  %v1879 = vsel %vm147, %v1878, %v1877
  %v1881 = vsel %vm143, %v1875, %v1879
  %1882 = vrot.lane.b32.xlu0 %v1831, 32
  %v1883 = vpop.permute.xlu0 %1882
  %v1884 = vsel %vm155, %v1883, 0
  %1886 = vmatprep.subr.mxu0 0.0
  %1887 = vmatpush1.msra.mxu0 %v1575
  %1888 = vmatprep.subr.mxu0 0.0
  %1889 = vmatpush1.msra.mxu0 %v1576
  %1890 = vmatprep.subr.mxu0 0.0
  %1891 = vmatpush1.msra.mxu0 %v1577
  %1892 = vmatprep.subr.mxu0 0.0
  %1893 = vmatpush1.msra.mxu0 %v1578
  %1894 = vmatprep.subr.mxu0 0.0
  %1895 = vmatpush1.msra.mxu0 0.0
  %1896 = vmatprep.subr.mxu0 0.0
  %1897 = vmatpush1.msra.mxu0 0.0
  %1898 = vmatprep.subr.mxu0 0.0
  %1899 = vmatpush1.msra.mxu0 0.0
  %1900 = vmatprep.subr.mxu0 0.0
  %1901 = vmatpush1.msra.mxu0 0.0
  %1902 = vmatprep.subr.mxu0 0.0
  %1903 = vmatpush1.msra.mxu0 0.0
  %1904 = vmatprep.subr.mxu0 0.0
  %1905 = vmatpush1.msra.mxu0 0.0
  %1906 = vmatprep.subr.mxu0 0.0
  %1907 = vmatpush1.msra.mxu0 0.0
  %1908 = vmatprep.subr.mxu0 0.0
  %1909 = vmatpush1.msra.mxu0 0.0
  %1910 = vmatprep.subr.mxu0 0.0
  %1911 = vmatpush1.msra.mxu0 0.0
  %1912 = vmatprep.subr.mxu0 0.0
  %1913 = vmatpush1.msra.mxu0 0.0
  %1914 = vmatprep.subr.mxu0 0.0
  %1915 = vmatpush1.msra.mxu0 0.0
  %1916 = vmatprep.subr.mxu0 0.0
  %1917 = vmatpush1.msra.mxu0 0.0
  %1918 = vmatprep.subr.mxu0 0.0
  %1919 = vmatpush1.msra.mxu0 0.0
  %1920 = vmatprep.subr.mxu0 0.0
  %1921 = vmatpush1.msra.mxu0 0.0
  %1922 = vmatprep.subr.mxu0 0.0
  %1923 = vmatpush1.msra.mxu0 0.0
  %1924 = vmatprep.subr.mxu0 0.0
  %1925 = vmatpush1.msra.mxu0 0.0
  %1926 = vmatprep.subr.mxu0 0.0
  %1927 = vmatpush1.msra.mxu0 0.0
  %1928 = vmatprep.subr.mxu0 0.0
  %1929 = vmatpush1.msra.mxu0 0.0
  %1930 = vmatprep.subr.mxu0 0.0
  %1931 = vmatpush1.msra.mxu0 0.0
  %1932 = vmatprep.subr.mxu0 0.0
  %1933 = vmatpush1.msra.mxu0 0.0
  %1934 = vmatprep.subr.mxu0 0.0
  %1935 = vmatpush1.msra.mxu0 0.0
  %1936 = vmatprep.subr.mxu0 0.0
  %1937 = vmatpush1.msra.mxu0 0.0
  %1938 = vmatprep.subr.mxu0 0.0
  %1939 = vmatpush1.msra.mxu0 0.0
  %1940 = vmatprep.subr.mxu0 0.0
  %1941 = vmatpush1.msra.mxu0 0.0
  %1942 = vmatprep.subr.mxu0 0.0
  %1943 = vmatpush1.msra.mxu0 0.0
  %1944 = vmatprep.subr.mxu0 0.0
  %1945 = vmatpush1.msra.mxu0 0.0
  %1946 = vmatprep.subr.mxu0 0.0
  %1947 = vmatpush1.msra.mxu0 0.0
  %1948 = vmatprep.subr.mxu0 0.0
  %1949 = vmatpush1.msra.mxu0 0.0
  %1950 = vmatprep.mubr.f32.mxu0 0.0
  %1951 = vmatmul.mubr.f32.gmra.mrb[0].mxu0 %v1884
  %v1952 = vpop.f32.mrb[0].mxu0
  %v1953 = vadd.f32 0.0, %v1952
  %v1954 = vpop.f32.mrb[0].mxu0
  %1955 = vdwg.mxu0
  %v1956 = vadd.f32 %v1881, %v1953
  %v1957 = vxor.u32 %v1956, 2147483648
  %v1958 = vmul.f32 %v1957, 1.442695
  %v1959 = vpow.pop %v1958
  %v1960 = vadd.f32 %v1959, 1.0
  %v1961 = vrcp.pop %v1960
  %v1962 = vmul.f32 1.0, %v1961
  %v1963 = vtanh.pop %v1956
  %v1964 = vmul.f32 %v1962, %v1825
  %1966 = vrot.lane.b32.xlu0 %v1963, 64
  %v1967 = vpop.permute.xlu0 %1966
  %v1969 = vmul.f32 %v1962, %v1967
  %1971 = vrot.lane.b32.xlu0 %v1969, 32
  %v1972 = vpop.permute.xlu0 %1971
  %v1974 = vadd.f32 %v1964, %v1972
  %v1975 = vtanh.pop %v1974
  %1977 = vrot.lane.b32.xlu0 %v1975, 64
  %v1978 = vpop.permute.xlu0 %1977
  %v1980 = vmul.f32 %v1962, %v1978
  %v1983 = vunpack.c.l.s4 1966171168
  %v1984 = vunpack.c.0.s8 %v1983
  %v1985 = vlaneseq
  %v1986 = vshrl.u32 %v1985, 7
  %v1987 = vsub.s32 %v1984, %v1986
  %v1988 = vrot.slane %v1980, %v1987
  %v1989 = vcombine.high %v1988, %v1988
  %v1991 = vunpack.c.l.s4 1966171168
  %v1992 = vunpack.c.0.s8 %v1991
  %v1993 = vlaneseq
  %v1994 = vshrl.u32 %v1993, 7
  %v1995 = vsub.s32 %v1992, %v1994
  %v1996 = vrot.slane %v1988, %v1995
  %v1998 = vunpack.c.l.s4 1966171168
  %v1999 = vunpack.c.0.s8 %v1998
  %v2000 = vlaneseq
  %v2001 = vshrl.u32 %v2000, 7
  %v2002 = vsub.s32 %v1999, %v2001
  %v2003 = vrot.slane %v1989, %v2002
  %v2004 = vlaneseq
  %v2005 = vshrl.u32 %v2004, 7
  %v2006 = vsub.s32 0, %v2005
  %v2007 = vrot.slane %v1996, %v2006
  %v2008 = vlaneseq
  %v2009 = vshrl.u32 %v2008, 7
  %v2010 = vsub.s32 0, %v2009
  %v2011 = vrot.slane %v2003, %v2010
  %2012 = vrot.lane.b32.xlu0 %v2007, 32
  %v2013 = vpop.permute.xlu0 %2012
  %2014 = vrot.lane.b32.xlu0 %v2011, 32
  %v2015 = vpop.permute.xlu0 %2014
  %2018 = vst.msk [vmem:[%s11 + $0x2] sm:$0x1] %vm291, %v2013
  %2019 = vst.msk [vmem:[%s11 + $0xa] sm:$0x1] %vm291, %v2015
  %2020 = vst.msk [vmem:[%s11 + $0x5] sm:$0x1] %vm294, %v2013
  %2021 = vst.msk [vmem:[%s11 + $0xd] sm:$0x1] %vm294, %v2015
  %v2022 = vrot.slane %v1567, 3
  %v2023 = vrot.slane %v1572, 2
  %v2024 = vsel %vm147, %v2023, %v2022
  %v2026 = vrot.slane %v1567, 4
  %v2027 = vrot.slane %v1572, 3
  %v2028 = vsel %vm147, %v2027, %v2026
  %v2030 = vsel %vm143, %v2024, %v2028
  %2031 = vrot.lane.b32.xlu0 %v1980, 32
  %v2032 = vpop.permute.xlu0 %2031
  %v2033 = vsel %vm155, %v2032, 0
  %2035 = vmatprep.subr.mxu0 0.0
  %2036 = vmatpush1.msra.mxu0 %v1575
  %2037 = vmatprep.subr.mxu0 0.0
  %2038 = vmatpush1.msra.mxu0 %v1576
  %2039 = vmatprep.subr.mxu0 0.0
  %2040 = vmatpush1.msra.mxu0 %v1577
  %2041 = vmatprep.subr.mxu0 0.0
  %2042 = vmatpush1.msra.mxu0 %v1578
  %2043 = vmatprep.subr.mxu0 0.0
  %2044 = vmatpush1.msra.mxu0 0.0
  %2045 = vmatprep.subr.mxu0 0.0
  %2046 = vmatpush1.msra.mxu0 0.0
  %2047 = vmatprep.subr.mxu0 0.0
  %2048 = vmatpush1.msra.mxu0 0.0
  %2049 = vmatprep.subr.mxu0 0.0
  %2050 = vmatpush1.msra.mxu0 0.0
  %2051 = vmatprep.subr.mxu0 0.0
  %2052 = vmatpush1.msra.mxu0 0.0
  %2053 = vmatprep.subr.mxu0 0.0
  %2054 = vmatpush1.msra.mxu0 0.0
  %2055 = vmatprep.subr.mxu0 0.0
  %2056 = vmatpush1.msra.mxu0 0.0
  %2057 = vmatprep.subr.mxu0 0.0
  %2058 = vmatpush1.msra.mxu0 0.0
  %2059 = vmatprep.subr.mxu0 0.0
  %2060 = vmatpush1.msra.mxu0 0.0
  %2061 = vmatprep.subr.mxu0 0.0
  %2062 = vmatpush1.msra.mxu0 0.0
  %2063 = vmatprep.subr.mxu0 0.0
  %2064 = vmatpush1.msra.mxu0 0.0
  %2065 = vmatprep.subr.mxu0 0.0
  %2066 = vmatpush1.msra.mxu0 0.0
  %2067 = vmatprep.subr.mxu0 0.0
  %2068 = vmatpush1.msra.mxu0 0.0
  %2069 = vmatprep.subr.mxu0 0.0
  %2070 = vmatpush1.msra.mxu0 0.0
  %2071 = vmatprep.subr.mxu0 0.0
  %2072 = vmatpush1.msra.mxu0 0.0
  %2073 = vmatprep.subr.mxu0 0.0
  %2074 = vmatpush1.msra.mxu0 0.0
  %2075 = vmatprep.subr.mxu0 0.0
  %2076 = vmatpush1.msra.mxu0 0.0
  %2077 = vmatprep.subr.mxu0 0.0
  %2078 = vmatpush1.msra.mxu0 0.0
  %2079 = vmatprep.subr.mxu0 0.0
  %2080 = vmatpush1.msra.mxu0 0.0
  %2081 = vmatprep.subr.mxu0 0.0
  %2082 = vmatpush1.msra.mxu0 0.0
  %2083 = vmatprep.subr.mxu0 0.0
  %2084 = vmatpush1.msra.mxu0 0.0
  %2085 = vmatprep.subr.mxu0 0.0
  %2086 = vmatpush1.msra.mxu0 0.0
  %2087 = vmatprep.subr.mxu0 0.0
  %2088 = vmatpush1.msra.mxu0 0.0
  %2089 = vmatprep.subr.mxu0 0.0
  %2090 = vmatpush1.msra.mxu0 0.0
  %2091 = vmatprep.subr.mxu0 0.0
  %2092 = vmatpush1.msra.mxu0 0.0
  %2093 = vmatprep.subr.mxu0 0.0
  %2094 = vmatpush1.msra.mxu0 0.0
  %2095 = vmatprep.subr.mxu0 0.0
  %2096 = vmatpush1.msra.mxu0 0.0
  %2097 = vmatprep.subr.mxu0 0.0
  %2098 = vmatpush1.msra.mxu0 0.0
  %2099 = vmatprep.mubr.f32.mxu0 0.0
  %2100 = vmatmul.mubr.f32.gmra.mrb[0].mxu0 %v2033
  %v2101 = vpop.f32.mrb[0].mxu0
  %v2102 = vadd.f32 0.0, %v2101
  %v2103 = vpop.f32.mrb[0].mxu0
  %2104 = vdwg.mxu0
  %v2105 = vadd.f32 %v2030, %v2102
  %v2106 = vxor.u32 %v2105, 2147483648
  %v2107 = vmul.f32 %v2106, 1.442695
  %v2108 = vpow.pop %v2107
  %v2109 = vadd.f32 %v2108, 1.0
  %v2110 = vrcp.pop %v2109
  %v2111 = vmul.f32 1.0, %v2110
  %v2112 = vtanh.pop %v2105
  %v2113 = vmul.f32 %v2111, %v1974
  %2115 = vrot.lane.b32.xlu0 %v2112, 64
  %v2116 = vpop.permute.xlu0 %2115
  %v2118 = vmul.f32 %v2111, %v2116
  %2120 = vrot.lane.b32.xlu0 %v2118, 32
  %v2121 = vpop.permute.xlu0 %2120
  %v2123 = vadd.f32 %v2113, %v2121
  %v2124 = vtanh.pop %v2123
  %2126 = vrot.lane.b32.xlu0 %v2124, 64
  %v2127 = vpop.permute.xlu0 %2126
  %v2129 = vmul.f32 %v2111, %v2127
  %v2132 = vunpack.c.l.s4 1966171168
  %v2133 = vunpack.c.0.s8 %v2132
  %v2134 = vlaneseq
  %v2135 = vshrl.u32 %v2134, 7
  %v2136 = vsub.s32 %v2133, %v2135
  %v2137 = vrot.slane %v2129, %v2136
  %v2138 = vcombine.high %v2137, %v2137
  %v2140 = vunpack.c.l.s4 1966171168
  %v2141 = vunpack.c.0.s8 %v2140
  %v2142 = vlaneseq
  %v2143 = vshrl.u32 %v2142, 7
  %v2144 = vsub.s32 %v2141, %v2143
  %v2145 = vrot.slane %v2137, %v2144
  %v2147 = vunpack.c.l.s4 1966171168
  %v2148 = vunpack.c.0.s8 %v2147
  %v2149 = vlaneseq
  %v2150 = vshrl.u32 %v2149, 7
  %v2151 = vsub.s32 %v2148, %v2150
  %v2152 = vrot.slane %v2138, %v2151
  %v2153 = vlaneseq
  %v2154 = vshrl.u32 %v2153, 7
  %v2155 = vsub.s32 0, %v2154
  %v2156 = vrot.slane %v2145, %v2155
  %v2157 = vlaneseq
  %v2158 = vshrl.u32 %v2157, 7
  %v2159 = vsub.s32 0, %v2158
  %v2160 = vrot.slane %v2152, %v2159
  %2161 = vrot.lane.b32.xlu0 %v2156, 32
  %v2162 = vpop.permute.xlu0 %2161
  %2163 = vrot.lane.b32.xlu0 %v2160, 32
  %v2164 = vpop.permute.xlu0 %2163
  %2167 = vst.msk [vmem:[%s11 + $0x3] sm:$0x1] %vm291, %v2162
  %2168 = vst.msk [vmem:[%s11 + $0xb] sm:$0x1] %vm291, %v2164
  %2169 = vst.msk [vmem:[%s11 + $0x4] sm:$0x1] %vm294, %v2162
  %2170 = vst.msk [vmem:[%s11 + $0xc] sm:$0x1] %vm294, %v2164
  %v2171 = vsel %vm143, %v2028, %v2024
  %2172 = vrot.lane.b32.xlu0 %v2129, 32
  %v2173 = vpop.permute.xlu0 %2172
  %v2174 = vsel %vm155, %v2173, 0
  %2176 = vmatprep.subr.mxu0 0.0
  %2177 = vmatpush1.msra.mxu0 %v1575
  %2178 = vmatprep.subr.mxu0 0.0
  %2179 = vmatpush1.msra.mxu0 %v1576
  %2180 = vmatprep.subr.mxu0 0.0
  %2181 = vmatpush1.msra.mxu0 %v1577
  %2182 = vmatprep.subr.mxu0 0.0
  %2183 = vmatpush1.msra.mxu0 %v1578
  %2184 = vmatprep.subr.mxu0 0.0
  %2185 = vmatpush1.msra.mxu0 0.0
  %2186 = vmatprep.subr.mxu0 0.0
  %2187 = vmatpush1.msra.mxu0 0.0
  %2188 = vmatprep.subr.mxu0 0.0
  %2189 = vmatpush1.msra.mxu0 0.0
  %2190 = vmatprep.subr.mxu0 0.0
  %2191 = vmatpush1.msra.mxu0 0.0
  %2192 = vmatprep.subr.mxu0 0.0
  %2193 = vmatpush1.msra.mxu0 0.0
  %2194 = vmatprep.subr.mxu0 0.0
  %2195 = vmatpush1.msra.mxu0 0.0
  %2196 = vmatprep.subr.mxu0 0.0
  %2197 = vmatpush1.msra.mxu0 0.0
  %2198 = vmatprep.subr.mxu0 0.0
  %2199 = vmatpush1.msra.mxu0 0.0
  %2200 = vmatprep.subr.mxu0 0.0
  %2201 = vmatpush1.msra.mxu0 0.0
  %2202 = vmatprep.subr.mxu0 0.0
  %2203 = vmatpush1.msra.mxu0 0.0
  %2204 = vmatprep.subr.mxu0 0.0
  %2205 = vmatpush1.msra.mxu0 0.0
  %2206 = vmatprep.subr.mxu0 0.0
  %2207 = vmatpush1.msra.mxu0 0.0
  %2208 = vmatprep.subr.mxu0 0.0
  %2209 = vmatpush1.msra.mxu0 0.0
  %2210 = vmatprep.subr.mxu0 0.0
  %2211 = vmatpush1.msra.mxu0 0.0
  %2212 = vmatprep.subr.mxu0 0.0
  %2213 = vmatpush1.msra.mxu0 0.0
  %2214 = vmatprep.subr.mxu0 0.0
  %2215 = vmatpush1.msra.mxu0 0.0
  %2216 = vmatprep.subr.mxu0 0.0
  %2217 = vmatpush1.msra.mxu0 0.0
  %2218 = vmatprep.subr.mxu0 0.0
  %2219 = vmatpush1.msra.mxu0 0.0
  %2220 = vmatprep.subr.mxu0 0.0
  %2221 = vmatpush1.msra.mxu0 0.0
  %2222 = vmatprep.subr.mxu0 0.0
  %2223 = vmatpush1.msra.mxu0 0.0
  %2224 = vmatprep.subr.mxu0 0.0
  %2225 = vmatpush1.msra.mxu0 0.0
  %2226 = vmatprep.subr.mxu0 0.0
  %2227 = vmatpush1.msra.mxu0 0.0
  %2228 = vmatprep.subr.mxu0 0.0
  %2229 = vmatpush1.msra.mxu0 0.0
  %2230 = vmatprep.subr.mxu0 0.0
  %2231 = vmatpush1.msra.mxu0 0.0
  %2232 = vmatprep.subr.mxu0 0.0
  %2233 = vmatpush1.msra.mxu0 0.0
  %2234 = vmatprep.subr.mxu0 0.0
  %2235 = vmatpush1.msra.mxu0 0.0
  %2236 = vmatprep.subr.mxu0 0.0
  %2237 = vmatpush1.msra.mxu0 0.0
  %2238 = vmatprep.subr.mxu0 0.0
  %2239 = vmatpush1.msra.mxu0 0.0
  %2240 = vmatprep.mubr.f32.mxu0 0.0
  %2241 = vmatmul.mubr.f32.gmra.mrb[0].mxu0 %v2174
  %v2242 = vpop.f32.mrb[0].mxu0
  %v2243 = vadd.f32 0.0, %v2242
  %v2244 = vpop.f32.mrb[0].mxu0
  %2245 = vdwg.mxu0
  %v2246 = vadd.f32 %v2171, %v2243
  %v2247 = vxor.u32 %v2246, 2147483648
  %v2248 = vmul.f32 %v2247, 1.442695
  %v2249 = vpow.pop %v2248
  %v2250 = vadd.f32 %v2249, 1.0
  %v2251 = vrcp.pop %v2250
  %v2252 = vmul.f32 1.0, %v2251
  %v2253 = vtanh.pop %v2246
  %v2254 = vmul.f32 %v2252, %v2123
  %2256 = vrot.lane.b32.xlu0 %v2253, 64
  %v2257 = vpop.permute.xlu0 %2256
  %v2259 = vmul.f32 %v2252, %v2257
  %2261 = vrot.lane.b32.xlu0 %v2259, 32
  %v2262 = vpop.permute.xlu0 %2261
  %v2264 = vadd.f32 %v2254, %v2262
  %v2265 = vtanh.pop %v2264
  %2267 = vrot.lane.b32.xlu0 %v2265, 64
  %v2268 = vpop.permute.xlu0 %2267
  %v2270 = vmul.f32 %v2252, %v2268
  %v2273 = vunpack.c.l.s4 1966171168
  %v2274 = vunpack.c.0.s8 %v2273
  %v2275 = vlaneseq
  %v2276 = vshrl.u32 %v2275, 7
  %v2277 = vsub.s32 %v2274, %v2276
  %v2278 = vrot.slane %v2270, %v2277
  %v2279 = vcombine.high %v2278, %v2278
  %v2281 = vunpack.c.l.s4 1966171168
  %v2282 = vunpack.c.0.s8 %v2281
  %v2283 = vlaneseq
  %v2284 = vshrl.u32 %v2283, 7
  %v2285 = vsub.s32 %v2282, %v2284
  %v2286 = vrot.slane %v2278, %v2285
  %v2288 = vunpack.c.l.s4 1966171168
  %v2289 = vunpack.c.0.s8 %v2288
  %v2290 = vlaneseq
  %v2291 = vshrl.u32 %v2290, 7
  %v2292 = vsub.s32 %v2289, %v2291
  %v2293 = vrot.slane %v2279, %v2292
  %v2294 = vlaneseq
  %v2295 = vshrl.u32 %v2294, 7
  %v2296 = vsub.s32 0, %v2295
  %v2297 = vrot.slane %v2286, %v2296
  %v2298 = vlaneseq
  %v2299 = vshrl.u32 %v2298, 7
  %v2300 = vsub.s32 0, %v2299
  %v2301 = vrot.slane %v2293, %v2300
  %2302 = vrot.lane.b32.xlu0 %v2297, 32
  %v2303 = vpop.permute.xlu0 %2302
  %2304 = vrot.lane.b32.xlu0 %v2301, 32
  %v2305 = vpop.permute.xlu0 %2304
  %2308 = vst.msk [vmem:[%s11 + $0x4] sm:$0x1] %vm291, %v2303
  %2309 = vst.msk [vmem:[%s11 + $0xc] sm:$0x1] %vm291, %v2305
  %2310 = vst.msk [vmem:[%s11 + $0x3] sm:$0x1] %vm294, %v2303
  %2311 = vst.msk [vmem:[%s11 + $0xb] sm:$0x1] %vm294, %v2305
  %v2312 = vsel %vm143, %v1879, %v1875
  %2313 = vrot.lane.b32.xlu0 %v2270, 32
  %v2314 = vpop.permute.xlu0 %2313
  %v2315 = vsel %vm155, %v2314, 0
  %2317 = vmatprep.subr.mxu0 0.0
  %2318 = vmatpush1.msra.mxu0 %v1575
  %2319 = vmatprep.subr.mxu0 0.0
  %2320 = vmatpush1.msra.mxu0 %v1576
  %2321 = vmatprep.subr.mxu0 0.0
  %2322 = vmatpush1.msra.mxu0 %v1577
  %2323 = vmatprep.subr.mxu0 0.0
  %2324 = vmatpush1.msra.mxu0 %v1578
  %2325 = vmatprep.subr.mxu0 0.0
  %2326 = vmatpush1.msra.mxu0 0.0
  %2327 = vmatprep.subr.mxu0 0.0
  %2328 = vmatpush1.msra.mxu0 0.0
  %2329 = vmatprep.subr.mxu0 0.0
  %2330 = vmatpush1.msra.mxu0 0.0
  %2331 = vmatprep.subr.mxu0 0.0
  %2332 = vmatpush1.msra.mxu0 0.0
  %2333 = vmatprep.subr.mxu0 0.0
  %2334 = vmatpush1.msra.mxu0 0.0
  %2335 = vmatprep.subr.mxu0 0.0
  %2336 = vmatpush1.msra.mxu0 0.0
  %2337 = vmatprep.subr.mxu0 0.0
  %2338 = vmatpush1.msra.mxu0 0.0
  %2339 = vmatprep.subr.mxu0 0.0
  %2340 = vmatpush1.msra.mxu0 0.0
  %2341 = vmatprep.subr.mxu0 0.0
  %2342 = vmatpush1.msra.mxu0 0.0
  %2343 = vmatprep.subr.mxu0 0.0
  %2344 = vmatpush1.msra.mxu0 0.0
  %2345 = vmatprep.subr.mxu0 0.0
  %2346 = vmatpush1.msra.mxu0 0.0
  %2347 = vmatprep.subr.mxu0 0.0
  %2348 = vmatpush1.msra.mxu0 0.0
  %2349 = vmatprep.subr.mxu0 0.0
  %2350 = vmatpush1.msra.mxu0 0.0
  %2351 = vmatprep.subr.mxu0 0.0
  %2352 = vmatpush1.msra.mxu0 0.0
  %2353 = vmatprep.subr.mxu0 0.0
  %2354 = vmatpush1.msra.mxu0 0.0
  %2355 = vmatprep.subr.mxu0 0.0
  %2356 = vmatpush1.msra.mxu0 0.0
  %2357 = vmatprep.subr.mxu0 0.0
  %2358 = vmatpush1.msra.mxu0 0.0
  %2359 = vmatprep.subr.mxu0 0.0
  %2360 = vmatpush1.msra.mxu0 0.0
  %2361 = vmatprep.subr.mxu0 0.0
  %2362 = vmatpush1.msra.mxu0 0.0
  %2363 = vmatprep.subr.mxu0 0.0
  %2364 = vmatpush1.msra.mxu0 0.0
  %2365 = vmatprep.subr.mxu0 0.0
  %2366 = vmatpush1.msra.mxu0 0.0
  %2367 = vmatprep.subr.mxu0 0.0
  %2368 = vmatpush1.msra.mxu0 0.0
  %2369 = vmatprep.subr.mxu0 0.0
  %2370 = vmatpush1.msra.mxu0 0.0
  %2371 = vmatprep.subr.mxu0 0.0
  %2372 = vmatpush1.msra.mxu0 0.0
  %2373 = vmatprep.subr.mxu0 0.0
  %2374 = vmatpush1.msra.mxu0 0.0
  %2375 = vmatprep.subr.mxu0 0.0
  %2376 = vmatpush1.msra.mxu0 0.0
  %2377 = vmatprep.subr.mxu0 0.0
  %2378 = vmatpush1.msra.mxu0 0.0
  %2379 = vmatprep.subr.mxu0 0.0
  %2380 = vmatpush1.msra.mxu0 0.0
  %2381 = vmatprep.mubr.f32.mxu0 0.0
  %2382 = vmatmul.mubr.f32.gmra.mrb[0].mxu0 %v2315
  %v2383 = vpop.f32.mrb[0].mxu0
  %v2384 = vadd.f32 0.0, %v2383
  %v2385 = vpop.f32.mrb[0].mxu0
  %2386 = vdwg.mxu0
  %v2387 = vadd.f32 %v2312, %v2384
  %v2388 = vxor.u32 %v2387, 2147483648
  %v2389 = vmul.f32 %v2388, 1.442695
  %v2390 = vpow.pop %v2389
  %v2391 = vadd.f32 %v2390, 1.0
  %v2392 = vrcp.pop %v2391
  %v2393 = vmul.f32 1.0, %v2392
  %v2394 = vtanh.pop %v2387
  %v2395 = vmul.f32 %v2393, %v2264
  %2397 = vrot.lane.b32.xlu0 %v2394, 64
  %v2398 = vpop.permute.xlu0 %2397
  %v2400 = vmul.f32 %v2393, %v2398
  %2402 = vrot.lane.b32.xlu0 %v2400, 32
  %v2403 = vpop.permute.xlu0 %2402
  %v2405 = vadd.f32 %v2395, %v2403
  %v2406 = vtanh.pop %v2405
  %2408 = vrot.lane.b32.xlu0 %v2406, 64
  %v2409 = vpop.permute.xlu0 %2408
  %v2411 = vmul.f32 %v2393, %v2409
  %v2414 = vunpack.c.l.s4 1966171168
  %v2415 = vunpack.c.0.s8 %v2414
  %v2416 = vlaneseq
  %v2417 = vshrl.u32 %v2416, 7
  %v2418 = vsub.s32 %v2415, %v2417
  %v2419 = vrot.slane %v2411, %v2418
  %v2420 = vcombine.high %v2419, %v2419
  %v2422 = vunpack.c.l.s4 1966171168
  %v2423 = vunpack.c.0.s8 %v2422
  %v2424 = vlaneseq
  %v2425 = vshrl.u32 %v2424, 7
  %v2426 = vsub.s32 %v2423, %v2425
  %v2427 = vrot.slane %v2419, %v2426
  %v2429 = vunpack.c.l.s4 1966171168
  %v2430 = vunpack.c.0.s8 %v2429
  %v2431 = vlaneseq
  %v2432 = vshrl.u32 %v2431, 7
  %v2433 = vsub.s32 %v2430, %v2432
  %v2434 = vrot.slane %v2420, %v2433
  %v2435 = vlaneseq
  %v2436 = vshrl.u32 %v2435, 7
  %v2437 = vsub.s32 0, %v2436
  %v2438 = vrot.slane %v2427, %v2437
  %v2439 = vlaneseq
  %v2440 = vshrl.u32 %v2439, 7
  %v2441 = vsub.s32 0, %v2440
  %v2442 = vrot.slane %v2434, %v2441
  %2443 = vrot.lane.b32.xlu0 %v2438, 32
  %v2444 = vpop.permute.xlu0 %2443
  %2445 = vrot.lane.b32.xlu0 %v2442, 32
  %v2446 = vpop.permute.xlu0 %2445
  %2449 = vst.msk [vmem:[%s11 + $0x5] sm:$0x1] %vm291, %v2444
  %2450 = vst.msk [vmem:[%s11 + $0xd] sm:$0x1] %vm291, %v2446
  %2451 = vst.msk [vmem:[%s11 + $0x2] sm:$0x1] %vm294, %v2444
  %2452 = vst.msk [vmem:[%s11 + $0xa] sm:$0x1] %vm294, %v2446
  %v2453 = vsel %vm143, %v1730, %v1726
  %2454 = vrot.lane.b32.xlu0 %v2411, 32
  %v2455 = vpop.permute.xlu0 %2454
  %v2456 = vsel %vm155, %v2455, 0
  %2458 = vmatprep.subr.mxu0 0.0
  %2459 = vmatpush1.msra.mxu0 %v1575
  %2460 = vmatprep.subr.mxu0 0.0
  %2461 = vmatpush1.msra.mxu0 %v1576
  %2462 = vmatprep.subr.mxu0 0.0
  %2463 = vmatpush1.msra.mxu0 %v1577
  %2464 = vmatprep.subr.mxu0 0.0
  %2465 = vmatpush1.msra.mxu0 %v1578
  %2466 = vmatprep.subr.mxu0 0.0
  %2467 = vmatpush1.msra.mxu0 0.0
  %2468 = vmatprep.subr.mxu0 0.0
  %2469 = vmatpush1.msra.mxu0 0.0
  %2470 = vmatprep.subr.mxu0 0.0
  %2471 = vmatpush1.msra.mxu0 0.0
  %2472 = vmatprep.subr.mxu0 0.0
  %2473 = vmatpush1.msra.mxu0 0.0
  %2474 = vmatprep.subr.mxu0 0.0
  %2475 = vmatpush1.msra.mxu0 0.0
  %2476 = vmatprep.subr.mxu0 0.0
  %2477 = vmatpush1.msra.mxu0 0.0
  %2478 = vmatprep.subr.mxu0 0.0
  %2479 = vmatpush1.msra.mxu0 0.0
  %2480 = vmatprep.subr.mxu0 0.0
  %2481 = vmatpush1.msra.mxu0 0.0
  %2482 = vmatprep.subr.mxu0 0.0
  %2483 = vmatpush1.msra.mxu0 0.0
  %2484 = vmatprep.subr.mxu0 0.0
  %2485 = vmatpush1.msra.mxu0 0.0
  %2486 = vmatprep.subr.mxu0 0.0
  %2487 = vmatpush1.msra.mxu0 0.0
  %2488 = vmatprep.subr.mxu0 0.0
  %2489 = vmatpush1.msra.mxu0 0.0
  %2490 = vmatprep.subr.mxu0 0.0
  %2491 = vmatpush1.msra.mxu0 0.0
  %2492 = vmatprep.subr.mxu0 0.0
  %2493 = vmatpush1.msra.mxu0 0.0
  %2494 = vmatprep.subr.mxu0 0.0
  %2495 = vmatpush1.msra.mxu0 0.0
  %2496 = vmatprep.subr.mxu0 0.0
  %2497 = vmatpush1.msra.mxu0 0.0
  %2498 = vmatprep.subr.mxu0 0.0
  %2499 = vmatpush1.msra.mxu0 0.0
  %2500 = vmatprep.subr.mxu0 0.0
  %2501 = vmatpush1.msra.mxu0 0.0
  %2502 = vmatprep.subr.mxu0 0.0
  %2503 = vmatpush1.msra.mxu0 0.0
  %2504 = vmatprep.subr.mxu0 0.0
  %2505 = vmatpush1.msra.mxu0 0.0
  %2506 = vmatprep.subr.mxu0 0.0
  %2507 = vmatpush1.msra.mxu0 0.0
  %2508 = vmatprep.subr.mxu0 0.0
  %2509 = vmatpush1.msra.mxu0 0.0
  %2510 = vmatprep.subr.mxu0 0.0
  %2511 = vmatpush1.msra.mxu0 0.0
  %2512 = vmatprep.subr.mxu0 0.0
  %2513 = vmatpush1.msra.mxu0 0.0
  %2514 = vmatprep.subr.mxu0 0.0
  %2515 = vmatpush1.msra.mxu0 0.0
  %2516 = vmatprep.subr.mxu0 0.0
  %2517 = vmatpush1.msra.mxu0 0.0
  %2518 = vmatprep.subr.mxu0 0.0
  %2519 = vmatpush1.msra.mxu0 0.0
  %2520 = vmatprep.subr.mxu0 0.0
  %2521 = vmatpush1.msra.mxu0 0.0
  %2522 = vmatprep.mubr.f32.mxu0 0.0
  %2523 = vmatmul.mubr.f32.gmra.mrb[0].mxu0 %v2456
  %v2524 = vpop.f32.mrb[0].mxu0
  %v2525 = vadd.f32 0.0, %v2524
  %v2526 = vpop.f32.mrb[0].mxu0
  %2527 = vdwg.mxu0
  %v2528 = vadd.f32 %v2453, %v2525
  %v2529 = vxor.u32 %v2528, 2147483648
  %v2530 = vmul.f32 %v2529, 1.442695
  %v2531 = vpow.pop %v2530
  %v2532 = vadd.f32 %v2531, 1.0
  %v2533 = vrcp.pop %v2532
  %v2534 = vmul.f32 1.0, %v2533
  %v2535 = vtanh.pop %v2528
  %v2536 = vmul.f32 %v2534, %v2405
  %2538 = vrot.lane.b32.xlu0 %v2535, 64
  %v2539 = vpop.permute.xlu0 %2538
  %v2541 = vmul.f32 %v2534, %v2539
  %2543 = vrot.lane.b32.xlu0 %v2541, 32
  %v2544 = vpop.permute.xlu0 %2543
  %v2546 = vadd.f32 %v2536, %v2544
  %v2547 = vtanh.pop %v2546
  %2549 = vrot.lane.b32.xlu0 %v2547, 64
  %v2550 = vpop.permute.xlu0 %2549
  %v2552 = vmul.f32 %v2534, %v2550
  %v2555 = vunpack.c.l.s4 1966171168
  %v2556 = vunpack.c.0.s8 %v2555
  %v2557 = vlaneseq
  %v2558 = vshrl.u32 %v2557, 7
  %v2559 = vsub.s32 %v2556, %v2558
  %v2560 = vrot.slane %v2552, %v2559
  %v2561 = vcombine.high %v2560, %v2560
  %v2563 = vunpack.c.l.s4 1966171168
  %v2564 = vunpack.c.0.s8 %v2563
  %v2565 = vlaneseq
  %v2566 = vshrl.u32 %v2565, 7
  %v2567 = vsub.s32 %v2564, %v2566
  %v2568 = vrot.slane %v2560, %v2567
  %v2570 = vunpack.c.l.s4 1966171168
  %v2571 = vunpack.c.0.s8 %v2570
  %v2572 = vlaneseq
  %v2573 = vshrl.u32 %v2572, 7
  %v2574 = vsub.s32 %v2571, %v2573
  %v2575 = vrot.slane %v2561, %v2574
  %v2576 = vlaneseq
  %v2577 = vshrl.u32 %v2576, 7
  %v2578 = vsub.s32 0, %v2577
  %v2579 = vrot.slane %v2568, %v2578
  %v2580 = vlaneseq
  %v2581 = vshrl.u32 %v2580, 7
  %v2582 = vsub.s32 0, %v2581
  %v2583 = vrot.slane %v2575, %v2582
  %2584 = vrot.lane.b32.xlu0 %v2579, 32
  %v2585 = vpop.permute.xlu0 %2584
  %2586 = vrot.lane.b32.xlu0 %v2583, 32
  %v2587 = vpop.permute.xlu0 %2586
  %2590 = vst.msk [vmem:[%s11 + $0x6] sm:$0x1] %vm291, %v2585
  %2591 = vst.msk [vmem:[%s11 + $0xe] sm:$0x1] %vm291, %v2587
  %2592 = vst.msk [vmem:[%s11 + $0x1] sm:$0x1] %vm294, %v2585
  %2593 = vst.msk [vmem:[%s11 + $0x9] sm:$0x1] %vm294, %v2587
  %v2594 = vsel %vm143, %v1586, %v1582
  %2595 = vrot.lane.b32.xlu0 %v2552, 32
  %v2596 = vpop.permute.xlu0 %2595
  %v2597 = vsel %vm155, %v2596, 0
  %2599 = vmatprep.subr.mxu0 0.0
  %2600 = vmatpush1.msra.mxu0 %v1575
  %2601 = vmatprep.subr.mxu0 0.0
  %2602 = vmatpush1.msra.mxu0 %v1576
  %2603 = vmatprep.subr.mxu0 0.0
  %2604 = vmatpush1.msra.mxu0 %v1577
  %2605 = vmatprep.subr.mxu0 0.0
  %2606 = vmatpush1.msra.mxu0 %v1578
  %2607 = vmatprep.subr.mxu0 0.0
  %2608 = vmatpush1.msra.mxu0 0.0
  %2609 = vmatprep.subr.mxu0 0.0
  %2610 = vmatpush1.msra.mxu0 0.0
  %2611 = vmatprep.subr.mxu0 0.0
  %2612 = vmatpush1.msra.mxu0 0.0
  %2613 = vmatprep.subr.mxu0 0.0
  %2614 = vmatpush1.msra.mxu0 0.0
  %2615 = vmatprep.subr.mxu0 0.0
  %2616 = vmatpush1.msra.mxu0 0.0
  %2617 = vmatprep.subr.mxu0 0.0
  %2618 = vmatpush1.msra.mxu0 0.0
  %2619 = vmatprep.subr.mxu0 0.0
  %2620 = vmatpush1.msra.mxu0 0.0
  %2621 = vmatprep.subr.mxu0 0.0
  %2622 = vmatpush1.msra.mxu0 0.0
  %2623 = vmatprep.subr.mxu0 0.0
  %2624 = vmatpush1.msra.mxu0 0.0
  %2625 = vmatprep.subr.mxu0 0.0
  %2626 = vmatpush1.msra.mxu0 0.0
  %2627 = vmatprep.subr.mxu0 0.0
  %2628 = vmatpush1.msra.mxu0 0.0
  %2629 = vmatprep.subr.mxu0 0.0
  %2630 = vmatpush1.msra.mxu0 0.0
  %2631 = vmatprep.subr.mxu0 0.0
  %2632 = vmatpush1.msra.mxu0 0.0
  %2633 = vmatprep.subr.mxu0 0.0
  %2634 = vmatpush1.msra.mxu0 0.0
  %2635 = vmatprep.subr.mxu0 0.0
  %2636 = vmatpush1.msra.mxu0 0.0
  %2637 = vmatprep.subr.mxu0 0.0
  %2638 = vmatpush1.msra.mxu0 0.0
  %2639 = vmatprep.subr.mxu0 0.0
  %2640 = vmatpush1.msra.mxu0 0.0
  %2641 = vmatprep.subr.mxu0 0.0
  %2642 = vmatpush1.msra.mxu0 0.0
  %2643 = vmatprep.subr.mxu0 0.0
  %2644 = vmatpush1.msra.mxu0 0.0
  %2645 = vmatprep.subr.mxu0 0.0
  %2646 = vmatpush1.msra.mxu0 0.0
  %2647 = vmatprep.subr.mxu0 0.0
  %2648 = vmatpush1.msra.mxu0 0.0
  %2649 = vmatprep.subr.mxu0 0.0
  %2650 = vmatpush1.msra.mxu0 0.0
  %2651 = vmatprep.subr.mxu0 0.0
  %2652 = vmatpush1.msra.mxu0 0.0
  %2653 = vmatprep.subr.mxu0 0.0
  %2654 = vmatpush1.msra.mxu0 0.0
  %2655 = vmatprep.subr.mxu0 0.0
  %2656 = vmatpush1.msra.mxu0 0.0
  %2657 = vmatprep.subr.mxu0 0.0
  %2658 = vmatpush1.msra.mxu0 0.0
  %2659 = vmatprep.subr.mxu0 0.0
  %2660 = vmatpush1.msra.mxu0 0.0
  %2661 = vmatprep.subr.mxu0 0.0
  %2662 = vmatpush1.msra.mxu0 0.0
  %2663 = vmatprep.mubr.f32.mxu0 0.0
  %2664 = vmatmul.mubr.f32.gmra.mrb[0].mxu0 %v2597
  %v2665 = vpop.f32.mrb[0].mxu0
  %v2666 = vadd.f32 0.0, %v2665
  %v2667 = vpop.f32.mrb[0].mxu0
  %2668 = vdwg.mxu0
  %v2669 = vadd.f32 %v2594, %v2666
  %v2670 = vxor.u32 %v2669, 2147483648
  %v2671 = vmul.f32 %v2670, 1.442695
  %v2672 = vpow.pop %v2671
  %v2673 = vadd.f32 %v2672, 1.0
  %v2674 = vrcp.pop %v2673
  %v2675 = vmul.f32 1.0, %v2674
  %v2676 = vtanh.pop %v2669
  %v2677 = vmul.f32 %v2675, %v2546
  %2679 = vrot.lane.b32.xlu0 %v2676, 64
  %v2680 = vpop.permute.xlu0 %2679
  %v2682 = vmul.f32 %v2675, %v2680
  %2684 = vrot.lane.b32.xlu0 %v2682, 32
  %v2685 = vpop.permute.xlu0 %2684
  %v2687 = vadd.f32 %v2677, %v2685
  %v2688 = vtanh.pop %v2687
  %2690 = vrot.lane.b32.xlu0 %v2688, 64
  %v2691 = vpop.permute.xlu0 %2690
  %v2693 = vmul.f32 %v2675, %v2691
  %v2696 = vunpack.c.l.s4 1966171168
  %v2697 = vunpack.c.0.s8 %v2696
  %v2698 = vlaneseq
  %v2699 = vshrl.u32 %v2698, 7
  %v2700 = vsub.s32 %v2697, %v2699
  %v2701 = vrot.slane %v2693, %v2700
  %v2702 = vcombine.high %v2701, %v2701
  %v2704 = vunpack.c.l.s4 1966171168
  %v2705 = vunpack.c.0.s8 %v2704
  %v2706 = vlaneseq
  %v2707 = vshrl.u32 %v2706, 7
  %v2708 = vsub.s32 %v2705, %v2707
  %v2709 = vrot.slane %v2701, %v2708
  %v2711 = vunpack.c.l.s4 1966171168
  %v2712 = vunpack.c.0.s8 %v2711
  %v2713 = vlaneseq
  %v2714 = vshrl.u32 %v2713, 7
  %v2715 = vsub.s32 %v2712, %v2714
  %v2716 = vrot.slane %v2702, %v2715
  %v2717 = vlaneseq
  %v2718 = vshrl.u32 %v2717, 7
  %v2719 = vsub.s32 0, %v2718
  %v2720 = vrot.slane %v2709, %v2719
  %v2721 = vlaneseq
  %v2722 = vshrl.u32 %v2721, 7
  %v2723 = vsub.s32 0, %v2722
  %v2724 = vrot.slane %v2716, %v2723
  %2725 = vrot.lane.b32.xlu0 %v2720, 32
  %v2726 = vpop.permute.xlu0 %2725
  %2727 = vrot.lane.b32.xlu0 %v2724, 32
  %v2728 = vpop.permute.xlu0 %2727
  %2731 = vst.msk [vmem:[%s11 + $0x7] sm:$0x1] %vm291, %v2726
  %2732 = vst.msk [vmem:[%s11 + $0xf] sm:$0x1] %vm291, %v2728
  %2733 = vst.msk [vmem:[%s11] sm:$0x1] %vm294, %v2726
  %2734 = vst.msk [vmem:[%s11 + $0x8] sm:$0x1] %vm294, %v2728
  %s2735 = scalar_lea.vmem %s7, 32
  %v2736 = vld [vmem:[%s2735] sm:$0xff]
  %v2737 = vld [vmem:[%s2735 + $0x8] sm:$0xff]
  %v2738 = vld [vmem:[%s2735 + $0x10] sm:$0xff]
  %v2739 = vld [vmem:[%s2735 + $0x18] sm:$0xff]
  %s2740 = scalar_lea.vmem %s8, 1
  %v2741 = vld [vmem:[%s2740] sm:$0x1]
  %v2743 = vlaneseq
  %v2744 = vshrl.u32 %v2743, 7
  %v2745 = vsub.s32 0, %v2744
  %v2746 = vrot.slane %v2741, %v2745
  %2748 = vrot.lane.b32.xlu0 %v2693, 32
  %v2749 = vpop.permute.xlu0 %2748
  %v2750 = vsel %vm155, %v2749, 0
  %2752 = vmatprep.subr.mxu0 0.0
  %2753 = vmatpush1.msra.mxu0 %v2736
  %2754 = vmatprep.subr.mxu0 0.0
  %2755 = vmatpush1.msra.mxu0 %v2737
  %2756 = vmatprep.subr.mxu0 0.0
  %2757 = vmatpush1.msra.mxu0 %v2738
  %2758 = vmatprep.subr.mxu0 0.0
  %2759 = vmatpush1.msra.mxu0 %v2739
  %2760 = vmatprep.subr.mxu0 0.0
  %2761 = vmatpush1.msra.mxu0 0.0
  %2762 = vmatprep.subr.mxu0 0.0
  %2763 = vmatpush1.msra.mxu0 0.0
  %2764 = vmatprep.subr.mxu0 0.0
  %2765 = vmatpush1.msra.mxu0 0.0
  %2766 = vmatprep.subr.mxu0 0.0
  %2767 = vmatpush1.msra.mxu0 0.0
  %2768 = vmatprep.subr.mxu0 0.0
  %2769 = vmatpush1.msra.mxu0 0.0
  %2770 = vmatprep.subr.mxu0 0.0
  %2771 = vmatpush1.msra.mxu0 0.0
  %2772 = vmatprep.subr.mxu0 0.0
  %2773 = vmatpush1.msra.mxu0 0.0
  %2774 = vmatprep.subr.mxu0 0.0
  %2775 = vmatpush1.msra.mxu0 0.0
  %2776 = vmatprep.subr.mxu0 0.0
  %2777 = vmatpush1.msra.mxu0 0.0
  %2778 = vmatprep.subr.mxu0 0.0
  %2779 = vmatpush1.msra.mxu0 0.0
  %2780 = vmatprep.subr.mxu0 0.0
  %2781 = vmatpush1.msra.mxu0 0.0
  %2782 = vmatprep.subr.mxu0 0.0
  %2783 = vmatpush1.msra.mxu0 0.0
  %2784 = vmatprep.subr.mxu0 0.0
  %2785 = vmatpush1.msra.mxu0 0.0
  %2786 = vmatprep.subr.mxu0 0.0
  %2787 = vmatpush1.msra.mxu0 0.0
  %2788 = vmatprep.subr.mxu0 0.0
  %2789 = vmatpush1.msra.mxu0 0.0
  %2790 = vmatprep.subr.mxu0 0.0
  %2791 = vmatpush1.msra.mxu0 0.0
  %2792 = vmatprep.subr.mxu0 0.0
  %2793 = vmatpush1.msra.mxu0 0.0
  %2794 = vmatprep.subr.mxu0 0.0
  %2795 = vmatpush1.msra.mxu0 0.0
  %2796 = vmatprep.subr.mxu0 0.0
  %2797 = vmatpush1.msra.mxu0 0.0
  %2798 = vmatprep.subr.mxu0 0.0
  %2799 = vmatpush1.msra.mxu0 0.0
  %2800 = vmatprep.subr.mxu0 0.0
  %2801 = vmatpush1.msra.mxu0 0.0
  %2802 = vmatprep.subr.mxu0 0.0
  %2803 = vmatpush1.msra.mxu0 0.0
  %2804 = vmatprep.subr.mxu0 0.0
  %2805 = vmatpush1.msra.mxu0 0.0
  %2806 = vmatprep.subr.mxu0 0.0
  %2807 = vmatpush1.msra.mxu0 0.0
  %2808 = vmatprep.subr.mxu0 0.0
  %2809 = vmatpush1.msra.mxu0 0.0
  %2810 = vmatprep.subr.mxu0 0.0
  %2811 = vmatpush1.msra.mxu0 0.0
  %2812 = vmatprep.subr.mxu0 0.0
  %2813 = vmatpush1.msra.mxu0 0.0
  %2814 = vmatprep.subr.mxu0 0.0
  %2815 = vmatpush1.msra.mxu0 0.0
  %2816 = vmatprep.mubr.f32.mxu0 0.0
  %2817 = vmatmul.mubr.f32.gmra.mrb[0].mxu0 %v2750
  %v2818 = vpop.f32.mrb[0].mxu0
  %v2819 = vadd.f32 %v2746, %v2818
  %v2820 = vpop.f32.mrb[0].mxu0
  %2821 = vdwg.mxu0
  %s2822 = scalar_lea.vmem %s12, 2
  %2823 = vst.msk [vmem:[%s2822] sm:$0x3] %vm1392, %v2819
  %s2824 = scalar_lea.vmem %s9, 32
  %v2825 = vld [vmem:[%s2824] sm:$0xff]
  %v2826 = vld [vmem:[%s2824 + $0x8] sm:$0xff]
  %v2827 = vld [vmem:[%s2824 + $0x10] sm:$0xff]
  %v2828 = vld [vmem:[%s2824 + $0x18] sm:$0xff]
  %s2829 = scalar_lea.vmem %s10, 1
  %v2830 = vld [vmem:[%s2829] sm:$0x1]
  %v2832 = vlaneseq
  %v2833 = vshrl.u32 %v2832, 7
  %v2834 = vsub.s32 0, %v2833
  %v2835 = vrot.slane %v2830, %v2834
  %2838 = vrot.lane.b32.xlu0 %v2687, 96
  %v2839 = vpop.permute.xlu0 %2838
  %v2840 = vsel %vm155, %v2839, 0
  %2842 = vmatprep.subr.mxu0 0.0
  %2843 = vmatpush1.msra.mxu0 %v2825
  %2844 = vmatprep.subr.mxu0 0.0
  %2845 = vmatpush1.msra.mxu0 %v2826
  %2846 = vmatprep.subr.mxu0 0.0
  %2847 = vmatpush1.msra.mxu0 %v2827
  %2848 = vmatprep.subr.mxu0 0.0
  %2849 = vmatpush1.msra.mxu0 %v2828
  %2850 = vmatprep.subr.mxu0 0.0
  %2851 = vmatpush1.msra.mxu0 0.0
  %2852 = vmatprep.subr.mxu0 0.0
  %2853 = vmatpush1.msra.mxu0 0.0
  %2854 = vmatprep.subr.mxu0 0.0
  %2855 = vmatpush1.msra.mxu0 0.0
  %2856 = vmatprep.subr.mxu0 0.0
  %2857 = vmatpush1.msra.mxu0 0.0
  %2858 = vmatprep.subr.mxu0 0.0
  %2859 = vmatpush1.msra.mxu0 0.0
  %2860 = vmatprep.subr.mxu0 0.0
  %2861 = vmatpush1.msra.mxu0 0.0
  %2862 = vmatprep.subr.mxu0 0.0
  %2863 = vmatpush1.msra.mxu0 0.0
  %2864 = vmatprep.subr.mxu0 0.0
  %2865 = vmatpush1.msra.mxu0 0.0
  %2866 = vmatprep.subr.mxu0 0.0
  %2867 = vmatpush1.msra.mxu0 0.0
  %2868 = vmatprep.subr.mxu0 0.0
  %2869 = vmatpush1.msra.mxu0 0.0
  %2870 = vmatprep.subr.mxu0 0.0
  %2871 = vmatpush1.msra.mxu0 0.0
  %2872 = vmatprep.subr.mxu0 0.0
  %2873 = vmatpush1.msra.mxu0 0.0
  %2874 = vmatprep.subr.mxu0 0.0
  %2875 = vmatpush1.msra.mxu0 0.0
  %2876 = vmatprep.subr.mxu0 0.0
  %2877 = vmatpush1.msra.mxu0 0.0
  %2878 = vmatprep.subr.mxu0 0.0
  %2879 = vmatpush1.msra.mxu0 0.0
  %2880 = vmatprep.subr.mxu0 0.0
  %2881 = vmatpush1.msra.mxu0 0.0
  %2882 = vmatprep.subr.mxu0 0.0
  %2883 = vmatpush1.msra.mxu0 0.0
  %2884 = vmatprep.subr.mxu0 0.0
  %2885 = vmatpush1.msra.mxu0 0.0
  %2886 = vmatprep.subr.mxu0 0.0
  %2887 = vmatpush1.msra.mxu0 0.0
  %2888 = vmatprep.subr.mxu0 0.0
  %2889 = vmatpush1.msra.mxu0 0.0
  %2890 = vmatprep.subr.mxu0 0.0
  %2891 = vmatpush1.msra.mxu0 0.0
  %2892 = vmatprep.subr.mxu0 0.0
  %2893 = vmatpush1.msra.mxu0 0.0
  %2894 = vmatprep.subr.mxu0 0.0
  %2895 = vmatpush1.msra.mxu0 0.0
  %2896 = vmatprep.subr.mxu0 0.0
  %2897 = vmatpush1.msra.mxu0 0.0
  %2898 = vmatprep.subr.mxu0 0.0
  %2899 = vmatpush1.msra.mxu0 0.0
  %2900 = vmatprep.subr.mxu0 0.0
  %2901 = vmatpush1.msra.mxu0 0.0
  %2902 = vmatprep.subr.mxu0 0.0
  %2903 = vmatpush1.msra.mxu0 0.0
  %2904 = vmatprep.subr.mxu0 0.0
  %2905 = vmatpush1.msra.mxu0 0.0
  %2906 = vmatprep.mubr.f32.mxu0 0.0
  %2907 = vmatmul.mubr.f32.gmra.mrb[0].mxu0 %v2840
  %v2908 = vpop.f32.mrb[0].mxu0
  %v2909 = vadd.f32 %v2835, %v2908
  %v2910 = vpop.f32.mrb[0].mxu0
  %2911 = vdwg.mxu0
  %s2912 = scalar_lea.vmem %s13, 2
  %2913 = vst.msk [vmem:[%s2912] sm:$0x3] %vm1392, %v2909
  // Predicated region
  $region46: #{seq2seq_forward.2} parent=0 // pred_check
    _
  $region47: #{seq2seq_forward.2} parent=0 // pred_check_branch
    %2915 = sbr.rel (0) target = $region49
  $region48: #{seq2seq_forward.2} parent=0 // pred_region
    _
  $region49: #{seq2seq_forward.2} parent=0 // pred_fallthru
    _
  // Predicated region
  $region50: #{seq2seq_forward.2} parent=0 // pred_check
    _
  $region51: #{seq2seq_forward.2} parent=0 // pred_check_branch
    %2917 = sbr.rel (0) target = $region53
  $region52: #{seq2seq_forward.2} parent=0 // pred_region
    _
  $region53: #{seq2seq_forward.2} parent=0 // pred_fallthru
    _
  // Predicated region
  $region54: #{seq2seq_forward.2} parent=0 // pred_check
    _
  $region55: #{seq2seq_forward.2} parent=0 // pred_check_branch
    %2919 = sbr.rel (0) target = $region57
  $region56: #{seq2seq_forward.2} parent=0 // pred_region
    _
  $region57: #{seq2seq_forward.2} parent=0 // pred_fallthru
    _
  // Predicated region
  $region58: #{seq2seq_forward.2} parent=0 // pred_check
    _
  $region59: #{seq2seq_forward.2} parent=0 // pred_check_branch
    %2921 = sbr.rel (0) target = $region61
  $region60: #{seq2seq_forward.2} parent=0 // pred_region
    _
  $region61: #{seq2seq_forward.2} parent=0 // pred_fallthru
    _
  // Predicated region
  $region62: #{seq2seq_forward.2} parent=0 // pred_check
    _
  $region63: #{seq2seq_forward.2} parent=0 // pred_check_branch
    %2923 = sbr.rel (0) target = $region65
  $region64: #{seq2seq_forward.2} parent=0 // pred_region
    _
  $region65: #{seq2seq_forward.2} parent=0 // pred_fallthru
    _
  // Predicated region
  $region66: #{seq2seq_forward.2} parent=0 // pred_check
    _
  $region67: #{seq2seq_forward.2} parent=0 // pred_check_branch
    %2925 = sbr.rel (0) target = $region69
  $region68: #{seq2seq_forward.2} parent=0 // pred_region
    _
  $region69: #{seq2seq_forward.2} parent=0 // pred_fallthru
    _

// kernel: seq2seq_forward.3
$region0: #{seq2seq_forward.3}
  #allocation0 [shape = 'u32[]', space=smem, size = 0x4, offset = 0x4, fixed_abs, tag = 'smem constant byte address 0x4 - core index']
  #allocation1 [shape = 'u32[144,128]{1,0:T(1,128)}', space=vmem, size = 0x12000, scoped, tag = 'internal scratch']
  %s0 = inlined_call_operand.vmem [shape: f32[2,8,32], index: 0, kind: input, shape index: {}]
  %s1 = inlined_call_operand.vmem [shape: f32[2,2,16], index: 1, kind: input, shape index: {}]
  %s2 = inlined_call_operand.vmem [shape: f32[2,2,16], index: 2, kind: input, shape index: {}]
  %s3 = inlined_call_operand.vmem [shape: s32[2,6], index: 3, kind: input, shape index: {}]
  %s4 = inlined_call_operand.vmem [shape: f32[16,16], index: 4, kind: input, shape index: {}]
  %s5 = inlined_call_operand.vmem [shape: f32[48,128], index: 5, kind: input, shape index: {}]
  %s6 = inlined_call_operand.vmem [shape: f32[32,128], index: 6, kind: input, shape index: {}]
  %s7 = inlined_call_operand.vmem [shape: f32[1,128], index: 7, kind: input, shape index: {}]
  %s8 = inlined_call_operand.vmem [shape: f32[32,128], index: 8, kind: input, shape index: {}]
  %s9 = inlined_call_operand.vmem [shape: f32[32,128], index: 9, kind: input, shape index: {}]
  %s10 = inlined_call_operand.vmem [shape: f32[1,128], index: 10, kind: input, shape index: {}]
  %s11 = inlined_call_operand.vmem [shape: f32[32,128], index: 11, kind: input, shape index: {}]
  %s12 = inlined_call_operand.vmem [shape: f32[1,128], index: 12, kind: input, shape index: {}]
  %s13 = inlined_call_operand.hbm [shape: f32[6,2,128], index: 13, kind: output, shape index: {}]
  %s14 = sld [smem:[#allocation0]]
  $region62: #{seq2seq_forward.3} parent=0
    _
  %s16 = ssub.s32 1, %s14
  %s17 = scalar_select 0, %s16, %s14
  $region1: #{seq2seq_forward.3} parent=0
    #allocation2 [shape = 'u8[6144]{0}', space=vmem, size = 0x1800, scoped, tag = 'output window, operand 0, single buffered']
    #allocation3 [shape = 's32[1]{0}', space=sflag, size = 0x4, scoped, tag = 'scoped memory for seq2seq_forward.3']
    %18 = vsyncpa [#allocation3], 0
    // Predicated region
    $region2: #{seq2seq_forward.3} parent=1 // pred_check
      _
    $region3: #{seq2seq_forward.3} parent=1 // pred_check_branch
      %20 = sbr.rel (0) target = $region5
    $region4: #{seq2seq_forward.3} parent=1 // pred_region
      _
    $region5: #{seq2seq_forward.3} parent=1 // pred_fallthru
      _
    // Predicated region
    $region6: #{seq2seq_forward.3} parent=1 // pred_check
      _
    $region7: #{seq2seq_forward.3} parent=1 // pred_check_branch
      %22 = sbr.rel (0) target = $region9
    $region8: #{seq2seq_forward.3} parent=1 // pred_region
      _
    $region9: #{seq2seq_forward.3} parent=1 // pred_fallthru
      _
    // Predicated region
    $region10: #{seq2seq_forward.3} parent=1 // pred_check
      _
    $region11: #{seq2seq_forward.3} parent=1 // pred_check_branch
      %24 = sbr.rel (0) target = $region13
    $region12: #{seq2seq_forward.3} parent=1 // pred_region
      _
    $region13: #{seq2seq_forward.3} parent=1 // pred_fallthru
      _
    // Predicated region
    $region14: #{seq2seq_forward.3} parent=1 // pred_check
      _
    $region15: #{seq2seq_forward.3} parent=1 // pred_check_branch
      %26 = sbr.rel (0) target = $region17
    $region16: #{seq2seq_forward.3} parent=1 // pred_region
      _
    $region17: #{seq2seq_forward.3} parent=1 // pred_fallthru
      _
    // Predicated region
    $region18: #{seq2seq_forward.3} parent=1 // pred_check
      _
    $region19: #{seq2seq_forward.3} parent=1 // pred_check_branch
      %28 = sbr.rel (0) target = $region21
    $region20: #{seq2seq_forward.3} parent=1 // pred_region
      _
    $region21: #{seq2seq_forward.3} parent=1 // pred_fallthru
      _
    // Predicated region
    $region22: #{seq2seq_forward.3} parent=1 // pred_check
      _
    $region23: #{seq2seq_forward.3} parent=1 // pred_check_branch
      %30 = sbr.rel (0) target = $region25
    $region24: #{seq2seq_forward.3} parent=1 // pred_region
      _
    $region25: #{seq2seq_forward.3} parent=1 // pred_fallthru
      _
    // Predicated region
    $region26: #{seq2seq_forward.3} parent=1 // pred_check
      _
    $region27: #{seq2seq_forward.3} parent=1 // pred_check_branch
      %32 = sbr.rel (0) target = $region29
    $region28: #{seq2seq_forward.3} parent=1 // pred_region
      _
    $region29: #{seq2seq_forward.3} parent=1 // pred_fallthru
      _
    // Predicated region
    $region30: #{seq2seq_forward.3} parent=1 // pred_check
      _
    $region31: #{seq2seq_forward.3} parent=1 // pred_check_branch
      %34 = sbr.rel (0) target = $region33
    $region32: #{seq2seq_forward.3} parent=1 // pred_region
      _
    $region33: #{seq2seq_forward.3} parent=1 // pred_fallthru
      _
    // Predicated region
    $region34: #{seq2seq_forward.3} parent=1 // pred_check
      _
    $region35: #{seq2seq_forward.3} parent=1 // pred_check_branch
      %36 = sbr.rel (0) target = $region37
    $region36: #{seq2seq_forward.3} parent=1 // pred_region
      _
    $region37: #{seq2seq_forward.3} parent=1 // pred_fallthru
      _
    // Predicated region
    $region38: #{seq2seq_forward.3} parent=1 // pred_check
      _
    $region39: #{seq2seq_forward.3} parent=1 // pred_check_branch
      %38 = sbr.rel (0) target = $region41
    $region40: #{seq2seq_forward.3} parent=1 // pred_region
      _
    $region41: #{seq2seq_forward.3} parent=1 // pred_fallthru
      _
    // Predicated region
    $region42: #{seq2seq_forward.3} parent=1 // pred_check
      _
    $region43: #{seq2seq_forward.3} parent=1 // pred_check_branch
      %40 = sbr.rel (0) target = $region45
    $region44: #{seq2seq_forward.3} parent=1 // pred_region
      _
    $region45: #{seq2seq_forward.3} parent=1 // pred_fallthru
      _
    // Predicated region
    $region46: #{seq2seq_forward.3} parent=1 // pred_check
      _
    $region47: #{seq2seq_forward.3} parent=1 // pred_check_branch
      %42 = sbr.rel (0) target = $region49
    $region48: #{seq2seq_forward.3} parent=1 // pred_region
      _
    $region49: #{seq2seq_forward.3} parent=1 // pred_fallthru
      _
    // Predicated region
    $region50: #{seq2seq_forward.3} parent=1 // pred_check
      _
    $region51: #{seq2seq_forward.3} parent=1 // pred_check_branch
      %44 = sbr.rel (0) target = $region53
    $region52: #{seq2seq_forward.3} parent=1 // pred_region
      _
    $region53: #{seq2seq_forward.3} parent=1 // pred_fallthru
      _
    %v45 = vld [vmem:[%s0] sm:$0xff]
    %v46 = vld [vmem:[%s0 + $0x8] sm:$0xff]
    %v47 = vld [vmem:[%s4] sm:$0xff]
    %v48 = vld [vmem:[%s4 + $0x8] sm:$0xff]
    %v49 = vld [vmem:[%s5] sm:$0xff]
    %v50 = vld [vmem:[%s5 + $0x8] sm:$0xff]
    %v51 = vld [vmem:[%s5 + $0x10] sm:$0xff]
    %v52 = vld [vmem:[%s5 + $0x18] sm:$0xff]
    %v53 = vld [vmem:[%s5 + $0x20] sm:$0xff]
    %v54 = vld [vmem:[%s5 + $0x28] sm:$0xff]
    %v55 = vld [vmem:[%s6] sm:$0xff]
    %v56 = vld [vmem:[%s6 + $0x8] sm:$0xff]
    %v57 = vld [vmem:[%s6 + $0x10] sm:$0xff]
    %v58 = vld [vmem:[%s6 + $0x18] sm:$0xff]
    %v59 = vld [vmem:[%s8] sm:$0xff]
    %v60 = vld [vmem:[%s8 + $0x8] sm:$0xff]
    %v61 = vld [vmem:[%s8 + $0x10] sm:$0xff]
    %v62 = vld [vmem:[%s8 + $0x18] sm:$0xff]
    %v63 = vld [vmem:[%s9] sm:$0xff]
    %v64 = vld [vmem:[%s9 + $0x8] sm:$0xff]
    %v65 = vld [vmem:[%s9 + $0x10] sm:$0xff]
    %v66 = vld [vmem:[%s9 + $0x18] sm:$0xff]
    %v67 = vld [vmem:[%s11] sm:$0xff]
    %v68 = vld [vmem:[%s11 + $0x8] sm:$0xff]
    %v69 = vld [vmem:[%s11 + $0x10] sm:$0xff]
    %v70 = vld [vmem:[%s11 + $0x18] sm:$0xff]
    %v71 = vld [vmem:[%s7] sm:$0x1]
    %v73 = vlaneseq
    %v74 = vshrl.u32 %v73, 7
    %v75 = vsub.s32 0, %v74
    %v76 = vrot.slane %v71, %v75
    %v78 = vld [vmem:[%s10] sm:$0x1]
    %v80 = vlaneseq
    %v81 = vshrl.u32 %v80, 7
    %v82 = vsub.s32 0, %v81
    %v83 = vrot.slane %v78, %v82
    %v85 = vld [vmem:[%s12] sm:$0x1]
    %v87 = vlaneseq
    %v88 = vshrl.u32 %v87, 7
    %v89 = vsub.s32 0, %v88
    %v90 = vrot.slane %v85, %v89
    %v92 = vld [vmem:[%s1] sm:$0x3]
    %s93 = scalar_lea.vmem %s1, 2
    %v94 = vld [vmem:[%s93] sm:$0x3]
    %v95 = vld [vmem:[%s2] sm:$0x3]
    %s96 = scalar_lea.vmem %s2, 2
    %v97 = vld [vmem:[%s96] sm:$0x3]
    %99 = vrot.lane.b32.xlu0 %v92, 16
    %v100 = vpop.permute.xlu0 %99
    %vm102 = vcmask 130048
    %v103 = vsel %vm102, 0.0, %v100
    %105 = vrot.lane.b32.xlu0 %v94, 16
    %v106 = vpop.permute.xlu0 %105
    %v108 = vsel %vm102, 0.0, %v106
    %110 = vrot.lane.b32.xlu0 %v95, 16
    %v111 = vpop.permute.xlu0 %110
    %v113 = vsel %vm102, 0.0, %v111
    %115 = vrot.lane.b32.xlu0 %v97, 16
    %v116 = vpop.permute.xlu0 %115
    %v118 = vsel %vm102, 0.0, %v116
    %v119 = vsel %vm102, %v92, %v100
    %v120 = vsel %vm102, %v94, %v106
    %v121 = vsel %vm102, %v95, %v111
    %v122 = vsel %vm102, %v97, %v116
    %v123 = vlaneseq
    %v124 = vand.u32 %v123, 127
    %125 = vst [vmem:[#allocation2] sm:$0x3] 0.0
    %v126 = vld [vmem:[%s3] sm:$0x3]
    %127 = vset.pattern.permute.xlu0 0
    %128 = vperm.xlu0 %127, %v126
    %v129 = vpop.permute.xlu0 %128
    %vm130 = vcmp.eq.s32.totalorder %v129, %v124
    %v131 = vsel %vm130, 1, 0
    %v132 = vcvt.s32.f32 %v131
    %v134 = vsel %vm102, %v132, 0
    %136 = vmatprep.subr.mxu0 0.0
    %137 = vmatpush1.msra.mxu0 %v47
    %138 = vmatprep.subr.mxu0 0.0
    %139 = vmatpush1.msra.mxu0 %v48
    %140 = vmatprep.subr.mxu0 0.0
    %141 = vmatpush1.msra.mxu0 0.0
    %142 = vmatprep.subr.mxu0 0.0
    %143 = vmatpush1.msra.mxu0 0.0
    %144 = vmatprep.subr.mxu0 0.0
    %145 = vmatpush1.msra.mxu0 0.0
    %146 = vmatprep.subr.mxu0 0.0
    %147 = vmatpush1.msra.mxu0 0.0
    %148 = vmatprep.subr.mxu0 0.0
    %149 = vmatpush1.msra.mxu0 0.0
    %150 = vmatprep.subr.mxu0 0.0
    %151 = vmatpush1.msra.mxu0 0.0
    %152 = vmatprep.subr.mxu0 0.0
    %153 = vmatpush1.msra.mxu0 0.0
    %154 = vmatprep.subr.mxu0 0.0
    %155 = vmatpush1.msra.mxu0 0.0
    %156 = vmatprep.subr.mxu0 0.0
    %157 = vmatpush1.msra.mxu0 0.0
    %158 = vmatprep.subr.mxu0 0.0
    %159 = vmatpush1.msra.mxu0 0.0
    %160 = vmatprep.subr.mxu0 0.0
    %161 = vmatpush1.msra.mxu0 0.0
    %162 = vmatprep.subr.mxu0 0.0
    %163 = vmatpush1.msra.mxu0 0.0
    %164 = vmatprep.subr.mxu0 0.0
    %165 = vmatpush1.msra.mxu0 0.0
    %166 = vmatprep.subr.mxu0 0.0
    %167 = vmatpush1.msra.mxu0 0.0
    %168 = vmatprep.subr.mxu0 0.0
    %169 = vmatpush1.msra.mxu0 0.0
    %170 = vmatprep.subr.mxu0 0.0
    %171 = vmatpush1.msra.mxu0 0.0
    %172 = vmatprep.subr.mxu0 0.0
    %173 = vmatpush1.msra.mxu0 0.0
    %174 = vmatprep.subr.mxu0 0.0
    %175 = vmatpush1.msra.mxu0 0.0
    %176 = vmatprep.subr.mxu0 0.0
    %177 = vmatpush1.msra.mxu0 0.0
    %178 = vmatprep.subr.mxu0 0.0
    %179 = vmatpush1.msra.mxu0 0.0
    %180 = vmatprep.subr.mxu0 0.0
    %181 = vmatpush1.msra.mxu0 0.0
    %182 = vmatprep.subr.mxu0 0.0
    %183 = vmatpush1.msra.mxu0 0.0
    %184 = vmatprep.subr.mxu0 0.0
    %185 = vmatpush1.msra.mxu0 0.0
    %186 = vmatprep.subr.mxu0 0.0
    %187 = vmatpush1.msra.mxu0 0.0
    %188 = vmatprep.subr.mxu0 0.0
    %189 = vmatpush1.msra.mxu0 0.0
    %190 = vmatprep.subr.mxu0 0.0
    %191 = vmatpush1.msra.mxu0 0.0
    %192 = vmatprep.subr.mxu0 0.0
    %193 = vmatpush1.msra.mxu0 0.0
    %194 = vmatprep.subr.mxu0 0.0
    %195 = vmatpush1.msra.mxu0 0.0
    %196 = vmatprep.subr.mxu0 0.0
    %197 = vmatpush1.msra.mxu0 0.0
    %198 = vmatprep.subr.mxu0 0.0
    %199 = vmatpush1.msra.mxu0 0.0
    %200 = vmatprep.mubr.f32.mxu0 0.0
    %201 = vmatmul.mubr.f32.gmra.mrb[0].mxu0 %v134
    %v202 = vpop.f32.mrb[0].mxu0
    %v203 = vadd.f32 0.0, %v202
    %v204 = vpop.f32.mrb[0].mxu0
    %205 = vdwg.mxu0
    %v208 = vunpack.c.l.s4 1966171168
    %v209 = vunpack.c.0.s8 %v208
    %v210 = vlaneseq
    %v211 = vshrl.u32 %v210, 7
    %v212 = vsub.s32 %v209, %v211
    %v213 = vrot.slane %v120, %v212
    %v214 = vcombine.high %v213, %v213
    %v216 = vunpack.c.l.s4 1966171168
    %v217 = vunpack.c.0.s8 %v216
    %v218 = vlaneseq
    %v219 = vshrl.u32 %v218, 7
    %v220 = vsub.s32 %v217, %v219
    %v221 = vrot.slane %v213, %v220
    %v223 = vunpack.c.l.s4 1966171168
    %v224 = vunpack.c.0.s8 %v223
    %v225 = vlaneseq
    %v226 = vshrl.u32 %v225, 7
    %v227 = vsub.s32 %v224, %v226
    %v228 = vrot.slane %v214, %v227
    %vm229 = vcmask 261120
    %v230 = vsel %vm229, %v221, 0
    %v233 = vsel %vm229, %v45, 0
    %235 = vmatprep.subr.mxu0 0.0
    %236 = vmatpush1.xpose.msra.mxu0 %v233
    %237 = vmatprep.subr.mxu0 0.0
    %238 = vmatpush1.xpose.msra.mxu0 0.0
    %239 = vmatprep.subr.mxu0 0.0
    %240 = vmatpush1.xpose.msra.mxu0 0.0
    %241 = vmatprep.subr.mxu0 0.0
    %242 = vmatpush1.xpose.msra.mxu0 0.0
    %243 = vmatprep.subr.mxu0 0.0
    %244 = vmatpush1.xpose.msra.mxu0 0.0
    %245 = vmatprep.subr.mxu0 0.0
    %246 = vmatpush1.xpose.msra.mxu0 0.0
    %247 = vmatprep.subr.mxu0 0.0
    %248 = vmatpush1.xpose.msra.mxu0 0.0
    %249 = vmatprep.subr.mxu0 0.0
    %250 = vmatpush1.xpose.msra.mxu0 0.0
    %251 = vmatprep.subr.mxu0 0.0
    %252 = vmatpush1.xpose.msra.mxu0 0.0
    %253 = vmatprep.subr.mxu0 0.0
    %254 = vmatpush1.xpose.msra.mxu0 0.0
    %255 = vmatprep.subr.mxu0 0.0
    %256 = vmatpush1.xpose.msra.mxu0 0.0
    %257 = vmatprep.subr.mxu0 0.0
    %258 = vmatpush1.xpose.msra.mxu0 0.0
    %259 = vmatprep.subr.mxu0 0.0
    %260 = vmatpush1.xpose.msra.mxu0 0.0
    %261 = vmatprep.subr.mxu0 0.0
    %262 = vmatpush1.xpose.msra.mxu0 0.0
    %263 = vmatprep.subr.mxu0 0.0
    %264 = vmatpush1.xpose.msra.mxu0 0.0
    %265 = vmatprep.subr.mxu0 0.0
    %266 = vmatpush1.xpose.msra.mxu0 0.0
    %267 = vmatprep.subr.mxu0 0.0
    %268 = vmatpush1.xpose.msra.mxu0 0.0
    %269 = vmatprep.subr.mxu0 0.0
    %270 = vmatpush1.xpose.msra.mxu0 0.0
    %271 = vmatprep.subr.mxu0 0.0
    %272 = vmatpush1.xpose.msra.mxu0 0.0
    %273 = vmatprep.subr.mxu0 0.0
    %274 = vmatpush1.xpose.msra.mxu0 0.0
    %275 = vmatprep.subr.mxu0 0.0
    %276 = vmatpush1.xpose.msra.mxu0 0.0
    %277 = vmatprep.subr.mxu0 0.0
    %278 = vmatpush1.xpose.msra.mxu0 0.0
    %279 = vmatprep.subr.mxu0 0.0
    %280 = vmatpush1.xpose.msra.mxu0 0.0
    %281 = vmatprep.subr.mxu0 0.0
    %282 = vmatpush1.xpose.msra.mxu0 0.0
    %283 = vmatprep.subr.mxu0 0.0
    %284 = vmatpush1.xpose.msra.mxu0 0.0
    %285 = vmatprep.subr.mxu0 0.0
    %286 = vmatpush1.xpose.msra.mxu0 0.0
    %287 = vmatprep.subr.mxu0 0.0
    %288 = vmatpush1.xpose.msra.mxu0 0.0
    %289 = vmatprep.subr.mxu0 0.0
    %290 = vmatpush1.xpose.msra.mxu0 0.0
    %291 = vmatprep.subr.mxu0 0.0
    %292 = vmatpush1.xpose.msra.mxu0 0.0
    %293 = vmatprep.subr.mxu0 0.0
    %294 = vmatpush1.xpose.msra.mxu0 0.0
    %295 = vmatprep.subr.mxu0 0.0
    %296 = vmatpush1.xpose.msra.mxu0 0.0
    %297 = vmatprep.subr.mxu0 0.0
    %298 = vmatpush1.xpose.msra.mxu0 0.0
    %299 = vmatprep.mubr.f32.mxu0 0.0
    %300 = vmatmul.mubr.f32.gmra.mrb[0].mxu0 %v230
    %v301 = vpop.f32.mrb[0].mxu0
    %v302 = vadd.f32 0.0, %v301
    %v303 = vpop.f32.mrb[0].mxu0
    %304 = vdwg.mxu0
    %v305 = vsel %vm229, %v228, 0
    %v308 = vsel %vm229, %v46, 0
    %310 = vmatprep.subr.mxu0 0.0
    %311 = vmatpush1.xpose.msra.mxu0 %v308
    %312 = vmatprep.subr.mxu0 0.0
    %313 = vmatpush1.xpose.msra.mxu0 0.0
    %314 = vmatprep.subr.mxu0 0.0
    %315 = vmatpush1.xpose.msra.mxu0 0.0
    %316 = vmatprep.subr.mxu0 0.0
    %317 = vmatpush1.xpose.msra.mxu0 0.0
    %318 = vmatprep.subr.mxu0 0.0
    %319 = vmatpush1.xpose.msra.mxu0 0.0
    %320 = vmatprep.subr.mxu0 0.0
    %321 = vmatpush1.xpose.msra.mxu0 0.0
    %322 = vmatprep.subr.mxu0 0.0
    %323 = vmatpush1.xpose.msra.mxu0 0.0
    %324 = vmatprep.subr.mxu0 0.0
    %325 = vmatpush1.xpose.msra.mxu0 0.0
    %326 = vmatprep.subr.mxu0 0.0
    %327 = vmatpush1.xpose.msra.mxu0 0.0
    %328 = vmatprep.subr.mxu0 0.0
    %329 = vmatpush1.xpose.msra.mxu0 0.0
    %330 = vmatprep.subr.mxu0 0.0
    %331 = vmatpush1.xpose.msra.mxu0 0.0
    %332 = vmatprep.subr.mxu0 0.0
    %333 = vmatpush1.xpose.msra.mxu0 0.0
    %334 = vmatprep.subr.mxu0 0.0
    %335 = vmatpush1.xpose.msra.mxu0 0.0
    %336 = vmatprep.subr.mxu0 0.0
    %337 = vmatpush1.xpose.msra.mxu0 0.0
    %338 = vmatprep.subr.mxu0 0.0
    %339 = vmatpush1.xpose.msra.mxu0 0.0
    %340 = vmatprep.subr.mxu0 0.0
    %341 = vmatpush1.xpose.msra.mxu0 0.0
    %342 = vmatprep.subr.mxu0 0.0
    %343 = vmatpush1.xpose.msra.mxu0 0.0
    %344 = vmatprep.subr.mxu0 0.0
    %345 = vmatpush1.xpose.msra.mxu0 0.0
    %346 = vmatprep.subr.mxu0 0.0
    %347 = vmatpush1.xpose.msra.mxu0 0.0
    %348 = vmatprep.subr.mxu0 0.0
    %349 = vmatpush1.xpose.msra.mxu0 0.0
    %350 = vmatprep.subr.mxu0 0.0
    %351 = vmatpush1.xpose.msra.mxu0 0.0
    %352 = vmatprep.subr.mxu0 0.0
    %353 = vmatpush1.xpose.msra.mxu0 0.0
    %354 = vmatprep.subr.mxu0 0.0
    %355 = vmatpush1.xpose.msra.mxu0 0.0
    %356 = vmatprep.subr.mxu0 0.0
    %357 = vmatpush1.xpose.msra.mxu0 0.0
    %358 = vmatprep.subr.mxu0 0.0
    %359 = vmatpush1.xpose.msra.mxu0 0.0
    %360 = vmatprep.subr.mxu0 0.0
    %361 = vmatpush1.xpose.msra.mxu0 0.0
    %362 = vmatprep.subr.mxu0 0.0
    %363 = vmatpush1.xpose.msra.mxu0 0.0
    %364 = vmatprep.subr.mxu0 0.0
    %365 = vmatpush1.xpose.msra.mxu0 0.0
    %366 = vmatprep.subr.mxu0 0.0
    %367 = vmatpush1.xpose.msra.mxu0 0.0
    %368 = vmatprep.subr.mxu0 0.0
    %369 = vmatpush1.xpose.msra.mxu0 0.0
    %370 = vmatprep.subr.mxu0 0.0
    %371 = vmatpush1.xpose.msra.mxu0 0.0
    %372 = vmatprep.subr.mxu0 0.0
    %373 = vmatpush1.xpose.msra.mxu0 0.0
    %374 = vmatprep.mubr.f32.mxu0 0.0
    %375 = vmatmul.mubr.f32.gmra.mrb[0].mxu0 %v305
    %v376 = vpop.f32.mrb[0].mxu0
    %v377 = vadd.f32 0.0, %v376
    %v378 = vpop.f32.mrb[0].mxu0
    %379 = vdwg.mxu0
    %vm380 = vcmask 57344
    %v381 = vsel %vm380, %v302, -inf
    %382 = vmax.xlane.f32.xlu0 %v381
    %v383 = vpop.xlane.xlu0 %382
    %v384 = vsel %vm380, %v377, -inf
    %385 = vmax.xlane.f32.xlu0 %v384
    %v386 = vpop.xlane.xlu0 %385
    %v387 = vsub.f32 %v302, %v383
    %v388 = vsub.f32 %v377, %v386
    %v389 = vmul.f32 %v387, 1.442695
    %v390 = vpow.pop %v389
    %v391 = vmul.f32 %v388, 1.442695
    %v392 = vpow.pop %v391
    %v393 = vsel %vm380, %v390, 0.0
    %394 = vadd.xlane.f32.xlu0 %v393
    %v395 = vpop.xlane.xlu0 %394
    %v396 = vsel %vm380, %v392, 0.0
    %397 = vadd.xlane.f32.xlu0 %v396
    %v398 = vpop.xlane.xlu0 %397
    %v399 = vrcp.pop %v395
    %v400 = vrcp.pop %v398
    %v401 = vmul.f32 %v390, %v399
    %v402 = vmul.f32 %v392, %v400
    %vm403 = vcmask 64512
    %v405 = vsel %vm403, %v401, 0
    %407 = vmatprep.subr.mxu0 0.0
    %408 = vmatpush1.msra.mxu0 %v45
    %409 = vmatprep.subr.mxu0 0.0
    %410 = vmatpush1.msra.mxu0 0.0
    %411 = vmatprep.subr.mxu0 0.0
    %412 = vmatpush1.msra.mxu0 0.0
    %413 = vmatprep.subr.mxu0 0.0
    %414 = vmatpush1.msra.mxu0 0.0
    %415 = vmatprep.subr.mxu0 0.0
    %416 = vmatpush1.msra.mxu0 0.0
    %417 = vmatprep.subr.mxu0 0.0
    %418 = vmatpush1.msra.mxu0 0.0
    %419 = vmatprep.subr.mxu0 0.0
    %420 = vmatpush1.msra.mxu0 0.0
    %421 = vmatprep.subr.mxu0 0.0
    %422 = vmatpush1.msra.mxu0 0.0
    %423 = vmatprep.subr.mxu0 0.0
    %424 = vmatpush1.msra.mxu0 0.0
    %425 = vmatprep.subr.mxu0 0.0
    %426 = vmatpush1.msra.mxu0 0.0
    %427 = vmatprep.subr.mxu0 0.0
    %428 = vmatpush1.msra.mxu0 0.0
    %429 = vmatprep.subr.mxu0 0.0
    %430 = vmatpush1.msra.mxu0 0.0
    %431 = vmatprep.subr.mxu0 0.0
    %432 = vmatpush1.msra.mxu0 0.0
    %433 = vmatprep.subr.mxu0 0.0
    %434 = vmatpush1.msra.mxu0 0.0
    %435 = vmatprep.subr.mxu0 0.0
    %436 = vmatpush1.msra.mxu0 0.0
    %437 = vmatprep.subr.mxu0 0.0
    %438 = vmatpush1.msra.mxu0 0.0
    %439 = vmatprep.subr.mxu0 0.0
    %440 = vmatpush1.msra.mxu0 0.0
    %441 = vmatprep.subr.mxu0 0.0
    %442 = vmatpush1.msra.mxu0 0.0
    %443 = vmatprep.subr.mxu0 0.0
    %444 = vmatpush1.msra.mxu0 0.0
    %445 = vmatprep.subr.mxu0 0.0
    %446 = vmatpush1.msra.mxu0 0.0
    %447 = vmatprep.subr.mxu0 0.0
    %448 = vmatpush1.msra.mxu0 0.0
    %449 = vmatprep.subr.mxu0 0.0
    %450 = vmatpush1.msra.mxu0 0.0
    %451 = vmatprep.subr.mxu0 0.0
    %452 = vmatpush1.msra.mxu0 0.0
    %453 = vmatprep.subr.mxu0 0.0
    %454 = vmatpush1.msra.mxu0 0.0
    %455 = vmatprep.subr.mxu0 0.0
    %456 = vmatpush1.msra.mxu0 0.0
    %457 = vmatprep.subr.mxu0 0.0
    %458 = vmatpush1.msra.mxu0 0.0
    %459 = vmatprep.subr.mxu0 0.0
    %460 = vmatpush1.msra.mxu0 0.0
    %461 = vmatprep.subr.mxu0 0.0
    %462 = vmatpush1.msra.mxu0 0.0
    %463 = vmatprep.subr.mxu0 0.0
    %464 = vmatpush1.msra.mxu0 0.0
    %465 = vmatprep.subr.mxu0 0.0
    %466 = vmatpush1.msra.mxu0 0.0
    %467 = vmatprep.subr.mxu0 0.0
    %468 = vmatpush1.msra.mxu0 0.0
    %469 = vmatprep.subr.mxu0 0.0
    %470 = vmatpush1.msra.mxu0 0.0
    %471 = vmatprep.mubr.f32.mxu0 0.0
    %472 = vmatmul.mubr.f32.gmra.mrb[0].mxu0 %v405
    %v473 = vpop.f32.mrb[0].mxu0
    %v474 = vadd.f32 0.0, %v473
    %v475 = vpop.f32.mrb[0].mxu0
    %476 = vdwg.mxu0
    %v478 = vsel %vm403, %v402, 0
    %480 = vmatprep.subr.mxu0 0.0
    %481 = vmatpush1.msra.mxu0 %v46
    %482 = vmatprep.subr.mxu0 0.0
    %483 = vmatpush1.msra.mxu0 0.0
    %484 = vmatprep.subr.mxu0 0.0
    %485 = vmatpush1.msra.mxu0 0.0
    %486 = vmatprep.subr.mxu0 0.0
    %487 = vmatpush1.msra.mxu0 0.0
    %488 = vmatprep.subr.mxu0 0.0
    %489 = vmatpush1.msra.mxu0 0.0
    %490 = vmatprep.subr.mxu0 0.0
    %491 = vmatpush1.msra.mxu0 0.0
    %492 = vmatprep.subr.mxu0 0.0
    %493 = vmatpush1.msra.mxu0 0.0
    %494 = vmatprep.subr.mxu0 0.0
    %495 = vmatpush1.msra.mxu0 0.0
    %496 = vmatprep.subr.mxu0 0.0
    %497 = vmatpush1.msra.mxu0 0.0
    %498 = vmatprep.subr.mxu0 0.0
    %499 = vmatpush1.msra.mxu0 0.0
    %500 = vmatprep.subr.mxu0 0.0
    %501 = vmatpush1.msra.mxu0 0.0
    %502 = vmatprep.subr.mxu0 0.0
    %503 = vmatpush1.msra.mxu0 0.0
    %504 = vmatprep.subr.mxu0 0.0
    %505 = vmatpush1.msra.mxu0 0.0
    %506 = vmatprep.subr.mxu0 0.0
    %507 = vmatpush1.msra.mxu0 0.0
    %508 = vmatprep.subr.mxu0 0.0
    %509 = vmatpush1.msra.mxu0 0.0
    %510 = vmatprep.subr.mxu0 0.0
    %511 = vmatpush1.msra.mxu0 0.0
    %512 = vmatprep.subr.mxu0 0.0
    %513 = vmatpush1.msra.mxu0 0.0
    %514 = vmatprep.subr.mxu0 0.0
    %515 = vmatpush1.msra.mxu0 0.0
    %516 = vmatprep.subr.mxu0 0.0
    %517 = vmatpush1.msra.mxu0 0.0
    %518 = vmatprep.subr.mxu0 0.0
    %519 = vmatpush1.msra.mxu0 0.0
    %520 = vmatprep.subr.mxu0 0.0
    %521 = vmatpush1.msra.mxu0 0.0
    %522 = vmatprep.subr.mxu0 0.0
    %523 = vmatpush1.msra.mxu0 0.0
    %524 = vmatprep.subr.mxu0 0.0
    %525 = vmatpush1.msra.mxu0 0.0
    %526 = vmatprep.subr.mxu0 0.0
    %527 = vmatpush1.msra.mxu0 0.0
    %528 = vmatprep.subr.mxu0 0.0
    %529 = vmatpush1.msra.mxu0 0.0
    %530 = vmatprep.subr.mxu0 0.0
    %531 = vmatpush1.msra.mxu0 0.0
    %532 = vmatprep.subr.mxu0 0.0
    %533 = vmatpush1.msra.mxu0 0.0
    %534 = vmatprep.subr.mxu0 0.0
    %535 = vmatpush1.msra.mxu0 0.0
    %536 = vmatprep.subr.mxu0 0.0
    %537 = vmatpush1.msra.mxu0 0.0
    %538 = vmatprep.subr.mxu0 0.0
    %539 = vmatpush1.msra.mxu0 0.0
    %540 = vmatprep.subr.mxu0 0.0
    %541 = vmatpush1.msra.mxu0 0.0
    %542 = vmatprep.subr.mxu0 0.0
    %543 = vmatpush1.msra.mxu0 0.0
    %544 = vmatprep.mubr.f32.mxu0 0.0
    %545 = vmatmul.mubr.f32.gmra.mrb[0].mxu0 %v478
    %v546 = vpop.f32.mrb[0].mxu0
    %v547 = vadd.f32 0.0, %v546
    %v548 = vpop.f32.mrb[0].mxu0
    %549 = vdwg.mxu0
    %v552 = vrot.slane %v547, 7
    %vm553 = vcmask 1041409
    %v554 = vsel %vm553, %v552, %v474
    %v555 = vsel %vm229, %v554, 0
    %557 = vmatprep.subr.mxu0 0.0
    %558 = vmatpush1.msra.mxu0 %v51
    %559 = vmatprep.subr.mxu0 0.0
    %560 = vmatpush1.msra.mxu0 %v52
    %561 = vmatprep.subr.mxu0 0.0
    %562 = vmatpush1.msra.mxu0 %v53
    %563 = vmatprep.subr.mxu0 0.0
    %564 = vmatpush1.msra.mxu0 %v54
    %565 = vmatprep.subr.mxu0 0.0
    %566 = vmatpush1.msra.mxu0 0.0
    %567 = vmatprep.subr.mxu0 0.0
    %568 = vmatpush1.msra.mxu0 0.0
    %569 = vmatprep.subr.mxu0 0.0
    %570 = vmatpush1.msra.mxu0 0.0
    %571 = vmatprep.subr.mxu0 0.0
    %572 = vmatpush1.msra.mxu0 0.0
    %573 = vmatprep.subr.mxu0 0.0
    %574 = vmatpush1.msra.mxu0 0.0
    %575 = vmatprep.subr.mxu0 0.0
    %576 = vmatpush1.msra.mxu0 0.0
    %577 = vmatprep.subr.mxu0 0.0
    %578 = vmatpush1.msra.mxu0 0.0
    %579 = vmatprep.subr.mxu0 0.0
    %580 = vmatpush1.msra.mxu0 0.0
    %581 = vmatprep.subr.mxu0 0.0
    %582 = vmatpush1.msra.mxu0 0.0
    %583 = vmatprep.subr.mxu0 0.0
    %584 = vmatpush1.msra.mxu0 0.0
    %585 = vmatprep.subr.mxu0 0.0
    %586 = vmatpush1.msra.mxu0 0.0
    %587 = vmatprep.subr.mxu0 0.0
    %588 = vmatpush1.msra.mxu0 0.0
    %589 = vmatprep.subr.mxu0 0.0
    %590 = vmatpush1.msra.mxu0 0.0
    %591 = vmatprep.subr.mxu0 0.0
    %592 = vmatpush1.msra.mxu0 0.0
    %593 = vmatprep.subr.mxu0 0.0
    %594 = vmatpush1.msra.mxu0 0.0
    %595 = vmatprep.subr.mxu0 0.0
    %596 = vmatpush1.msra.mxu0 0.0
    %597 = vmatprep.subr.mxu0 0.0
    %598 = vmatpush1.msra.mxu0 0.0
    %599 = vmatprep.subr.mxu0 0.0
    %600 = vmatpush1.msra.mxu0 0.0
    %601 = vmatprep.subr.mxu0 0.0
    %602 = vmatpush1.msra.mxu0 0.0
    %603 = vmatprep.subr.mxu0 0.0
    %604 = vmatpush1.msra.mxu0 0.0
    %605 = vmatprep.subr.mxu0 0.0
    %606 = vmatpush1.msra.mxu0 0.0
    %607 = vmatprep.subr.mxu0 0.0
    %608 = vmatpush1.msra.mxu0 0.0
    %609 = vmatprep.subr.mxu0 0.0
    %610 = vmatpush1.msra.mxu0 0.0
    %611 = vmatprep.subr.mxu0 0.0
    %612 = vmatpush1.msra.mxu0 0.0
    %613 = vmatprep.subr.mxu0 0.0
    %614 = vmatpush1.msra.mxu0 0.0
    %615 = vmatprep.subr.mxu0 0.0
    %616 = vmatpush1.msra.mxu0 0.0
    %617 = vmatprep.subr.mxu0 0.0
    %618 = vmatpush1.msra.mxu0 0.0
    %619 = vmatprep.subr.mxu0 0.0
    %620 = vmatpush1.msra.mxu0 0.0
    %621 = vmatprep.mubr.f32.mxu0 0.0
    %622 = vmatmul.mubr.f32.gmra.mrb[0].mxu0 %v555
    %v623 = vpop.f32.mrb[0].mxu0
    %v624 = vadd.f32 0.0, %v623
    %v625 = vpop.f32.mrb[0].mxu0
    %626 = vdwg.mxu0
    %v628 = vsel %vm102, %v203, 0
    %630 = vmatprep.subr.mxu0 0.0
    %631 = vmatpush1.msra.mxu0 %v49
    %632 = vmatprep.subr.mxu0 0.0
    %633 = vmatpush1.msra.mxu0 %v50
    %634 = vmatprep.subr.mxu0 0.0
    %635 = vmatpush1.msra.mxu0 0.0
    %636 = vmatprep.subr.mxu0 0.0
    %637 = vmatpush1.msra.mxu0 0.0
    %638 = vmatprep.subr.mxu0 0.0
    %639 = vmatpush1.msra.mxu0 0.0
    %640 = vmatprep.subr.mxu0 0.0
    %641 = vmatpush1.msra.mxu0 0.0
    %642 = vmatprep.subr.mxu0 0.0
    %643 = vmatpush1.msra.mxu0 0.0
    %644 = vmatprep.subr.mxu0 0.0
    %645 = vmatpush1.msra.mxu0 0.0
    %646 = vmatprep.subr.mxu0 0.0
    %647 = vmatpush1.msra.mxu0 0.0
    %648 = vmatprep.subr.mxu0 0.0
    %649 = vmatpush1.msra.mxu0 0.0
    %650 = vmatprep.subr.mxu0 0.0
    %651 = vmatpush1.msra.mxu0 0.0
    %652 = vmatprep.subr.mxu0 0.0
    %653 = vmatpush1.msra.mxu0 0.0
    %654 = vmatprep.subr.mxu0 0.0
    %655 = vmatpush1.msra.mxu0 0.0
    %656 = vmatprep.subr.mxu0 0.0
    %657 = vmatpush1.msra.mxu0 0.0
    %658 = vmatprep.subr.mxu0 0.0
    %659 = vmatpush1.msra.mxu0 0.0
    %660 = vmatprep.subr.mxu0 0.0
    %661 = vmatpush1.msra.mxu0 0.0
    %662 = vmatprep.subr.mxu0 0.0
    %663 = vmatpush1.msra.mxu0 0.0
    %664 = vmatprep.subr.mxu0 0.0
    %665 = vmatpush1.msra.mxu0 0.0
    %666 = vmatprep.subr.mxu0 0.0
    %667 = vmatpush1.msra.mxu0 0.0
    %668 = vmatprep.subr.mxu0 0.0
    %669 = vmatpush1.msra.mxu0 0.0
    %670 = vmatprep.subr.mxu0 0.0
    %671 = vmatpush1.msra.mxu0 0.0
    %672 = vmatprep.subr.mxu0 0.0
    %673 = vmatpush1.msra.mxu0 0.0
    %674 = vmatprep.subr.mxu0 0.0
    %675 = vmatpush1.msra.mxu0 0.0
    %676 = vmatprep.subr.mxu0 0.0
    %677 = vmatpush1.msra.mxu0 0.0
    %678 = vmatprep.subr.mxu0 0.0
    %679 = vmatpush1.msra.mxu0 0.0
    %680 = vmatprep.subr.mxu0 0.0
    %681 = vmatpush1.msra.mxu0 0.0
    %682 = vmatprep.subr.mxu0 0.0
    %683 = vmatpush1.msra.mxu0 0.0
    %684 = vmatprep.subr.mxu0 0.0
    %685 = vmatpush1.msra.mxu0 0.0
    %686 = vmatprep.subr.mxu0 0.0
    %687 = vmatpush1.msra.mxu0 0.0
    %688 = vmatprep.subr.mxu0 0.0
    %689 = vmatpush1.msra.mxu0 0.0
    %690 = vmatprep.subr.mxu0 0.0
    %691 = vmatpush1.msra.mxu0 0.0
    %692 = vmatprep.subr.mxu0 0.0
    %693 = vmatpush1.msra.mxu0 0.0
    %694 = vmatprep.mubr.f32.mxu0 0.0
    %695 = vmatmul.mubr.f32.gmra.mrb[0].mxu0 %v628
    %v696 = vpop.f32.mrb[0].mxu0
    %v697 = vadd.f32 %v624, %v696
    %v698 = vpop.f32.mrb[0].mxu0
    %699 = vdwg.mxu0
    %v701 = vsel %vm229, %v119, 0
    %703 = vmatprep.subr.mxu0 0.0
    %704 = vmatpush1.msra.mxu0 %v55
    %705 = vmatprep.subr.mxu0 0.0
    %706 = vmatpush1.msra.mxu0 %v56
    %707 = vmatprep.subr.mxu0 0.0
    %708 = vmatpush1.msra.mxu0 %v57
    %709 = vmatprep.subr.mxu0 0.0
    %710 = vmatpush1.msra.mxu0 %v58
    %711 = vmatprep.subr.mxu0 0.0
    %712 = vmatpush1.msra.mxu0 0.0
    %713 = vmatprep.subr.mxu0 0.0
    %714 = vmatpush1.msra.mxu0 0.0
    %715 = vmatprep.subr.mxu0 0.0
    %716 = vmatpush1.msra.mxu0 0.0
    %717 = vmatprep.subr.mxu0 0.0
    %718 = vmatpush1.msra.mxu0 0.0
    %719 = vmatprep.subr.mxu0 0.0
    %720 = vmatpush1.msra.mxu0 0.0
    %721 = vmatprep.subr.mxu0 0.0
    %722 = vmatpush1.msra.mxu0 0.0
    %723 = vmatprep.subr.mxu0 0.0
    %724 = vmatpush1.msra.mxu0 0.0
    %725 = vmatprep.subr.mxu0 0.0
    %726 = vmatpush1.msra.mxu0 0.0
    %727 = vmatprep.subr.mxu0 0.0
    %728 = vmatpush1.msra.mxu0 0.0
    %729 = vmatprep.subr.mxu0 0.0
    %730 = vmatpush1.msra.mxu0 0.0
    %731 = vmatprep.subr.mxu0 0.0
    %732 = vmatpush1.msra.mxu0 0.0
    %733 = vmatprep.subr.mxu0 0.0
    %734 = vmatpush1.msra.mxu0 0.0
    %735 = vmatprep.subr.mxu0 0.0
    %736 = vmatpush1.msra.mxu0 0.0
    %737 = vmatprep.subr.mxu0 0.0
    %738 = vmatpush1.msra.mxu0 0.0
    %739 = vmatprep.subr.mxu0 0.0
    %740 = vmatpush1.msra.mxu0 0.0
    %741 = vmatprep.subr.mxu0 0.0
    %742 = vmatpush1.msra.mxu0 0.0
    %743 = vmatprep.subr.mxu0 0.0
    %744 = vmatpush1.msra.mxu0 0.0
    %745 = vmatprep.subr.mxu0 0.0
    %746 = vmatpush1.msra.mxu0 0.0
    %747 = vmatprep.subr.mxu0 0.0
    %748 = vmatpush1.msra.mxu0 0.0
    %749 = vmatprep.subr.mxu0 0.0
    %750 = vmatpush1.msra.mxu0 0.0
    %751 = vmatprep.subr.mxu0 0.0
    %752 = vmatpush1.msra.mxu0 0.0
    %753 = vmatprep.subr.mxu0 0.0
    %754 = vmatpush1.msra.mxu0 0.0
    %755 = vmatprep.subr.mxu0 0.0
    %756 = vmatpush1.msra.mxu0 0.0
    %757 = vmatprep.subr.mxu0 0.0
    %758 = vmatpush1.msra.mxu0 0.0
    %759 = vmatprep.subr.mxu0 0.0
    %760 = vmatpush1.msra.mxu0 0.0
    %761 = vmatprep.subr.mxu0 0.0
    %762 = vmatpush1.msra.mxu0 0.0
    %763 = vmatprep.subr.mxu0 0.0
    %764 = vmatpush1.msra.mxu0 0.0
    %765 = vmatprep.subr.mxu0 0.0
    %766 = vmatpush1.msra.mxu0 0.0
    %767 = vmatprep.mubr.f32.mxu0 0.0
    %768 = vmatmul.mubr.f32.gmra.mrb[0].mxu0 %v701
    %v769 = vpop.f32.mrb[0].mxu0
    %v770 = vadd.f32 0.0, %v769
    %v771 = vpop.f32.mrb[0].mxu0
    %772 = vdwg.mxu0
    %v773 = vadd.f32 %v697, %v770
    %v774 = vadd.f32 %v773, %v76
    %v775 = vxor.u32 %v774, 2147483648
    %v776 = vmul.f32 %v775, 1.442695
    %v777 = vpow.pop %v776
    %v778 = vadd.f32 %v777, 1.0
    %v779 = vrcp.pop %v778
    %v780 = vmul.f32 1.0, %v779
    %v781 = vtanh.pop %v774
    %783 = vrot.lane.b32.xlu0 %v121, 32
    %v784 = vpop.permute.xlu0 %783
    %v786 = vmul.f32 %v780, %v784
    %788 = vrot.lane.b32.xlu0 %v781, 64
    %v789 = vpop.permute.xlu0 %788
    %v791 = vmul.f32 %v780, %v789
    %793 = vrot.lane.b32.xlu0 %v791, 32
    %v794 = vpop.permute.xlu0 %793
    %v796 = vadd.f32 %v786, %v794
    %v797 = vtanh.pop %v796
    %799 = vrot.lane.b32.xlu0 %v797, 64
    %v800 = vpop.permute.xlu0 %799
    %v802 = vmul.f32 %v780, %v800
    %v803 = vsel %vm229, %v120, 0
    %805 = vmatprep.subr.mxu0 0.0
    %806 = vmatpush1.msra.mxu0 %v63
    %807 = vmatprep.subr.mxu0 0.0
    %808 = vmatpush1.msra.mxu0 %v64
    %809 = vmatprep.subr.mxu0 0.0
    %810 = vmatpush1.msra.mxu0 %v65
    %811 = vmatprep.subr.mxu0 0.0
    %812 = vmatpush1.msra.mxu0 %v66
    %813 = vmatprep.subr.mxu0 0.0
    %814 = vmatpush1.msra.mxu0 0.0
    %815 = vmatprep.subr.mxu0 0.0
    %816 = vmatpush1.msra.mxu0 0.0
    %817 = vmatprep.subr.mxu0 0.0
    %818 = vmatpush1.msra.mxu0 0.0
    %819 = vmatprep.subr.mxu0 0.0
    %820 = vmatpush1.msra.mxu0 0.0
    %821 = vmatprep.subr.mxu0 0.0
    %822 = vmatpush1.msra.mxu0 0.0
    %823 = vmatprep.subr.mxu0 0.0
    %824 = vmatpush1.msra.mxu0 0.0
    %825 = vmatprep.subr.mxu0 0.0
    %826 = vmatpush1.msra.mxu0 0.0
    %827 = vmatprep.subr.mxu0 0.0
    %828 = vmatpush1.msra.mxu0 0.0
    %829 = vmatprep.subr.mxu0 0.0
    %830 = vmatpush1.msra.mxu0 0.0
    %831 = vmatprep.subr.mxu0 0.0
    %832 = vmatpush1.msra.mxu0 0.0
    %833 = vmatprep.subr.mxu0 0.0
    %834 = vmatpush1.msra.mxu0 0.0
    %835 = vmatprep.subr.mxu0 0.0
    %836 = vmatpush1.msra.mxu0 0.0
    %837 = vmatprep.subr.mxu0 0.0
    %838 = vmatpush1.msra.mxu0 0.0
    %839 = vmatprep.subr.mxu0 0.0
    %840 = vmatpush1.msra.mxu0 0.0
    %841 = vmatprep.subr.mxu0 0.0
    %842 = vmatpush1.msra.mxu0 0.0
    %843 = vmatprep.subr.mxu0 0.0
    %844 = vmatpush1.msra.mxu0 0.0
    %845 = vmatprep.subr.mxu0 0.0
    %846 = vmatpush1.msra.mxu0 0.0
    %847 = vmatprep.subr.mxu0 0.0
    %848 = vmatpush1.msra.mxu0 0.0
    %849 = vmatprep.subr.mxu0 0.0
    %850 = vmatpush1.msra.mxu0 0.0
    %851 = vmatprep.subr.mxu0 0.0
    %852 = vmatpush1.msra.mxu0 0.0
    %853 = vmatprep.subr.mxu0 0.0
    %854 = vmatpush1.msra.mxu0 0.0
    %855 = vmatprep.subr.mxu0 0.0
    %856 = vmatpush1.msra.mxu0 0.0
    %857 = vmatprep.subr.mxu0 0.0
    %858 = vmatpush1.msra.mxu0 0.0
    %859 = vmatprep.subr.mxu0 0.0
    %860 = vmatpush1.msra.mxu0 0.0
    %861 = vmatprep.subr.mxu0 0.0
    %862 = vmatpush1.msra.mxu0 0.0
    %863 = vmatprep.subr.mxu0 0.0
    %864 = vmatpush1.msra.mxu0 0.0
    %865 = vmatprep.subr.mxu0 0.0
    %866 = vmatpush1.msra.mxu0 0.0
    %867 = vmatprep.subr.mxu0 0.0
    %868 = vmatpush1.msra.mxu0 0.0
    %869 = vmatprep.mubr.f32.mxu0 0.0
    %870 = vmatmul.mubr.f32.gmra.mrb[0].mxu0 %v803
    %v871 = vpop.f32.mrb[0].mxu0
    %v872 = vadd.f32 0.0, %v871
    %v873 = vpop.f32.mrb[0].mxu0
    %874 = vdwg.mxu0
    %876 = vrot.lane.b32.xlu0 %v802, 32
    %v877 = vpop.permute.xlu0 %876
    %v878 = vsel %vm229, %v877, 0
    %880 = vmatprep.subr.mxu0 0.0
    %881 = vmatpush1.msra.mxu0 %v59
    %882 = vmatprep.subr.mxu0 0.0
    %883 = vmatpush1.msra.mxu0 %v60
    %884 = vmatprep.subr.mxu0 0.0
    %885 = vmatpush1.msra.mxu0 %v61
    %886 = vmatprep.subr.mxu0 0.0
    %887 = vmatpush1.msra.mxu0 %v62
    %888 = vmatprep.subr.mxu0 0.0
    %889 = vmatpush1.msra.mxu0 0.0
    %890 = vmatprep.subr.mxu0 0.0
    %891 = vmatpush1.msra.mxu0 0.0
    %892 = vmatprep.subr.mxu0 0.0
    %893 = vmatpush1.msra.mxu0 0.0
    %894 = vmatprep.subr.mxu0 0.0
    %895 = vmatpush1.msra.mxu0 0.0
    %896 = vmatprep.subr.mxu0 0.0
    %897 = vmatpush1.msra.mxu0 0.0
    %898 = vmatprep.subr.mxu0 0.0
    %899 = vmatpush1.msra.mxu0 0.0
    %900 = vmatprep.subr.mxu0 0.0
    %901 = vmatpush1.msra.mxu0 0.0
    %902 = vmatprep.subr.mxu0 0.0
    %903 = vmatpush1.msra.mxu0 0.0
    %904 = vmatprep.subr.mxu0 0.0
    %905 = vmatpush1.msra.mxu0 0.0
    %906 = vmatprep.subr.mxu0 0.0
    %907 = vmatpush1.msra.mxu0 0.0
    %908 = vmatprep.subr.mxu0 0.0
    %909 = vmatpush1.msra.mxu0 0.0
    %910 = vmatprep.subr.mxu0 0.0
    %911 = vmatpush1.msra.mxu0 0.0
    %912 = vmatprep.subr.mxu0 0.0
    %913 = vmatpush1.msra.mxu0 0.0
    %914 = vmatprep.subr.mxu0 0.0
    %915 = vmatpush1.msra.mxu0 0.0
    %916 = vmatprep.subr.mxu0 0.0
    %917 = vmatpush1.msra.mxu0 0.0
    %918 = vmatprep.subr.mxu0 0.0
    %919 = vmatpush1.msra.mxu0 0.0
    %920 = vmatprep.subr.mxu0 0.0
    %921 = vmatpush1.msra.mxu0 0.0
    %922 = vmatprep.subr.mxu0 0.0
    %923 = vmatpush1.msra.mxu0 0.0
    %924 = vmatprep.subr.mxu0 0.0
    %925 = vmatpush1.msra.mxu0 0.0
    %926 = vmatprep.subr.mxu0 0.0
    %927 = vmatpush1.msra.mxu0 0.0
    %928 = vmatprep.subr.mxu0 0.0
    %929 = vmatpush1.msra.mxu0 0.0
    %930 = vmatprep.subr.mxu0 0.0
    %931 = vmatpush1.msra.mxu0 0.0
    %932 = vmatprep.subr.mxu0 0.0
    %933 = vmatpush1.msra.mxu0 0.0
    %934 = vmatprep.subr.mxu0 0.0
    %935 = vmatpush1.msra.mxu0 0.0
    %936 = vmatprep.subr.mxu0 0.0
    %937 = vmatpush1.msra.mxu0 0.0
    %938 = vmatprep.subr.mxu0 0.0
    %939 = vmatpush1.msra.mxu0 0.0
    %940 = vmatprep.subr.mxu0 0.0
    %941 = vmatpush1.msra.mxu0 0.0
    %942 = vmatprep.subr.mxu0 0.0
    %943 = vmatpush1.msra.mxu0 0.0
    %944 = vmatprep.mubr.f32.mxu0 0.0
    %945 = vmatmul.mubr.f32.gmra.mrb[0].mxu0 %v878
    %v946 = vpop.f32.mrb[0].mxu0
    %v947 = vadd.f32 %v872, %v946
    %v948 = vpop.f32.mrb[0].mxu0
    %949 = vdwg.mxu0
    %v950 = vadd.f32 %v947, %v83
    %v951 = vxor.u32 %v950, 2147483648
    %v952 = vmul.f32 %v951, 1.442695
    %v953 = vpow.pop %v952
    %v954 = vadd.f32 %v953, 1.0
    %v955 = vrcp.pop %v954
    %v956 = vmul.f32 1.0, %v955
    %v957 = vtanh.pop %v950
    %959 = vrot.lane.b32.xlu0 %v122, 32
    %v960 = vpop.permute.xlu0 %959
    %v962 = vmul.f32 %v956, %v960
    %964 = vrot.lane.b32.xlu0 %v957, 64
    %v965 = vpop.permute.xlu0 %964
    %v967 = vmul.f32 %v956, %v965
    %969 = vrot.lane.b32.xlu0 %v967, 32
    %v970 = vpop.permute.xlu0 %969
    %v972 = vadd.f32 %v962, %v970
    %v973 = vtanh.pop %v972
    %975 = vrot.lane.b32.xlu0 %v973, 64
    %v976 = vpop.permute.xlu0 %975
    %v978 = vmul.f32 %v956, %v976
    %980 = vrot.lane.b32.xlu0 %v978, 32
    %v981 = vpop.permute.xlu0 %980
    %v982 = vsel %vm229, %v981, 0
    %984 = vmatprep.subr.mxu0 0.0
    %985 = vmatpush1.msra.mxu0 %v67
    %986 = vmatprep.subr.mxu0 0.0
    %987 = vmatpush1.msra.mxu0 %v68
    %988 = vmatprep.subr.mxu0 0.0
    %989 = vmatpush1.msra.mxu0 %v69
    %990 = vmatprep.subr.mxu0 0.0
    %991 = vmatpush1.msra.mxu0 %v70
    %992 = vmatprep.subr.mxu0 0.0
    %993 = vmatpush1.msra.mxu0 0.0
    %994 = vmatprep.subr.mxu0 0.0
    %995 = vmatpush1.msra.mxu0 0.0
    %996 = vmatprep.subr.mxu0 0.0
    %997 = vmatpush1.msra.mxu0 0.0
    %998 = vmatprep.subr.mxu0 0.0
    %999 = vmatpush1.msra.mxu0 0.0
    %1000 = vmatprep.subr.mxu0 0.0
    %1001 = vmatpush1.msra.mxu0 0.0
    %1002 = vmatprep.subr.mxu0 0.0
    %1003 = vmatpush1.msra.mxu0 0.0
    %1004 = vmatprep.subr.mxu0 0.0
    %1005 = vmatpush1.msra.mxu0 0.0
    %1006 = vmatprep.subr.mxu0 0.0
    %1007 = vmatpush1.msra.mxu0 0.0
    %1008 = vmatprep.subr.mxu0 0.0
    %1009 = vmatpush1.msra.mxu0 0.0
    %1010 = vmatprep.subr.mxu0 0.0
    %1011 = vmatpush1.msra.mxu0 0.0
    %1012 = vmatprep.subr.mxu0 0.0
    %1013 = vmatpush1.msra.mxu0 0.0
    %1014 = vmatprep.subr.mxu0 0.0
    %1015 = vmatpush1.msra.mxu0 0.0
    %1016 = vmatprep.subr.mxu0 0.0
    %1017 = vmatpush1.msra.mxu0 0.0
    %1018 = vmatprep.subr.mxu0 0.0
    %1019 = vmatpush1.msra.mxu0 0.0
    %1020 = vmatprep.subr.mxu0 0.0
    %1021 = vmatpush1.msra.mxu0 0.0
    %1022 = vmatprep.subr.mxu0 0.0
    %1023 = vmatpush1.msra.mxu0 0.0
    %1024 = vmatprep.subr.mxu0 0.0
    %1025 = vmatpush1.msra.mxu0 0.0
    %1026 = vmatprep.subr.mxu0 0.0
    %1027 = vmatpush1.msra.mxu0 0.0
    %1028 = vmatprep.subr.mxu0 0.0
    %1029 = vmatpush1.msra.mxu0 0.0
    %1030 = vmatprep.subr.mxu0 0.0
    %1031 = vmatpush1.msra.mxu0 0.0
    %1032 = vmatprep.subr.mxu0 0.0
    %1033 = vmatpush1.msra.mxu0 0.0
    %1034 = vmatprep.subr.mxu0 0.0
    %1035 = vmatpush1.msra.mxu0 0.0
    %1036 = vmatprep.subr.mxu0 0.0
    %1037 = vmatpush1.msra.mxu0 0.0
    %1038 = vmatprep.subr.mxu0 0.0
    %1039 = vmatpush1.msra.mxu0 0.0
    %1040 = vmatprep.subr.mxu0 0.0
    %1041 = vmatpush1.msra.mxu0 0.0
    %1042 = vmatprep.subr.mxu0 0.0
    %1043 = vmatpush1.msra.mxu0 0.0
    %1044 = vmatprep.subr.mxu0 0.0
    %1045 = vmatpush1.msra.mxu0 0.0
    %1046 = vmatprep.subr.mxu0 0.0
    %1047 = vmatpush1.msra.mxu0 0.0
    %1048 = vmatprep.mubr.f32.mxu0 0.0
    %1049 = vmatmul.mubr.f32.gmra.mrb[0].mxu0 %v982
    %v1050 = vpop.f32.mrb[0].mxu0
    %v1051 = vadd.f32 %v90, %v1050
    %v1052 = vpop.f32.mrb[0].mxu0
    %1053 = vdwg.mxu0
    %s1054 = scalar_lea.vmem [#allocation2], 2
    %1055 = vst [vmem:[%s1054] sm:$0x3] %v1051
    %1057 = vrot.lane.b32.xlu0 %v103, 96
    %v1058 = vpop.permute.xlu0 %1057
    %v1060 = vadd.f32 %v802, %v1058
    %1062 = vrot.lane.b32.xlu0 %v108, 96
    %v1063 = vpop.permute.xlu0 %1062
    %v1065 = vadd.f32 %v978, %v1063
    %1067 = vrot.lane.b32.xlu0 %v113, 32
    %v1068 = vpop.permute.xlu0 %1067
    %v1070 = vadd.f32 %v796, %v1068
    %1072 = vrot.lane.b32.xlu0 %v118, 32
    %v1073 = vpop.permute.xlu0 %1072
    %v1075 = vadd.f32 %v972, %v1073
    %vm1076 = vcmask 1041408
    %v1077 = vsel %vm1076, %v1051, -inf
    %1078 = vmax.xlane.f32.xlu0 %v1077
    %v1079 = vpop.xlane.xlu0 %1078
    %vm1080 = vcmp.ge.f32.partialorder %v1051, %v1079
    %v1081 = vsel %vm1080, %v124, 128
    %v1082 = vsel %vm1076, %v1081, 2147483647
    %v1083 = vand.u32 %v1082, 65535
    %v1084 = vshra.s32 %v1082, 16
    %v1085 = vcvt.s32.f32 %v1083
    %v1086 = vcvt.s32.f32 %v1084
    %1087 = vmin.xlane.f32.xlu0 %v1086
    %v1088 = vpop.xlane.xlu0 %1087
    %vm1089 = vcmp.eq.f32.partialorder %v1086, %v1088
    %v1090 = vsel %vm1089, %v1085, inf
    %1091 = vmin.xlane.f32.xlu0 %v1090
    %v1092 = vpop.xlane.xlu0 %1091
    %v1093 = vcvt.f32.s32 %v1092
    %v1094 = vcvt.f32.s32 %v1088
    %v1095 = vshll.u32 %v1094, 16
    %v1096 = vadd.s32 %v1095, %v1093
    %vm1097 = vcmp.eq.s32.totalorder %v1096, %v124
    %v1098 = vsel %vm1097, 1, 0
    %v1099 = vcvt.s32.f32 %v1098
    %v1101 = vsel %vm102, %v1099, 0
    %1103 = vmatprep.subr.mxu0 0.0
    %1104 = vmatpush1.msra.mxu0 %v47
    %1105 = vmatprep.subr.mxu0 0.0
    %1106 = vmatpush1.msra.mxu0 %v48
    %1107 = vmatprep.subr.mxu0 0.0
    %1108 = vmatpush1.msra.mxu0 0.0
    %1109 = vmatprep.subr.mxu0 0.0
    %1110 = vmatpush1.msra.mxu0 0.0
    %1111 = vmatprep.subr.mxu0 0.0
    %1112 = vmatpush1.msra.mxu0 0.0
    %1113 = vmatprep.subr.mxu0 0.0
    %1114 = vmatpush1.msra.mxu0 0.0
    %1115 = vmatprep.subr.mxu0 0.0
    %1116 = vmatpush1.msra.mxu0 0.0
    %1117 = vmatprep.subr.mxu0 0.0
    %1118 = vmatpush1.msra.mxu0 0.0
    %1119 = vmatprep.subr.mxu0 0.0
    %1120 = vmatpush1.msra.mxu0 0.0
    %1121 = vmatprep.subr.mxu0 0.0
    %1122 = vmatpush1.msra.mxu0 0.0
    %1123 = vmatprep.subr.mxu0 0.0
    %1124 = vmatpush1.msra.mxu0 0.0
    %1125 = vmatprep.subr.mxu0 0.0
    %1126 = vmatpush1.msra.mxu0 0.0
    %1127 = vmatprep.subr.mxu0 0.0
    %1128 = vmatpush1.msra.mxu0 0.0
    %1129 = vmatprep.subr.mxu0 0.0
    %1130 = vmatpush1.msra.mxu0 0.0
    %1131 = vmatprep.subr.mxu0 0.0
    %1132 = vmatpush1.msra.mxu0 0.0
    %1133 = vmatprep.subr.mxu0 0.0
    %1134 = vmatpush1.msra.mxu0 0.0
    %1135 = vmatprep.subr.mxu0 0.0
    %1136 = vmatpush1.msra.mxu0 0.0
    %1137 = vmatprep.subr.mxu0 0.0
    %1138 = vmatpush1.msra.mxu0 0.0
    %1139 = vmatprep.subr.mxu0 0.0
    %1140 = vmatpush1.msra.mxu0 0.0
    %1141 = vmatprep.subr.mxu0 0.0
    %1142 = vmatpush1.msra.mxu0 0.0
    %1143 = vmatprep.subr.mxu0 0.0
    %1144 = vmatpush1.msra.mxu0 0.0
    %1145 = vmatprep.subr.mxu0 0.0
    %1146 = vmatpush1.msra.mxu0 0.0
    %1147 = vmatprep.subr.mxu0 0.0
    %1148 = vmatpush1.msra.mxu0 0.0
    %1149 = vmatprep.subr.mxu0 0.0
    %1150 = vmatpush1.msra.mxu0 0.0
    %1151 = vmatprep.subr.mxu0 0.0
    %1152 = vmatpush1.msra.mxu0 0.0
    %1153 = vmatprep.subr.mxu0 0.0
    %1154 = vmatpush1.msra.mxu0 0.0
    %1155 = vmatprep.subr.mxu0 0.0
    %1156 = vmatpush1.msra.mxu0 0.0
    %1157 = vmatprep.subr.mxu0 0.0
    %1158 = vmatpush1.msra.mxu0 0.0
    %1159 = vmatprep.subr.mxu0 0.0
    %1160 = vmatpush1.msra.mxu0 0.0
    %1161 = vmatprep.subr.mxu0 0.0
    %1162 = vmatpush1.msra.mxu0 0.0
    %1163 = vmatprep.subr.mxu0 0.0
    %1164 = vmatpush1.msra.mxu0 0.0
    %1165 = vmatprep.subr.mxu0 0.0
    %1166 = vmatpush1.msra.mxu0 0.0
    %1167 = vmatprep.mubr.f32.mxu0 0.0
    %1168 = vmatmul.mubr.f32.gmra.mrb[0].mxu0 %v1101
    %v1169 = vpop.f32.mrb[0].mxu0
    %v1170 = vadd.f32 0.0, %v1169
    %v1171 = vpop.f32.mrb[0].mxu0
    %1172 = vdwg.mxu0
    %v1175 = vunpack.c.l.s4 1966171168
    %v1176 = vunpack.c.0.s8 %v1175
    %v1177 = vlaneseq
    %v1178 = vshrl.u32 %v1177, 7
    %v1179 = vsub.s32 %v1176, %v1178
    %v1180 = vrot.slane %v1065, %v1179
    %v1181 = vcombine.high %v1180, %v1180
    %v1183 = vunpack.c.l.s4 1966171168
    %v1184 = vunpack.c.0.s8 %v1183
    %v1185 = vlaneseq
    %v1186 = vshrl.u32 %v1185, 7
    %v1187 = vsub.s32 %v1184, %v1186
    %v1188 = vrot.slane %v1180, %v1187
    %v1190 = vunpack.c.l.s4 1966171168
    %v1191 = vunpack.c.0.s8 %v1190
    %v1192 = vlaneseq
    %v1193 = vshrl.u32 %v1192, 7
    %v1194 = vsub.s32 %v1191, %v1193
    %v1195 = vrot.slane %v1181, %v1194
    %v1196 = vlaneseq
    %v1197 = vshrl.u32 %v1196, 7
    %v1198 = vsub.s32 0, %v1197
    %v1199 = vrot.slane %v1188, %v1198
    %1200 = vrot.lane.b32.xlu0 %v1199, 32
    %v1201 = vpop.permute.xlu0 %1200
    %v1202 = vsel %vm229, %v1201, 0
    %1204 = vmatprep.subr.mxu0 0.0
    %1205 = vmatpush1.xpose.msra.mxu0 %v233
    %1206 = vmatprep.subr.mxu0 0.0
    %1207 = vmatpush1.xpose.msra.mxu0 0.0
    %1208 = vmatprep.subr.mxu0 0.0
    %1209 = vmatpush1.xpose.msra.mxu0 0.0
    %1210 = vmatprep.subr.mxu0 0.0
    %1211 = vmatpush1.xpose.msra.mxu0 0.0
    %1212 = vmatprep.subr.mxu0 0.0
    %1213 = vmatpush1.xpose.msra.mxu0 0.0
    %1214 = vmatprep.subr.mxu0 0.0
    %1215 = vmatpush1.xpose.msra.mxu0 0.0
    %1216 = vmatprep.subr.mxu0 0.0
    %1217 = vmatpush1.xpose.msra.mxu0 0.0
    %1218 = vmatprep.subr.mxu0 0.0
    %1219 = vmatpush1.xpose.msra.mxu0 0.0
    %1220 = vmatprep.subr.mxu0 0.0
    %1221 = vmatpush1.xpose.msra.mxu0 0.0
    %1222 = vmatprep.subr.mxu0 0.0
    %1223 = vmatpush1.xpose.msra.mxu0 0.0
    %1224 = vmatprep.subr.mxu0 0.0
    %1225 = vmatpush1.xpose.msra.mxu0 0.0
    %1226 = vmatprep.subr.mxu0 0.0
    %1227 = vmatpush1.xpose.msra.mxu0 0.0
    %1228 = vmatprep.subr.mxu0 0.0
    %1229 = vmatpush1.xpose.msra.mxu0 0.0
    %1230 = vmatprep.subr.mxu0 0.0
    %1231 = vmatpush1.xpose.msra.mxu0 0.0
    %1232 = vmatprep.subr.mxu0 0.0
    %1233 = vmatpush1.xpose.msra.mxu0 0.0
    %1234 = vmatprep.subr.mxu0 0.0
    %1235 = vmatpush1.xpose.msra.mxu0 0.0
    %1236 = vmatprep.subr.mxu0 0.0
    %1237 = vmatpush1.xpose.msra.mxu0 0.0
    %1238 = vmatprep.subr.mxu0 0.0
    %1239 = vmatpush1.xpose.msra.mxu0 0.0
    %1240 = vmatprep.subr.mxu0 0.0
    %1241 = vmatpush1.xpose.msra.mxu0 0.0
    %1242 = vmatprep.subr.mxu0 0.0
    %1243 = vmatpush1.xpose.msra.mxu0 0.0
    %1244 = vmatprep.subr.mxu0 0.0
    %1245 = vmatpush1.xpose.msra.mxu0 0.0
    %1246 = vmatprep.subr.mxu0 0.0
    %1247 = vmatpush1.xpose.msra.mxu0 0.0
    %1248 = vmatprep.subr.mxu0 0.0
    %1249 = vmatpush1.xpose.msra.mxu0 0.0
    %1250 = vmatprep.subr.mxu0 0.0
    %1251 = vmatpush1.xpose.msra.mxu0 0.0
    %1252 = vmatprep.subr.mxu0 0.0
    %1253 = vmatpush1.xpose.msra.mxu0 0.0
    %1254 = vmatprep.subr.mxu0 0.0
    %1255 = vmatpush1.xpose.msra.mxu0 0.0
    %1256 = vmatprep.subr.mxu0 0.0
    %1257 = vmatpush1.xpose.msra.mxu0 0.0
    %1258 = vmatprep.subr.mxu0 0.0
    %1259 = vmatpush1.xpose.msra.mxu0 0.0
    %1260 = vmatprep.subr.mxu0 0.0
    %1261 = vmatpush1.xpose.msra.mxu0 0.0
    %1262 = vmatprep.subr.mxu0 0.0
    %1263 = vmatpush1.xpose.msra.mxu0 0.0
    %1264 = vmatprep.subr.mxu0 0.0
    %1265 = vmatpush1.xpose.msra.mxu0 0.0
    %1266 = vmatprep.subr.mxu0 0.0
    %1267 = vmatpush1.xpose.msra.mxu0 0.0
    %1268 = vmatprep.mubr.f32.mxu0 0.0
    %1269 = vmatmul.mubr.f32.gmra.mrb[0].mxu0 %v1202
    %v1270 = vpop.f32.mrb[0].mxu0
    %v1271 = vadd.f32 0.0, %v1270
    %v1272 = vpop.f32.mrb[0].mxu0
    %1273 = vdwg.mxu0
    %v1274 = vlaneseq
    %v1275 = vshrl.u32 %v1274, 7
    %v1276 = vsub.s32 0, %v1275
    %v1277 = vrot.slane %v1195, %v1276
    %1278 = vrot.lane.b32.xlu0 %v1277, 32
    %v1279 = vpop.permute.xlu0 %1278
    %v1280 = vsel %vm229, %v1279, 0
    %1282 = vmatprep.subr.mxu0 0.0
    %1283 = vmatpush1.xpose.msra.mxu0 %v308
    %1284 = vmatprep.subr.mxu0 0.0
    %1285 = vmatpush1.xpose.msra.mxu0 0.0
    %1286 = vmatprep.subr.mxu0 0.0
    %1287 = vmatpush1.xpose.msra.mxu0 0.0
    %1288 = vmatprep.subr.mxu0 0.0
    %1289 = vmatpush1.xpose.msra.mxu0 0.0
    %1290 = vmatprep.subr.mxu0 0.0
    %1291 = vmatpush1.xpose.msra.mxu0 0.0
    %1292 = vmatprep.subr.mxu0 0.0
    %1293 = vmatpush1.xpose.msra.mxu0 0.0
    %1294 = vmatprep.subr.mxu0 0.0
    %1295 = vmatpush1.xpose.msra.mxu0 0.0
    %1296 = vmatprep.subr.mxu0 0.0
    %1297 = vmatpush1.xpose.msra.mxu0 0.0
    %1298 = vmatprep.subr.mxu0 0.0
    %1299 = vmatpush1.xpose.msra.mxu0 0.0
    %1300 = vmatprep.subr.mxu0 0.0
    %1301 = vmatpush1.xpose.msra.mxu0 0.0
    %1302 = vmatprep.subr.mxu0 0.0
    %1303 = vmatpush1.xpose.msra.mxu0 0.0
    %1304 = vmatprep.subr.mxu0 0.0
    %1305 = vmatpush1.xpose.msra.mxu0 0.0
    %1306 = vmatprep.subr.mxu0 0.0
    %1307 = vmatpush1.xpose.msra.mxu0 0.0
    %1308 = vmatprep.subr.mxu0 0.0
    %1309 = vmatpush1.xpose.msra.mxu0 0.0
    %1310 = vmatprep.subr.mxu0 0.0
    %1311 = vmatpush1.xpose.msra.mxu0 0.0
    %1312 = vmatprep.subr.mxu0 0.0
    %1313 = vmatpush1.xpose.msra.mxu0 0.0
    %1314 = vmatprep.subr.mxu0 0.0
    %1315 = vmatpush1.xpose.msra.mxu0 0.0
    %1316 = vmatprep.subr.mxu0 0.0
    %1317 = vmatpush1.xpose.msra.mxu0 0.0
    %1318 = vmatprep.subr.mxu0 0.0
    %1319 = vmatpush1.xpose.msra.mxu0 0.0
    %1320 = vmatprep.subr.mxu0 0.0
    %1321 = vmatpush1.xpose.msra.mxu0 0.0
    %1322 = vmatprep.subr.mxu0 0.0
    %1323 = vmatpush1.xpose.msra.mxu0 0.0
    %1324 = vmatprep.subr.mxu0 0.0
    %1325 = vmatpush1.xpose.msra.mxu0 0.0
    %1326 = vmatprep.subr.mxu0 0.0
    %1327 = vmatpush1.xpose.msra.mxu0 0.0
    %1328 = vmatprep.subr.mxu0 0.0
    %1329 = vmatpush1.xpose.msra.mxu0 0.0
    %1330 = vmatprep.subr.mxu0 0.0
    %1331 = vmatpush1.xpose.msra.mxu0 0.0
    %1332 = vmatprep.subr.mxu0 0.0
    %1333 = vmatpush1.xpose.msra.mxu0 0.0
    %1334 = vmatprep.subr.mxu0 0.0
    %1335 = vmatpush1.xpose.msra.mxu0 0.0
    %1336 = vmatprep.subr.mxu0 0.0
    %1337 = vmatpush1.xpose.msra.mxu0 0.0
    %1338 = vmatprep.subr.mxu0 0.0
    %1339 = vmatpush1.xpose.msra.mxu0 0.0
    %1340 = vmatprep.subr.mxu0 0.0
    %1341 = vmatpush1.xpose.msra.mxu0 0.0
    %1342 = vmatprep.subr.mxu0 0.0
    %1343 = vmatpush1.xpose.msra.mxu0 0.0
    %1344 = vmatprep.subr.mxu0 0.0
    %1345 = vmatpush1.xpose.msra.mxu0 0.0
    %1346 = vmatprep.mubr.f32.mxu0 0.0
    %1347 = vmatmul.mubr.f32.gmra.mrb[0].mxu0 %v1280
    %v1348 = vpop.f32.mrb[0].mxu0
    %v1349 = vadd.f32 0.0, %v1348
    %v1350 = vpop.f32.mrb[0].mxu0
    %1351 = vdwg.mxu0
    %v1352 = vsel %vm380, %v1271, -inf
    %1353 = vmax.xlane.f32.xlu0 %v1352
    %v1354 = vpop.xlane.xlu0 %1353
    %v1355 = vsel %vm380, %v1349, -inf
    %1356 = vmax.xlane.f32.xlu0 %v1355
    %v1357 = vpop.xlane.xlu0 %1356
    %v1358 = vsub.f32 %v1271, %v1354
    %v1359 = vsub.f32 %v1349, %v1357
    %v1360 = vmul.f32 %v1358, 1.442695
    %v1361 = vpow.pop %v1360
    %v1362 = vmul.f32 %v1359, 1.442695
    %v1363 = vpow.pop %v1362
    %v1364 = vsel %vm380, %v1361, 0.0
    %1365 = vadd.xlane.f32.xlu0 %v1364
    %v1366 = vpop.xlane.xlu0 %1365
    %v1367 = vsel %vm380, %v1363, 0.0
    %1368 = vadd.xlane.f32.xlu0 %v1367
    %v1369 = vpop.xlane.xlu0 %1368
    %v1370 = vrcp.pop %v1366
    %v1371 = vrcp.pop %v1369
    %v1372 = vmul.f32 %v1361, %v1370
    %v1373 = vmul.f32 %v1363, %v1371
    %v1375 = vsel %vm403, %v1372, 0
    %1377 = vmatprep.subr.mxu0 0.0
    %1378 = vmatpush1.msra.mxu0 %v45
    %1379 = vmatprep.subr.mxu0 0.0
    %1380 = vmatpush1.msra.mxu0 0.0
    %1381 = vmatprep.subr.mxu0 0.0
    %1382 = vmatpush1.msra.mxu0 0.0
    %1383 = vmatprep.subr.mxu0 0.0
    %1384 = vmatpush1.msra.mxu0 0.0
    %1385 = vmatprep.subr.mxu0 0.0
    %1386 = vmatpush1.msra.mxu0 0.0
    %1387 = vmatprep.subr.mxu0 0.0
    %1388 = vmatpush1.msra.mxu0 0.0
    %1389 = vmatprep.subr.mxu0 0.0
    %1390 = vmatpush1.msra.mxu0 0.0
    %1391 = vmatprep.subr.mxu0 0.0
    %1392 = vmatpush1.msra.mxu0 0.0
    %1393 = vmatprep.subr.mxu0 0.0
    %1394 = vmatpush1.msra.mxu0 0.0
    %1395 = vmatprep.subr.mxu0 0.0
    %1396 = vmatpush1.msra.mxu0 0.0
    %1397 = vmatprep.subr.mxu0 0.0
    %1398 = vmatpush1.msra.mxu0 0.0
    %1399 = vmatprep.subr.mxu0 0.0
    %1400 = vmatpush1.msra.mxu0 0.0
    %1401 = vmatprep.subr.mxu0 0.0
    %1402 = vmatpush1.msra.mxu0 0.0
    %1403 = vmatprep.subr.mxu0 0.0
    %1404 = vmatpush1.msra.mxu0 0.0
    %1405 = vmatprep.subr.mxu0 0.0
    %1406 = vmatpush1.msra.mxu0 0.0
    %1407 = vmatprep.subr.mxu0 0.0
    %1408 = vmatpush1.msra.mxu0 0.0
    %1409 = vmatprep.subr.mxu0 0.0
    %1410 = vmatpush1.msra.mxu0 0.0
    %1411 = vmatprep.subr.mxu0 0.0
    %1412 = vmatpush1.msra.mxu0 0.0
    %1413 = vmatprep.subr.mxu0 0.0
    %1414 = vmatpush1.msra.mxu0 0.0
    %1415 = vmatprep.subr.mxu0 0.0
    %1416 = vmatpush1.msra.mxu0 0.0
    %1417 = vmatprep.subr.mxu0 0.0
    %1418 = vmatpush1.msra.mxu0 0.0
    %1419 = vmatprep.subr.mxu0 0.0
    %1420 = vmatpush1.msra.mxu0 0.0
    %1421 = vmatprep.subr.mxu0 0.0
    %1422 = vmatpush1.msra.mxu0 0.0
    %1423 = vmatprep.subr.mxu0 0.0
    %1424 = vmatpush1.msra.mxu0 0.0
    %1425 = vmatprep.subr.mxu0 0.0
    %1426 = vmatpush1.msra.mxu0 0.0
    %1427 = vmatprep.subr.mxu0 0.0
    %1428 = vmatpush1.msra.mxu0 0.0
    %1429 = vmatprep.subr.mxu0 0.0
    %1430 = vmatpush1.msra.mxu0 0.0
    %1431 = vmatprep.subr.mxu0 0.0
    %1432 = vmatpush1.msra.mxu0 0.0
    %1433 = vmatprep.subr.mxu0 0.0
    %1434 = vmatpush1.msra.mxu0 0.0
    %1435 = vmatprep.subr.mxu0 0.0
    %1436 = vmatpush1.msra.mxu0 0.0
    %1437 = vmatprep.subr.mxu0 0.0
    %1438 = vmatpush1.msra.mxu0 0.0
    %1439 = vmatprep.subr.mxu0 0.0
    %1440 = vmatpush1.msra.mxu0 0.0
    %1441 = vmatprep.mubr.f32.mxu0 0.0
    %1442 = vmatmul.mubr.f32.gmra.mrb[0].mxu0 %v1375
    %v1443 = vpop.f32.mrb[0].mxu0
    %v1444 = vadd.f32 0.0, %v1443
    %v1445 = vpop.f32.mrb[0].mxu0
    %1446 = vdwg.mxu0
    %v1448 = vsel %vm403, %v1373, 0
    %1450 = vmatprep.subr.mxu0 0.0
    %1451 = vmatpush1.msra.mxu0 %v46
    %1452 = vmatprep.subr.mxu0 0.0
    %1453 = vmatpush1.msra.mxu0 0.0
    %1454 = vmatprep.subr.mxu0 0.0
    %1455 = vmatpush1.msra.mxu0 0.0
    %1456 = vmatprep.subr.mxu0 0.0
    %1457 = vmatpush1.msra.mxu0 0.0
    %1458 = vmatprep.subr.mxu0 0.0
    %1459 = vmatpush1.msra.mxu0 0.0
    %1460 = vmatprep.subr.mxu0 0.0
    %1461 = vmatpush1.msra.mxu0 0.0
    %1462 = vmatprep.subr.mxu0 0.0
    %1463 = vmatpush1.msra.mxu0 0.0
    %1464 = vmatprep.subr.mxu0 0.0
    %1465 = vmatpush1.msra.mxu0 0.0
    %1466 = vmatprep.subr.mxu0 0.0
    %1467 = vmatpush1.msra.mxu0 0.0
    %1468 = vmatprep.subr.mxu0 0.0
    %1469 = vmatpush1.msra.mxu0 0.0
    %1470 = vmatprep.subr.mxu0 0.0
    %1471 = vmatpush1.msra.mxu0 0.0
    %1472 = vmatprep.subr.mxu0 0.0
    %1473 = vmatpush1.msra.mxu0 0.0
    %1474 = vmatprep.subr.mxu0 0.0
    %1475 = vmatpush1.msra.mxu0 0.0
    %1476 = vmatprep.subr.mxu0 0.0
    %1477 = vmatpush1.msra.mxu0 0.0
    %1478 = vmatprep.subr.mxu0 0.0
    %1479 = vmatpush1.msra.mxu0 0.0
    %1480 = vmatprep.subr.mxu0 0.0
    %1481 = vmatpush1.msra.mxu0 0.0
    %1482 = vmatprep.subr.mxu0 0.0
    %1483 = vmatpush1.msra.mxu0 0.0
    %1484 = vmatprep.subr.mxu0 0.0
    %1485 = vmatpush1.msra.mxu0 0.0
    %1486 = vmatprep.subr.mxu0 0.0
    %1487 = vmatpush1.msra.mxu0 0.0
    %1488 = vmatprep.subr.mxu0 0.0
    %1489 = vmatpush1.msra.mxu0 0.0
    %1490 = vmatprep.subr.mxu0 0.0
    %1491 = vmatpush1.msra.mxu0 0.0
    %1492 = vmatprep.subr.mxu0 0.0
    %1493 = vmatpush1.msra.mxu0 0.0
    %1494 = vmatprep.subr.mxu0 0.0
    %1495 = vmatpush1.msra.mxu0 0.0
    %1496 = vmatprep.subr.mxu0 0.0
    %1497 = vmatpush1.msra.mxu0 0.0
    %1498 = vmatprep.subr.mxu0 0.0
    %1499 = vmatpush1.msra.mxu0 0.0
    %1500 = vmatprep.subr.mxu0 0.0
    %1501 = vmatpush1.msra.mxu0 0.0
    %1502 = vmatprep.subr.mxu0 0.0
    %1503 = vmatpush1.msra.mxu0 0.0
    %1504 = vmatprep.subr.mxu0 0.0
    %1505 = vmatpush1.msra.mxu0 0.0
    %1506 = vmatprep.subr.mxu0 0.0
    %1507 = vmatpush1.msra.mxu0 0.0
    %1508 = vmatprep.subr.mxu0 0.0
    %1509 = vmatpush1.msra.mxu0 0.0
    %1510 = vmatprep.subr.mxu0 0.0
    %1511 = vmatpush1.msra.mxu0 0.0
    %1512 = vmatprep.subr.mxu0 0.0
    %1513 = vmatpush1.msra.mxu0 0.0
    %1514 = vmatprep.mubr.f32.mxu0 0.0
    %1515 = vmatmul.mubr.f32.gmra.mrb[0].mxu0 %v1448
    %v1516 = vpop.f32.mrb[0].mxu0
    %v1517 = vadd.f32 0.0, %v1516
    %v1518 = vpop.f32.mrb[0].mxu0
    %1519 = vdwg.mxu0
    %v1522 = vrot.slane %v1517, 7
    %v1523 = vsel %vm553, %v1522, %v1444
    %v1524 = vsel %vm229, %v1523, 0
    %1526 = vmatprep.subr.mxu0 0.0
    %1527 = vmatpush1.msra.mxu0 %v51
    %1528 = vmatprep.subr.mxu0 0.0
    %1529 = vmatpush1.msra.mxu0 %v52
    %1530 = vmatprep.subr.mxu0 0.0
    %1531 = vmatpush1.msra.mxu0 %v53
    %1532 = vmatprep.subr.mxu0 0.0
    %1533 = vmatpush1.msra.mxu0 %v54
    %1534 = vmatprep.subr.mxu0 0.0
    %1535 = vmatpush1.msra.mxu0 0.0
    %1536 = vmatprep.subr.mxu0 0.0
    %1537 = vmatpush1.msra.mxu0 0.0
    %1538 = vmatprep.subr.mxu0 0.0
    %1539 = vmatpush1.msra.mxu0 0.0
    %1540 = vmatprep.subr.mxu0 0.0
    %1541 = vmatpush1.msra.mxu0 0.0
    %1542 = vmatprep.subr.mxu0 0.0
    %1543 = vmatpush1.msra.mxu0 0.0
    %1544 = vmatprep.subr.mxu0 0.0
    %1545 = vmatpush1.msra.mxu0 0.0
    %1546 = vmatprep.subr.mxu0 0.0
    %1547 = vmatpush1.msra.mxu0 0.0
    %1548 = vmatprep.subr.mxu0 0.0
    %1549 = vmatpush1.msra.mxu0 0.0
    %1550 = vmatprep.subr.mxu0 0.0
    %1551 = vmatpush1.msra.mxu0 0.0
    %1552 = vmatprep.subr.mxu0 0.0
    %1553 = vmatpush1.msra.mxu0 0.0
    %1554 = vmatprep.subr.mxu0 0.0
    %1555 = vmatpush1.msra.mxu0 0.0
    %1556 = vmatprep.subr.mxu0 0.0
    %1557 = vmatpush1.msra.mxu0 0.0
    %1558 = vmatprep.subr.mxu0 0.0
    %1559 = vmatpush1.msra.mxu0 0.0
    %1560 = vmatprep.subr.mxu0 0.0
    %1561 = vmatpush1.msra.mxu0 0.0
    %1562 = vmatprep.subr.mxu0 0.0
    %1563 = vmatpush1.msra.mxu0 0.0
    %1564 = vmatprep.subr.mxu0 0.0
    %1565 = vmatpush1.msra.mxu0 0.0
    %1566 = vmatprep.subr.mxu0 0.0
    %1567 = vmatpush1.msra.mxu0 0.0
    %1568 = vmatprep.subr.mxu0 0.0
    %1569 = vmatpush1.msra.mxu0 0.0
    %1570 = vmatprep.subr.mxu0 0.0
    %1571 = vmatpush1.msra.mxu0 0.0
    %1572 = vmatprep.subr.mxu0 0.0
    %1573 = vmatpush1.msra.mxu0 0.0
    %1574 = vmatprep.subr.mxu0 0.0
    %1575 = vmatpush1.msra.mxu0 0.0
    %1576 = vmatprep.subr.mxu0 0.0
    %1577 = vmatpush1.msra.mxu0 0.0
    %1578 = vmatprep.subr.mxu0 0.0
    %1579 = vmatpush1.msra.mxu0 0.0
    %1580 = vmatprep.subr.mxu0 0.0
    %1581 = vmatpush1.msra.mxu0 0.0
    %1582 = vmatprep.subr.mxu0 0.0
    %1583 = vmatpush1.msra.mxu0 0.0
    %1584 = vmatprep.subr.mxu0 0.0
    %1585 = vmatpush1.msra.mxu0 0.0
    %1586 = vmatprep.subr.mxu0 0.0
    %1587 = vmatpush1.msra.mxu0 0.0
    %1588 = vmatprep.subr.mxu0 0.0
    %1589 = vmatpush1.msra.mxu0 0.0
    %1590 = vmatprep.mubr.f32.mxu0 0.0
    %1591 = vmatmul.mubr.f32.gmra.mrb[0].mxu0 %v1524
    %v1592 = vpop.f32.mrb[0].mxu0
    %v1593 = vadd.f32 0.0, %v1592
    %v1594 = vpop.f32.mrb[0].mxu0
    %1595 = vdwg.mxu0
    %v1597 = vsel %vm102, %v1170, 0
    %1599 = vmatprep.subr.mxu0 0.0
    %1600 = vmatpush1.msra.mxu0 %v49
    %1601 = vmatprep.subr.mxu0 0.0
    %1602 = vmatpush1.msra.mxu0 %v50
    %1603 = vmatprep.subr.mxu0 0.0
    %1604 = vmatpush1.msra.mxu0 0.0
    %1605 = vmatprep.subr.mxu0 0.0
    %1606 = vmatpush1.msra.mxu0 0.0
    %1607 = vmatprep.subr.mxu0 0.0
    %1608 = vmatpush1.msra.mxu0 0.0
    %1609 = vmatprep.subr.mxu0 0.0
    %1610 = vmatpush1.msra.mxu0 0.0
    %1611 = vmatprep.subr.mxu0 0.0
    %1612 = vmatpush1.msra.mxu0 0.0
    %1613 = vmatprep.subr.mxu0 0.0
    %1614 = vmatpush1.msra.mxu0 0.0
    %1615 = vmatprep.subr.mxu0 0.0
    %1616 = vmatpush1.msra.mxu0 0.0
    %1617 = vmatprep.subr.mxu0 0.0
    %1618 = vmatpush1.msra.mxu0 0.0
    %1619 = vmatprep.subr.mxu0 0.0
    %1620 = vmatpush1.msra.mxu0 0.0
    %1621 = vmatprep.subr.mxu0 0.0
    %1622 = vmatpush1.msra.mxu0 0.0
    %1623 = vmatprep.subr.mxu0 0.0
    %1624 = vmatpush1.msra.mxu0 0.0
    %1625 = vmatprep.subr.mxu0 0.0
    %1626 = vmatpush1.msra.mxu0 0.0
    %1627 = vmatprep.subr.mxu0 0.0
    %1628 = vmatpush1.msra.mxu0 0.0
    %1629 = vmatprep.subr.mxu0 0.0
    %1630 = vmatpush1.msra.mxu0 0.0
    %1631 = vmatprep.subr.mxu0 0.0
    %1632 = vmatpush1.msra.mxu0 0.0
    %1633 = vmatprep.subr.mxu0 0.0
    %1634 = vmatpush1.msra.mxu0 0.0
    %1635 = vmatprep.subr.mxu0 0.0
    %1636 = vmatpush1.msra.mxu0 0.0
    %1637 = vmatprep.subr.mxu0 0.0
    %1638 = vmatpush1.msra.mxu0 0.0
    %1639 = vmatprep.subr.mxu0 0.0
    %1640 = vmatpush1.msra.mxu0 0.0
    %1641 = vmatprep.subr.mxu0 0.0
    %1642 = vmatpush1.msra.mxu0 0.0
    %1643 = vmatprep.subr.mxu0 0.0
    %1644 = vmatpush1.msra.mxu0 0.0
    %1645 = vmatprep.subr.mxu0 0.0
    %1646 = vmatpush1.msra.mxu0 0.0
    %1647 = vmatprep.subr.mxu0 0.0
    %1648 = vmatpush1.msra.mxu0 0.0
    %1649 = vmatprep.subr.mxu0 0.0
    %1650 = vmatpush1.msra.mxu0 0.0
    %1651 = vmatprep.subr.mxu0 0.0
    %1652 = vmatpush1.msra.mxu0 0.0
    %1653 = vmatprep.subr.mxu0 0.0
    %1654 = vmatpush1.msra.mxu0 0.0
    %1655 = vmatprep.subr.mxu0 0.0
    %1656 = vmatpush1.msra.mxu0 0.0
    %1657 = vmatprep.subr.mxu0 0.0
    %1658 = vmatpush1.msra.mxu0 0.0
    %1659 = vmatprep.subr.mxu0 0.0
    %1660 = vmatpush1.msra.mxu0 0.0
    %1661 = vmatprep.subr.mxu0 0.0
    %1662 = vmatpush1.msra.mxu0 0.0
    %1663 = vmatprep.mubr.f32.mxu0 0.0
    %1664 = vmatmul.mubr.f32.gmra.mrb[0].mxu0 %v1597
    %v1665 = vpop.f32.mrb[0].mxu0
    %v1666 = vadd.f32 %v1593, %v1665
    %v1667 = vpop.f32.mrb[0].mxu0
    %1668 = vdwg.mxu0
    %1670 = vrot.lane.b32.xlu0 %v1060, 32
    %v1671 = vpop.permute.xlu0 %1670
    %v1672 = vsel %vm229, %v1671, 0
    %1674 = vmatprep.subr.mxu0 0.0
    %1675 = vmatpush1.msra.mxu0 %v55
    %1676 = vmatprep.subr.mxu0 0.0
    %1677 = vmatpush1.msra.mxu0 %v56
    %1678 = vmatprep.subr.mxu0 0.0
    %1679 = vmatpush1.msra.mxu0 %v57
    %1680 = vmatprep.subr.mxu0 0.0
    %1681 = vmatpush1.msra.mxu0 %v58
    %1682 = vmatprep.subr.mxu0 0.0
    %1683 = vmatpush1.msra.mxu0 0.0
    %1684 = vmatprep.subr.mxu0 0.0
    %1685 = vmatpush1.msra.mxu0 0.0
    %1686 = vmatprep.subr.mxu0 0.0
    %1687 = vmatpush1.msra.mxu0 0.0
    %1688 = vmatprep.subr.mxu0 0.0
    %1689 = vmatpush1.msra.mxu0 0.0
    %1690 = vmatprep.subr.mxu0 0.0
    %1691 = vmatpush1.msra.mxu0 0.0
    %1692 = vmatprep.subr.mxu0 0.0
    %1693 = vmatpush1.msra.mxu0 0.0
    %1694 = vmatprep.subr.mxu0 0.0
    %1695 = vmatpush1.msra.mxu0 0.0
    %1696 = vmatprep.subr.mxu0 0.0
    %1697 = vmatpush1.msra.mxu0 0.0
    %1698 = vmatprep.subr.mxu0 0.0
    %1699 = vmatpush1.msra.mxu0 0.0
    %1700 = vmatprep.subr.mxu0 0.0
    %1701 = vmatpush1.msra.mxu0 0.0
    %1702 = vmatprep.subr.mxu0 0.0
    %1703 = vmatpush1.msra.mxu0 0.0
    %1704 = vmatprep.subr.mxu0 0.0
    %1705 = vmatpush1.msra.mxu0 0.0
    %1706 = vmatprep.subr.mxu0 0.0
    %1707 = vmatpush1.msra.mxu0 0.0
    %1708 = vmatprep.subr.mxu0 0.0
    %1709 = vmatpush1.msra.mxu0 0.0
    %1710 = vmatprep.subr.mxu0 0.0
    %1711 = vmatpush1.msra.mxu0 0.0
    %1712 = vmatprep.subr.mxu0 0.0
    %1713 = vmatpush1.msra.mxu0 0.0
    %1714 = vmatprep.subr.mxu0 0.0
    %1715 = vmatpush1.msra.mxu0 0.0
    %1716 = vmatprep.subr.mxu0 0.0
    %1717 = vmatpush1.msra.mxu0 0.0
    %1718 = vmatprep.subr.mxu0 0.0
    %1719 = vmatpush1.msra.mxu0 0.0
    %1720 = vmatprep.subr.mxu0 0.0
    %1721 = vmatpush1.msra.mxu0 0.0
    %1722 = vmatprep.subr.mxu0 0.0
    %1723 = vmatpush1.msra.mxu0 0.0
    %1724 = vmatprep.subr.mxu0 0.0
    %1725 = vmatpush1.msra.mxu0 0.0
    %1726 = vmatprep.subr.mxu0 0.0
    %1727 = vmatpush1.msra.mxu0 0.0
    %1728 = vmatprep.subr.mxu0 0.0
    %1729 = vmatpush1.msra.mxu0 0.0
    %1730 = vmatprep.subr.mxu0 0.0
    %1731 = vmatpush1.msra.mxu0 0.0
    %1732 = vmatprep.subr.mxu0 0.0
    %1733 = vmatpush1.msra.mxu0 0.0
    %1734 = vmatprep.subr.mxu0 0.0
    %1735 = vmatpush1.msra.mxu0 0.0
    %1736 = vmatprep.subr.mxu0 0.0
    %1737 = vmatpush1.msra.mxu0 0.0
    %1738 = vmatprep.mubr.f32.mxu0 0.0
    %1739 = vmatmul.mubr.f32.gmra.mrb[0].mxu0 %v1672
    %v1740 = vpop.f32.mrb[0].mxu0
    %v1741 = vadd.f32 0.0, %v1740
    %v1742 = vpop.f32.mrb[0].mxu0
    %1743 = vdwg.mxu0
    %v1744 = vadd.f32 %v1666, %v1741
    %v1745 = vadd.f32 %v1744, %v76
    %v1746 = vxor.u32 %v1745, 2147483648
    %v1747 = vmul.f32 %v1746, 1.442695
    %v1748 = vpow.pop %v1747
    %v1749 = vadd.f32 %v1748, 1.0
    %v1750 = vrcp.pop %v1749
    %v1751 = vmul.f32 1.0, %v1750
    %v1752 = vtanh.pop %v1745
    %v1753 = vmul.f32 %v1751, %v1070
    %1755 = vrot.lane.b32.xlu0 %v1752, 64
    %v1756 = vpop.permute.xlu0 %1755
    %v1758 = vmul.f32 %v1751, %v1756
    %1760 = vrot.lane.b32.xlu0 %v1758, 32
    %v1761 = vpop.permute.xlu0 %1760
    %v1763 = vadd.f32 %v1753, %v1761
    %v1764 = vtanh.pop %v1763
    %1766 = vrot.lane.b32.xlu0 %v1764, 64
    %v1767 = vpop.permute.xlu0 %1766
    %v1769 = vmul.f32 %v1751, %v1767
    %1770 = vrot.lane.b32.xlu0 %v1065, 32
    %v1771 = vpop.permute.xlu0 %1770
    %v1772 = vsel %vm229, %v1771, 0
    %1774 = vmatprep.subr.mxu0 0.0
    %1775 = vmatpush1.msra.mxu0 %v63
    %1776 = vmatprep.subr.mxu0 0.0
    %1777 = vmatpush1.msra.mxu0 %v64
    %1778 = vmatprep.subr.mxu0 0.0
    %1779 = vmatpush1.msra.mxu0 %v65
    %1780 = vmatprep.subr.mxu0 0.0
    %1781 = vmatpush1.msra.mxu0 %v66
    %1782 = vmatprep.subr.mxu0 0.0
    %1783 = vmatpush1.msra.mxu0 0.0
    %1784 = vmatprep.subr.mxu0 0.0
    %1785 = vmatpush1.msra.mxu0 0.0
    %1786 = vmatprep.subr.mxu0 0.0
    %1787 = vmatpush1.msra.mxu0 0.0
    %1788 = vmatprep.subr.mxu0 0.0
    %1789 = vmatpush1.msra.mxu0 0.0
    %1790 = vmatprep.subr.mxu0 0.0
    %1791 = vmatpush1.msra.mxu0 0.0
    %1792 = vmatprep.subr.mxu0 0.0
    %1793 = vmatpush1.msra.mxu0 0.0
    %1794 = vmatprep.subr.mxu0 0.0
    %1795 = vmatpush1.msra.mxu0 0.0
    %1796 = vmatprep.subr.mxu0 0.0
    %1797 = vmatpush1.msra.mxu0 0.0
    %1798 = vmatprep.subr.mxu0 0.0
    %1799 = vmatpush1.msra.mxu0 0.0
    %1800 = vmatprep.subr.mxu0 0.0
    %1801 = vmatpush1.msra.mxu0 0.0
    %1802 = vmatprep.subr.mxu0 0.0
    %1803 = vmatpush1.msra.mxu0 0.0
    %1804 = vmatprep.subr.mxu0 0.0
    %1805 = vmatpush1.msra.mxu0 0.0
    %1806 = vmatprep.subr.mxu0 0.0
    %1807 = vmatpush1.msra.mxu0 0.0
    %1808 = vmatprep.subr.mxu0 0.0
    %1809 = vmatpush1.msra.mxu0 0.0
    %1810 = vmatprep.subr.mxu0 0.0
    %1811 = vmatpush1.msra.mxu0 0.0
    %1812 = vmatprep.subr.mxu0 0.0
    %1813 = vmatpush1.msra.mxu0 0.0
    %1814 = vmatprep.subr.mxu0 0.0
    %1815 = vmatpush1.msra.mxu0 0.0
    %1816 = vmatprep.subr.mxu0 0.0
    %1817 = vmatpush1.msra.mxu0 0.0
    %1818 = vmatprep.subr.mxu0 0.0
    %1819 = vmatpush1.msra.mxu0 0.0
    %1820 = vmatprep.subr.mxu0 0.0
    %1821 = vmatpush1.msra.mxu0 0.0
    %1822 = vmatprep.subr.mxu0 0.0
    %1823 = vmatpush1.msra.mxu0 0.0
    %1824 = vmatprep.subr.mxu0 0.0
    %1825 = vmatpush1.msra.mxu0 0.0
    %1826 = vmatprep.subr.mxu0 0.0
    %1827 = vmatpush1.msra.mxu0 0.0
    %1828 = vmatprep.subr.mxu0 0.0
    %1829 = vmatpush1.msra.mxu0 0.0
    %1830 = vmatprep.subr.mxu0 0.0
    %1831 = vmatpush1.msra.mxu0 0.0
    %1832 = vmatprep.subr.mxu0 0.0
    %1833 = vmatpush1.msra.mxu0 0.0
    %1834 = vmatprep.subr.mxu0 0.0
    %1835 = vmatpush1.msra.mxu0 0.0
    %1836 = vmatprep.subr.mxu0 0.0
    %1837 = vmatpush1.msra.mxu0 0.0
    %1838 = vmatprep.mubr.f32.mxu0 0.0
    %1839 = vmatmul.mubr.f32.gmra.mrb[0].mxu0 %v1772
    %v1840 = vpop.f32.mrb[0].mxu0
    %v1841 = vadd.f32 0.0, %v1840
    %v1842 = vpop.f32.mrb[0].mxu0
    %1843 = vdwg.mxu0
    %1845 = vrot.lane.b32.xlu0 %v1769, 32
    %v1846 = vpop.permute.xlu0 %1845
    %v1847 = vsel %vm229, %v1846, 0
    %1849 = vmatprep.subr.mxu0 0.0
    %1850 = vmatpush1.msra.mxu0 %v59
    %1851 = vmatprep.subr.mxu0 0.0
    %1852 = vmatpush1.msra.mxu0 %v60
    %1853 = vmatprep.subr.mxu0 0.0
    %1854 = vmatpush1.msra.mxu0 %v61
    %1855 = vmatprep.subr.mxu0 0.0
    %1856 = vmatpush1.msra.mxu0 %v62
    %1857 = vmatprep.subr.mxu0 0.0
    %1858 = vmatpush1.msra.mxu0 0.0
    %1859 = vmatprep.subr.mxu0 0.0
    %1860 = vmatpush1.msra.mxu0 0.0
    %1861 = vmatprep.subr.mxu0 0.0
    %1862 = vmatpush1.msra.mxu0 0.0
    %1863 = vmatprep.subr.mxu0 0.0
    %1864 = vmatpush1.msra.mxu0 0.0
    %1865 = vmatprep.subr.mxu0 0.0
    %1866 = vmatpush1.msra.mxu0 0.0
    %1867 = vmatprep.subr.mxu0 0.0
    %1868 = vmatpush1.msra.mxu0 0.0
    %1869 = vmatprep.subr.mxu0 0.0
    %1870 = vmatpush1.msra.mxu0 0.0
    %1871 = vmatprep.subr.mxu0 0.0
    %1872 = vmatpush1.msra.mxu0 0.0
    %1873 = vmatprep.subr.mxu0 0.0
    %1874 = vmatpush1.msra.mxu0 0.0
    %1875 = vmatprep.subr.mxu0 0.0
    %1876 = vmatpush1.msra.mxu0 0.0
    %1877 = vmatprep.subr.mxu0 0.0
    %1878 = vmatpush1.msra.mxu0 0.0
    %1879 = vmatprep.subr.mxu0 0.0
    %1880 = vmatpush1.msra.mxu0 0.0
    %1881 = vmatprep.subr.mxu0 0.0
    %1882 = vmatpush1.msra.mxu0 0.0
    %1883 = vmatprep.subr.mxu0 0.0
    %1884 = vmatpush1.msra.mxu0 0.0
    %1885 = vmatprep.subr.mxu0 0.0
    %1886 = vmatpush1.msra.mxu0 0.0
    %1887 = vmatprep.subr.mxu0 0.0
    %1888 = vmatpush1.msra.mxu0 0.0
    %1889 = vmatprep.subr.mxu0 0.0
    %1890 = vmatpush1.msra.mxu0 0.0
    %1891 = vmatprep.subr.mxu0 0.0
    %1892 = vmatpush1.msra.mxu0 0.0
    %1893 = vmatprep.subr.mxu0 0.0
    %1894 = vmatpush1.msra.mxu0 0.0
    %1895 = vmatprep.subr.mxu0 0.0
    %1896 = vmatpush1.msra.mxu0 0.0
    %1897 = vmatprep.subr.mxu0 0.0
    %1898 = vmatpush1.msra.mxu0 0.0
    %1899 = vmatprep.subr.mxu0 0.0
    %1900 = vmatpush1.msra.mxu0 0.0
    %1901 = vmatprep.subr.mxu0 0.0
    %1902 = vmatpush1.msra.mxu0 0.0
    %1903 = vmatprep.subr.mxu0 0.0
    %1904 = vmatpush1.msra.mxu0 0.0
    %1905 = vmatprep.subr.mxu0 0.0
    %1906 = vmatpush1.msra.mxu0 0.0
    %1907 = vmatprep.subr.mxu0 0.0
    %1908 = vmatpush1.msra.mxu0 0.0
    %1909 = vmatprep.subr.mxu0 0.0
    %1910 = vmatpush1.msra.mxu0 0.0
    %1911 = vmatprep.subr.mxu0 0.0
    %1912 = vmatpush1.msra.mxu0 0.0
    %1913 = vmatprep.mubr.f32.mxu0 0.0
    %1914 = vmatmul.mubr.f32.gmra.mrb[0].mxu0 %v1847
    %v1915 = vpop.f32.mrb[0].mxu0
    %v1916 = vadd.f32 %v1841, %v1915
    %v1917 = vpop.f32.mrb[0].mxu0
    %1918 = vdwg.mxu0
    %v1919 = vadd.f32 %v1916, %v83
    %v1920 = vxor.u32 %v1919, 2147483648
    %v1921 = vmul.f32 %v1920, 1.442695
    %v1922 = vpow.pop %v1921
    %v1923 = vadd.f32 %v1922, 1.0
    %v1924 = vrcp.pop %v1923
    %v1925 = vmul.f32 1.0, %v1924
    %v1926 = vtanh.pop %v1919
    %v1927 = vmul.f32 %v1925, %v1075
    %1929 = vrot.lane.b32.xlu0 %v1926, 64
    %v1930 = vpop.permute.xlu0 %1929
    %v1932 = vmul.f32 %v1925, %v1930
    %1934 = vrot.lane.b32.xlu0 %v1932, 32
    %v1935 = vpop.permute.xlu0 %1934
    %v1937 = vadd.f32 %v1927, %v1935
    %v1938 = vtanh.pop %v1937
    %1940 = vrot.lane.b32.xlu0 %v1938, 64
    %v1941 = vpop.permute.xlu0 %1940
    %v1943 = vmul.f32 %v1925, %v1941
    %1945 = vrot.lane.b32.xlu0 %v1943, 32
    %v1946 = vpop.permute.xlu0 %1945
    %v1947 = vsel %vm229, %v1946, 0
    %1949 = vmatprep.subr.mxu0 0.0
    %1950 = vmatpush1.msra.mxu0 %v67
    %1951 = vmatprep.subr.mxu0 0.0
    %1952 = vmatpush1.msra.mxu0 %v68
    %1953 = vmatprep.subr.mxu0 0.0
    %1954 = vmatpush1.msra.mxu0 %v69
    %1955 = vmatprep.subr.mxu0 0.0
    %1956 = vmatpush1.msra.mxu0 %v70
    %1957 = vmatprep.subr.mxu0 0.0
    %1958 = vmatpush1.msra.mxu0 0.0
    %1959 = vmatprep.subr.mxu0 0.0
    %1960 = vmatpush1.msra.mxu0 0.0
    %1961 = vmatprep.subr.mxu0 0.0
    %1962 = vmatpush1.msra.mxu0 0.0
    %1963 = vmatprep.subr.mxu0 0.0
    %1964 = vmatpush1.msra.mxu0 0.0
    %1965 = vmatprep.subr.mxu0 0.0
    %1966 = vmatpush1.msra.mxu0 0.0
    %1967 = vmatprep.subr.mxu0 0.0
    %1968 = vmatpush1.msra.mxu0 0.0
    %1969 = vmatprep.subr.mxu0 0.0
    %1970 = vmatpush1.msra.mxu0 0.0
    %1971 = vmatprep.subr.mxu0 0.0
    %1972 = vmatpush1.msra.mxu0 0.0
    %1973 = vmatprep.subr.mxu0 0.0
    %1974 = vmatpush1.msra.mxu0 0.0
    %1975 = vmatprep.subr.mxu0 0.0
    %1976 = vmatpush1.msra.mxu0 0.0
    %1977 = vmatprep.subr.mxu0 0.0
    %1978 = vmatpush1.msra.mxu0 0.0
    %1979 = vmatprep.subr.mxu0 0.0
    %1980 = vmatpush1.msra.mxu0 0.0
    %1981 = vmatprep.subr.mxu0 0.0
    %1982 = vmatpush1.msra.mxu0 0.0
    %1983 = vmatprep.subr.mxu0 0.0
    %1984 = vmatpush1.msra.mxu0 0.0
    %1985 = vmatprep.subr.mxu0 0.0
    %1986 = vmatpush1.msra.mxu0 0.0
    %1987 = vmatprep.subr.mxu0 0.0
    %1988 = vmatpush1.msra.mxu0 0.0
    %1989 = vmatprep.subr.mxu0 0.0
    %1990 = vmatpush1.msra.mxu0 0.0
    %1991 = vmatprep.subr.mxu0 0.0
    %1992 = vmatpush1.msra.mxu0 0.0
    %1993 = vmatprep.subr.mxu0 0.0
    %1994 = vmatpush1.msra.mxu0 0.0
    %1995 = vmatprep.subr.mxu0 0.0
    %1996 = vmatpush1.msra.mxu0 0.0
    %1997 = vmatprep.subr.mxu0 0.0
    %1998 = vmatpush1.msra.mxu0 0.0
    %1999 = vmatprep.subr.mxu0 0.0
    %2000 = vmatpush1.msra.mxu0 0.0
    %2001 = vmatprep.subr.mxu0 0.0
    %2002 = vmatpush1.msra.mxu0 0.0
    %2003 = vmatprep.subr.mxu0 0.0
    %2004 = vmatpush1.msra.mxu0 0.0
    %2005 = vmatprep.subr.mxu0 0.0
    %2006 = vmatpush1.msra.mxu0 0.0
    %2007 = vmatprep.subr.mxu0 0.0
    %2008 = vmatpush1.msra.mxu0 0.0
    %2009 = vmatprep.subr.mxu0 0.0
    %2010 = vmatpush1.msra.mxu0 0.0
    %2011 = vmatprep.subr.mxu0 0.0
    %2012 = vmatpush1.msra.mxu0 0.0
    %2013 = vmatprep.mubr.f32.mxu0 0.0
    %2014 = vmatmul.mubr.f32.gmra.mrb[0].mxu0 %v1947
    %v2015 = vpop.f32.mrb[0].mxu0
    %v2016 = vadd.f32 %v90, %v2015
    %v2017 = vpop.f32.mrb[0].mxu0
    %2018 = vdwg.mxu0
    %s2019 = scalar_lea.vmem [#allocation2], 4
    %2020 = vst [vmem:[%s2019] sm:$0x3] %v2016
    %v2021 = vadd.f32 %v1769, %v1058
    %v2022 = vadd.f32 %v1943, %v1063
    %v2023 = vadd.f32 %v1763, %v1068
    %v2024 = vadd.f32 %v1937, %v1073
    %v2025 = vsel %vm1076, %v2016, -inf
    %2026 = vmax.xlane.f32.xlu0 %v2025
    %v2027 = vpop.xlane.xlu0 %2026
    %vm2028 = vcmp.ge.f32.partialorder %v2016, %v2027
    %v2029 = vsel %vm2028, %v124, 128
    %v2030 = vsel %vm1076, %v2029, 2147483647
    %v2031 = vand.u32 %v2030, 65535
    %v2032 = vshra.s32 %v2030, 16
    %v2033 = vcvt.s32.f32 %v2031
    %v2034 = vcvt.s32.f32 %v2032
    %2035 = vmin.xlane.f32.xlu0 %v2034
    %v2036 = vpop.xlane.xlu0 %2035
    %vm2037 = vcmp.eq.f32.partialorder %v2034, %v2036
    %v2038 = vsel %vm2037, %v2033, inf
    %2039 = vmin.xlane.f32.xlu0 %v2038
    %v2040 = vpop.xlane.xlu0 %2039
    %v2041 = vcvt.f32.s32 %v2040
    %v2042 = vcvt.f32.s32 %v2036
    %v2043 = vshll.u32 %v2042, 16
    %v2044 = vadd.s32 %v2043, %v2041
    %vm2045 = vcmp.eq.s32.totalorder %v2044, %v124
    %v2046 = vsel %vm2045, 1, 0
    %v2047 = vcvt.s32.f32 %v2046
    %v2049 = vsel %vm102, %v2047, 0
    %2051 = vmatprep.subr.mxu0 0.0
    %2052 = vmatpush1.msra.mxu0 %v47
    %2053 = vmatprep.subr.mxu0 0.0
    %2054 = vmatpush1.msra.mxu0 %v48
    %2055 = vmatprep.subr.mxu0 0.0
    %2056 = vmatpush1.msra.mxu0 0.0
    %2057 = vmatprep.subr.mxu0 0.0
    %2058 = vmatpush1.msra.mxu0 0.0
    %2059 = vmatprep.subr.mxu0 0.0
    %2060 = vmatpush1.msra.mxu0 0.0
    %2061 = vmatprep.subr.mxu0 0.0
    %2062 = vmatpush1.msra.mxu0 0.0
    %2063 = vmatprep.subr.mxu0 0.0
    %2064 = vmatpush1.msra.mxu0 0.0
    %2065 = vmatprep.subr.mxu0 0.0
    %2066 = vmatpush1.msra.mxu0 0.0
    %2067 = vmatprep.subr.mxu0 0.0
    %2068 = vmatpush1.msra.mxu0 0.0
    %2069 = vmatprep.subr.mxu0 0.0
    %2070 = vmatpush1.msra.mxu0 0.0
    %2071 = vmatprep.subr.mxu0 0.0
    %2072 = vmatpush1.msra.mxu0 0.0
    %2073 = vmatprep.subr.mxu0 0.0
    %2074 = vmatpush1.msra.mxu0 0.0
    %2075 = vmatprep.subr.mxu0 0.0
    %2076 = vmatpush1.msra.mxu0 0.0
    %2077 = vmatprep.subr.mxu0 0.0
    %2078 = vmatpush1.msra.mxu0 0.0
    %2079 = vmatprep.subr.mxu0 0.0
    %2080 = vmatpush1.msra.mxu0 0.0
    %2081 = vmatprep.subr.mxu0 0.0
    %2082 = vmatpush1.msra.mxu0 0.0
    %2083 = vmatprep.subr.mxu0 0.0
    %2084 = vmatpush1.msra.mxu0 0.0
    %2085 = vmatprep.subr.mxu0 0.0
    %2086 = vmatpush1.msra.mxu0 0.0
    %2087 = vmatprep.subr.mxu0 0.0
    %2088 = vmatpush1.msra.mxu0 0.0
    %2089 = vmatprep.subr.mxu0 0.0
    %2090 = vmatpush1.msra.mxu0 0.0
    %2091 = vmatprep.subr.mxu0 0.0
    %2092 = vmatpush1.msra.mxu0 0.0
    %2093 = vmatprep.subr.mxu0 0.0
    %2094 = vmatpush1.msra.mxu0 0.0
    %2095 = vmatprep.subr.mxu0 0.0
    %2096 = vmatpush1.msra.mxu0 0.0
    %2097 = vmatprep.subr.mxu0 0.0
    %2098 = vmatpush1.msra.mxu0 0.0
    %2099 = vmatprep.subr.mxu0 0.0
    %2100 = vmatpush1.msra.mxu0 0.0
    %2101 = vmatprep.subr.mxu0 0.0
    %2102 = vmatpush1.msra.mxu0 0.0
    %2103 = vmatprep.subr.mxu0 0.0
    %2104 = vmatpush1.msra.mxu0 0.0
    %2105 = vmatprep.subr.mxu0 0.0
    %2106 = vmatpush1.msra.mxu0 0.0
    %2107 = vmatprep.subr.mxu0 0.0
    %2108 = vmatpush1.msra.mxu0 0.0
    %2109 = vmatprep.subr.mxu0 0.0
    %2110 = vmatpush1.msra.mxu0 0.0
    %2111 = vmatprep.subr.mxu0 0.0
    %2112 = vmatpush1.msra.mxu0 0.0
    %2113 = vmatprep.subr.mxu0 0.0
    %2114 = vmatpush1.msra.mxu0 0.0
    %2115 = vmatprep.mubr.f32.mxu0 0.0
    %2116 = vmatmul.mubr.f32.gmra.mrb[0].mxu0 %v2049
    %v2117 = vpop.f32.mrb[0].mxu0
    %v2118 = vadd.f32 0.0, %v2117
    %v2119 = vpop.f32.mrb[0].mxu0
    %2120 = vdwg.mxu0
    %v2123 = vunpack.c.l.s4 1966171168
    %v2124 = vunpack.c.0.s8 %v2123
    %v2125 = vlaneseq
    %v2126 = vshrl.u32 %v2125, 7
    %v2127 = vsub.s32 %v2124, %v2126
    %v2128 = vrot.slane %v2022, %v2127
    %v2129 = vcombine.high %v2128, %v2128
    %v2131 = vunpack.c.l.s4 1966171168
    %v2132 = vunpack.c.0.s8 %v2131
    %v2133 = vlaneseq
    %v2134 = vshrl.u32 %v2133, 7
    %v2135 = vsub.s32 %v2132, %v2134
    %v2136 = vrot.slane %v2128, %v2135
    %v2138 = vunpack.c.l.s4 1966171168
    %v2139 = vunpack.c.0.s8 %v2138
    %v2140 = vlaneseq
    %v2141 = vshrl.u32 %v2140, 7
    %v2142 = vsub.s32 %v2139, %v2141
    %v2143 = vrot.slane %v2129, %v2142
    %v2144 = vlaneseq
    %v2145 = vshrl.u32 %v2144, 7
    %v2146 = vsub.s32 0, %v2145
    %v2147 = vrot.slane %v2136, %v2146
    %2148 = vrot.lane.b32.xlu0 %v2147, 32
    %v2149 = vpop.permute.xlu0 %2148
    %v2150 = vsel %vm229, %v2149, 0
    %2152 = vmatprep.subr.mxu0 0.0
    %2153 = vmatpush1.xpose.msra.mxu0 %v233
    %2154 = vmatprep.subr.mxu0 0.0
    %2155 = vmatpush1.xpose.msra.mxu0 0.0
    %2156 = vmatprep.subr.mxu0 0.0
    %2157 = vmatpush1.xpose.msra.mxu0 0.0
    %2158 = vmatprep.subr.mxu0 0.0
    %2159 = vmatpush1.xpose.msra.mxu0 0.0
    %2160 = vmatprep.subr.mxu0 0.0
    %2161 = vmatpush1.xpose.msra.mxu0 0.0
    %2162 = vmatprep.subr.mxu0 0.0
    %2163 = vmatpush1.xpose.msra.mxu0 0.0
    %2164 = vmatprep.subr.mxu0 0.0
    %2165 = vmatpush1.xpose.msra.mxu0 0.0
    %2166 = vmatprep.subr.mxu0 0.0
    %2167 = vmatpush1.xpose.msra.mxu0 0.0
    %2168 = vmatprep.subr.mxu0 0.0
    %2169 = vmatpush1.xpose.msra.mxu0 0.0
    %2170 = vmatprep.subr.mxu0 0.0
    %2171 = vmatpush1.xpose.msra.mxu0 0.0
    %2172 = vmatprep.subr.mxu0 0.0
    %2173 = vmatpush1.xpose.msra.mxu0 0.0
    %2174 = vmatprep.subr.mxu0 0.0
    %2175 = vmatpush1.xpose.msra.mxu0 0.0
    %2176 = vmatprep.subr.mxu0 0.0
    %2177 = vmatpush1.xpose.msra.mxu0 0.0
    %2178 = vmatprep.subr.mxu0 0.0
    %2179 = vmatpush1.xpose.msra.mxu0 0.0
    %2180 = vmatprep.subr.mxu0 0.0
    %2181 = vmatpush1.xpose.msra.mxu0 0.0
    %2182 = vmatprep.subr.mxu0 0.0
    %2183 = vmatpush1.xpose.msra.mxu0 0.0
    %2184 = vmatprep.subr.mxu0 0.0
    %2185 = vmatpush1.xpose.msra.mxu0 0.0
    %2186 = vmatprep.subr.mxu0 0.0
    %2187 = vmatpush1.xpose.msra.mxu0 0.0
    %2188 = vmatprep.subr.mxu0 0.0
    %2189 = vmatpush1.xpose.msra.mxu0 0.0
    %2190 = vmatprep.subr.mxu0 0.0
    %2191 = vmatpush1.xpose.msra.mxu0 0.0
    %2192 = vmatprep.subr.mxu0 0.0
    %2193 = vmatpush1.xpose.msra.mxu0 0.0
    %2194 = vmatprep.subr.mxu0 0.0
    %2195 = vmatpush1.xpose.msra.mxu0 0.0
    %2196 = vmatprep.subr.mxu0 0.0
    %2197 = vmatpush1.xpose.msra.mxu0 0.0
    %2198 = vmatprep.subr.mxu0 0.0
    %2199 = vmatpush1.xpose.msra.mxu0 0.0
    %2200 = vmatprep.subr.mxu0 0.0
    %2201 = vmatpush1.xpose.msra.mxu0 0.0
    %2202 = vmatprep.subr.mxu0 0.0
    %2203 = vmatpush1.xpose.msra.mxu0 0.0
    %2204 = vmatprep.subr.mxu0 0.0
    %2205 = vmatpush1.xpose.msra.mxu0 0.0
    %2206 = vmatprep.subr.mxu0 0.0
    %2207 = vmatpush1.xpose.msra.mxu0 0.0
    %2208 = vmatprep.subr.mxu0 0.0
    %2209 = vmatpush1.xpose.msra.mxu0 0.0
    %2210 = vmatprep.subr.mxu0 0.0
    %2211 = vmatpush1.xpose.msra.mxu0 0.0
    %2212 = vmatprep.subr.mxu0 0.0
    %2213 = vmatpush1.xpose.msra.mxu0 0.0
    %2214 = vmatprep.subr.mxu0 0.0
    %2215 = vmatpush1.xpose.msra.mxu0 0.0
    %2216 = vmatprep.mubr.f32.mxu0 0.0
    %2217 = vmatmul.mubr.f32.gmra.mrb[0].mxu0 %v2150
    %v2218 = vpop.f32.mrb[0].mxu0
    %v2219 = vadd.f32 0.0, %v2218
    %v2220 = vpop.f32.mrb[0].mxu0
    %2221 = vdwg.mxu0
    %v2222 = vlaneseq
    %v2223 = vshrl.u32 %v2222, 7
    %v2224 = vsub.s32 0, %v2223
    %v2225 = vrot.slane %v2143, %v2224
    %2226 = vrot.lane.b32.xlu0 %v2225, 32
    %v2227 = vpop.permute.xlu0 %2226
    %v2228 = vsel %vm229, %v2227, 0
    %2230 = vmatprep.subr.mxu0 0.0
    %2231 = vmatpush1.xpose.msra.mxu0 %v308
    %2232 = vmatprep.subr.mxu0 0.0
    %2233 = vmatpush1.xpose.msra.mxu0 0.0
    %2234 = vmatprep.subr.mxu0 0.0
    %2235 = vmatpush1.xpose.msra.mxu0 0.0
    %2236 = vmatprep.subr.mxu0 0.0
    %2237 = vmatpush1.xpose.msra.mxu0 0.0
    %2238 = vmatprep.subr.mxu0 0.0
    %2239 = vmatpush1.xpose.msra.mxu0 0.0
    %2240 = vmatprep.subr.mxu0 0.0
    %2241 = vmatpush1.xpose.msra.mxu0 0.0
    %2242 = vmatprep.subr.mxu0 0.0
    %2243 = vmatpush1.xpose.msra.mxu0 0.0
    %2244 = vmatprep.subr.mxu0 0.0
    %2245 = vmatpush1.xpose.msra.mxu0 0.0
    %2246 = vmatprep.subr.mxu0 0.0
    %2247 = vmatpush1.xpose.msra.mxu0 0.0
    %2248 = vmatprep.subr.mxu0 0.0
    %2249 = vmatpush1.xpose.msra.mxu0 0.0
    %2250 = vmatprep.subr.mxu0 0.0
    %2251 = vmatpush1.xpose.msra.mxu0 0.0
    %2252 = vmatprep.subr.mxu0 0.0
    %2253 = vmatpush1.xpose.msra.mxu0 0.0
    %2254 = vmatprep.subr.mxu0 0.0
    %2255 = vmatpush1.xpose.msra.mxu0 0.0
    %2256 = vmatprep.subr.mxu0 0.0
    %2257 = vmatpush1.xpose.msra.mxu0 0.0
    %2258 = vmatprep.subr.mxu0 0.0
    %2259 = vmatpush1.xpose.msra.mxu0 0.0
    %2260 = vmatprep.subr.mxu0 0.0
    %2261 = vmatpush1.xpose.msra.mxu0 0.0
    %2262 = vmatprep.subr.mxu0 0.0
    %2263 = vmatpush1.xpose.msra.mxu0 0.0
    %2264 = vmatprep.subr.mxu0 0.0
    %2265 = vmatpush1.xpose.msra.mxu0 0.0
    %2266 = vmatprep.subr.mxu0 0.0
    %2267 = vmatpush1.xpose.msra.mxu0 0.0
    %2268 = vmatprep.subr.mxu0 0.0
    %2269 = vmatpush1.xpose.msra.mxu0 0.0
    %2270 = vmatprep.subr.mxu0 0.0
    %2271 = vmatpush1.xpose.msra.mxu0 0.0
    %2272 = vmatprep.subr.mxu0 0.0
    %2273 = vmatpush1.xpose.msra.mxu0 0.0
    %2274 = vmatprep.subr.mxu0 0.0
    %2275 = vmatpush1.xpose.msra.mxu0 0.0
    %2276 = vmatprep.subr.mxu0 0.0
    %2277 = vmatpush1.xpose.msra.mxu0 0.0
    %2278 = vmatprep.subr.mxu0 0.0
    %2279 = vmatpush1.xpose.msra.mxu0 0.0
    %2280 = vmatprep.subr.mxu0 0.0
    %2281 = vmatpush1.xpose.msra.mxu0 0.0
    %2282 = vmatprep.subr.mxu0 0.0
    %2283 = vmatpush1.xpose.msra.mxu0 0.0
    %2284 = vmatprep.subr.mxu0 0.0
    %2285 = vmatpush1.xpose.msra.mxu0 0.0
    %2286 = vmatprep.subr.mxu0 0.0
    %2287 = vmatpush1.xpose.msra.mxu0 0.0
    %2288 = vmatprep.subr.mxu0 0.0
    %2289 = vmatpush1.xpose.msra.mxu0 0.0
    %2290 = vmatprep.subr.mxu0 0.0
    %2291 = vmatpush1.xpose.msra.mxu0 0.0
    %2292 = vmatprep.subr.mxu0 0.0
    %2293 = vmatpush1.xpose.msra.mxu0 0.0
    %2294 = vmatprep.mubr.f32.mxu0 0.0
    %2295 = vmatmul.mubr.f32.gmra.mrb[0].mxu0 %v2228
    %v2296 = vpop.f32.mrb[0].mxu0
    %v2297 = vadd.f32 0.0, %v2296
    %v2298 = vpop.f32.mrb[0].mxu0
    %2299 = vdwg.mxu0
    %v2300 = vsel %vm380, %v2219, -inf
    %2301 = vmax.xlane.f32.xlu0 %v2300
    %v2302 = vpop.xlane.xlu0 %2301
    %v2303 = vsel %vm380, %v2297, -inf
    %2304 = vmax.xlane.f32.xlu0 %v2303
    %v2305 = vpop.xlane.xlu0 %2304
    %v2306 = vsub.f32 %v2219, %v2302
    %v2307 = vsub.f32 %v2297, %v2305
    %v2308 = vmul.f32 %v2306, 1.442695
    %v2309 = vpow.pop %v2308
    %v2310 = vmul.f32 %v2307, 1.442695
    %v2311 = vpow.pop %v2310
    %v2312 = vsel %vm380, %v2309, 0.0
    %2313 = vadd.xlane.f32.xlu0 %v2312
    %v2314 = vpop.xlane.xlu0 %2313
    %v2315 = vsel %vm380, %v2311, 0.0
    %2316 = vadd.xlane.f32.xlu0 %v2315
    %v2317 = vpop.xlane.xlu0 %2316
    %v2318 = vrcp.pop %v2314
    %v2319 = vrcp.pop %v2317
    %v2320 = vmul.f32 %v2309, %v2318
    %v2321 = vmul.f32 %v2311, %v2319
    %v2323 = vsel %vm403, %v2320, 0
    %2325 = vmatprep.subr.mxu0 0.0
    %2326 = vmatpush1.msra.mxu0 %v45
    %2327 = vmatprep.subr.mxu0 0.0
    %2328 = vmatpush1.msra.mxu0 0.0
    %2329 = vmatprep.subr.mxu0 0.0
    %2330 = vmatpush1.msra.mxu0 0.0
    %2331 = vmatprep.subr.mxu0 0.0
    %2332 = vmatpush1.msra.mxu0 0.0
    %2333 = vmatprep.subr.mxu0 0.0
    %2334 = vmatpush1.msra.mxu0 0.0
    %2335 = vmatprep.subr.mxu0 0.0
    %2336 = vmatpush1.msra.mxu0 0.0
    %2337 = vmatprep.subr.mxu0 0.0
    %2338 = vmatpush1.msra.mxu0 0.0
    %2339 = vmatprep.subr.mxu0 0.0
    %2340 = vmatpush1.msra.mxu0 0.0
    %2341 = vmatprep.subr.mxu0 0.0
    %2342 = vmatpush1.msra.mxu0 0.0
    %2343 = vmatprep.subr.mxu0 0.0
    %2344 = vmatpush1.msra.mxu0 0.0
    %2345 = vmatprep.subr.mxu0 0.0
    %2346 = vmatpush1.msra.mxu0 0.0
    %2347 = vmatprep.subr.mxu0 0.0
    %2348 = vmatpush1.msra.mxu0 0.0
    %2349 = vmatprep.subr.mxu0 0.0
    %2350 = vmatpush1.msra.mxu0 0.0
    %2351 = vmatprep.subr.mxu0 0.0
    %2352 = vmatpush1.msra.mxu0 0.0
    %2353 = vmatprep.subr.mxu0 0.0
    %2354 = vmatpush1.msra.mxu0 0.0
    %2355 = vmatprep.subr.mxu0 0.0
    %2356 = vmatpush1.msra.mxu0 0.0
    %2357 = vmatprep.subr.mxu0 0.0
    %2358 = vmatpush1.msra.mxu0 0.0
    %2359 = vmatprep.subr.mxu0 0.0
    %2360 = vmatpush1.msra.mxu0 0.0
    %2361 = vmatprep.subr.mxu0 0.0
    %2362 = vmatpush1.msra.mxu0 0.0
    %2363 = vmatprep.subr.mxu0 0.0
    %2364 = vmatpush1.msra.mxu0 0.0
    %2365 = vmatprep.subr.mxu0 0.0
    %2366 = vmatpush1.msra.mxu0 0.0
    %2367 = vmatprep.subr.mxu0 0.0
    %2368 = vmatpush1.msra.mxu0 0.0
    %2369 = vmatprep.subr.mxu0 0.0
    %2370 = vmatpush1.msra.mxu0 0.0
    %2371 = vmatprep.subr.mxu0 0.0
    %2372 = vmatpush1.msra.mxu0 0.0
    %2373 = vmatprep.subr.mxu0 0.0
    %2374 = vmatpush1.msra.mxu0 0.0
    %2375 = vmatprep.subr.mxu0 0.0
    %2376 = vmatpush1.msra.mxu0 0.0
    %2377 = vmatprep.subr.mxu0 0.0
    %2378 = vmatpush1.msra.mxu0 0.0
    %2379 = vmatprep.subr.mxu0 0.0
    %2380 = vmatpush1.msra.mxu0 0.0
    %2381 = vmatprep.subr.mxu0 0.0
    %2382 = vmatpush1.msra.mxu0 0.0
    %2383 = vmatprep.subr.mxu0 0.0
    %2384 = vmatpush1.msra.mxu0 0.0
    %2385 = vmatprep.subr.mxu0 0.0
    %2386 = vmatpush1.msra.mxu0 0.0
    %2387 = vmatprep.subr.mxu0 0.0
    %2388 = vmatpush1.msra.mxu0 0.0
    %2389 = vmatprep.mubr.f32.mxu0 0.0
    %2390 = vmatmul.mubr.f32.gmra.mrb[0].mxu0 %v2323
    %v2391 = vpop.f32.mrb[0].mxu0
    %v2392 = vadd.f32 0.0, %v2391
    %v2393 = vpop.f32.mrb[0].mxu0
    %2394 = vdwg.mxu0
    %v2396 = vsel %vm403, %v2321, 0
    %2398 = vmatprep.subr.mxu0 0.0
    %2399 = vmatpush1.msra.mxu0 %v46
    %2400 = vmatprep.subr.mxu0 0.0
    %2401 = vmatpush1.msra.mxu0 0.0
    %2402 = vmatprep.subr.mxu0 0.0
    %2403 = vmatpush1.msra.mxu0 0.0
    %2404 = vmatprep.subr.mxu0 0.0
    %2405 = vmatpush1.msra.mxu0 0.0
    %2406 = vmatprep.subr.mxu0 0.0
    %2407 = vmatpush1.msra.mxu0 0.0
    %2408 = vmatprep.subr.mxu0 0.0
    %2409 = vmatpush1.msra.mxu0 0.0
    %2410 = vmatprep.subr.mxu0 0.0
    %2411 = vmatpush1.msra.mxu0 0.0
    %2412 = vmatprep.subr.mxu0 0.0
    %2413 = vmatpush1.msra.mxu0 0.0
    %2414 = vmatprep.subr.mxu0 0.0
    %2415 = vmatpush1.msra.mxu0 0.0
    %2416 = vmatprep.subr.mxu0 0.0
    %2417 = vmatpush1.msra.mxu0 0.0
    %2418 = vmatprep.subr.mxu0 0.0
    %2419 = vmatpush1.msra.mxu0 0.0
    %2420 = vmatprep.subr.mxu0 0.0
    %2421 = vmatpush1.msra.mxu0 0.0
    %2422 = vmatprep.subr.mxu0 0.0
    %2423 = vmatpush1.msra.mxu0 0.0
    %2424 = vmatprep.subr.mxu0 0.0
    %2425 = vmatpush1.msra.mxu0 0.0
    %2426 = vmatprep.subr.mxu0 0.0
    %2427 = vmatpush1.msra.mxu0 0.0
    %2428 = vmatprep.subr.mxu0 0.0
    %2429 = vmatpush1.msra.mxu0 0.0
    %2430 = vmatprep.subr.mxu0 0.0
    %2431 = vmatpush1.msra.mxu0 0.0
    %2432 = vmatprep.subr.mxu0 0.0
    %2433 = vmatpush1.msra.mxu0 0.0
    %2434 = vmatprep.subr.mxu0 0.0
    %2435 = vmatpush1.msra.mxu0 0.0
    %2436 = vmatprep.subr.mxu0 0.0
    %2437 = vmatpush1.msra.mxu0 0.0
    %2438 = vmatprep.subr.mxu0 0.0
    %2439 = vmatpush1.msra.mxu0 0.0
    %2440 = vmatprep.subr.mxu0 0.0
    %2441 = vmatpush1.msra.mxu0 0.0
    %2442 = vmatprep.subr.mxu0 0.0
    %2443 = vmatpush1.msra.mxu0 0.0
    %2444 = vmatprep.subr.mxu0 0.0
    %2445 = vmatpush1.msra.mxu0 0.0
    %2446 = vmatprep.subr.mxu0 0.0
    %2447 = vmatpush1.msra.mxu0 0.0
    %2448 = vmatprep.subr.mxu0 0.0
    %2449 = vmatpush1.msra.mxu0 0.0
    %2450 = vmatprep.subr.mxu0 0.0
    %2451 = vmatpush1.msra.mxu0 0.0
    %2452 = vmatprep.subr.mxu0 0.0
    %2453 = vmatpush1.msra.mxu0 0.0
    %2454 = vmatprep.subr.mxu0 0.0
    %2455 = vmatpush1.msra.mxu0 0.0
    %2456 = vmatprep.subr.mxu0 0.0
    %2457 = vmatpush1.msra.mxu0 0.0
    %2458 = vmatprep.subr.mxu0 0.0
    %2459 = vmatpush1.msra.mxu0 0.0
    %2460 = vmatprep.subr.mxu0 0.0
    %2461 = vmatpush1.msra.mxu0 0.0
    %2462 = vmatprep.mubr.f32.mxu0 0.0
    %2463 = vmatmul.mubr.f32.gmra.mrb[0].mxu0 %v2396
    %v2464 = vpop.f32.mrb[0].mxu0
    %v2465 = vadd.f32 0.0, %v2464
    %v2466 = vpop.f32.mrb[0].mxu0
    %2467 = vdwg.mxu0
    %v2470 = vrot.slane %v2465, 7
    %v2471 = vsel %vm553, %v2470, %v2392
    %v2472 = vsel %vm229, %v2471, 0
    %2474 = vmatprep.subr.mxu0 0.0
    %2475 = vmatpush1.msra.mxu0 %v51
    %2476 = vmatprep.subr.mxu0 0.0
    %2477 = vmatpush1.msra.mxu0 %v52
    %2478 = vmatprep.subr.mxu0 0.0
    %2479 = vmatpush1.msra.mxu0 %v53
    %2480 = vmatprep.subr.mxu0 0.0
    %2481 = vmatpush1.msra.mxu0 %v54
    %2482 = vmatprep.subr.mxu0 0.0
    %2483 = vmatpush1.msra.mxu0 0.0
    %2484 = vmatprep.subr.mxu0 0.0
    %2485 = vmatpush1.msra.mxu0 0.0
    %2486 = vmatprep.subr.mxu0 0.0
    %2487 = vmatpush1.msra.mxu0 0.0
    %2488 = vmatprep.subr.mxu0 0.0
    %2489 = vmatpush1.msra.mxu0 0.0
    %2490 = vmatprep.subr.mxu0 0.0
    %2491 = vmatpush1.msra.mxu0 0.0
    %2492 = vmatprep.subr.mxu0 0.0
    %2493 = vmatpush1.msra.mxu0 0.0
    %2494 = vmatprep.subr.mxu0 0.0
    %2495 = vmatpush1.msra.mxu0 0.0
    %2496 = vmatprep.subr.mxu0 0.0
    %2497 = vmatpush1.msra.mxu0 0.0
    %2498 = vmatprep.subr.mxu0 0.0
    %2499 = vmatpush1.msra.mxu0 0.0
    %2500 = vmatprep.subr.mxu0 0.0
    %2501 = vmatpush1.msra.mxu0 0.0
    %2502 = vmatprep.subr.mxu0 0.0
    %2503 = vmatpush1.msra.mxu0 0.0
    %2504 = vmatprep.subr.mxu0 0.0
    %2505 = vmatpush1.msra.mxu0 0.0
    %2506 = vmatprep.subr.mxu0 0.0
    %2507 = vmatpush1.msra.mxu0 0.0
    %2508 = vmatprep.subr.mxu0 0.0
    %2509 = vmatpush1.msra.mxu0 0.0
    %2510 = vmatprep.subr.mxu0 0.0
    %2511 = vmatpush1.msra.mxu0 0.0
    %2512 = vmatprep.subr.mxu0 0.0
    %2513 = vmatpush1.msra.mxu0 0.0
    %2514 = vmatprep.subr.mxu0 0.0
    %2515 = vmatpush1.msra.mxu0 0.0
    %2516 = vmatprep.subr.mxu0 0.0
    %2517 = vmatpush1.msra.mxu0 0.0
    %2518 = vmatprep.subr.mxu0 0.0
    %2519 = vmatpush1.msra.mxu0 0.0
    %2520 = vmatprep.subr.mxu0 0.0
    %2521 = vmatpush1.msra.mxu0 0.0
    %2522 = vmatprep.subr.mxu0 0.0
    %2523 = vmatpush1.msra.mxu0 0.0
    %2524 = vmatprep.subr.mxu0 0.0
    %2525 = vmatpush1.msra.mxu0 0.0
    %2526 = vmatprep.subr.mxu0 0.0
    %2527 = vmatpush1.msra.mxu0 0.0
    %2528 = vmatprep.subr.mxu0 0.0
    %2529 = vmatpush1.msra.mxu0 0.0
    %2530 = vmatprep.subr.mxu0 0.0
    %2531 = vmatpush1.msra.mxu0 0.0
    %2532 = vmatprep.subr.mxu0 0.0
    %2533 = vmatpush1.msra.mxu0 0.0
    %2534 = vmatprep.subr.mxu0 0.0
    %2535 = vmatpush1.msra.mxu0 0.0
    %2536 = vmatprep.subr.mxu0 0.0
    %2537 = vmatpush1.msra.mxu0 0.0
    %2538 = vmatprep.mubr.f32.mxu0 0.0
    %2539 = vmatmul.mubr.f32.gmra.mrb[0].mxu0 %v2472
    %v2540 = vpop.f32.mrb[0].mxu0
    %v2541 = vadd.f32 0.0, %v2540
    %v2542 = vpop.f32.mrb[0].mxu0
    %2543 = vdwg.mxu0
    %v2545 = vsel %vm102, %v2118, 0
    %2547 = vmatprep.subr.mxu0 0.0
    %2548 = vmatpush1.msra.mxu0 %v49
    %2549 = vmatprep.subr.mxu0 0.0
    %2550 = vmatpush1.msra.mxu0 %v50
    %2551 = vmatprep.subr.mxu0 0.0
    %2552 = vmatpush1.msra.mxu0 0.0
    %2553 = vmatprep.subr.mxu0 0.0
    %2554 = vmatpush1.msra.mxu0 0.0
    %2555 = vmatprep.subr.mxu0 0.0
    %2556 = vmatpush1.msra.mxu0 0.0
    %2557 = vmatprep.subr.mxu0 0.0
    %2558 = vmatpush1.msra.mxu0 0.0
    %2559 = vmatprep.subr.mxu0 0.0
    %2560 = vmatpush1.msra.mxu0 0.0
    %2561 = vmatprep.subr.mxu0 0.0
    %2562 = vmatpush1.msra.mxu0 0.0
    %2563 = vmatprep.subr.mxu0 0.0
    %2564 = vmatpush1.msra.mxu0 0.0
    %2565 = vmatprep.subr.mxu0 0.0
    %2566 = vmatpush1.msra.mxu0 0.0
    %2567 = vmatprep.subr.mxu0 0.0
    %2568 = vmatpush1.msra.mxu0 0.0
    %2569 = vmatprep.subr.mxu0 0.0
    %2570 = vmatpush1.msra.mxu0 0.0
    %2571 = vmatprep.subr.mxu0 0.0
    %2572 = vmatpush1.msra.mxu0 0.0
    %2573 = vmatprep.subr.mxu0 0.0
    %2574 = vmatpush1.msra.mxu0 0.0
    %2575 = vmatprep.subr.mxu0 0.0
    %2576 = vmatpush1.msra.mxu0 0.0
    %2577 = vmatprep.subr.mxu0 0.0
    %2578 = vmatpush1.msra.mxu0 0.0
    %2579 = vmatprep.subr.mxu0 0.0
    %2580 = vmatpush1.msra.mxu0 0.0
    %2581 = vmatprep.subr.mxu0 0.0
    %2582 = vmatpush1.msra.mxu0 0.0
    %2583 = vmatprep.subr.mxu0 0.0
    %2584 = vmatpush1.msra.mxu0 0.0
    %2585 = vmatprep.subr.mxu0 0.0
    %2586 = vmatpush1.msra.mxu0 0.0
    %2587 = vmatprep.subr.mxu0 0.0
    %2588 = vmatpush1.msra.mxu0 0.0
    %2589 = vmatprep.subr.mxu0 0.0
    %2590 = vmatpush1.msra.mxu0 0.0
    %2591 = vmatprep.subr.mxu0 0.0
    %2592 = vmatpush1.msra.mxu0 0.0
    %2593 = vmatprep.subr.mxu0 0.0
    %2594 = vmatpush1.msra.mxu0 0.0
    %2595 = vmatprep.subr.mxu0 0.0
    %2596 = vmatpush1.msra.mxu0 0.0
    %2597 = vmatprep.subr.mxu0 0.0
    %2598 = vmatpush1.msra.mxu0 0.0
    %2599 = vmatprep.subr.mxu0 0.0
    %2600 = vmatpush1.msra.mxu0 0.0
    %2601 = vmatprep.subr.mxu0 0.0
    %2602 = vmatpush1.msra.mxu0 0.0
    %2603 = vmatprep.subr.mxu0 0.0
    %2604 = vmatpush1.msra.mxu0 0.0
    %2605 = vmatprep.subr.mxu0 0.0
    %2606 = vmatpush1.msra.mxu0 0.0
    %2607 = vmatprep.subr.mxu0 0.0
    %2608 = vmatpush1.msra.mxu0 0.0
    %2609 = vmatprep.subr.mxu0 0.0
    %2610 = vmatpush1.msra.mxu0 0.0
    %2611 = vmatprep.mubr.f32.mxu0 0.0
    %2612 = vmatmul.mubr.f32.gmra.mrb[0].mxu0 %v2545
    %v2613 = vpop.f32.mrb[0].mxu0
    %v2614 = vadd.f32 %v2541, %v2613
    %v2615 = vpop.f32.mrb[0].mxu0
    %2616 = vdwg.mxu0
    %2618 = vrot.lane.b32.xlu0 %v2021, 32
    %v2619 = vpop.permute.xlu0 %2618
    %v2620 = vsel %vm229, %v2619, 0
    %2622 = vmatprep.subr.mxu0 0.0
    %2623 = vmatpush1.msra.mxu0 %v55
    %2624 = vmatprep.subr.mxu0 0.0
    %2625 = vmatpush1.msra.mxu0 %v56
    %2626 = vmatprep.subr.mxu0 0.0
    %2627 = vmatpush1.msra.mxu0 %v57
    %2628 = vmatprep.subr.mxu0 0.0
    %2629 = vmatpush1.msra.mxu0 %v58
    %2630 = vmatprep.subr.mxu0 0.0
    %2631 = vmatpush1.msra.mxu0 0.0
    %2632 = vmatprep.subr.mxu0 0.0
    %2633 = vmatpush1.msra.mxu0 0.0
    %2634 = vmatprep.subr.mxu0 0.0
    %2635 = vmatpush1.msra.mxu0 0.0
    %2636 = vmatprep.subr.mxu0 0.0
    %2637 = vmatpush1.msra.mxu0 0.0
    %2638 = vmatprep.subr.mxu0 0.0
    %2639 = vmatpush1.msra.mxu0 0.0
    %2640 = vmatprep.subr.mxu0 0.0
    %2641 = vmatpush1.msra.mxu0 0.0
    %2642 = vmatprep.subr.mxu0 0.0
    %2643 = vmatpush1.msra.mxu0 0.0
    %2644 = vmatprep.subr.mxu0 0.0
    %2645 = vmatpush1.msra.mxu0 0.0
    %2646 = vmatprep.subr.mxu0 0.0
    %2647 = vmatpush1.msra.mxu0 0.0
    %2648 = vmatprep.subr.mxu0 0.0
    %2649 = vmatpush1.msra.mxu0 0.0
    %2650 = vmatprep.subr.mxu0 0.0
    %2651 = vmatpush1.msra.mxu0 0.0
    %2652 = vmatprep.subr.mxu0 0.0
    %2653 = vmatpush1.msra.mxu0 0.0
    %2654 = vmatprep.subr.mxu0 0.0
    %2655 = vmatpush1.msra.mxu0 0.0
    %2656 = vmatprep.subr.mxu0 0.0
    %2657 = vmatpush1.msra.mxu0 0.0
    %2658 = vmatprep.subr.mxu0 0.0
    %2659 = vmatpush1.msra.mxu0 0.0
    %2660 = vmatprep.subr.mxu0 0.0
    %2661 = vmatpush1.msra.mxu0 0.0
    %2662 = vmatprep.subr.mxu0 0.0
    %2663 = vmatpush1.msra.mxu0 0.0
    %2664 = vmatprep.subr.mxu0 0.0
    %2665 = vmatpush1.msra.mxu0 0.0
    %2666 = vmatprep.subr.mxu0 0.0
    %2667 = vmatpush1.msra.mxu0 0.0
    %2668 = vmatprep.subr.mxu0 0.0
    %2669 = vmatpush1.msra.mxu0 0.0
    %2670 = vmatprep.subr.mxu0 0.0
    %2671 = vmatpush1.msra.mxu0 0.0
    %2672 = vmatprep.subr.mxu0 0.0
    %2673 = vmatpush1.msra.mxu0 0.0
    %2674 = vmatprep.subr.mxu0 0.0
    %2675 = vmatpush1.msra.mxu0 0.0
    %2676 = vmatprep.subr.mxu0 0.0
    %2677 = vmatpush1.msra.mxu0 0.0
    %2678 = vmatprep.subr.mxu0 0.0
    %2679 = vmatpush1.msra.mxu0 0.0
    %2680 = vmatprep.subr.mxu0 0.0
    %2681 = vmatpush1.msra.mxu0 0.0
    %2682 = vmatprep.subr.mxu0 0.0
    %2683 = vmatpush1.msra.mxu0 0.0
    %2684 = vmatprep.subr.mxu0 0.0
    %2685 = vmatpush1.msra.mxu0 0.0
    %2686 = vmatprep.mubr.f32.mxu0 0.0
    %2687 = vmatmul.mubr.f32.gmra.mrb[0].mxu0 %v2620
    %v2688 = vpop.f32.mrb[0].mxu0
    %v2689 = vadd.f32 0.0, %v2688
    %v2690 = vpop.f32.mrb[0].mxu0
    %2691 = vdwg.mxu0
    %v2692 = vadd.f32 %v2614, %v2689
    %v2693 = vadd.f32 %v2692, %v76
    %v2694 = vxor.u32 %v2693, 2147483648
    %v2695 = vmul.f32 %v2694, 1.442695
    %v2696 = vpow.pop %v2695
    %v2697 = vadd.f32 %v2696, 1.0
    %v2698 = vrcp.pop %v2697
    %v2699 = vmul.f32 1.0, %v2698
    %v2700 = vtanh.pop %v2693
    %v2701 = vmul.f32 %v2699, %v2023
    %2703 = vrot.lane.b32.xlu0 %v2700, 64
    %v2704 = vpop.permute.xlu0 %2703
    %v2706 = vmul.f32 %v2699, %v2704
    %2708 = vrot.lane.b32.xlu0 %v2706, 32
    %v2709 = vpop.permute.xlu0 %2708
    %v2711 = vadd.f32 %v2701, %v2709
    %v2712 = vtanh.pop %v2711
    %2714 = vrot.lane.b32.xlu0 %v2712, 64
    %v2715 = vpop.permute.xlu0 %2714
    %v2717 = vmul.f32 %v2699, %v2715
    %2718 = vrot.lane.b32.xlu0 %v2022, 32
    %v2719 = vpop.permute.xlu0 %2718
    %v2720 = vsel %vm229, %v2719, 0
    %2722 = vmatprep.subr.mxu0 0.0
    %2723 = vmatpush1.msra.mxu0 %v63
    %2724 = vmatprep.subr.mxu0 0.0
    %2725 = vmatpush1.msra.mxu0 %v64
    %2726 = vmatprep.subr.mxu0 0.0
    %2727 = vmatpush1.msra.mxu0 %v65
    %2728 = vmatprep.subr.mxu0 0.0
    %2729 = vmatpush1.msra.mxu0 %v66
    %2730 = vmatprep.subr.mxu0 0.0
    %2731 = vmatpush1.msra.mxu0 0.0
    %2732 = vmatprep.subr.mxu0 0.0
    %2733 = vmatpush1.msra.mxu0 0.0
    %2734 = vmatprep.subr.mxu0 0.0
    %2735 = vmatpush1.msra.mxu0 0.0
    %2736 = vmatprep.subr.mxu0 0.0
    %2737 = vmatpush1.msra.mxu0 0.0
    %2738 = vmatprep.subr.mxu0 0.0
    %2739 = vmatpush1.msra.mxu0 0.0
    %2740 = vmatprep.subr.mxu0 0.0
    %2741 = vmatpush1.msra.mxu0 0.0
    %2742 = vmatprep.subr.mxu0 0.0
    %2743 = vmatpush1.msra.mxu0 0.0
    %2744 = vmatprep.subr.mxu0 0.0
    %2745 = vmatpush1.msra.mxu0 0.0
    %2746 = vmatprep.subr.mxu0 0.0
    %2747 = vmatpush1.msra.mxu0 0.0
    %2748 = vmatprep.subr.mxu0 0.0
    %2749 = vmatpush1.msra.mxu0 0.0
    %2750 = vmatprep.subr.mxu0 0.0
    %2751 = vmatpush1.msra.mxu0 0.0
    %2752 = vmatprep.subr.mxu0 0.0
    %2753 = vmatpush1.msra.mxu0 0.0
    %2754 = vmatprep.subr.mxu0 0.0
    %2755 = vmatpush1.msra.mxu0 0.0
    %2756 = vmatprep.subr.mxu0 0.0
    %2757 = vmatpush1.msra.mxu0 0.0
    %2758 = vmatprep.subr.mxu0 0.0
    %2759 = vmatpush1.msra.mxu0 0.0
    %2760 = vmatprep.subr.mxu0 0.0
    %2761 = vmatpush1.msra.mxu0 0.0
    %2762 = vmatprep.subr.mxu0 0.0
    %2763 = vmatpush1.msra.mxu0 0.0
    %2764 = vmatprep.subr.mxu0 0.0
    %2765 = vmatpush1.msra.mxu0 0.0
    %2766 = vmatprep.subr.mxu0 0.0
    %2767 = vmatpush1.msra.mxu0 0.0
    %2768 = vmatprep.subr.mxu0 0.0
    %2769 = vmatpush1.msra.mxu0 0.0
    %2770 = vmatprep.subr.mxu0 0.0
    %2771 = vmatpush1.msra.mxu0 0.0
    %2772 = vmatprep.subr.mxu0 0.0
    %2773 = vmatpush1.msra.mxu0 0.0
    %2774 = vmatprep.subr.mxu0 0.0
    %2775 = vmatpush1.msra.mxu0 0.0
    %2776 = vmatprep.subr.mxu0 0.0
    %2777 = vmatpush1.msra.mxu0 0.0
    %2778 = vmatprep.subr.mxu0 0.0
    %2779 = vmatpush1.msra.mxu0 0.0
    %2780 = vmatprep.subr.mxu0 0.0
    %2781 = vmatpush1.msra.mxu0 0.0
    %2782 = vmatprep.subr.mxu0 0.0
    %2783 = vmatpush1.msra.mxu0 0.0
    %2784 = vmatprep.subr.mxu0 0.0
    %2785 = vmatpush1.msra.mxu0 0.0
    %2786 = vmatprep.mubr.f32.mxu0 0.0
    %2787 = vmatmul.mubr.f32.gmra.mrb[0].mxu0 %v2720
    %v2788 = vpop.f32.mrb[0].mxu0
    %v2789 = vadd.f32 0.0, %v2788
    %v2790 = vpop.f32.mrb[0].mxu0
    %2791 = vdwg.mxu0
    %2793 = vrot.lane.b32.xlu0 %v2717, 32
    %v2794 = vpop.permute.xlu0 %2793
    %v2795 = vsel %vm229, %v2794, 0
    %2797 = vmatprep.subr.mxu0 0.0
    %2798 = vmatpush1.msra.mxu0 %v59
    %2799 = vmatprep.subr.mxu0 0.0
    %2800 = vmatpush1.msra.mxu0 %v60
    %2801 = vmatprep.subr.mxu0 0.0
    %2802 = vmatpush1.msra.mxu0 %v61
    %2803 = vmatprep.subr.mxu0 0.0
    %2804 = vmatpush1.msra.mxu0 %v62
    %2805 = vmatprep.subr.mxu0 0.0
    %2806 = vmatpush1.msra.mxu0 0.0
    %2807 = vmatprep.subr.mxu0 0.0
    %2808 = vmatpush1.msra.mxu0 0.0
    %2809 = vmatprep.subr.mxu0 0.0
    %2810 = vmatpush1.msra.mxu0 0.0
    %2811 = vmatprep.subr.mxu0 0.0
    %2812 = vmatpush1.msra.mxu0 0.0
    %2813 = vmatprep.subr.mxu0 0.0
    %2814 = vmatpush1.msra.mxu0 0.0
    %2815 = vmatprep.subr.mxu0 0.0
    %2816 = vmatpush1.msra.mxu0 0.0
    %2817 = vmatprep.subr.mxu0 0.0
    %2818 = vmatpush1.msra.mxu0 0.0
    %2819 = vmatprep.subr.mxu0 0.0
    %2820 = vmatpush1.msra.mxu0 0.0
    %2821 = vmatprep.subr.mxu0 0.0
    %2822 = vmatpush1.msra.mxu0 0.0
    %2823 = vmatprep.subr.mxu0 0.0
    %2824 = vmatpush1.msra.mxu0 0.0
    %2825 = vmatprep.subr.mxu0 0.0
    %2826 = vmatpush1.msra.mxu0 0.0
    %2827 = vmatprep.subr.mxu0 0.0
    %2828 = vmatpush1.msra.mxu0 0.0
    %2829 = vmatprep.subr.mxu0 0.0
    %2830 = vmatpush1.msra.mxu0 0.0
    %2831 = vmatprep.subr.mxu0 0.0
    %2832 = vmatpush1.msra.mxu0 0.0
    %2833 = vmatprep.subr.mxu0 0.0
    %2834 = vmatpush1.msra.mxu0 0.0
    %2835 = vmatprep.subr.mxu0 0.0
    %2836 = vmatpush1.msra.mxu0 0.0
    %2837 = vmatprep.subr.mxu0 0.0
    %2838 = vmatpush1.msra.mxu0 0.0
    %2839 = vmatprep.subr.mxu0 0.0
    %2840 = vmatpush1.msra.mxu0 0.0
    %2841 = vmatprep.subr.mxu0 0.0
    %2842 = vmatpush1.msra.mxu0 0.0
    %2843 = vmatprep.subr.mxu0 0.0
    %2844 = vmatpush1.msra.mxu0 0.0
    %2845 = vmatprep.subr.mxu0 0.0
    %2846 = vmatpush1.msra.mxu0 0.0
    %2847 = vmatprep.subr.mxu0 0.0
    %2848 = vmatpush1.msra.mxu0 0.0
    %2849 = vmatprep.subr.mxu0 0.0
    %2850 = vmatpush1.msra.mxu0 0.0
    %2851 = vmatprep.subr.mxu0 0.0
    %2852 = vmatpush1.msra.mxu0 0.0
    %2853 = vmatprep.subr.mxu0 0.0
    %2854 = vmatpush1.msra.mxu0 0.0
    %2855 = vmatprep.subr.mxu0 0.0
    %2856 = vmatpush1.msra.mxu0 0.0
    %2857 = vmatprep.subr.mxu0 0.0
    %2858 = vmatpush1.msra.mxu0 0.0
    %2859 = vmatprep.subr.mxu0 0.0
    %2860 = vmatpush1.msra.mxu0 0.0
    %2861 = vmatprep.mubr.f32.mxu0 0.0
    %2862 = vmatmul.mubr.f32.gmra.mrb[0].mxu0 %v2795
    %v2863 = vpop.f32.mrb[0].mxu0
    %v2864 = vadd.f32 %v2789, %v2863
    %v2865 = vpop.f32.mrb[0].mxu0
    %2866 = vdwg.mxu0
    %v2867 = vadd.f32 %v2864, %v83
    %v2868 = vxor.u32 %v2867, 2147483648
    %v2869 = vmul.f32 %v2868, 1.442695
    %v2870 = vpow.pop %v2869
    %v2871 = vadd.f32 %v2870, 1.0
    %v2872 = vrcp.pop %v2871
    %v2873 = vmul.f32 1.0, %v2872
    %v2874 = vtanh.pop %v2867
    %v2875 = vmul.f32 %v2873, %v2024
    %2877 = vrot.lane.b32.xlu0 %v2874, 64
    %v2878 = vpop.permute.xlu0 %2877
    %v2880 = vmul.f32 %v2873, %v2878
    %2882 = vrot.lane.b32.xlu0 %v2880, 32
    %v2883 = vpop.permute.xlu0 %2882
    %v2885 = vadd.f32 %v2875, %v2883
    %v2886 = vtanh.pop %v2885
    %2888 = vrot.lane.b32.xlu0 %v2886, 64
    %v2889 = vpop.permute.xlu0 %2888
    %v2891 = vmul.f32 %v2873, %v2889
    %2893 = vrot.lane.b32.xlu0 %v2891, 32
    %v2894 = vpop.permute.xlu0 %2893
    %v2895 = vsel %vm229, %v2894, 0
    %2897 = vmatprep.subr.mxu0 0.0
    %2898 = vmatpush1.msra.mxu0 %v67
    %2899 = vmatprep.subr.mxu0 0.0
    %2900 = vmatpush1.msra.mxu0 %v68
    %2901 = vmatprep.subr.mxu0 0.0
    %2902 = vmatpush1.msra.mxu0 %v69
    %2903 = vmatprep.subr.mxu0 0.0
    %2904 = vmatpush1.msra.mxu0 %v70
    %2905 = vmatprep.subr.mxu0 0.0
    %2906 = vmatpush1.msra.mxu0 0.0
    %2907 = vmatprep.subr.mxu0 0.0
    %2908 = vmatpush1.msra.mxu0 0.0
    %2909 = vmatprep.subr.mxu0 0.0
    %2910 = vmatpush1.msra.mxu0 0.0
    %2911 = vmatprep.subr.mxu0 0.0
    %2912 = vmatpush1.msra.mxu0 0.0
    %2913 = vmatprep.subr.mxu0 0.0
    %2914 = vmatpush1.msra.mxu0 0.0
    %2915 = vmatprep.subr.mxu0 0.0
    %2916 = vmatpush1.msra.mxu0 0.0
    %2917 = vmatprep.subr.mxu0 0.0
    %2918 = vmatpush1.msra.mxu0 0.0
    %2919 = vmatprep.subr.mxu0 0.0
    %2920 = vmatpush1.msra.mxu0 0.0
    %2921 = vmatprep.subr.mxu0 0.0
    %2922 = vmatpush1.msra.mxu0 0.0
    %2923 = vmatprep.subr.mxu0 0.0
    %2924 = vmatpush1.msra.mxu0 0.0
    %2925 = vmatprep.subr.mxu0 0.0
    %2926 = vmatpush1.msra.mxu0 0.0
    %2927 = vmatprep.subr.mxu0 0.0
    %2928 = vmatpush1.msra.mxu0 0.0
    %2929 = vmatprep.subr.mxu0 0.0
    %2930 = vmatpush1.msra.mxu0 0.0
    %2931 = vmatprep.subr.mxu0 0.0
    %2932 = vmatpush1.msra.mxu0 0.0
    %2933 = vmatprep.subr.mxu0 0.0
    %2934 = vmatpush1.msra.mxu0 0.0
    %2935 = vmatprep.subr.mxu0 0.0
    %2936 = vmatpush1.msra.mxu0 0.0
    %2937 = vmatprep.subr.mxu0 0.0
    %2938 = vmatpush1.msra.mxu0 0.0
    %2939 = vmatprep.subr.mxu0 0.0
    %2940 = vmatpush1.msra.mxu0 0.0
    %2941 = vmatprep.subr.mxu0 0.0
    %2942 = vmatpush1.msra.mxu0 0.0
    %2943 = vmatprep.subr.mxu0 0.0
    %2944 = vmatpush1.msra.mxu0 0.0
    %2945 = vmatprep.subr.mxu0 0.0
    %2946 = vmatpush1.msra.mxu0 0.0
    %2947 = vmatprep.subr.mxu0 0.0
    %2948 = vmatpush1.msra.mxu0 0.0
    %2949 = vmatprep.subr.mxu0 0.0
    %2950 = vmatpush1.msra.mxu0 0.0
    %2951 = vmatprep.subr.mxu0 0.0
    %2952 = vmatpush1.msra.mxu0 0.0
    %2953 = vmatprep.subr.mxu0 0.0
    %2954 = vmatpush1.msra.mxu0 0.0
    %2955 = vmatprep.subr.mxu0 0.0
    %2956 = vmatpush1.msra.mxu0 0.0
    %2957 = vmatprep.subr.mxu0 0.0
    %2958 = vmatpush1.msra.mxu0 0.0
    %2959 = vmatprep.subr.mxu0 0.0
    %2960 = vmatpush1.msra.mxu0 0.0
    %2961 = vmatprep.mubr.f32.mxu0 0.0
    %2962 = vmatmul.mubr.f32.gmra.mrb[0].mxu0 %v2895
    %v2963 = vpop.f32.mrb[0].mxu0
    %v2964 = vadd.f32 %v90, %v2963
    %v2965 = vpop.f32.mrb[0].mxu0
    %2966 = vdwg.mxu0
    %s2967 = scalar_lea.vmem [#allocation2], 6
    %2968 = vst [vmem:[%s2967] sm:$0x3] %v2964
    %v2969 = vadd.f32 %v2717, %v1058
    %v2970 = vadd.f32 %v2891, %v1063
    %v2971 = vadd.f32 %v2711, %v1068
    %v2972 = vadd.f32 %v2885, %v1073
    %v2973 = vsel %vm1076, %v2964, -inf
    %2974 = vmax.xlane.f32.xlu0 %v2973
    %v2975 = vpop.xlane.xlu0 %2974
    %vm2976 = vcmp.ge.f32.partialorder %v2964, %v2975
    %v2977 = vsel %vm2976, %v124, 128
    %v2978 = vsel %vm1076, %v2977, 2147483647
    %v2979 = vand.u32 %v2978, 65535
    %v2980 = vshra.s32 %v2978, 16
    %v2981 = vcvt.s32.f32 %v2979
    %v2982 = vcvt.s32.f32 %v2980
    %2983 = vmin.xlane.f32.xlu0 %v2982
    %v2984 = vpop.xlane.xlu0 %2983
    %vm2985 = vcmp.eq.f32.partialorder %v2982, %v2984
    %v2986 = vsel %vm2985, %v2981, inf
    %2987 = vmin.xlane.f32.xlu0 %v2986
    %v2988 = vpop.xlane.xlu0 %2987
    %v2989 = vcvt.f32.s32 %v2988
    %v2990 = vcvt.f32.s32 %v2984
    %v2991 = vshll.u32 %v2990, 16
    %v2992 = vadd.s32 %v2991, %v2989
    %vm2993 = vcmp.eq.s32.totalorder %v2992, %v124
    %v2994 = vsel %vm2993, 1, 0
    %v2995 = vcvt.s32.f32 %v2994
    %v2997 = vsel %vm102, %v2995, 0
    %2999 = vmatprep.subr.mxu0 0.0
    %3000 = vmatpush1.msra.mxu0 %v47
    %3001 = vmatprep.subr.mxu0 0.0
    %3002 = vmatpush1.msra.mxu0 %v48
    %3003 = vmatprep.subr.mxu0 0.0
    %3004 = vmatpush1.msra.mxu0 0.0
    %3005 = vmatprep.subr.mxu0 0.0
    %3006 = vmatpush1.msra.mxu0 0.0
    %3007 = vmatprep.subr.mxu0 0.0
    %3008 = vmatpush1.msra.mxu0 0.0
    %3009 = vmatprep.subr.mxu0 0.0
    %3010 = vmatpush1.msra.mxu0 0.0
    %3011 = vmatprep.subr.mxu0 0.0
    %3012 = vmatpush1.msra.mxu0 0.0
    %3013 = vmatprep.subr.mxu0 0.0
    %3014 = vmatpush1.msra.mxu0 0.0
    %3015 = vmatprep.subr.mxu0 0.0
    %3016 = vmatpush1.msra.mxu0 0.0
    %3017 = vmatprep.subr.mxu0 0.0
    %3018 = vmatpush1.msra.mxu0 0.0
    %3019 = vmatprep.subr.mxu0 0.0
    %3020 = vmatpush1.msra.mxu0 0.0
    %3021 = vmatprep.subr.mxu0 0.0
    %3022 = vmatpush1.msra.mxu0 0.0
    %3023 = vmatprep.subr.mxu0 0.0
    %3024 = vmatpush1.msra.mxu0 0.0
    %3025 = vmatprep.subr.mxu0 0.0
    %3026 = vmatpush1.msra.mxu0 0.0
    %3027 = vmatprep.subr.mxu0 0.0
    %3028 = vmatpush1.msra.mxu0 0.0
    %3029 = vmatprep.subr.mxu0 0.0
    %3030 = vmatpush1.msra.mxu0 0.0
    %3031 = vmatprep.subr.mxu0 0.0
    %3032 = vmatpush1.msra.mxu0 0.0
    %3033 = vmatprep.subr.mxu0 0.0
    %3034 = vmatpush1.msra.mxu0 0.0
    %3035 = vmatprep.subr.mxu0 0.0
    %3036 = vmatpush1.msra.mxu0 0.0
    %3037 = vmatprep.subr.mxu0 0.0
    %3038 = vmatpush1.msra.mxu0 0.0
    %3039 = vmatprep.subr.mxu0 0.0
    %3040 = vmatpush1.msra.mxu0 0.0
    %3041 = vmatprep.subr.mxu0 0.0
    %3042 = vmatpush1.msra.mxu0 0.0
    %3043 = vmatprep.subr.mxu0 0.0
    %3044 = vmatpush1.msra.mxu0 0.0
    %3045 = vmatprep.subr.mxu0 0.0
    %3046 = vmatpush1.msra.mxu0 0.0
    %3047 = vmatprep.subr.mxu0 0.0
    %3048 = vmatpush1.msra.mxu0 0.0
    %3049 = vmatprep.subr.mxu0 0.0
    %3050 = vmatpush1.msra.mxu0 0.0
    %3051 = vmatprep.subr.mxu0 0.0
    %3052 = vmatpush1.msra.mxu0 0.0
    %3053 = vmatprep.subr.mxu0 0.0
    %3054 = vmatpush1.msra.mxu0 0.0
    %3055 = vmatprep.subr.mxu0 0.0
    %3056 = vmatpush1.msra.mxu0 0.0
    %3057 = vmatprep.subr.mxu0 0.0
    %3058 = vmatpush1.msra.mxu0 0.0
    %3059 = vmatprep.subr.mxu0 0.0
    %3060 = vmatpush1.msra.mxu0 0.0
    %3061 = vmatprep.subr.mxu0 0.0
    %3062 = vmatpush1.msra.mxu0 0.0
    %3063 = vmatprep.mubr.f32.mxu0 0.0
    %3064 = vmatmul.mubr.f32.gmra.mrb[0].mxu0 %v2997
    %v3065 = vpop.f32.mrb[0].mxu0
    %v3066 = vadd.f32 0.0, %v3065
    %v3067 = vpop.f32.mrb[0].mxu0
    %3068 = vdwg.mxu0
    %v3071 = vunpack.c.l.s4 1966171168
    %v3072 = vunpack.c.0.s8 %v3071
    %v3073 = vlaneseq
    %v3074 = vshrl.u32 %v3073, 7
    %v3075 = vsub.s32 %v3072, %v3074
    %v3076 = vrot.slane %v2970, %v3075
    %v3077 = vcombine.high %v3076, %v3076
    %v3079 = vunpack.c.l.s4 1966171168
    %v3080 = vunpack.c.0.s8 %v3079
    %v3081 = vlaneseq
    %v3082 = vshrl.u32 %v3081, 7
    %v3083 = vsub.s32 %v3080, %v3082
    %v3084 = vrot.slane %v3076, %v3083
    %v3086 = vunpack.c.l.s4 1966171168
    %v3087 = vunpack.c.0.s8 %v3086
    %v3088 = vlaneseq
    %v3089 = vshrl.u32 %v3088, 7
    %v3090 = vsub.s32 %v3087, %v3089
    %v3091 = vrot.slane %v3077, %v3090
    %v3092 = vlaneseq
    %v3093 = vshrl.u32 %v3092, 7
    %v3094 = vsub.s32 0, %v3093
    %v3095 = vrot.slane %v3084, %v3094
    %3096 = vrot.lane.b32.xlu0 %v3095, 32
    %v3097 = vpop.permute.xlu0 %3096
    %v3098 = vsel %vm229, %v3097, 0
    %3100 = vmatprep.subr.mxu0 0.0
    %3101 = vmatpush1.xpose.msra.mxu0 %v233
    %3102 = vmatprep.subr.mxu0 0.0
    %3103 = vmatpush1.xpose.msra.mxu0 0.0
    %3104 = vmatprep.subr.mxu0 0.0
    %3105 = vmatpush1.xpose.msra.mxu0 0.0
    %3106 = vmatprep.subr.mxu0 0.0
    %3107 = vmatpush1.xpose.msra.mxu0 0.0
    %3108 = vmatprep.subr.mxu0 0.0
    %3109 = vmatpush1.xpose.msra.mxu0 0.0
    %3110 = vmatprep.subr.mxu0 0.0
    %3111 = vmatpush1.xpose.msra.mxu0 0.0
    %3112 = vmatprep.subr.mxu0 0.0
    %3113 = vmatpush1.xpose.msra.mxu0 0.0
    %3114 = vmatprep.subr.mxu0 0.0
    %3115 = vmatpush1.xpose.msra.mxu0 0.0
    %3116 = vmatprep.subr.mxu0 0.0
    %3117 = vmatpush1.xpose.msra.mxu0 0.0
    %3118 = vmatprep.subr.mxu0 0.0
    %3119 = vmatpush1.xpose.msra.mxu0 0.0
    %3120 = vmatprep.subr.mxu0 0.0
    %3121 = vmatpush1.xpose.msra.mxu0 0.0
    %3122 = vmatprep.subr.mxu0 0.0
    %3123 = vmatpush1.xpose.msra.mxu0 0.0
    %3124 = vmatprep.subr.mxu0 0.0
    %3125 = vmatpush1.xpose.msra.mxu0 0.0
    %3126 = vmatprep.subr.mxu0 0.0
    %3127 = vmatpush1.xpose.msra.mxu0 0.0
    %3128 = vmatprep.subr.mxu0 0.0
    %3129 = vmatpush1.xpose.msra.mxu0 0.0
    %3130 = vmatprep.subr.mxu0 0.0
    %3131 = vmatpush1.xpose.msra.mxu0 0.0
    %3132 = vmatprep.subr.mxu0 0.0
    %3133 = vmatpush1.xpose.msra.mxu0 0.0
    %3134 = vmatprep.subr.mxu0 0.0
    %3135 = vmatpush1.xpose.msra.mxu0 0.0
    %3136 = vmatprep.subr.mxu0 0.0
    %3137 = vmatpush1.xpose.msra.mxu0 0.0
    %3138 = vmatprep.subr.mxu0 0.0
    %3139 = vmatpush1.xpose.msra.mxu0 0.0
    %3140 = vmatprep.subr.mxu0 0.0
    %3141 = vmatpush1.xpose.msra.mxu0 0.0
    %3142 = vmatprep.subr.mxu0 0.0
    %3143 = vmatpush1.xpose.msra.mxu0 0.0
    %3144 = vmatprep.subr.mxu0 0.0
    %3145 = vmatpush1.xpose.msra.mxu0 0.0
    %3146 = vmatprep.subr.mxu0 0.0
    %3147 = vmatpush1.xpose.msra.mxu0 0.0
    %3148 = vmatprep.subr.mxu0 0.0
    %3149 = vmatpush1.xpose.msra.mxu0 0.0
    %3150 = vmatprep.subr.mxu0 0.0
    %3151 = vmatpush1.xpose.msra.mxu0 0.0
    %3152 = vmatprep.subr.mxu0 0.0
    %3153 = vmatpush1.xpose.msra.mxu0 0.0
    %3154 = vmatprep.subr.mxu0 0.0
    %3155 = vmatpush1.xpose.msra.mxu0 0.0
    %3156 = vmatprep.subr.mxu0 0.0
    %3157 = vmatpush1.xpose.msra.mxu0 0.0
    %3158 = vmatprep.subr.mxu0 0.0
    %3159 = vmatpush1.xpose.msra.mxu0 0.0
    %3160 = vmatprep.subr.mxu0 0.0
    %3161 = vmatpush1.xpose.msra.mxu0 0.0
    %3162 = vmatprep.subr.mxu0 0.0
    %3163 = vmatpush1.xpose.msra.mxu0 0.0
    %3164 = vmatprep.mubr.f32.mxu0 0.0
    %3165 = vmatmul.mubr.f32.gmra.mrb[0].mxu0 %v3098
    %v3166 = vpop.f32.mrb[0].mxu0
    %v3167 = vadd.f32 0.0, %v3166
    %v3168 = vpop.f32.mrb[0].mxu0
    %3169 = vdwg.mxu0
    %v3170 = vlaneseq
    %v3171 = vshrl.u32 %v3170, 7
    %v3172 = vsub.s32 0, %v3171
    %v3173 = vrot.slane %v3091, %v3172
    %3174 = vrot.lane.b32.xlu0 %v3173, 32
    %v3175 = vpop.permute.xlu0 %3174
    %v3176 = vsel %vm229, %v3175, 0
    %3178 = vmatprep.subr.mxu0 0.0
    %3179 = vmatpush1.xpose.msra.mxu0 %v308
    %3180 = vmatprep.subr.mxu0 0.0
    %3181 = vmatpush1.xpose.msra.mxu0 0.0
    %3182 = vmatprep.subr.mxu0 0.0
    %3183 = vmatpush1.xpose.msra.mxu0 0.0
    %3184 = vmatprep.subr.mxu0 0.0
    %3185 = vmatpush1.xpose.msra.mxu0 0.0
    %3186 = vmatprep.subr.mxu0 0.0
    %3187 = vmatpush1.xpose.msra.mxu0 0.0
    %3188 = vmatprep.subr.mxu0 0.0
    %3189 = vmatpush1.xpose.msra.mxu0 0.0
    %3190 = vmatprep.subr.mxu0 0.0
    %3191 = vmatpush1.xpose.msra.mxu0 0.0
    %3192 = vmatprep.subr.mxu0 0.0
    %3193 = vmatpush1.xpose.msra.mxu0 0.0
    %3194 = vmatprep.subr.mxu0 0.0
    %3195 = vmatpush1.xpose.msra.mxu0 0.0
    %3196 = vmatprep.subr.mxu0 0.0
    %3197 = vmatpush1.xpose.msra.mxu0 0.0
    %3198 = vmatprep.subr.mxu0 0.0
    %3199 = vmatpush1.xpose.msra.mxu0 0.0
    %3200 = vmatprep.subr.mxu0 0.0
    %3201 = vmatpush1.xpose.msra.mxu0 0.0
    %3202 = vmatprep.subr.mxu0 0.0
    %3203 = vmatpush1.xpose.msra.mxu0 0.0
    %3204 = vmatprep.subr.mxu0 0.0
    %3205 = vmatpush1.xpose.msra.mxu0 0.0
    %3206 = vmatprep.subr.mxu0 0.0
    %3207 = vmatpush1.xpose.msra.mxu0 0.0
    %3208 = vmatprep.subr.mxu0 0.0
    %3209 = vmatpush1.xpose.msra.mxu0 0.0
    %3210 = vmatprep.subr.mxu0 0.0
    %3211 = vmatpush1.xpose.msra.mxu0 0.0
    %3212 = vmatprep.subr.mxu0 0.0
    %3213 = vmatpush1.xpose.msra.mxu0 0.0
    %3214 = vmatprep.subr.mxu0 0.0
    %3215 = vmatpush1.xpose.msra.mxu0 0.0
    %3216 = vmatprep.subr.mxu0 0.0
    %3217 = vmatpush1.xpose.msra.mxu0 0.0
    %3218 = vmatprep.subr.mxu0 0.0
    %3219 = vmatpush1.xpose.msra.mxu0 0.0
    %3220 = vmatprep.subr.mxu0 0.0
    %3221 = vmatpush1.xpose.msra.mxu0 0.0
    %3222 = vmatprep.subr.mxu0 0.0
    %3223 = vmatpush1.xpose.msra.mxu0 0.0
    %3224 = vmatprep.subr.mxu0 0.0
    %3225 = vmatpush1.xpose.msra.mxu0 0.0
    %3226 = vmatprep.subr.mxu0 0.0
    %3227 = vmatpush1.xpose.msra.mxu0 0.0
    %3228 = vmatprep.subr.mxu0 0.0
    %3229 = vmatpush1.xpose.msra.mxu0 0.0
    %3230 = vmatprep.subr.mxu0 0.0
    %3231 = vmatpush1.xpose.msra.mxu0 0.0
    %3232 = vmatprep.subr.mxu0 0.0
    %3233 = vmatpush1.xpose.msra.mxu0 0.0
    %3234 = vmatprep.subr.mxu0 0.0
    %3235 = vmatpush1.xpose.msra.mxu0 0.0
    %3236 = vmatprep.subr.mxu0 0.0
    %3237 = vmatpush1.xpose.msra.mxu0 0.0
    %3238 = vmatprep.subr.mxu0 0.0
    %3239 = vmatpush1.xpose.msra.mxu0 0.0
    %3240 = vmatprep.subr.mxu0 0.0
    %3241 = vmatpush1.xpose.msra.mxu0 0.0
    %3242 = vmatprep.mubr.f32.mxu0 0.0
    %3243 = vmatmul.mubr.f32.gmra.mrb[0].mxu0 %v3176
    %v3244 = vpop.f32.mrb[0].mxu0
    %v3245 = vadd.f32 0.0, %v3244
    %v3246 = vpop.f32.mrb[0].mxu0
    %3247 = vdwg.mxu0
    %v3248 = vsel %vm380, %v3167, -inf
    %3249 = vmax.xlane.f32.xlu0 %v3248
    %v3250 = vpop.xlane.xlu0 %3249
    %v3251 = vsel %vm380, %v3245, -inf
    %3252 = vmax.xlane.f32.xlu0 %v3251
    %v3253 = vpop.xlane.xlu0 %3252
    %v3254 = vsub.f32 %v3167, %v3250
    %v3255 = vsub.f32 %v3245, %v3253
    %v3256 = vmul.f32 %v3254, 1.442695
    %v3257 = vpow.pop %v3256
    %v3258 = vmul.f32 %v3255, 1.442695
    %v3259 = vpow.pop %v3258
    %v3260 = vsel %vm380, %v3257, 0.0
    %3261 = vadd.xlane.f32.xlu0 %v3260
    %v3262 = vpop.xlane.xlu0 %3261
    %v3263 = vsel %vm380, %v3259, 0.0
    %3264 = vadd.xlane.f32.xlu0 %v3263
    %v3265 = vpop.xlane.xlu0 %3264
    %v3266 = vrcp.pop %v3262
    %v3267 = vrcp.pop %v3265
    %v3268 = vmul.f32 %v3257, %v3266
    %v3269 = vmul.f32 %v3259, %v3267
    %v3271 = vsel %vm403, %v3268, 0
    %3273 = vmatprep.subr.mxu0 0.0
    %3274 = vmatpush1.msra.mxu0 %v45
    %3275 = vmatprep.subr.mxu0 0.0
    %3276 = vmatpush1.msra.mxu0 0.0
    %3277 = vmatprep.subr.mxu0 0.0
    %3278 = vmatpush1.msra.mxu0 0.0
    %3279 = vmatprep.subr.mxu0 0.0
    %3280 = vmatpush1.msra.mxu0 0.0
    %3281 = vmatprep.subr.mxu0 0.0
    %3282 = vmatpush1.msra.mxu0 0.0
    %3283 = vmatprep.subr.mxu0 0.0
    %3284 = vmatpush1.msra.mxu0 0.0
    %3285 = vmatprep.subr.mxu0 0.0
    %3286 = vmatpush1.msra.mxu0 0.0
    %3287 = vmatprep.subr.mxu0 0.0
    %3288 = vmatpush1.msra.mxu0 0.0
    %3289 = vmatprep.subr.mxu0 0.0
    %3290 = vmatpush1.msra.mxu0 0.0
    %3291 = vmatprep.subr.mxu0 0.0
    %3292 = vmatpush1.msra.mxu0 0.0
    %3293 = vmatprep.subr.mxu0 0.0
    %3294 = vmatpush1.msra.mxu0 0.0
    %3295 = vmatprep.subr.mxu0 0.0
    %3296 = vmatpush1.msra.mxu0 0.0
    %3297 = vmatprep.subr.mxu0 0.0
    %3298 = vmatpush1.msra.mxu0 0.0
    %3299 = vmatprep.subr.mxu0 0.0
    %3300 = vmatpush1.msra.mxu0 0.0
    %3301 = vmatprep.subr.mxu0 0.0
    %3302 = vmatpush1.msra.mxu0 0.0
    %3303 = vmatprep.subr.mxu0 0.0
    %3304 = vmatpush1.msra.mxu0 0.0
    %3305 = vmatprep.subr.mxu0 0.0
    %3306 = vmatpush1.msra.mxu0 0.0
    %3307 = vmatprep.subr.mxu0 0.0
    %3308 = vmatpush1.msra.mxu0 0.0
    %3309 = vmatprep.subr.mxu0 0.0
    %3310 = vmatpush1.msra.mxu0 0.0
    %3311 = vmatprep.subr.mxu0 0.0
    %3312 = vmatpush1.msra.mxu0 0.0
    %3313 = vmatprep.subr.mxu0 0.0
    %3314 = vmatpush1.msra.mxu0 0.0
    %3315 = vmatprep.subr.mxu0 0.0
    %3316 = vmatpush1.msra.mxu0 0.0
    %3317 = vmatprep.subr.mxu0 0.0
    %3318 = vmatpush1.msra.mxu0 0.0
    %3319 = vmatprep.subr.mxu0 0.0
    %3320 = vmatpush1.msra.mxu0 0.0
    %3321 = vmatprep.subr.mxu0 0.0
    %3322 = vmatpush1.msra.mxu0 0.0
    %3323 = vmatprep.subr.mxu0 0.0
    %3324 = vmatpush1.msra.mxu0 0.0
    %3325 = vmatprep.subr.mxu0 0.0
    %3326 = vmatpush1.msra.mxu0 0.0
    %3327 = vmatprep.subr.mxu0 0.0
    %3328 = vmatpush1.msra.mxu0 0.0
    %3329 = vmatprep.subr.mxu0 0.0
    %3330 = vmatpush1.msra.mxu0 0.0
    %3331 = vmatprep.subr.mxu0 0.0
    %3332 = vmatpush1.msra.mxu0 0.0
    %3333 = vmatprep.subr.mxu0 0.0
    %3334 = vmatpush1.msra.mxu0 0.0
    %3335 = vmatprep.subr.mxu0 0.0
    %3336 = vmatpush1.msra.mxu0 0.0
    %3337 = vmatprep.mubr.f32.mxu0 0.0
    %3338 = vmatmul.mubr.f32.gmra.mrb[0].mxu0 %v3271
    %v3339 = vpop.f32.mrb[0].mxu0
    %v3340 = vadd.f32 0.0, %v3339
    %v3341 = vpop.f32.mrb[0].mxu0
    %3342 = vdwg.mxu0
    %v3344 = vsel %vm403, %v3269, 0
    %3346 = vmatprep.subr.mxu0 0.0
    %3347 = vmatpush1.msra.mxu0 %v46
    %3348 = vmatprep.subr.mxu0 0.0
    %3349 = vmatpush1.msra.mxu0 0.0
    %3350 = vmatprep.subr.mxu0 0.0
    %3351 = vmatpush1.msra.mxu0 0.0
    %3352 = vmatprep.subr.mxu0 0.0
    %3353 = vmatpush1.msra.mxu0 0.0
    %3354 = vmatprep.subr.mxu0 0.0
    %3355 = vmatpush1.msra.mxu0 0.0
    %3356 = vmatprep.subr.mxu0 0.0
    %3357 = vmatpush1.msra.mxu0 0.0
    %3358 = vmatprep.subr.mxu0 0.0
    %3359 = vmatpush1.msra.mxu0 0.0
    %3360 = vmatprep.subr.mxu0 0.0
    %3361 = vmatpush1.msra.mxu0 0.0
    %3362 = vmatprep.subr.mxu0 0.0
    %3363 = vmatpush1.msra.mxu0 0.0
    %3364 = vmatprep.subr.mxu0 0.0
    %3365 = vmatpush1.msra.mxu0 0.0
    %3366 = vmatprep.subr.mxu0 0.0
    %3367 = vmatpush1.msra.mxu0 0.0
    %3368 = vmatprep.subr.mxu0 0.0
    %3369 = vmatpush1.msra.mxu0 0.0
    %3370 = vmatprep.subr.mxu0 0.0
    %3371 = vmatpush1.msra.mxu0 0.0
    %3372 = vmatprep.subr.mxu0 0.0
    %3373 = vmatpush1.msra.mxu0 0.0
    %3374 = vmatprep.subr.mxu0 0.0
    %3375 = vmatpush1.msra.mxu0 0.0
    %3376 = vmatprep.subr.mxu0 0.0
    %3377 = vmatpush1.msra.mxu0 0.0
    %3378 = vmatprep.subr.mxu0 0.0
    %3379 = vmatpush1.msra.mxu0 0.0
    %3380 = vmatprep.subr.mxu0 0.0
    %3381 = vmatpush1.msra.mxu0 0.0
    %3382 = vmatprep.subr.mxu0 0.0
    %3383 = vmatpush1.msra.mxu0 0.0
    %3384 = vmatprep.subr.mxu0 0.0
    %3385 = vmatpush1.msra.mxu0 0.0
    %3386 = vmatprep.subr.mxu0 0.0
    %3387 = vmatpush1.msra.mxu0 0.0
    %3388 = vmatprep.subr.mxu0 0.0
    %3389 = vmatpush1.msra.mxu0 0.0
    %3390 = vmatprep.subr.mxu0 0.0
    %3391 = vmatpush1.msra.mxu0 0.0
    %3392 = vmatprep.subr.mxu0 0.0
    %3393 = vmatpush1.msra.mxu0 0.0
    %3394 = vmatprep.subr.mxu0 0.0
    %3395 = vmatpush1.msra.mxu0 0.0
    %3396 = vmatprep.subr.mxu0 0.0
    %3397 = vmatpush1.msra.mxu0 0.0
    %3398 = vmatprep.subr.mxu0 0.0
    %3399 = vmatpush1.msra.mxu0 0.0
    %3400 = vmatprep.subr.mxu0 0.0
    %3401 = vmatpush1.msra.mxu0 0.0
    %3402 = vmatprep.subr.mxu0 0.0
    %3403 = vmatpush1.msra.mxu0 0.0
    %3404 = vmatprep.subr.mxu0 0.0
    %3405 = vmatpush1.msra.mxu0 0.0
    %3406 = vmatprep.subr.mxu0 0.0
    %3407 = vmatpush1.msra.mxu0 0.0
    %3408 = vmatprep.subr.mxu0 0.0
    %3409 = vmatpush1.msra.mxu0 0.0
    %3410 = vmatprep.mubr.f32.mxu0 0.0
    %3411 = vmatmul.mubr.f32.gmra.mrb[0].mxu0 %v3344
    %v3412 = vpop.f32.mrb[0].mxu0
    %v3413 = vadd.f32 0.0, %v3412
    %v3414 = vpop.f32.mrb[0].mxu0
    %3415 = vdwg.mxu0
    %v3418 = vrot.slane %v3413, 7
    %v3419 = vsel %vm553, %v3418, %v3340
    %v3420 = vsel %vm229, %v3419, 0
    %3422 = vmatprep.subr.mxu0 0.0
    %3423 = vmatpush1.msra.mxu0 %v51
    %3424 = vmatprep.subr.mxu0 0.0
    %3425 = vmatpush1.msra.mxu0 %v52
    %3426 = vmatprep.subr.mxu0 0.0
    %3427 = vmatpush1.msra.mxu0 %v53
    %3428 = vmatprep.subr.mxu0 0.0
    %3429 = vmatpush1.msra.mxu0 %v54
    %3430 = vmatprep.subr.mxu0 0.0
    %3431 = vmatpush1.msra.mxu0 0.0
    %3432 = vmatprep.subr.mxu0 0.0
    %3433 = vmatpush1.msra.mxu0 0.0
    %3434 = vmatprep.subr.mxu0 0.0
    %3435 = vmatpush1.msra.mxu0 0.0
    %3436 = vmatprep.subr.mxu0 0.0
    %3437 = vmatpush1.msra.mxu0 0.0
    %3438 = vmatprep.subr.mxu0 0.0
    %3439 = vmatpush1.msra.mxu0 0.0
    %3440 = vmatprep.subr.mxu0 0.0
    %3441 = vmatpush1.msra.mxu0 0.0
    %3442 = vmatprep.subr.mxu0 0.0
    %3443 = vmatpush1.msra.mxu0 0.0
    %3444 = vmatprep.subr.mxu0 0.0
    %3445 = vmatpush1.msra.mxu0 0.0
    %3446 = vmatprep.subr.mxu0 0.0
    %3447 = vmatpush1.msra.mxu0 0.0
    %3448 = vmatprep.subr.mxu0 0.0
    %3449 = vmatpush1.msra.mxu0 0.0
    %3450 = vmatprep.subr.mxu0 0.0
    %3451 = vmatpush1.msra.mxu0 0.0
    %3452 = vmatprep.subr.mxu0 0.0
    %3453 = vmatpush1.msra.mxu0 0.0
    %3454 = vmatprep.subr.mxu0 0.0
    %3455 = vmatpush1.msra.mxu0 0.0
    %3456 = vmatprep.subr.mxu0 0.0
    %3457 = vmatpush1.msra.mxu0 0.0
    %3458 = vmatprep.subr.mxu0 0.0
    %3459 = vmatpush1.msra.mxu0 0.0
    %3460 = vmatprep.subr.mxu0 0.0
    %3461 = vmatpush1.msra.mxu0 0.0
    %3462 = vmatprep.subr.mxu0 0.0
    %3463 = vmatpush1.msra.mxu0 0.0
    %3464 = vmatprep.subr.mxu0 0.0
    %3465 = vmatpush1.msra.mxu0 0.0
    %3466 = vmatprep.subr.mxu0 0.0
    %3467 = vmatpush1.msra.mxu0 0.0
    %3468 = vmatprep.subr.mxu0 0.0
    %3469 = vmatpush1.msra.mxu0 0.0
    %3470 = vmatprep.subr.mxu0 0.0
    %3471 = vmatpush1.msra.mxu0 0.0
    %3472 = vmatprep.subr.mxu0 0.0
    %3473 = vmatpush1.msra.mxu0 0.0
    %3474 = vmatprep.subr.mxu0 0.0
    %3475 = vmatpush1.msra.mxu0 0.0
    %3476 = vmatprep.subr.mxu0 0.0
    %3477 = vmatpush1.msra.mxu0 0.0
    %3478 = vmatprep.subr.mxu0 0.0
    %3479 = vmatpush1.msra.mxu0 0.0
    %3480 = vmatprep.subr.mxu0 0.0
    %3481 = vmatpush1.msra.mxu0 0.0
    %3482 = vmatprep.subr.mxu0 0.0
    %3483 = vmatpush1.msra.mxu0 0.0
    %3484 = vmatprep.subr.mxu0 0.0
    %3485 = vmatpush1.msra.mxu0 0.0
    %3486 = vmatprep.mubr.f32.mxu0 0.0
    %3487 = vmatmul.mubr.f32.gmra.mrb[0].mxu0 %v3420
    %v3488 = vpop.f32.mrb[0].mxu0
    %v3489 = vadd.f32 0.0, %v3488
    %v3490 = vpop.f32.mrb[0].mxu0
    %3491 = vdwg.mxu0
    %v3493 = vsel %vm102, %v3066, 0
    %3495 = vmatprep.subr.mxu0 0.0
    %3496 = vmatpush1.msra.mxu0 %v49
    %3497 = vmatprep.subr.mxu0 0.0
    %3498 = vmatpush1.msra.mxu0 %v50
    %3499 = vmatprep.subr.mxu0 0.0
    %3500 = vmatpush1.msra.mxu0 0.0
    %3501 = vmatprep.subr.mxu0 0.0
    %3502 = vmatpush1.msra.mxu0 0.0
    %3503 = vmatprep.subr.mxu0 0.0
    %3504 = vmatpush1.msra.mxu0 0.0
    %3505 = vmatprep.subr.mxu0 0.0
    %3506 = vmatpush1.msra.mxu0 0.0
    %3507 = vmatprep.subr.mxu0 0.0
    %3508 = vmatpush1.msra.mxu0 0.0
    %3509 = vmatprep.subr.mxu0 0.0
    %3510 = vmatpush1.msra.mxu0 0.0
    %3511 = vmatprep.subr.mxu0 0.0
    %3512 = vmatpush1.msra.mxu0 0.0
    %3513 = vmatprep.subr.mxu0 0.0
    %3514 = vmatpush1.msra.mxu0 0.0
    %3515 = vmatprep.subr.mxu0 0.0
    %3516 = vmatpush1.msra.mxu0 0.0
    %3517 = vmatprep.subr.mxu0 0.0
    %3518 = vmatpush1.msra.mxu0 0.0
    %3519 = vmatprep.subr.mxu0 0.0
    %3520 = vmatpush1.msra.mxu0 0.0
    %3521 = vmatprep.subr.mxu0 0.0
    %3522 = vmatpush1.msra.mxu0 0.0
    %3523 = vmatprep.subr.mxu0 0.0
    %3524 = vmatpush1.msra.mxu0 0.0
    %3525 = vmatprep.subr.mxu0 0.0
    %3526 = vmatpush1.msra.mxu0 0.0
    %3527 = vmatprep.subr.mxu0 0.0
    %3528 = vmatpush1.msra.mxu0 0.0
    %3529 = vmatprep.subr.mxu0 0.0
    %3530 = vmatpush1.msra.mxu0 0.0
    %3531 = vmatprep.subr.mxu0 0.0
    %3532 = vmatpush1.msra.mxu0 0.0
    %3533 = vmatprep.subr.mxu0 0.0
    %3534 = vmatpush1.msra.mxu0 0.0
    %3535 = vmatprep.subr.mxu0 0.0
    %3536 = vmatpush1.msra.mxu0 0.0
    %3537 = vmatprep.subr.mxu0 0.0
    %3538 = vmatpush1.msra.mxu0 0.0
    %3539 = vmatprep.subr.mxu0 0.0
    %3540 = vmatpush1.msra.mxu0 0.0
    %3541 = vmatprep.subr.mxu0 0.0
    %3542 = vmatpush1.msra.mxu0 0.0
    %3543 = vmatprep.subr.mxu0 0.0
    %3544 = vmatpush1.msra.mxu0 0.0
    %3545 = vmatprep.subr.mxu0 0.0
    %3546 = vmatpush1.msra.mxu0 0.0
    %3547 = vmatprep.subr.mxu0 0.0
    %3548 = vmatpush1.msra.mxu0 0.0
    %3549 = vmatprep.subr.mxu0 0.0
    %3550 = vmatpush1.msra.mxu0 0.0
    %3551 = vmatprep.subr.mxu0 0.0
    %3552 = vmatpush1.msra.mxu0 0.0
    %3553 = vmatprep.subr.mxu0 0.0
    %3554 = vmatpush1.msra.mxu0 0.0
    %3555 = vmatprep.subr.mxu0 0.0
    %3556 = vmatpush1.msra.mxu0 0.0
    %3557 = vmatprep.subr.mxu0 0.0
    %3558 = vmatpush1.msra.mxu0 0.0
    %3559 = vmatprep.mubr.f32.mxu0 0.0
    %3560 = vmatmul.mubr.f32.gmra.mrb[0].mxu0 %v3493
    %v3561 = vpop.f32.mrb[0].mxu0
    %v3562 = vadd.f32 %v3489, %v3561
    %v3563 = vpop.f32.mrb[0].mxu0
    %3564 = vdwg.mxu0
    %3566 = vrot.lane.b32.xlu0 %v2969, 32
    %v3567 = vpop.permute.xlu0 %3566
    %v3568 = vsel %vm229, %v3567, 0
    %3570 = vmatprep.subr.mxu0 0.0
    %3571 = vmatpush1.msra.mxu0 %v55
    %3572 = vmatprep.subr.mxu0 0.0
    %3573 = vmatpush1.msra.mxu0 %v56
    %3574 = vmatprep.subr.mxu0 0.0
    %3575 = vmatpush1.msra.mxu0 %v57
    %3576 = vmatprep.subr.mxu0 0.0
    %3577 = vmatpush1.msra.mxu0 %v58
    %3578 = vmatprep.subr.mxu0 0.0
    %3579 = vmatpush1.msra.mxu0 0.0
    %3580 = vmatprep.subr.mxu0 0.0
    %3581 = vmatpush1.msra.mxu0 0.0
    %3582 = vmatprep.subr.mxu0 0.0
    %3583 = vmatpush1.msra.mxu0 0.0
    %3584 = vmatprep.subr.mxu0 0.0
    %3585 = vmatpush1.msra.mxu0 0.0
    %3586 = vmatprep.subr.mxu0 0.0
    %3587 = vmatpush1.msra.mxu0 0.0
    %3588 = vmatprep.subr.mxu0 0.0
    %3589 = vmatpush1.msra.mxu0 0.0
    %3590 = vmatprep.subr.mxu0 0.0
    %3591 = vmatpush1.msra.mxu0 0.0
    %3592 = vmatprep.subr.mxu0 0.0
    %3593 = vmatpush1.msra.mxu0 0.0
    %3594 = vmatprep.subr.mxu0 0.0
    %3595 = vmatpush1.msra.mxu0 0.0
    %3596 = vmatprep.subr.mxu0 0.0
    %3597 = vmatpush1.msra.mxu0 0.0
    %3598 = vmatprep.subr.mxu0 0.0
    %3599 = vmatpush1.msra.mxu0 0.0
    %3600 = vmatprep.subr.mxu0 0.0
    %3601 = vmatpush1.msra.mxu0 0.0
    %3602 = vmatprep.subr.mxu0 0.0
    %3603 = vmatpush1.msra.mxu0 0.0
    %3604 = vmatprep.subr.mxu0 0.0
    %3605 = vmatpush1.msra.mxu0 0.0
    %3606 = vmatprep.subr.mxu0 0.0
    %3607 = vmatpush1.msra.mxu0 0.0
    %3608 = vmatprep.subr.mxu0 0.0
    %3609 = vmatpush1.msra.mxu0 0.0
    %3610 = vmatprep.subr.mxu0 0.0
    %3611 = vmatpush1.msra.mxu0 0.0
    %3612 = vmatprep.subr.mxu0 0.0
    %3613 = vmatpush1.msra.mxu0 0.0
    %3614 = vmatprep.subr.mxu0 0.0
    %3615 = vmatpush1.msra.mxu0 0.0
    %3616 = vmatprep.subr.mxu0 0.0
    %3617 = vmatpush1.msra.mxu0 0.0
    %3618 = vmatprep.subr.mxu0 0.0
    %3619 = vmatpush1.msra.mxu0 0.0
    %3620 = vmatprep.subr.mxu0 0.0
    %3621 = vmatpush1.msra.mxu0 0.0
    %3622 = vmatprep.subr.mxu0 0.0
    %3623 = vmatpush1.msra.mxu0 0.0
    %3624 = vmatprep.subr.mxu0 0.0
    %3625 = vmatpush1.msra.mxu0 0.0
    %3626 = vmatprep.subr.mxu0 0.0
    %3627 = vmatpush1.msra.mxu0 0.0
    %3628 = vmatprep.subr.mxu0 0.0
    %3629 = vmatpush1.msra.mxu0 0.0
    %3630 = vmatprep.subr.mxu0 0.0
    %3631 = vmatpush1.msra.mxu0 0.0
    %3632 = vmatprep.subr.mxu0 0.0
    %3633 = vmatpush1.msra.mxu0 0.0
    %3634 = vmatprep.mubr.f32.mxu0 0.0
    %3635 = vmatmul.mubr.f32.gmra.mrb[0].mxu0 %v3568
    %v3636 = vpop.f32.mrb[0].mxu0
    %v3637 = vadd.f32 0.0, %v3636
    %v3638 = vpop.f32.mrb[0].mxu0
    %3639 = vdwg.mxu0
    %v3640 = vadd.f32 %v3562, %v3637
    %v3641 = vadd.f32 %v3640, %v76
    %v3642 = vxor.u32 %v3641, 2147483648
    %v3643 = vmul.f32 %v3642, 1.442695
    %v3644 = vpow.pop %v3643
    %v3645 = vadd.f32 %v3644, 1.0
    %v3646 = vrcp.pop %v3645
    %v3647 = vmul.f32 1.0, %v3646
    %v3648 = vtanh.pop %v3641
    %v3649 = vmul.f32 %v3647, %v2971
    %3651 = vrot.lane.b32.xlu0 %v3648, 64
    %v3652 = vpop.permute.xlu0 %3651
    %v3654 = vmul.f32 %v3647, %v3652
    %3656 = vrot.lane.b32.xlu0 %v3654, 32
    %v3657 = vpop.permute.xlu0 %3656
    %v3659 = vadd.f32 %v3649, %v3657
    %v3660 = vtanh.pop %v3659
    %3662 = vrot.lane.b32.xlu0 %v3660, 64
    %v3663 = vpop.permute.xlu0 %3662
    %v3665 = vmul.f32 %v3647, %v3663
    %3666 = vrot.lane.b32.xlu0 %v2970, 32
    %v3667 = vpop.permute.xlu0 %3666
    %v3668 = vsel %vm229, %v3667, 0
    %3670 = vmatprep.subr.mxu0 0.0
    %3671 = vmatpush1.msra.mxu0 %v63
    %3672 = vmatprep.subr.mxu0 0.0
    %3673 = vmatpush1.msra.mxu0 %v64
    %3674 = vmatprep.subr.mxu0 0.0
    %3675 = vmatpush1.msra.mxu0 %v65
    %3676 = vmatprep.subr.mxu0 0.0
    %3677 = vmatpush1.msra.mxu0 %v66
    %3678 = vmatprep.subr.mxu0 0.0
    %3679 = vmatpush1.msra.mxu0 0.0
    %3680 = vmatprep.subr.mxu0 0.0
    %3681 = vmatpush1.msra.mxu0 0.0
    %3682 = vmatprep.subr.mxu0 0.0
    %3683 = vmatpush1.msra.mxu0 0.0
    %3684 = vmatprep.subr.mxu0 0.0
    %3685 = vmatpush1.msra.mxu0 0.0
    %3686 = vmatprep.subr.mxu0 0.0
    %3687 = vmatpush1.msra.mxu0 0.0
    %3688 = vmatprep.subr.mxu0 0.0
    %3689 = vmatpush1.msra.mxu0 0.0
    %3690 = vmatprep.subr.mxu0 0.0
    %3691 = vmatpush1.msra.mxu0 0.0
    %3692 = vmatprep.subr.mxu0 0.0
    %3693 = vmatpush1.msra.mxu0 0.0
    %3694 = vmatprep.subr.mxu0 0.0
    %3695 = vmatpush1.msra.mxu0 0.0
    %3696 = vmatprep.subr.mxu0 0.0
    %3697 = vmatpush1.msra.mxu0 0.0
    %3698 = vmatprep.subr.mxu0 0.0
    %3699 = vmatpush1.msra.mxu0 0.0
    %3700 = vmatprep.subr.mxu0 0.0
    %3701 = vmatpush1.msra.mxu0 0.0
    %3702 = vmatprep.subr.mxu0 0.0
    %3703 = vmatpush1.msra.mxu0 0.0
    %3704 = vmatprep.subr.mxu0 0.0
    %3705 = vmatpush1.msra.mxu0 0.0
    %3706 = vmatprep.subr.mxu0 0.0
    %3707 = vmatpush1.msra.mxu0 0.0
    %3708 = vmatprep.subr.mxu0 0.0
    %3709 = vmatpush1.msra.mxu0 0.0
    %3710 = vmatprep.subr.mxu0 0.0
    %3711 = vmatpush1.msra.mxu0 0.0
    %3712 = vmatprep.subr.mxu0 0.0
    %3713 = vmatpush1.msra.mxu0 0.0
    %3714 = vmatprep.subr.mxu0 0.0
    %3715 = vmatpush1.msra.mxu0 0.0
    %3716 = vmatprep.subr.mxu0 0.0
    %3717 = vmatpush1.msra.mxu0 0.0
    %3718 = vmatprep.subr.mxu0 0.0
    %3719 = vmatpush1.msra.mxu0 0.0
    %3720 = vmatprep.subr.mxu0 0.0
    %3721 = vmatpush1.msra.mxu0 0.0
    %3722 = vmatprep.subr.mxu0 0.0
    %3723 = vmatpush1.msra.mxu0 0.0
    %3724 = vmatprep.subr.mxu0 0.0
    %3725 = vmatpush1.msra.mxu0 0.0
    %3726 = vmatprep.subr.mxu0 0.0
    %3727 = vmatpush1.msra.mxu0 0.0
    %3728 = vmatprep.subr.mxu0 0.0
    %3729 = vmatpush1.msra.mxu0 0.0
    %3730 = vmatprep.subr.mxu0 0.0
    %3731 = vmatpush1.msra.mxu0 0.0
    %3732 = vmatprep.subr.mxu0 0.0
    %3733 = vmatpush1.msra.mxu0 0.0
    %3734 = vmatprep.mubr.f32.mxu0 0.0
    %3735 = vmatmul.mubr.f32.gmra.mrb[0].mxu0 %v3668
    %v3736 = vpop.f32.mrb[0].mxu0
    %v3737 = vadd.f32 0.0, %v3736
    %v3738 = vpop.f32.mrb[0].mxu0
    %3739 = vdwg.mxu0
    %3741 = vrot.lane.b32.xlu0 %v3665, 32
    %v3742 = vpop.permute.xlu0 %3741
    %v3743 = vsel %vm229, %v3742, 0
    %3745 = vmatprep.subr.mxu0 0.0
    %3746 = vmatpush1.msra.mxu0 %v59
    %3747 = vmatprep.subr.mxu0 0.0
    %3748 = vmatpush1.msra.mxu0 %v60
    %3749 = vmatprep.subr.mxu0 0.0
    %3750 = vmatpush1.msra.mxu0 %v61
    %3751 = vmatprep.subr.mxu0 0.0
    %3752 = vmatpush1.msra.mxu0 %v62
    %3753 = vmatprep.subr.mxu0 0.0
    %3754 = vmatpush1.msra.mxu0 0.0
    %3755 = vmatprep.subr.mxu0 0.0
    %3756 = vmatpush1.msra.mxu0 0.0
    %3757 = vmatprep.subr.mxu0 0.0
    %3758 = vmatpush1.msra.mxu0 0.0
    %3759 = vmatprep.subr.mxu0 0.0
    %3760 = vmatpush1.msra.mxu0 0.0
    %3761 = vmatprep.subr.mxu0 0.0
    %3762 = vmatpush1.msra.mxu0 0.0
    %3763 = vmatprep.subr.mxu0 0.0
    %3764 = vmatpush1.msra.mxu0 0.0
    %3765 = vmatprep.subr.mxu0 0.0
    %3766 = vmatpush1.msra.mxu0 0.0
    %3767 = vmatprep.subr.mxu0 0.0
    %3768 = vmatpush1.msra.mxu0 0.0
    %3769 = vmatprep.subr.mxu0 0.0
    %3770 = vmatpush1.msra.mxu0 0.0
    %3771 = vmatprep.subr.mxu0 0.0
    %3772 = vmatpush1.msra.mxu0 0.0
    %3773 = vmatprep.subr.mxu0 0.0
    %3774 = vmatpush1.msra.mxu0 0.0
    %3775 = vmatprep.subr.mxu0 0.0
    %3776 = vmatpush1.msra.mxu0 0.0
    %3777 = vmatprep.subr.mxu0 0.0
    %3778 = vmatpush1.msra.mxu0 0.0
    %3779 = vmatprep.subr.mxu0 0.0
    %3780 = vmatpush1.msra.mxu0 0.0
    %3781 = vmatprep.subr.mxu0 0.0
    %3782 = vmatpush1.msra.mxu0 0.0
    %3783 = vmatprep.subr.mxu0 0.0
    %3784 = vmatpush1.msra.mxu0 0.0
    %3785 = vmatprep.subr.mxu0 0.0
    %3786 = vmatpush1.msra.mxu0 0.0
    %3787 = vmatprep.subr.mxu0 0.0
    %3788 = vmatpush1.msra.mxu0 0.0
    %3789 = vmatprep.subr.mxu0 0.0
    %3790 = vmatpush1.msra.mxu0 0.0
    %3791 = vmatprep.subr.mxu0 0.0
    %3792 = vmatpush1.msra.mxu0 0.0
    %3793 = vmatprep.subr.mxu0 0.0
    %3794 = vmatpush1.msra.mxu0 0.0
    %3795 = vmatprep.subr.mxu0 0.0
    %3796 = vmatpush1.msra.mxu0 0.0
    %3797 = vmatprep.subr.mxu0 0.0
    %3798 = vmatpush1.msra.mxu0 0.0
    %3799 = vmatprep.subr.mxu0 0.0
    %3800 = vmatpush1.msra.mxu0 0.0
    %3801 = vmatprep.subr.mxu0 0.0
    %3802 = vmatpush1.msra.mxu0 0.0
    %3803 = vmatprep.subr.mxu0 0.0
    %3804 = vmatpush1.msra.mxu0 0.0
    %3805 = vmatprep.subr.mxu0 0.0
    %3806 = vmatpush1.msra.mxu0 0.0
    %3807 = vmatprep.subr.mxu0 0.0
    %3808 = vmatpush1.msra.mxu0 0.0
    %3809 = vmatprep.mubr.f32.mxu0 0.0
    %3810 = vmatmul.mubr.f32.gmra.mrb[0].mxu0 %v3743
    %v3811 = vpop.f32.mrb[0].mxu0
    %v3812 = vadd.f32 %v3737, %v3811
    %v3813 = vpop.f32.mrb[0].mxu0
    %3814 = vdwg.mxu0
    %v3815 = vadd.f32 %v3812, %v83
    %v3816 = vxor.u32 %v3815, 2147483648
    %v3817 = vmul.f32 %v3816, 1.442695
    %v3818 = vpow.pop %v3817
    %v3819 = vadd.f32 %v3818, 1.0
    %v3820 = vrcp.pop %v3819
    %v3821 = vmul.f32 1.0, %v3820
    %v3822 = vtanh.pop %v3815
    %v3823 = vmul.f32 %v3821, %v2972
    %3825 = vrot.lane.b32.xlu0 %v3822, 64
    %v3826 = vpop.permute.xlu0 %3825
    %v3828 = vmul.f32 %v3821, %v3826
    %3830 = vrot.lane.b32.xlu0 %v3828, 32
    %v3831 = vpop.permute.xlu0 %3830
    %v3833 = vadd.f32 %v3823, %v3831
    %v3834 = vtanh.pop %v3833
    %3836 = vrot.lane.b32.xlu0 %v3834, 64
    %v3837 = vpop.permute.xlu0 %3836
    %v3839 = vmul.f32 %v3821, %v3837
    %3841 = vrot.lane.b32.xlu0 %v3839, 32
    %v3842 = vpop.permute.xlu0 %3841
    %v3843 = vsel %vm229, %v3842, 0
    %3845 = vmatprep.subr.mxu0 0.0
    %3846 = vmatpush1.msra.mxu0 %v67
    %3847 = vmatprep.subr.mxu0 0.0
    %3848 = vmatpush1.msra.mxu0 %v68
    %3849 = vmatprep.subr.mxu0 0.0
    %3850 = vmatpush1.msra.mxu0 %v69
    %3851 = vmatprep.subr.mxu0 0.0
    %3852 = vmatpush1.msra.mxu0 %v70
    %3853 = vmatprep.subr.mxu0 0.0
    %3854 = vmatpush1.msra.mxu0 0.0
    %3855 = vmatprep.subr.mxu0 0.0
    %3856 = vmatpush1.msra.mxu0 0.0
    %3857 = vmatprep.subr.mxu0 0.0
    %3858 = vmatpush1.msra.mxu0 0.0
    %3859 = vmatprep.subr.mxu0 0.0
    %3860 = vmatpush1.msra.mxu0 0.0
    %3861 = vmatprep.subr.mxu0 0.0
    %3862 = vmatpush1.msra.mxu0 0.0
    %3863 = vmatprep.subr.mxu0 0.0
    %3864 = vmatpush1.msra.mxu0 0.0
    %3865 = vmatprep.subr.mxu0 0.0
    %3866 = vmatpush1.msra.mxu0 0.0
    %3867 = vmatprep.subr.mxu0 0.0
    %3868 = vmatpush1.msra.mxu0 0.0
    %3869 = vmatprep.subr.mxu0 0.0
    %3870 = vmatpush1.msra.mxu0 0.0
    %3871 = vmatprep.subr.mxu0 0.0
    %3872 = vmatpush1.msra.mxu0 0.0
    %3873 = vmatprep.subr.mxu0 0.0
    %3874 = vmatpush1.msra.mxu0 0.0
    %3875 = vmatprep.subr.mxu0 0.0
    %3876 = vmatpush1.msra.mxu0 0.0
    %3877 = vmatprep.subr.mxu0 0.0
    %3878 = vmatpush1.msra.mxu0 0.0
    %3879 = vmatprep.subr.mxu0 0.0
    %3880 = vmatpush1.msra.mxu0 0.0
    %3881 = vmatprep.subr.mxu0 0.0
    %3882 = vmatpush1.msra.mxu0 0.0
    %3883 = vmatprep.subr.mxu0 0.0
    %3884 = vmatpush1.msra.mxu0 0.0
    %3885 = vmatprep.subr.mxu0 0.0
    %3886 = vmatpush1.msra.mxu0 0.0
    %3887 = vmatprep.subr.mxu0 0.0
    %3888 = vmatpush1.msra.mxu0 0.0
    %3889 = vmatprep.subr.mxu0 0.0
    %3890 = vmatpush1.msra.mxu0 0.0
    %3891 = vmatprep.subr.mxu0 0.0
    %3892 = vmatpush1.msra.mxu0 0.0
    %3893 = vmatprep.subr.mxu0 0.0
    %3894 = vmatpush1.msra.mxu0 0.0
    %3895 = vmatprep.subr.mxu0 0.0
    %3896 = vmatpush1.msra.mxu0 0.0
    %3897 = vmatprep.subr.mxu0 0.0
    %3898 = vmatpush1.msra.mxu0 0.0
    %3899 = vmatprep.subr.mxu0 0.0
    %3900 = vmatpush1.msra.mxu0 0.0
    %3901 = vmatprep.subr.mxu0 0.0
    %3902 = vmatpush1.msra.mxu0 0.0
    %3903 = vmatprep.subr.mxu0 0.0
    %3904 = vmatpush1.msra.mxu0 0.0
    %3905 = vmatprep.subr.mxu0 0.0
    %3906 = vmatpush1.msra.mxu0 0.0
    %3907 = vmatprep.subr.mxu0 0.0
    %3908 = vmatpush1.msra.mxu0 0.0
    %3909 = vmatprep.mubr.f32.mxu0 0.0
    %3910 = vmatmul.mubr.f32.gmra.mrb[0].mxu0 %v3843
    %v3911 = vpop.f32.mrb[0].mxu0
    %v3912 = vadd.f32 %v90, %v3911
    %v3913 = vpop.f32.mrb[0].mxu0
    %3914 = vdwg.mxu0
    %s3915 = scalar_lea.vmem [#allocation2], 8
    %3916 = vst [vmem:[%s3915] sm:$0x3] %v3912
    %v3917 = vadd.f32 %v3665, %v1058
    %v3918 = vadd.f32 %v3839, %v1063
    %v3919 = vadd.f32 %v3659, %v1068
    %v3920 = vadd.f32 %v3833, %v1073
    %v3921 = vsel %vm1076, %v3912, -inf
    %3922 = vmax.xlane.f32.xlu0 %v3921
    %v3923 = vpop.xlane.xlu0 %3922
    %vm3924 = vcmp.ge.f32.partialorder %v3912, %v3923
    %v3925 = vsel %vm3924, %v124, 128
    %v3926 = vsel %vm1076, %v3925, 2147483647
    %v3927 = vand.u32 %v3926, 65535
    %v3928 = vshra.s32 %v3926, 16
    %v3929 = vcvt.s32.f32 %v3927
    %v3930 = vcvt.s32.f32 %v3928
    %3931 = vmin.xlane.f32.xlu0 %v3930
    %v3932 = vpop.xlane.xlu0 %3931
    %vm3933 = vcmp.eq.f32.partialorder %v3930, %v3932
    %v3934 = vsel %vm3933, %v3929, inf
    %3935 = vmin.xlane.f32.xlu0 %v3934
    %v3936 = vpop.xlane.xlu0 %3935
    %v3937 = vcvt.f32.s32 %v3936
    %v3938 = vcvt.f32.s32 %v3932
    %v3939 = vshll.u32 %v3938, 16
    %v3940 = vadd.s32 %v3939, %v3937
    %vm3941 = vcmp.eq.s32.totalorder %v3940, %v124
    %v3942 = vsel %vm3941, 1, 0
    %v3943 = vcvt.s32.f32 %v3942
    %v3945 = vsel %vm102, %v3943, 0
    %3947 = vmatprep.subr.mxu0 0.0
    %3948 = vmatpush1.msra.mxu0 %v47
    %3949 = vmatprep.subr.mxu0 0.0
    %3950 = vmatpush1.msra.mxu0 %v48
    %3951 = vmatprep.subr.mxu0 0.0
    %3952 = vmatpush1.msra.mxu0 0.0
    %3953 = vmatprep.subr.mxu0 0.0
    %3954 = vmatpush1.msra.mxu0 0.0
    %3955 = vmatprep.subr.mxu0 0.0
    %3956 = vmatpush1.msra.mxu0 0.0
    %3957 = vmatprep.subr.mxu0 0.0
    %3958 = vmatpush1.msra.mxu0 0.0
    %3959 = vmatprep.subr.mxu0 0.0
    %3960 = vmatpush1.msra.mxu0 0.0
    %3961 = vmatprep.subr.mxu0 0.0
    %3962 = vmatpush1.msra.mxu0 0.0
    %3963 = vmatprep.subr.mxu0 0.0
    %3964 = vmatpush1.msra.mxu0 0.0
    %3965 = vmatprep.subr.mxu0 0.0
    %3966 = vmatpush1.msra.mxu0 0.0
    %3967 = vmatprep.subr.mxu0 0.0
    %3968 = vmatpush1.msra.mxu0 0.0
    %3969 = vmatprep.subr.mxu0 0.0
    %3970 = vmatpush1.msra.mxu0 0.0
    %3971 = vmatprep.subr.mxu0 0.0
    %3972 = vmatpush1.msra.mxu0 0.0
    %3973 = vmatprep.subr.mxu0 0.0
    %3974 = vmatpush1.msra.mxu0 0.0
    %3975 = vmatprep.subr.mxu0 0.0
    %3976 = vmatpush1.msra.mxu0 0.0
    %3977 = vmatprep.subr.mxu0 0.0
    %3978 = vmatpush1.msra.mxu0 0.0
    %3979 = vmatprep.subr.mxu0 0.0
    %3980 = vmatpush1.msra.mxu0 0.0
    %3981 = vmatprep.subr.mxu0 0.0
    %3982 = vmatpush1.msra.mxu0 0.0
    %3983 = vmatprep.subr.mxu0 0.0
    %3984 = vmatpush1.msra.mxu0 0.0
    %3985 = vmatprep.subr.mxu0 0.0
    %3986 = vmatpush1.msra.mxu0 0.0
    %3987 = vmatprep.subr.mxu0 0.0
    %3988 = vmatpush1.msra.mxu0 0.0
    %3989 = vmatprep.subr.mxu0 0.0
    %3990 = vmatpush1.msra.mxu0 0.0
    %3991 = vmatprep.subr.mxu0 0.0
    %3992 = vmatpush1.msra.mxu0 0.0
    %3993 = vmatprep.subr.mxu0 0.0
    %3994 = vmatpush1.msra.mxu0 0.0
    %3995 = vmatprep.subr.mxu0 0.0
    %3996 = vmatpush1.msra.mxu0 0.0
    %3997 = vmatprep.subr.mxu0 0.0
    %3998 = vmatpush1.msra.mxu0 0.0
    %3999 = vmatprep.subr.mxu0 0.0
    %4000 = vmatpush1.msra.mxu0 0.0
    %4001 = vmatprep.subr.mxu0 0.0
    %4002 = vmatpush1.msra.mxu0 0.0
    %4003 = vmatprep.subr.mxu0 0.0
    %4004 = vmatpush1.msra.mxu0 0.0
    %4005 = vmatprep.subr.mxu0 0.0
    %4006 = vmatpush1.msra.mxu0 0.0
    %4007 = vmatprep.subr.mxu0 0.0
    %4008 = vmatpush1.msra.mxu0 0.0
    %4009 = vmatprep.subr.mxu0 0.0
    %4010 = vmatpush1.msra.mxu0 0.0
    %4011 = vmatprep.mubr.f32.mxu0 0.0
    %4012 = vmatmul.mubr.f32.gmra.mrb[0].mxu0 %v3945
    %v4013 = vpop.f32.mrb[0].mxu0
    %v4014 = vadd.f32 0.0, %v4013
    %v4015 = vpop.f32.mrb[0].mxu0
    %4016 = vdwg.mxu0
    %v4019 = vunpack.c.l.s4 1966171168
    %v4020 = vunpack.c.0.s8 %v4019
    %v4021 = vlaneseq
    %v4022 = vshrl.u32 %v4021, 7
    %v4023 = vsub.s32 %v4020, %v4022
    %v4024 = vrot.slane %v3918, %v4023
    %v4025 = vcombine.high %v4024, %v4024
    %v4027 = vunpack.c.l.s4 1966171168
    %v4028 = vunpack.c.0.s8 %v4027
    %v4029 = vlaneseq
    %v4030 = vshrl.u32 %v4029, 7
    %v4031 = vsub.s32 %v4028, %v4030
    %v4032 = vrot.slane %v4024, %v4031
    %v4034 = vunpack.c.l.s4 1966171168
    %v4035 = vunpack.c.0.s8 %v4034
    %v4036 = vlaneseq
    %v4037 = vshrl.u32 %v4036, 7
    %v4038 = vsub.s32 %v4035, %v4037
    %v4039 = vrot.slane %v4025, %v4038
    %v4040 = vlaneseq
    %v4041 = vshrl.u32 %v4040, 7
    %v4042 = vsub.s32 0, %v4041
    %v4043 = vrot.slane %v4032, %v4042
    %4044 = vrot.lane.b32.xlu0 %v4043, 32
    %v4045 = vpop.permute.xlu0 %4044
    %v4046 = vsel %vm229, %v4045, 0
    %4048 = vmatprep.subr.mxu0 0.0
    %4049 = vmatpush1.xpose.msra.mxu0 %v233
    %4050 = vmatprep.subr.mxu0 0.0
    %4051 = vmatpush1.xpose.msra.mxu0 0.0
    %4052 = vmatprep.subr.mxu0 0.0
    %4053 = vmatpush1.xpose.msra.mxu0 0.0
    %4054 = vmatprep.subr.mxu0 0.0
    %4055 = vmatpush1.xpose.msra.mxu0 0.0
    %4056 = vmatprep.subr.mxu0 0.0
    %4057 = vmatpush1.xpose.msra.mxu0 0.0
    %4058 = vmatprep.subr.mxu0 0.0
    %4059 = vmatpush1.xpose.msra.mxu0 0.0
    %4060 = vmatprep.subr.mxu0 0.0
    %4061 = vmatpush1.xpose.msra.mxu0 0.0
    %4062 = vmatprep.subr.mxu0 0.0
    %4063 = vmatpush1.xpose.msra.mxu0 0.0
    %4064 = vmatprep.subr.mxu0 0.0
    %4065 = vmatpush1.xpose.msra.mxu0 0.0
    %4066 = vmatprep.subr.mxu0 0.0
    %4067 = vmatpush1.xpose.msra.mxu0 0.0
    %4068 = vmatprep.subr.mxu0 0.0
    %4069 = vmatpush1.xpose.msra.mxu0 0.0
    %4070 = vmatprep.subr.mxu0 0.0
    %4071 = vmatpush1.xpose.msra.mxu0 0.0
    %4072 = vmatprep.subr.mxu0 0.0
    %4073 = vmatpush1.xpose.msra.mxu0 0.0
    %4074 = vmatprep.subr.mxu0 0.0
    %4075 = vmatpush1.xpose.msra.mxu0 0.0
    %4076 = vmatprep.subr.mxu0 0.0
    %4077 = vmatpush1.xpose.msra.mxu0 0.0
    %4078 = vmatprep.subr.mxu0 0.0
    %4079 = vmatpush1.xpose.msra.mxu0 0.0
    %4080 = vmatprep.subr.mxu0 0.0
    %4081 = vmatpush1.xpose.msra.mxu0 0.0
    %4082 = vmatprep.subr.mxu0 0.0
    %4083 = vmatpush1.xpose.msra.mxu0 0.0
    %4084 = vmatprep.subr.mxu0 0.0
    %4085 = vmatpush1.xpose.msra.mxu0 0.0
    %4086 = vmatprep.subr.mxu0 0.0
    %4087 = vmatpush1.xpose.msra.mxu0 0.0
    %4088 = vmatprep.subr.mxu0 0.0
    %4089 = vmatpush1.xpose.msra.mxu0 0.0
    %4090 = vmatprep.subr.mxu0 0.0
    %4091 = vmatpush1.xpose.msra.mxu0 0.0
    %4092 = vmatprep.subr.mxu0 0.0
    %4093 = vmatpush1.xpose.msra.mxu0 0.0
    %4094 = vmatprep.subr.mxu0 0.0
    %4095 = vmatpush1.xpose.msra.mxu0 0.0
    %4096 = vmatprep.subr.mxu0 0.0
    %4097 = vmatpush1.xpose.msra.mxu0 0.0
    %4098 = vmatprep.subr.mxu0 0.0
    %4099 = vmatpush1.xpose.msra.mxu0 0.0
    %4100 = vmatprep.subr.mxu0 0.0
    %4101 = vmatpush1.xpose.msra.mxu0 0.0
    %4102 = vmatprep.subr.mxu0 0.0
    %4103 = vmatpush1.xpose.msra.mxu0 0.0
    %4104 = vmatprep.subr.mxu0 0.0
    %4105 = vmatpush1.xpose.msra.mxu0 0.0
    %4106 = vmatprep.subr.mxu0 0.0
    %4107 = vmatpush1.xpose.msra.mxu0 0.0
    %4108 = vmatprep.subr.mxu0 0.0
    %4109 = vmatpush1.xpose.msra.mxu0 0.0
    %4110 = vmatprep.subr.mxu0 0.0
    %4111 = vmatpush1.xpose.msra.mxu0 0.0
    %4112 = vmatprep.mubr.f32.mxu0 0.0
    %4113 = vmatmul.mubr.f32.gmra.mrb[0].mxu0 %v4046
    %v4114 = vpop.f32.mrb[0].mxu0
    %v4115 = vadd.f32 0.0, %v4114
    %v4116 = vpop.f32.mrb[0].mxu0
    %4117 = vdwg.mxu0
    %v4118 = vlaneseq
    %v4119 = vshrl.u32 %v4118, 7
    %v4120 = vsub.s32 0, %v4119
    %v4121 = vrot.slane %v4039, %v4120
    %4122 = vrot.lane.b32.xlu0 %v4121, 32
    %v4123 = vpop.permute.xlu0 %4122
    %v4124 = vsel %vm229, %v4123, 0
    %4126 = vmatprep.subr.mxu0 0.0
    %4127 = vmatpush1.xpose.msra.mxu0 %v308
    %4128 = vmatprep.subr.mxu0 0.0
    %4129 = vmatpush1.xpose.msra.mxu0 0.0
    %4130 = vmatprep.subr.mxu0 0.0
    %4131 = vmatpush1.xpose.msra.mxu0 0.0
    %4132 = vmatprep.subr.mxu0 0.0
    %4133 = vmatpush1.xpose.msra.mxu0 0.0
    %4134 = vmatprep.subr.mxu0 0.0
    %4135 = vmatpush1.xpose.msra.mxu0 0.0
    %4136 = vmatprep.subr.mxu0 0.0
    %4137 = vmatpush1.xpose.msra.mxu0 0.0
    %4138 = vmatprep.subr.mxu0 0.0
    %4139 = vmatpush1.xpose.msra.mxu0 0.0
    %4140 = vmatprep.subr.mxu0 0.0
    %4141 = vmatpush1.xpose.msra.mxu0 0.0
    %4142 = vmatprep.subr.mxu0 0.0
    %4143 = vmatpush1.xpose.msra.mxu0 0.0
    %4144 = vmatprep.subr.mxu0 0.0
    %4145 = vmatpush1.xpose.msra.mxu0 0.0
    %4146 = vmatprep.subr.mxu0 0.0
    %4147 = vmatpush1.xpose.msra.mxu0 0.0
    %4148 = vmatprep.subr.mxu0 0.0
    %4149 = vmatpush1.xpose.msra.mxu0 0.0
    %4150 = vmatprep.subr.mxu0 0.0
    %4151 = vmatpush1.xpose.msra.mxu0 0.0
    %4152 = vmatprep.subr.mxu0 0.0
    %4153 = vmatpush1.xpose.msra.mxu0 0.0
    %4154 = vmatprep.subr.mxu0 0.0
    %4155 = vmatpush1.xpose.msra.mxu0 0.0
    %4156 = vmatprep.subr.mxu0 0.0
    %4157 = vmatpush1.xpose.msra.mxu0 0.0
    %4158 = vmatprep.subr.mxu0 0.0
    %4159 = vmatpush1.xpose.msra.mxu0 0.0
    %4160 = vmatprep.subr.mxu0 0.0
    %4161 = vmatpush1.xpose.msra.mxu0 0.0
    %4162 = vmatprep.subr.mxu0 0.0
    %4163 = vmatpush1.xpose.msra.mxu0 0.0
    %4164 = vmatprep.subr.mxu0 0.0
    %4165 = vmatpush1.xpose.msra.mxu0 0.0
    %4166 = vmatprep.subr.mxu0 0.0
    %4167 = vmatpush1.xpose.msra.mxu0 0.0
    %4168 = vmatprep.subr.mxu0 0.0
    %4169 = vmatpush1.xpose.msra.mxu0 0.0
    %4170 = vmatprep.subr.mxu0 0.0
    %4171 = vmatpush1.xpose.msra.mxu0 0.0
    %4172 = vmatprep.subr.mxu0 0.0
    %4173 = vmatpush1.xpose.msra.mxu0 0.0
    %4174 = vmatprep.subr.mxu0 0.0
    %4175 = vmatpush1.xpose.msra.mxu0 0.0
    %4176 = vmatprep.subr.mxu0 0.0
    %4177 = vmatpush1.xpose.msra.mxu0 0.0
    %4178 = vmatprep.subr.mxu0 0.0
    %4179 = vmatpush1.xpose.msra.mxu0 0.0
    %4180 = vmatprep.subr.mxu0 0.0
    %4181 = vmatpush1.xpose.msra.mxu0 0.0
    %4182 = vmatprep.subr.mxu0 0.0
    %4183 = vmatpush1.xpose.msra.mxu0 0.0
    %4184 = vmatprep.subr.mxu0 0.0
    %4185 = vmatpush1.xpose.msra.mxu0 0.0
    %4186 = vmatprep.subr.mxu0 0.0
    %4187 = vmatpush1.xpose.msra.mxu0 0.0
    %4188 = vmatprep.subr.mxu0 0.0
    %4189 = vmatpush1.xpose.msra.mxu0 0.0
    %4190 = vmatprep.mubr.f32.mxu0 0.0
    %4191 = vmatmul.mubr.f32.gmra.mrb[0].mxu0 %v4124
    %v4192 = vpop.f32.mrb[0].mxu0
    %v4193 = vadd.f32 0.0, %v4192
    %v4194 = vpop.f32.mrb[0].mxu0
    %4195 = vdwg.mxu0
    %v4196 = vsel %vm380, %v4115, -inf
    %4197 = vmax.xlane.f32.xlu0 %v4196
    %v4198 = vpop.xlane.xlu0 %4197
    %v4199 = vsel %vm380, %v4193, -inf
    %4200 = vmax.xlane.f32.xlu0 %v4199
    %v4201 = vpop.xlane.xlu0 %4200
    %v4202 = vsub.f32 %v4115, %v4198
    %v4203 = vsub.f32 %v4193, %v4201
    %v4204 = vmul.f32 %v4202, 1.442695
    %v4205 = vpow.pop %v4204
    %v4206 = vmul.f32 %v4203, 1.442695
    %v4207 = vpow.pop %v4206
    %v4208 = vsel %vm380, %v4205, 0.0
    %4209 = vadd.xlane.f32.xlu0 %v4208
    %v4210 = vpop.xlane.xlu0 %4209
    %v4211 = vsel %vm380, %v4207, 0.0
    %4212 = vadd.xlane.f32.xlu0 %v4211
    %v4213 = vpop.xlane.xlu0 %4212
    %v4214 = vrcp.pop %v4210
    %v4215 = vrcp.pop %v4213
    %v4216 = vmul.f32 %v4205, %v4214
    %v4217 = vmul.f32 %v4207, %v4215
    %v4219 = vsel %vm403, %v4216, 0
    %4221 = vmatprep.subr.mxu0 0.0
    %4222 = vmatpush1.msra.mxu0 %v45
    %4223 = vmatprep.subr.mxu0 0.0
    %4224 = vmatpush1.msra.mxu0 0.0
    %4225 = vmatprep.subr.mxu0 0.0
    %4226 = vmatpush1.msra.mxu0 0.0
    %4227 = vmatprep.subr.mxu0 0.0
    %4228 = vmatpush1.msra.mxu0 0.0
    %4229 = vmatprep.subr.mxu0 0.0
    %4230 = vmatpush1.msra.mxu0 0.0
    %4231 = vmatprep.subr.mxu0 0.0
    %4232 = vmatpush1.msra.mxu0 0.0
    %4233 = vmatprep.subr.mxu0 0.0
    %4234 = vmatpush1.msra.mxu0 0.0
    %4235 = vmatprep.subr.mxu0 0.0
    %4236 = vmatpush1.msra.mxu0 0.0
    %4237 = vmatprep.subr.mxu0 0.0
    %4238 = vmatpush1.msra.mxu0 0.0
    %4239 = vmatprep.subr.mxu0 0.0
    %4240 = vmatpush1.msra.mxu0 0.0
    %4241 = vmatprep.subr.mxu0 0.0
    %4242 = vmatpush1.msra.mxu0 0.0
    %4243 = vmatprep.subr.mxu0 0.0
    %4244 = vmatpush1.msra.mxu0 0.0
    %4245 = vmatprep.subr.mxu0 0.0
    %4246 = vmatpush1.msra.mxu0 0.0
    %4247 = vmatprep.subr.mxu0 0.0
    %4248 = vmatpush1.msra.mxu0 0.0
    %4249 = vmatprep.subr.mxu0 0.0
    %4250 = vmatpush1.msra.mxu0 0.0
    %4251 = vmatprep.subr.mxu0 0.0
    %4252 = vmatpush1.msra.mxu0 0.0
    %4253 = vmatprep.subr.mxu0 0.0
    %4254 = vmatpush1.msra.mxu0 0.0
    %4255 = vmatprep.subr.mxu0 0.0
    %4256 = vmatpush1.msra.mxu0 0.0
    %4257 = vmatprep.subr.mxu0 0.0
    %4258 = vmatpush1.msra.mxu0 0.0
    %4259 = vmatprep.subr.mxu0 0.0
    %4260 = vmatpush1.msra.mxu0 0.0
    %4261 = vmatprep.subr.mxu0 0.0
    %4262 = vmatpush1.msra.mxu0 0.0
    %4263 = vmatprep.subr.mxu0 0.0
    %4264 = vmatpush1.msra.mxu0 0.0
    %4265 = vmatprep.subr.mxu0 0.0
    %4266 = vmatpush1.msra.mxu0 0.0
    %4267 = vmatprep.subr.mxu0 0.0
    %4268 = vmatpush1.msra.mxu0 0.0
    %4269 = vmatprep.subr.mxu0 0.0
    %4270 = vmatpush1.msra.mxu0 0.0
    %4271 = vmatprep.subr.mxu0 0.0
    %4272 = vmatpush1.msra.mxu0 0.0
    %4273 = vmatprep.subr.mxu0 0.0
    %4274 = vmatpush1.msra.mxu0 0.0
    %4275 = vmatprep.subr.mxu0 0.0
    %4276 = vmatpush1.msra.mxu0 0.0
    %4277 = vmatprep.subr.mxu0 0.0
    %4278 = vmatpush1.msra.mxu0 0.0
    %4279 = vmatprep.subr.mxu0 0.0
    %4280 = vmatpush1.msra.mxu0 0.0
    %4281 = vmatprep.subr.mxu0 0.0
    %4282 = vmatpush1.msra.mxu0 0.0
    %4283 = vmatprep.subr.mxu0 0.0
    %4284 = vmatpush1.msra.mxu0 0.0
    %4285 = vmatprep.mubr.f32.mxu0 0.0
    %4286 = vmatmul.mubr.f32.gmra.mrb[0].mxu0 %v4219
    %v4287 = vpop.f32.mrb[0].mxu0
    %v4288 = vadd.f32 0.0, %v4287
    %v4289 = vpop.f32.mrb[0].mxu0
    %4290 = vdwg.mxu0
    %v4292 = vsel %vm403, %v4217, 0
    %4294 = vmatprep.subr.mxu0 0.0
    %4295 = vmatpush1.msra.mxu0 %v46
    %4296 = vmatprep.subr.mxu0 0.0
    %4297 = vmatpush1.msra.mxu0 0.0
    %4298 = vmatprep.subr.mxu0 0.0
    %4299 = vmatpush1.msra.mxu0 0.0
    %4300 = vmatprep.subr.mxu0 0.0
    %4301 = vmatpush1.msra.mxu0 0.0
    %4302 = vmatprep.subr.mxu0 0.0
    %4303 = vmatpush1.msra.mxu0 0.0
    %4304 = vmatprep.subr.mxu0 0.0
    %4305 = vmatpush1.msra.mxu0 0.0
    %4306 = vmatprep.subr.mxu0 0.0
    %4307 = vmatpush1.msra.mxu0 0.0
    %4308 = vmatprep.subr.mxu0 0.0
    %4309 = vmatpush1.msra.mxu0 0.0
    %4310 = vmatprep.subr.mxu0 0.0
    %4311 = vmatpush1.msra.mxu0 0.0
    %4312 = vmatprep.subr.mxu0 0.0
    %4313 = vmatpush1.msra.mxu0 0.0
    %4314 = vmatprep.subr.mxu0 0.0
    %4315 = vmatpush1.msra.mxu0 0.0
    %4316 = vmatprep.subr.mxu0 0.0
    %4317 = vmatpush1.msra.mxu0 0.0
    %4318 = vmatprep.subr.mxu0 0.0
    %4319 = vmatpush1.msra.mxu0 0.0
    %4320 = vmatprep.subr.mxu0 0.0
    %4321 = vmatpush1.msra.mxu0 0.0
    %4322 = vmatprep.subr.mxu0 0.0
    %4323 = vmatpush1.msra.mxu0 0.0
    %4324 = vmatprep.subr.mxu0 0.0
    %4325 = vmatpush1.msra.mxu0 0.0
    %4326 = vmatprep.subr.mxu0 0.0
    %4327 = vmatpush1.msra.mxu0 0.0
    %4328 = vmatprep.subr.mxu0 0.0
    %4329 = vmatpush1.msra.mxu0 0.0
    %4330 = vmatprep.subr.mxu0 0.0
    %4331 = vmatpush1.msra.mxu0 0.0
    %4332 = vmatprep.subr.mxu0 0.0
    %4333 = vmatpush1.msra.mxu0 0.0
    %4334 = vmatprep.subr.mxu0 0.0
    %4335 = vmatpush1.msra.mxu0 0.0
    %4336 = vmatprep.subr.mxu0 0.0
    %4337 = vmatpush1.msra.mxu0 0.0
    %4338 = vmatprep.subr.mxu0 0.0
    %4339 = vmatpush1.msra.mxu0 0.0
    %4340 = vmatprep.subr.mxu0 0.0
    %4341 = vmatpush1.msra.mxu0 0.0
    %4342 = vmatprep.subr.mxu0 0.0
    %4343 = vmatpush1.msra.mxu0 0.0
    %4344 = vmatprep.subr.mxu0 0.0
    %4345 = vmatpush1.msra.mxu0 0.0
    %4346 = vmatprep.subr.mxu0 0.0
    %4347 = vmatpush1.msra.mxu0 0.0
    %4348 = vmatprep.subr.mxu0 0.0
    %4349 = vmatpush1.msra.mxu0 0.0
    %4350 = vmatprep.subr.mxu0 0.0
    %4351 = vmatpush1.msra.mxu0 0.0
    %4352 = vmatprep.subr.mxu0 0.0
    %4353 = vmatpush1.msra.mxu0 0.0
    %4354 = vmatprep.subr.mxu0 0.0
    %4355 = vmatpush1.msra.mxu0 0.0
    %4356 = vmatprep.subr.mxu0 0.0
    %4357 = vmatpush1.msra.mxu0 0.0
    %4358 = vmatprep.mubr.f32.mxu0 0.0
    %4359 = vmatmul.mubr.f32.gmra.mrb[0].mxu0 %v4292
    %v4360 = vpop.f32.mrb[0].mxu0
    %v4361 = vadd.f32 0.0, %v4360
    %v4362 = vpop.f32.mrb[0].mxu0
    %4363 = vdwg.mxu0
    %v4366 = vrot.slane %v4361, 7
    %v4367 = vsel %vm553, %v4366, %v4288
    %v4368 = vsel %vm229, %v4367, 0
    %4370 = vmatprep.subr.mxu0 0.0
    %4371 = vmatpush1.msra.mxu0 %v51
    %4372 = vmatprep.subr.mxu0 0.0
    %4373 = vmatpush1.msra.mxu0 %v52
    %4374 = vmatprep.subr.mxu0 0.0
    %4375 = vmatpush1.msra.mxu0 %v53
    %4376 = vmatprep.subr.mxu0 0.0
    %4377 = vmatpush1.msra.mxu0 %v54
    %4378 = vmatprep.subr.mxu0 0.0
    %4379 = vmatpush1.msra.mxu0 0.0
    %4380 = vmatprep.subr.mxu0 0.0
    %4381 = vmatpush1.msra.mxu0 0.0
    %4382 = vmatprep.subr.mxu0 0.0
    %4383 = vmatpush1.msra.mxu0 0.0
    %4384 = vmatprep.subr.mxu0 0.0
    %4385 = vmatpush1.msra.mxu0 0.0
    %4386 = vmatprep.subr.mxu0 0.0
    %4387 = vmatpush1.msra.mxu0 0.0
    %4388 = vmatprep.subr.mxu0 0.0
    %4389 = vmatpush1.msra.mxu0 0.0
    %4390 = vmatprep.subr.mxu0 0.0
    %4391 = vmatpush1.msra.mxu0 0.0
    %4392 = vmatprep.subr.mxu0 0.0
    %4393 = vmatpush1.msra.mxu0 0.0
    %4394 = vmatprep.subr.mxu0 0.0
    %4395 = vmatpush1.msra.mxu0 0.0
    %4396 = vmatprep.subr.mxu0 0.0
    %4397 = vmatpush1.msra.mxu0 0.0
    %4398 = vmatprep.subr.mxu0 0.0
    %4399 = vmatpush1.msra.mxu0 0.0
    %4400 = vmatprep.subr.mxu0 0.0
    %4401 = vmatpush1.msra.mxu0 0.0
    %4402 = vmatprep.subr.mxu0 0.0
    %4403 = vmatpush1.msra.mxu0 0.0
    %4404 = vmatprep.subr.mxu0 0.0
    %4405 = vmatpush1.msra.mxu0 0.0
    %4406 = vmatprep.subr.mxu0 0.0
    %4407 = vmatpush1.msra.mxu0 0.0
    %4408 = vmatprep.subr.mxu0 0.0
    %4409 = vmatpush1.msra.mxu0 0.0
    %4410 = vmatprep.subr.mxu0 0.0
    %4411 = vmatpush1.msra.mxu0 0.0
    %4412 = vmatprep.subr.mxu0 0.0
    %4413 = vmatpush1.msra.mxu0 0.0
    %4414 = vmatprep.subr.mxu0 0.0
    %4415 = vmatpush1.msra.mxu0 0.0
    %4416 = vmatprep.subr.mxu0 0.0
    %4417 = vmatpush1.msra.mxu0 0.0
    %4418 = vmatprep.subr.mxu0 0.0
    %4419 = vmatpush1.msra.mxu0 0.0
    %4420 = vmatprep.subr.mxu0 0.0
    %4421 = vmatpush1.msra.mxu0 0.0
    %4422 = vmatprep.subr.mxu0 0.0
    %4423 = vmatpush1.msra.mxu0 0.0
    %4424 = vmatprep.subr.mxu0 0.0
    %4425 = vmatpush1.msra.mxu0 0.0
    %4426 = vmatprep.subr.mxu0 0.0
    %4427 = vmatpush1.msra.mxu0 0.0
    %4428 = vmatprep.subr.mxu0 0.0
    %4429 = vmatpush1.msra.mxu0 0.0
    %4430 = vmatprep.subr.mxu0 0.0
    %4431 = vmatpush1.msra.mxu0 0.0
    %4432 = vmatprep.subr.mxu0 0.0
    %4433 = vmatpush1.msra.mxu0 0.0
    %4434 = vmatprep.mubr.f32.mxu0 0.0
    %4435 = vmatmul.mubr.f32.gmra.mrb[0].mxu0 %v4368
    %v4436 = vpop.f32.mrb[0].mxu0
    %v4437 = vadd.f32 0.0, %v4436
    %v4438 = vpop.f32.mrb[0].mxu0
    %4439 = vdwg.mxu0
    %v4441 = vsel %vm102, %v4014, 0
    %4443 = vmatprep.subr.mxu0 0.0
    %4444 = vmatpush1.msra.mxu0 %v49
    %4445 = vmatprep.subr.mxu0 0.0
    %4446 = vmatpush1.msra.mxu0 %v50
    %4447 = vmatprep.subr.mxu0 0.0
    %4448 = vmatpush1.msra.mxu0 0.0
    %4449 = vmatprep.subr.mxu0 0.0
    %4450 = vmatpush1.msra.mxu0 0.0
    %4451 = vmatprep.subr.mxu0 0.0
    %4452 = vmatpush1.msra.mxu0 0.0
    %4453 = vmatprep.subr.mxu0 0.0
    %4454 = vmatpush1.msra.mxu0 0.0
    %4455 = vmatprep.subr.mxu0 0.0
    %4456 = vmatpush1.msra.mxu0 0.0
    %4457 = vmatprep.subr.mxu0 0.0
    %4458 = vmatpush1.msra.mxu0 0.0
    %4459 = vmatprep.subr.mxu0 0.0
    %4460 = vmatpush1.msra.mxu0 0.0
    %4461 = vmatprep.subr.mxu0 0.0
    %4462 = vmatpush1.msra.mxu0 0.0
    %4463 = vmatprep.subr.mxu0 0.0
    %4464 = vmatpush1.msra.mxu0 0.0
    %4465 = vmatprep.subr.mxu0 0.0
    %4466 = vmatpush1.msra.mxu0 0.0
    %4467 = vmatprep.subr.mxu0 0.0
    %4468 = vmatpush1.msra.mxu0 0.0
    %4469 = vmatprep.subr.mxu0 0.0
    %4470 = vmatpush1.msra.mxu0 0.0
    %4471 = vmatprep.subr.mxu0 0.0
    %4472 = vmatpush1.msra.mxu0 0.0
    %4473 = vmatprep.subr.mxu0 0.0
    %4474 = vmatpush1.msra.mxu0 0.0
    %4475 = vmatprep.subr.mxu0 0.0
    %4476 = vmatpush1.msra.mxu0 0.0
    %4477 = vmatprep.subr.mxu0 0.0
    %4478 = vmatpush1.msra.mxu0 0.0
    %4479 = vmatprep.subr.mxu0 0.0
    %4480 = vmatpush1.msra.mxu0 0.0
    %4481 = vmatprep.subr.mxu0 0.0
    %4482 = vmatpush1.msra.mxu0 0.0
    %4483 = vmatprep.subr.mxu0 0.0
    %4484 = vmatpush1.msra.mxu0 0.0
    %4485 = vmatprep.subr.mxu0 0.0
    %4486 = vmatpush1.msra.mxu0 0.0
    %4487 = vmatprep.subr.mxu0 0.0
    %4488 = vmatpush1.msra.mxu0 0.0
    %4489 = vmatprep.subr.mxu0 0.0
    %4490 = vmatpush1.msra.mxu0 0.0
    %4491 = vmatprep.subr.mxu0 0.0
    %4492 = vmatpush1.msra.mxu0 0.0
    %4493 = vmatprep.subr.mxu0 0.0
    %4494 = vmatpush1.msra.mxu0 0.0
    %4495 = vmatprep.subr.mxu0 0.0
    %4496 = vmatpush1.msra.mxu0 0.0
    %4497 = vmatprep.subr.mxu0 0.0
    %4498 = vmatpush1.msra.mxu0 0.0
    %4499 = vmatprep.subr.mxu0 0.0
    %4500 = vmatpush1.msra.mxu0 0.0
    %4501 = vmatprep.subr.mxu0 0.0
    %4502 = vmatpush1.msra.mxu0 0.0
    %4503 = vmatprep.subr.mxu0 0.0
    %4504 = vmatpush1.msra.mxu0 0.0
    %4505 = vmatprep.subr.mxu0 0.0
    %4506 = vmatpush1.msra.mxu0 0.0
    %4507 = vmatprep.mubr.f32.mxu0 0.0
    %4508 = vmatmul.mubr.f32.gmra.mrb[0].mxu0 %v4441
    %v4509 = vpop.f32.mrb[0].mxu0
    %v4510 = vadd.f32 %v4437, %v4509
    %v4511 = vpop.f32.mrb[0].mxu0
    %4512 = vdwg.mxu0
    %4514 = vrot.lane.b32.xlu0 %v3917, 32
    %v4515 = vpop.permute.xlu0 %4514
    %v4516 = vsel %vm229, %v4515, 0
    %4518 = vmatprep.subr.mxu0 0.0
    %4519 = vmatpush1.msra.mxu0 %v55
    %4520 = vmatprep.subr.mxu0 0.0
    %4521 = vmatpush1.msra.mxu0 %v56
    %4522 = vmatprep.subr.mxu0 0.0
    %4523 = vmatpush1.msra.mxu0 %v57
    %4524 = vmatprep.subr.mxu0 0.0
    %4525 = vmatpush1.msra.mxu0 %v58
    %4526 = vmatprep.subr.mxu0 0.0
    %4527 = vmatpush1.msra.mxu0 0.0
    %4528 = vmatprep.subr.mxu0 0.0
    %4529 = vmatpush1.msra.mxu0 0.0
    %4530 = vmatprep.subr.mxu0 0.0
    %4531 = vmatpush1.msra.mxu0 0.0
    %4532 = vmatprep.subr.mxu0 0.0
    %4533 = vmatpush1.msra.mxu0 0.0
    %4534 = vmatprep.subr.mxu0 0.0
    %4535 = vmatpush1.msra.mxu0 0.0
    %4536 = vmatprep.subr.mxu0 0.0
    %4537 = vmatpush1.msra.mxu0 0.0
    %4538 = vmatprep.subr.mxu0 0.0
    %4539 = vmatpush1.msra.mxu0 0.0
    %4540 = vmatprep.subr.mxu0 0.0
    %4541 = vmatpush1.msra.mxu0 0.0
    %4542 = vmatprep.subr.mxu0 0.0
    %4543 = vmatpush1.msra.mxu0 0.0
    %4544 = vmatprep.subr.mxu0 0.0
    %4545 = vmatpush1.msra.mxu0 0.0
    %4546 = vmatprep.subr.mxu0 0.0
    %4547 = vmatpush1.msra.mxu0 0.0
    %4548 = vmatprep.subr.mxu0 0.0
    %4549 = vmatpush1.msra.mxu0 0.0
    %4550 = vmatprep.subr.mxu0 0.0
    %4551 = vmatpush1.msra.mxu0 0.0
    %4552 = vmatprep.subr.mxu0 0.0
    %4553 = vmatpush1.msra.mxu0 0.0
    %4554 = vmatprep.subr.mxu0 0.0
    %4555 = vmatpush1.msra.mxu0 0.0
    %4556 = vmatprep.subr.mxu0 0.0
    %4557 = vmatpush1.msra.mxu0 0.0
    %4558 = vmatprep.subr.mxu0 0.0
    %4559 = vmatpush1.msra.mxu0 0.0
    %4560 = vmatprep.subr.mxu0 0.0
    %4561 = vmatpush1.msra.mxu0 0.0
    %4562 = vmatprep.subr.mxu0 0.0
    %4563 = vmatpush1.msra.mxu0 0.0
    %4564 = vmatprep.subr.mxu0 0.0
    %4565 = vmatpush1.msra.mxu0 0.0
    %4566 = vmatprep.subr.mxu0 0.0
    %4567 = vmatpush1.msra.mxu0 0.0
    %4568 = vmatprep.subr.mxu0 0.0
    %4569 = vmatpush1.msra.mxu0 0.0
    %4570 = vmatprep.subr.mxu0 0.0
    %4571 = vmatpush1.msra.mxu0 0.0
    %4572 = vmatprep.subr.mxu0 0.0
    %4573 = vmatpush1.msra.mxu0 0.0
    %4574 = vmatprep.subr.mxu0 0.0
    %4575 = vmatpush1.msra.mxu0 0.0
    %4576 = vmatprep.subr.mxu0 0.0
    %4577 = vmatpush1.msra.mxu0 0.0
    %4578 = vmatprep.subr.mxu0 0.0
    %4579 = vmatpush1.msra.mxu0 0.0
    %4580 = vmatprep.subr.mxu0 0.0
    %4581 = vmatpush1.msra.mxu0 0.0
    %4582 = vmatprep.mubr.f32.mxu0 0.0
    %4583 = vmatmul.mubr.f32.gmra.mrb[0].mxu0 %v4516
    %v4584 = vpop.f32.mrb[0].mxu0
    %v4585 = vadd.f32 0.0, %v4584
    %v4586 = vpop.f32.mrb[0].mxu0
    %4587 = vdwg.mxu0
    %v4588 = vadd.f32 %v4510, %v4585
    %v4589 = vadd.f32 %v4588, %v76
    %v4590 = vxor.u32 %v4589, 2147483648
    %v4591 = vmul.f32 %v4590, 1.442695
    %v4592 = vpow.pop %v4591
    %v4593 = vadd.f32 %v4592, 1.0
    %v4594 = vrcp.pop %v4593
    %v4595 = vmul.f32 1.0, %v4594
    %v4596 = vtanh.pop %v4589
    %v4597 = vmul.f32 %v4595, %v3919
    %4599 = vrot.lane.b32.xlu0 %v4596, 64
    %v4600 = vpop.permute.xlu0 %4599
    %v4602 = vmul.f32 %v4595, %v4600
    %4604 = vrot.lane.b32.xlu0 %v4602, 32
    %v4605 = vpop.permute.xlu0 %4604
    %v4607 = vadd.f32 %v4597, %v4605
    %v4608 = vtanh.pop %v4607
    %4610 = vrot.lane.b32.xlu0 %v4608, 64
    %v4611 = vpop.permute.xlu0 %4610
    %v4613 = vmul.f32 %v4595, %v4611
    %4614 = vrot.lane.b32.xlu0 %v3918, 32
    %v4615 = vpop.permute.xlu0 %4614
    %v4616 = vsel %vm229, %v4615, 0
    %4618 = vmatprep.subr.mxu0 0.0
    %4619 = vmatpush1.msra.mxu0 %v63
    %4620 = vmatprep.subr.mxu0 0.0
    %4621 = vmatpush1.msra.mxu0 %v64
    %4622 = vmatprep.subr.mxu0 0.0
    %4623 = vmatpush1.msra.mxu0 %v65
    %4624 = vmatprep.subr.mxu0 0.0
    %4625 = vmatpush1.msra.mxu0 %v66
    %4626 = vmatprep.subr.mxu0 0.0
    %4627 = vmatpush1.msra.mxu0 0.0
    %4628 = vmatprep.subr.mxu0 0.0
    %4629 = vmatpush1.msra.mxu0 0.0
    %4630 = vmatprep.subr.mxu0 0.0
    %4631 = vmatpush1.msra.mxu0 0.0
    %4632 = vmatprep.subr.mxu0 0.0
    %4633 = vmatpush1.msra.mxu0 0.0
    %4634 = vmatprep.subr.mxu0 0.0
    %4635 = vmatpush1.msra.mxu0 0.0
    %4636 = vmatprep.subr.mxu0 0.0
    %4637 = vmatpush1.msra.mxu0 0.0
    %4638 = vmatprep.subr.mxu0 0.0
    %4639 = vmatpush1.msra.mxu0 0.0
    %4640 = vmatprep.subr.mxu0 0.0
    %4641 = vmatpush1.msra.mxu0 0.0
    %4642 = vmatprep.subr.mxu0 0.0
    %4643 = vmatpush1.msra.mxu0 0.0
    %4644 = vmatprep.subr.mxu0 0.0
    %4645 = vmatpush1.msra.mxu0 0.0
    %4646 = vmatprep.subr.mxu0 0.0
    %4647 = vmatpush1.msra.mxu0 0.0
    %4648 = vmatprep.subr.mxu0 0.0
    %4649 = vmatpush1.msra.mxu0 0.0
    %4650 = vmatprep.subr.mxu0 0.0
    %4651 = vmatpush1.msra.mxu0 0.0
    %4652 = vmatprep.subr.mxu0 0.0
    %4653 = vmatpush1.msra.mxu0 0.0
    %4654 = vmatprep.subr.mxu0 0.0
    %4655 = vmatpush1.msra.mxu0 0.0
    %4656 = vmatprep.subr.mxu0 0.0
    %4657 = vmatpush1.msra.mxu0 0.0
    %4658 = vmatprep.subr.mxu0 0.0
    %4659 = vmatpush1.msra.mxu0 0.0
    %4660 = vmatprep.subr.mxu0 0.0
    %4661 = vmatpush1.msra.mxu0 0.0
    %4662 = vmatprep.subr.mxu0 0.0
    %4663 = vmatpush1.msra.mxu0 0.0
    %4664 = vmatprep.subr.mxu0 0.0
    %4665 = vmatpush1.msra.mxu0 0.0
    %4666 = vmatprep.subr.mxu0 0.0
    %4667 = vmatpush1.msra.mxu0 0.0
    %4668 = vmatprep.subr.mxu0 0.0
    %4669 = vmatpush1.msra.mxu0 0.0
    %4670 = vmatprep.subr.mxu0 0.0
    %4671 = vmatpush1.msra.mxu0 0.0
    %4672 = vmatprep.subr.mxu0 0.0
    %4673 = vmatpush1.msra.mxu0 0.0
    %4674 = vmatprep.subr.mxu0 0.0
    %4675 = vmatpush1.msra.mxu0 0.0
    %4676 = vmatprep.subr.mxu0 0.0
    %4677 = vmatpush1.msra.mxu0 0.0
    %4678 = vmatprep.subr.mxu0 0.0
    %4679 = vmatpush1.msra.mxu0 0.0
    %4680 = vmatprep.subr.mxu0 0.0
    %4681 = vmatpush1.msra.mxu0 0.0
    %4682 = vmatprep.mubr.f32.mxu0 0.0
    %4683 = vmatmul.mubr.f32.gmra.mrb[0].mxu0 %v4616
    %v4684 = vpop.f32.mrb[0].mxu0
    %v4685 = vadd.f32 0.0, %v4684
    %v4686 = vpop.f32.mrb[0].mxu0
    %4687 = vdwg.mxu0
    %4689 = vrot.lane.b32.xlu0 %v4613, 32
    %v4690 = vpop.permute.xlu0 %4689
    %v4691 = vsel %vm229, %v4690, 0
    %4693 = vmatprep.subr.mxu0 0.0
    %4694 = vmatpush1.msra.mxu0 %v59
    %4695 = vmatprep.subr.mxu0 0.0
    %4696 = vmatpush1.msra.mxu0 %v60
    %4697 = vmatprep.subr.mxu0 0.0
    %4698 = vmatpush1.msra.mxu0 %v61
    %4699 = vmatprep.subr.mxu0 0.0
    %4700 = vmatpush1.msra.mxu0 %v62
    %4701 = vmatprep.subr.mxu0 0.0
    %4702 = vmatpush1.msra.mxu0 0.0
    %4703 = vmatprep.subr.mxu0 0.0
    %4704 = vmatpush1.msra.mxu0 0.0
    %4705 = vmatprep.subr.mxu0 0.0
    %4706 = vmatpush1.msra.mxu0 0.0
    %4707 = vmatprep.subr.mxu0 0.0
    %4708 = vmatpush1.msra.mxu0 0.0
    %4709 = vmatprep.subr.mxu0 0.0
    %4710 = vmatpush1.msra.mxu0 0.0
    %4711 = vmatprep.subr.mxu0 0.0
    %4712 = vmatpush1.msra.mxu0 0.0
    %4713 = vmatprep.subr.mxu0 0.0
    %4714 = vmatpush1.msra.mxu0 0.0
    %4715 = vmatprep.subr.mxu0 0.0
    %4716 = vmatpush1.msra.mxu0 0.0
    %4717 = vmatprep.subr.mxu0 0.0
    %4718 = vmatpush1.msra.mxu0 0.0
    %4719 = vmatprep.subr.mxu0 0.0
    %4720 = vmatpush1.msra.mxu0 0.0
    %4721 = vmatprep.subr.mxu0 0.0
    %4722 = vmatpush1.msra.mxu0 0.0
    %4723 = vmatprep.subr.mxu0 0.0
    %4724 = vmatpush1.msra.mxu0 0.0
    %4725 = vmatprep.subr.mxu0 0.0
    %4726 = vmatpush1.msra.mxu0 0.0
    %4727 = vmatprep.subr.mxu0 0.0
    %4728 = vmatpush1.msra.mxu0 0.0
    %4729 = vmatprep.subr.mxu0 0.0
    %4730 = vmatpush1.msra.mxu0 0.0
    %4731 = vmatprep.subr.mxu0 0.0
    %4732 = vmatpush1.msra.mxu0 0.0
    %4733 = vmatprep.subr.mxu0 0.0
    %4734 = vmatpush1.msra.mxu0 0.0
    %4735 = vmatprep.subr.mxu0 0.0
    %4736 = vmatpush1.msra.mxu0 0.0
    %4737 = vmatprep.subr.mxu0 0.0
    %4738 = vmatpush1.msra.mxu0 0.0
    %4739 = vmatprep.subr.mxu0 0.0
    %4740 = vmatpush1.msra.mxu0 0.0
    %4741 = vmatprep.subr.mxu0 0.0
    %4742 = vmatpush1.msra.mxu0 0.0
    %4743 = vmatprep.subr.mxu0 0.0
    %4744 = vmatpush1.msra.mxu0 0.0
    %4745 = vmatprep.subr.mxu0 0.0
    %4746 = vmatpush1.msra.mxu0 0.0
    %4747 = vmatprep.subr.mxu0 0.0
    %4748 = vmatpush1.msra.mxu0 0.0
    %4749 = vmatprep.subr.mxu0 0.0
    %4750 = vmatpush1.msra.mxu0 0.0
    %4751 = vmatprep.subr.mxu0 0.0
    %4752 = vmatpush1.msra.mxu0 0.0
    %4753 = vmatprep.subr.mxu0 0.0
    %4754 = vmatpush1.msra.mxu0 0.0
    %4755 = vmatprep.subr.mxu0 0.0
    %4756 = vmatpush1.msra.mxu0 0.0
    %4757 = vmatprep.mubr.f32.mxu0 0.0
    %4758 = vmatmul.mubr.f32.gmra.mrb[0].mxu0 %v4691
    %v4759 = vpop.f32.mrb[0].mxu0
    %v4760 = vadd.f32 %v4685, %v4759
    %v4761 = vpop.f32.mrb[0].mxu0
    %4762 = vdwg.mxu0
    %v4763 = vadd.f32 %v4760, %v83
    %v4764 = vxor.u32 %v4763, 2147483648
    %v4765 = vmul.f32 %v4764, 1.442695
    %v4766 = vpow.pop %v4765
    %v4767 = vadd.f32 %v4766, 1.0
    %v4768 = vrcp.pop %v4767
    %v4769 = vmul.f32 1.0, %v4768
    %v4770 = vtanh.pop %v4763
    %v4771 = vmul.f32 %v4769, %v3920
    %4773 = vrot.lane.b32.xlu0 %v4770, 64
    %v4774 = vpop.permute.xlu0 %4773
    %v4776 = vmul.f32 %v4769, %v4774
    %4778 = vrot.lane.b32.xlu0 %v4776, 32
    %v4779 = vpop.permute.xlu0 %4778
    %v4781 = vadd.f32 %v4771, %v4779
    %v4782 = vtanh.pop %v4781
    %4784 = vrot.lane.b32.xlu0 %v4782, 64
    %v4785 = vpop.permute.xlu0 %4784
    %v4787 = vmul.f32 %v4769, %v4785
    %4789 = vrot.lane.b32.xlu0 %v4787, 32
    %v4790 = vpop.permute.xlu0 %4789
    %v4791 = vsel %vm229, %v4790, 0
    %4793 = vmatprep.subr.mxu0 0.0
    %4794 = vmatpush1.msra.mxu0 %v67
    %4795 = vmatprep.subr.mxu0 0.0
    %4796 = vmatpush1.msra.mxu0 %v68
    %4797 = vmatprep.subr.mxu0 0.0
    %4798 = vmatpush1.msra.mxu0 %v69
    %4799 = vmatprep.subr.mxu0 0.0
    %4800 = vmatpush1.msra.mxu0 %v70
    %4801 = vmatprep.subr.mxu0 0.0
    %4802 = vmatpush1.msra.mxu0 0.0
    %4803 = vmatprep.subr.mxu0 0.0
    %4804 = vmatpush1.msra.mxu0 0.0
    %4805 = vmatprep.subr.mxu0 0.0
    %4806 = vmatpush1.msra.mxu0 0.0
    %4807 = vmatprep.subr.mxu0 0.0
    %4808 = vmatpush1.msra.mxu0 0.0
    %4809 = vmatprep.subr.mxu0 0.0
    %4810 = vmatpush1.msra.mxu0 0.0
    %4811 = vmatprep.subr.mxu0 0.0
    %4812 = vmatpush1.msra.mxu0 0.0
    %4813 = vmatprep.subr.mxu0 0.0
    %4814 = vmatpush1.msra.mxu0 0.0
    %4815 = vmatprep.subr.mxu0 0.0
    %4816 = vmatpush1.msra.mxu0 0.0
    %4817 = vmatprep.subr.mxu0 0.0
    %4818 = vmatpush1.msra.mxu0 0.0
    %4819 = vmatprep.subr.mxu0 0.0
    %4820 = vmatpush1.msra.mxu0 0.0
    %4821 = vmatprep.subr.mxu0 0.0
    %4822 = vmatpush1.msra.mxu0 0.0
    %4823 = vmatprep.subr.mxu0 0.0
    %4824 = vmatpush1.msra.mxu0 0.0
    %4825 = vmatprep.subr.mxu0 0.0
    %4826 = vmatpush1.msra.mxu0 0.0
    %4827 = vmatprep.subr.mxu0 0.0
    %4828 = vmatpush1.msra.mxu0 0.0
    %4829 = vmatprep.subr.mxu0 0.0
    %4830 = vmatpush1.msra.mxu0 0.0
    %4831 = vmatprep.subr.mxu0 0.0
    %4832 = vmatpush1.msra.mxu0 0.0
    %4833 = vmatprep.subr.mxu0 0.0
    %4834 = vmatpush1.msra.mxu0 0.0
    %4835 = vmatprep.subr.mxu0 0.0
    %4836 = vmatpush1.msra.mxu0 0.0
    %4837 = vmatprep.subr.mxu0 0.0
    %4838 = vmatpush1.msra.mxu0 0.0
    %4839 = vmatprep.subr.mxu0 0.0
    %4840 = vmatpush1.msra.mxu0 0.0
    %4841 = vmatprep.subr.mxu0 0.0
    %4842 = vmatpush1.msra.mxu0 0.0
    %4843 = vmatprep.subr.mxu0 0.0
    %4844 = vmatpush1.msra.mxu0 0.0
    %4845 = vmatprep.subr.mxu0 0.0
    %4846 = vmatpush1.msra.mxu0 0.0
    %4847 = vmatprep.subr.mxu0 0.0
    %4848 = vmatpush1.msra.mxu0 0.0
    %4849 = vmatprep.subr.mxu0 0.0
    %4850 = vmatpush1.msra.mxu0 0.0
    %4851 = vmatprep.subr.mxu0 0.0
    %4852 = vmatpush1.msra.mxu0 0.0
    %4853 = vmatprep.subr.mxu0 0.0
    %4854 = vmatpush1.msra.mxu0 0.0
    %4855 = vmatprep.subr.mxu0 0.0
    %4856 = vmatpush1.msra.mxu0 0.0
    %4857 = vmatprep.mubr.f32.mxu0 0.0
    %4858 = vmatmul.mubr.f32.gmra.mrb[0].mxu0 %v4791
    %v4859 = vpop.f32.mrb[0].mxu0
    %v4860 = vadd.f32 %v90, %v4859
    %v4861 = vpop.f32.mrb[0].mxu0
    %4862 = vdwg.mxu0
    %s4863 = scalar_lea.vmem [#allocation2], 10
    %4864 = vst [vmem:[%s4863] sm:$0x3] %v4860
    // Predicated region
    $region54: #{seq2seq_forward.3} parent=1 // pred_check
      _
    $region55: #{seq2seq_forward.3} parent=1 // pred_check_branch
      %4866 = sbr.rel (0) target = $region57
    $region56: #{seq2seq_forward.3} parent=1 // pred_region
      %s4868 = ssub.s32 192, 192
      %4869 = vsyncadd [#allocation3], %s4868
      %s4870 = sshll.u32 [#allocation2], 4
      %s4871 = int_to_ptr.vmem [resolvable:$true] %s4870
      %4876 = dma.vmem_to_hbm [thread:$0]  %s4871, 192, %s13, [#allocation3], 32, 32, 2
    $region57: #{seq2seq_forward.3} parent=1 // pred_fallthru
      _
    // Predicated region
    $region58: #{seq2seq_forward.3} parent=1 // pred_check
      _
    $region59: #{seq2seq_forward.3} parent=1 // pred_check_branch
      %4878 = sbr.rel (0) target = $region61
    $region60: #{seq2seq_forward.3} parent=1 // pred_region
      %4879 = dma.done [#allocation3], 192
    $region61: #{seq2seq_forward.3} parent=1 // pred_fallthru
      _
    %4880 = vsyncpa [#allocation3], 1

</llo_original>
